<compile_context>
chip_gen: v5e
topology: v5e:2x2
jax: 0.10.0
libtpu: 0.0.40
codegen_flags: <defaults>
</compile_context>

<pallas_src>
import jax
import jax.numpy as jnp
import numpy as np
from jax.experimental import pallas as pl
from jax.experimental.pallas import tpu as pltpu

NUM_LAYERS  = 4                       # last 4 hidden states
D_MODEL     = 768                     # ViT hidden size
D_CONCAT    = NUM_LAYERS * D_MODEL    # 3072
D_HIDDEN    = 512                     # classifier hidden size
NUM_CLASSES = 102
C_PAD       = 128                     # lane-dense padded class dimension


def _classifier_kernel(x_ref, w1_ref, b1_ref, w2_ref, b2_ref, out_ref):
    # x_ref : (TB, 3072) bf16      w1_ref : (3072, 512) bf16   b1_ref : (1, 512) f32
    # w2_ref: (512, 128) bf16      b2_ref : (1, 128)    f32    out_ref: (TB, 128) f32
    h = jnp.dot(x_ref[...], w1_ref[...], preferred_element_type=jnp.float32)
    h = jnp.maximum(h + b1_ref[...], 0.0)              # bias + ReLU in f32
    # TODO(synk): nn.Dropout(0.3) compiled as identity (eval mode); training-mode
    #             dropout would use pltpu.prng_seed / pltpu.prng_random_bits here.
    logits = jnp.dot(h.astype(w2_ref.dtype), w2_ref[...],
                     preferred_element_type=jnp.float32)
    out_ref[...] = (logits + b2_ref[...]).astype(out_ref.dtype)


def prepare_classifier_params(w1, b1, w2, b2):
    """One-time weight preparation (call at model init, NOT per forward).

    bf16 cast for the MXU operands and zero-padding of the class dimension
    102 -> 128.  Hoisted out of the hot path so no extra XLA pass re-reads
    ~6 MB of f32 weights on every call.
    """
    w2p = jnp.zeros((D_HIDDEN, C_PAD), jnp.float32).at[:, :NUM_CLASSES].set(
        w2.astype(jnp.float32))
    b2p = jnp.zeros((C_PAD,), jnp.float32).at[:NUM_CLASSES].set(
        b2.astype(jnp.float32))
    return dict(
        w1=w1.astype(jnp.bfloat16),                         # (3072, 512) bf16
        b1=b1.reshape(1, D_HIDDEN).astype(jnp.float32),     # (1, 512)    f32
        w2=w2p.astype(jnp.bfloat16),                        # (512, 128)  bf16
        b2=b2p.reshape(1, C_PAD),                           # (1, 128)    f32
    )


def _choose_batch_tiling(B, tb_max):
    """Adaptive batch tile: minimise padding, TB multiple of 8 and >= 16."""
    num_tiles = max(1, -(-B // tb_max))       # ceil(B / tb_max)
    tb = -(-B // num_tiles)                   # ceil(B / num_tiles)
    tb = max(16, -(-tb // 8) * 8)             # round up to mult of 8, >= 16 (bf16 tile)
    return tb, num_tiles, tb * num_tiles


def _build_head_call(tb, num_tiles, b_pad, cost, resident_kwargs):
    in_specs = [
        # activations: tiled over batch (double-buffered by default)
        pl.BlockSpec((tb, D_CONCAT), lambda i: (i, 0)),
        # resident weights/biases: constant index_map, single buffer requested
        pl.BlockSpec((D_CONCAT, D_HIDDEN), lambda i: (0, 0), **resident_kwargs),
        pl.BlockSpec((1, D_HIDDEN), lambda i: (0, 0), **resident_kwargs),
        pl.BlockSpec((D_HIDDEN, C_PAD), lambda i: (0, 0), **resident_kwargs),
        pl.BlockSpec((1, C_PAD), lambda i: (0, 0), **resident_kwargs),
    ]
    return pl.pallas_call(
        _classifier_kernel,
        out_shape=jax.ShapeDtypeStruct((b_pad, C_PAD), jnp.float32),
        grid_spec=pltpu.PrefetchScalarGridSpec(
            num_scalar_prefetch=0,
            grid=(num_tiles,),
            in_specs=in_specs,
            out_specs=pl.BlockSpec((tb, C_PAD), lambda i: (i, 0)),
        ),
        compiler_params=pltpu.CompilerParams(
            # "parallel" only pays off with >= 2 grid steps (2 TCs on v7x);
            # a single tile on one core avoids duplicating the 3 MB w1 DMA.
            dimension_semantics=("parallel" if num_tiles > 1 else "arbitrary",),
        ),
        cost_estimate=cost,
    )


def vit_classifier_head(hs_stack, params, *, tb_max=128):
    """hs_stack: (4, B, S, 768) f32 (last-4 hidden states) -> logits (B, 102) f32.

    tb_max: 128 is a good default everywhere; 256 is fine on single-TC v6e
    (more MXU work per ~0.35 us grid step) and fits its VMEM budget.
    """
    L, B, S, D = hs_stack.shape
    assert L == NUM_LAYERS and D == D_MODEL

    # CLS gather + concat in the wrapper (cheap strided slice).  Order matches
    # torch: [hs[-4][:,0], hs[-3][:,0], hs[-2][:,0], hs[-1][:,0]] along features.
    cls = hs_stack[:, :, 0, :]                               # (4, B, 768)
    x = jnp.transpose(cls, (1, 0, 2)).reshape(B, D_CONCAT)   # (B, 3072)
    x = x.astype(jnp.bfloat16)
    # TODO(synk): at large B the CLS gather/concat could be fused into the kernel
    #             (4 accumulating K=768 dots) to save one activation HBM round trip.

    tb, num_tiles, b_pad = _choose_batch_tiling(B, tb_max)
    if b_pad != B:
        x = jnp.pad(x, ((0, b_pad - B), (0, 0)))

    w1, b1, w2, b2 = params["w1"], params["b1"], params["w2"], params["b2"]

    cost = pl.CostEstimate(
        flops=2 * b_pad * (D_CONCAT * D_HIDDEN + D_HIDDEN * C_PAD),
        transcendentals=0,
        bytes_accessed=(x.size * 2 + w1.size * 2 + w2.size * 2
                        + b1.size * 4 + b2.size * 4 + b_pad * C_PAD * 4),
    )

    try:
        # Single-buffer the resident weights (reclaims ~3 MB VMEM; headroom to
        # raise tb_max on v6e/v7x without touching vmem_limit_bytes).
        out = _build_head_call(tb, num_tiles, b_pad, cost,
                               dict(pipeline_mode=pl.Buffered(1)))(x, w1, b1, w2, b2)
    except Exception:
        # Fallback for jax builds without BlockSpec pipeline_mode support:
        # default double-buffered residents (correct, just more VMEM).
        out = _build_head_call(tb, num_tiles, b_pad, cost, {})(x, w1, b1, w2, b2)

    # Slice off batch padding and padded class columns.
    return out[:B, :NUM_CLASSES]


def _init_linear(key, fan_in, fan_out):
    # PyTorch nn.Linear default: U(-1/sqrt(fan_in), 1/sqrt(fan_in)) for W and b.
    kw, kb = jax.random.split(key)
    bound = 1.0 / np.sqrt(fan_in)
    w = jax.random.uniform(kw, (fan_in, fan_out), jnp.float32, -bound, bound)
    b = jax.random.uniform(kb, (fan_out,), jnp.float32, -bound, bound)
    return w, b


def _reference_bf16(hs_stack, w1, b1, w2, b2):
    # Same numerics path as the kernel (bf16 operands, f32 accumulation).
    cls = jnp.concatenate([hs_stack[l, :, 0, :] for l in range(NUM_LAYERS)], axis=-1)
    h = jnp.dot(cls.astype(jnp.bfloat16), w1.astype(jnp.bfloat16),
                preferred_element_type=jnp.float32)
    h = jnp.maximum(h + b1, 0.0)
    out = jnp.dot(h.astype(jnp.bfloat16), w2.astype(jnp.bfloat16),
                  preferred_element_type=jnp.float32)
    return out + b2


def _reference_f32(hs_stack, w1, b1, w2, b2):
    cls = jnp.concatenate([hs_stack[l, :, 0, :] for l in range(NUM_LAYERS)], axis=-1)
    h = jnp.maximum(cls @ w1 + b1, 0.0)
    return h @ w2 + b2


if __name__ == "__main__":
    key = jax.random.PRNGKey(0)
    k_hs, k_l1, k_l2 = jax.random.split(key, 3)

    B, S = 2, 8   # small batch / sequence (seq includes the CLS token at pos 0)
    hs_stack = jax.random.normal(k_hs, (NUM_LAYERS, B, S, D_MODEL), jnp.float32)

    w1, b1 = _init_linear(k_l1, D_CONCAT, D_HIDDEN)
    w2, b2 = _init_linear(k_l2, D_HIDDEN, NUM_CLASSES)

    # One-time weight prep (would live at model-init time in real use).
    params = prepare_classifier_params(w1, b1, w2, b2)

    logits = vit_classifier_head(hs_stack, params)
    logits = jax.block_until_ready(logits)

    assert logits.shape == (B, NUM_CLASSES)

    ref_bf16 = _reference_bf16(hs_stack, w1, b1, w2, b2)
    ref_f32 = _reference_f32(hs_stack, w1, b1, w2, b2)
    assert np.allclose(np.asarray(logits), np.asarray(ref_bf16), rtol=1e-2, atol=1e-2)
    assert np.allclose(np.asarray(logits), np.asarray(ref_f32), rtol=5e-2, atol=5e-2)

    print("KERNEL_OK")
</pallas_src>

<mosaic_0001>
module attributes {stable_mosaic.version = 11 : i64} {
  func.func @_classifier_kernel(%arg0: i32, %arg1: memref<16x3072xbf16, #tpu.memory_space<vmem>>, %arg2: memref<3072x512xbf16, #tpu.memory_space<vmem>>, %arg3: memref<1x512xf32, #tpu.memory_space<vmem>>, %arg4: memref<512x128xbf16, #tpu.memory_space<vmem>>, %arg5: memref<1x128xf32, #tpu.memory_space<vmem>>, %arg6: memref<16x128xf32, #tpu.memory_space<vmem>>) attributes {dimension_semantics = [#tpu.dimension_semantics<arbitrary>], iteration_bounds = array<i64: 1>, scalar_prefetch = 0 : i64, scratch_operands = 0 : i64, tpu.core_type = #tpu.core_type<tc>, window_params = [{transform_indices = @transform_0, window_bounds = array<i64: 16, 3072>}, {pipeline_mode = #tpu.pipeline_mode<synchronous>, transform_indices = @transform_1, window_bounds = array<i64: 3072, 512>}, {pipeline_mode = #tpu.pipeline_mode<synchronous>, transform_indices = @transform_2, window_bounds = array<i64: 1, 512>}, {pipeline_mode = #tpu.pipeline_mode<synchronous>, transform_indices = @transform_3, window_bounds = array<i64: 512, 128>}, {pipeline_mode = #tpu.pipeline_mode<synchronous>, transform_indices = @transform_4, window_bounds = array<i64: 1, 128>}, {transform_indices = @transform_5, window_bounds = array<i64: 16, 128>}]} {
    %c0 = arith.constant 0 : index
    %c0_0 = arith.constant 0 : index
    %0 = vector.load %arg1[%c0, %c0_0] : memref<16x3072xbf16, #tpu.memory_space<vmem>>, vector<16x3072xbf16>
    %c0_1 = arith.constant 0 : index
    %c0_2 = arith.constant 0 : index
    %1 = vector.load %arg2[%c0_1, %c0_2] : memref<3072x512xbf16, #tpu.memory_space<vmem>>, vector<3072x512xbf16>
    %cst = arith.constant dense<0.000000e+00> : vector<16x512xf32>
    %2 = tpu.matmul %0, %1, %cst {dimension_numbers = #tpu.dot_dimension_numbers<[1], [0], [0], [1], [0, 0, 1, 1], [], []>} : vector<16x3072xbf16>, vector<3072x512xbf16>, vector<16x512xf32> -> vector<16x512xf32>
    %c0_3 = arith.constant 0 : index
    %c0_4 = arith.constant 0 : index
    %3 = vector.load %arg3[%c0_3, %c0_4] : memref<1x512xf32, #tpu.memory_space<vmem>>, vector<1x512xf32>
    %4 = vector.broadcast %3 : vector<1x512xf32> to vector<16x512xf32>
    %5 = arith.addf %2, %4 : vector<16x512xf32>
    %cst_5 = arith.constant 0.000000e+00 : f32
    %6 = vector.broadcast %cst_5 : f32 to vector<16x512xf32>
    %7 = arith.maximumf %5, %6 : vector<16x512xf32>
    %8 = arith.truncf %7 : vector<16x512xf32> to vector<16x512xbf16>
    %c0_6 = arith.constant 0 : index
    %c0_7 = arith.constant 0 : index
    %9 = vector.load %arg4[%c0_6, %c0_7] : memref<512x128xbf16, #tpu.memory_space<vmem>>, vector<512x128xbf16>
    %cst_8 = arith.constant dense<0.000000e+00> : vector<16x128xf32>
    %10 = tpu.matmul %8, %9, %cst_8 {dimension_numbers = #tpu.dot_dimension_numbers<[1], [0], [0], [1], [0, 0, 1, 1], [], []>} : vector<16x512xbf16>, vector<512x128xbf16>, vector<16x128xf32> -> vector<16x128xf32>
    %c0_9 = arith.constant 0 : index
    %c0_10 = arith.constant 0 : index
    %11 = vector.load %arg5[%c0_9, %c0_10] : memref<1x128xf32, #tpu.memory_space<vmem>>, vector<1x128xf32>
    %12 = vector.broadcast %11 : vector<1x128xf32> to vector<16x128xf32>
    %13 = arith.addf %10, %12 : vector<16x128xf32>
    %c0_11 = arith.constant 0 : index
    %c0_12 = arith.constant 0 : index
    %14 = vector.load %arg6[%c0_11, %c0_12] : memref<16x128xf32, #tpu.memory_space<vmem>>, vector<16x128xf32>
    tpu.vector_store %arg6[%c0_11, %c0_12], %13 {strides = array<i32>} : memref<16x128xf32, #tpu.memory_space<vmem>>, vector<16x128xf32>,
    return
  }
  func.func @transform_0(%arg0: i32) -> (i32, i32) {
    %c0_i32 = arith.constant 0 : i32
    %c0_i32_0 = arith.constant 0 : i32
    return %arg0, %c0_i32 : i32, i32
  }
  func.func @transform_1(%arg0: i32) -> (i32, i32) {
    %c0_i32 = arith.constant 0 : i32
    %c0_i32_0 = arith.constant 0 : i32
    %c0_i32_1 = arith.constant 0 : i32
    return %c0_i32, %c0_i32_0 : i32, i32
  }
  func.func @transform_2(%arg0: i32) -> (i32, i32) {
    %c0_i32 = arith.constant 0 : i32
    %c0_i32_0 = arith.constant 0 : i32
    %c0_i32_1 = arith.constant 0 : i32
    return %c0_i32, %c0_i32_0 : i32, i32
  }
  func.func @transform_3(%arg0: i32) -> (i32, i32) {
    %c0_i32 = arith.constant 0 : i32
    %c0_i32_0 = arith.constant 0 : i32
    %c0_i32_1 = arith.constant 0 : i32
    return %c0_i32, %c0_i32_0 : i32, i32
  }
  func.func @transform_4(%arg0: i32) -> (i32, i32) {
    %c0_i32 = arith.constant 0 : i32
    %c0_i32_0 = arith.constant 0 : i32
    %c0_i32_1 = arith.constant 0 : i32
    return %c0_i32, %c0_i32_0 : i32, i32
  }
  func.func @transform_5(%arg0: i32) -> (i32, i32) {
    %c0_i32 = arith.constant 0 : i32
    %c0_i32_0 = arith.constant 0 : i32
    return %arg0, %c0_i32 : i32, i32
  }
}

module attributes {stable_mosaic.version = 11 : i64} {
  func.func @_classifier_kernel(%arg0: i32, %arg1: memref<16x3072xbf16, #tpu.memory_space<vmem>>, %arg2: memref<3072x512xbf16, #tpu.memory_space<vmem>>, %arg3: memref<1x512xf32, #tpu.memory_space<vmem>>, %arg4: memref<512x128xbf16, #tpu.memory_space<vmem>>, %arg5: memref<1x128xf32, #tpu.memory_space<vmem>>, %arg6: memref<16x128xf32, #tpu.memory_space<vmem>>) attributes {dimension_semantics = [#tpu.dimension_semantics<arbitrary>], iteration_bounds = array<i64: 1>, scalar_prefetch = 0 : i64, scratch_operands = 0 : i64, tpu.core_type = #tpu.core_type<tc>, window_params = [{transform_indices = @transform_0, window_bounds = array<i64: 16, 3072>}, {pipeline_mode = #tpu.pipeline_mode<synchronous>, transform_indices = @transform_1, window_bounds = array<i64: 3072, 512>}, {pipeline_mode = #tpu.pipeline_mode<synchronous>, transform_indices = @transform_2, window_bounds = array<i64: 1, 512>}, {pipeline_mode = #tpu.pipeline_mode<synchronous>, transform_indices = @transform_3, window_bounds = array<i64: 512, 128>}, {pipeline_mode = #tpu.pipeline_mode<synchronous>, transform_indices = @transform_4, window_bounds = array<i64: 1, 128>}, {transform_indices = @transform_5, window_bounds = array<i64: 16, 128>}]} {
    %c0 = arith.constant 0 : index
    %c0_0 = arith.constant 0 : index
    %0 = vector.load %arg1[%c0, %c0_0] : memref<16x3072xbf16, #tpu.memory_space<vmem>>, vector<16x3072xbf16>
    %c0_1 = arith.constant 0 : index
    %c0_2 = arith.constant 0 : index
    %1 = vector.load %arg2[%c0_1, %c0_2] : memref<3072x512xbf16, #tpu.memory_space<vmem>>, vector<3072x512xbf16>
    %cst = arith.constant dense<0.000000e+00> : vector<16x512xf32>
    %2 = tpu.matmul %0, %1, %cst {dimension_numbers = #tpu.dot_dimension_numbers<[1], [0], [0], [1], [0, 0, 1, 1], [], []>} : vector<16x3072xbf16>, vector<3072x512xbf16>, vector<16x512xf32> -> vector<16x512xf32>
    %c0_3 = arith.constant 0 : index
    %c0_4 = arith.constant 0 : index
    %3 = vector.load %arg3[%c0_3, %c0_4] : memref<1x512xf32, #tpu.memory_space<vmem>>, vector<1x512xf32>
    %4 = vector.broadcast %3 : vector<1x512xf32> to vector<16x512xf32>
    %5 = arith.addf %2, %4 : vector<16x512xf32>
    %cst_5 = arith.constant 0.000000e+00 : f32
    %6 = vector.broadcast %cst_5 : f32 to vector<16x512xf32>
    %7 = arith.maximumf %5, %6 : vector<16x512xf32>
    %8 = arith.truncf %7 : vector<16x512xf32> to vector<16x512xbf16>
    %c0_6 = arith.constant 0 : index
    %c0_7 = arith.constant 0 : index
    %9 = vector.load %arg4[%c0_6, %c0_7] : memref<512x128xbf16, #tpu.memory_space<vmem>>, vector<512x128xbf16>
    %cst_8 = arith.constant dense<0.000000e+00> : vector<16x128xf32>
    %10 = tpu.matmul %8, %9, %cst_8 {dimension_numbers = #tpu.dot_dimension_numbers<[1], [0], [0], [1], [0, 0, 1, 1], [], []>} : vector<16x512xbf16>, vector<512x128xbf16>, vector<16x128xf32> -> vector<16x128xf32>
    %c0_9 = arith.constant 0 : index
    %c0_10 = arith.constant 0 : index
    %11 = vector.load %arg5[%c0_9, %c0_10] : memref<1x128xf32, #tpu.memory_space<vmem>>, vector<1x128xf32>
    %12 = vector.broadcast %11 : vector<1x128xf32> to vector<16x128xf32>
    %13 = arith.addf %10, %12 : vector<16x128xf32>
    %c0_11 = arith.constant 0 : index
    %c0_12 = arith.constant 0 : index
    %14 = vector.load %arg6[%c0_11, %c0_12] : memref<16x128xf32, #tpu.memory_space<vmem>>, vector<16x128xf32>
    tpu.vector_store %arg6[%c0_11, %c0_12], %13 {strides = array<i32>} : memref<16x128xf32, #tpu.memory_space<vmem>>, vector<16x128xf32>,
    return
  }
  func.func @transform_0(%arg0: i32) -> (i32, i32) {
    %c0_i32 = arith.constant 0 : i32
    %c0_i32_0 = arith.constant 0 : i32
    return %arg0, %c0_i32 : i32, i32
  }
  func.func @transform_1(%arg0: i32) -> (i32, i32) {
    %c0_i32 = arith.constant 0 : i32
    %c0_i32_0 = arith.constant 0 : i32
    %c0_i32_1 = arith.constant 0 : i32
    return %c0_i32, %c0_i32_0 : i32, i32
  }
  func.func @transform_2(%arg0: i32) -> (i32, i32) {
    %c0_i32 = arith.constant 0 : i32
    %c0_i32_0 = arith.constant 0 : i32
    %c0_i32_1 = arith.constant 0 : i32
    return %c0_i32, %c0_i32_0 : i32, i32
  }
  func.func @transform_3(%arg0: i32) -> (i32, i32) {
    %c0_i32 = arith.constant 0 : i32
    %c0_i32_0 = arith.constant 0 : i32
    %c0_i32_1 = arith.constant 0 : i32
    return %c0_i32, %c0_i32_0 : i32, i32
  }
  func.func @transform_4(%arg0: i32) -> (i32, i32) {
    %c0_i32 = arith.constant 0 : i32
    %c0_i32_0 = arith.constant 0 : i32
    %c0_i32_1 = arith.constant 0 : i32
    return %c0_i32, %c0_i32_0 : i32, i32
  }
  func.func @transform_5(%arg0: i32) -> (i32, i32) {
    %c0_i32 = arith.constant 0 : i32
    %c0_i32_0 = arith.constant 0 : i32
    return %arg0, %c0_i32 : i32, i32
  }
}

</mosaic_0001>

<llo_original>
// kernel: tpu_custom_call.1
$region0: #{tpu_custom_call.1}
  #allocation0 [shape = 'u32[]', space=smem, size = 0x4, offset = 0x4, fixed_abs, tag = 'smem constant byte address 0x4 - core index']
  #allocation1 [shape = 'u32[72,128]{1,0:T(1,128)}', space=vmem, size = 0x9000, scoped, tag = 'internal scratch']
  %s0 = inlined_call_operand.hbm [shape: bf16[16,3072], index: 0, kind: input, shape index: {}]
  %s1 = inlined_call_operand.hbm [shape: bf16[3072,512], index: 1, kind: input, shape index: {}]
  %s2 = inlined_call_operand.hbm [shape: f32[1,512], index: 2, kind: input, shape index: {}]
  %s3 = inlined_call_operand.hbm [shape: bf16[512,128], index: 3, kind: input, shape index: {}]
  %s4 = inlined_call_operand.hbm [shape: f32[1,128], index: 4, kind: input, shape index: {}]
  %s5 = inlined_call_operand.hbm [shape: f32[16,128], index: 5, kind: output, shape index: {}]
  %s6 = sld [smem:[#allocation0]]
  $region50: #{tpu_custom_call.1} parent=0
    _
  %s8 = ssub.s32 1, %s6
  %s9 = scalar_select 0, %s8, %s6
  $region1: #{tpu_custom_call.1} parent=0
    #allocation2 [shape = 'u8[98304]{0}', space=vmem, size = 0x18000, scoped, tag = 'input window, operand 0, single buffered']
    #allocation3 [shape = 's32[1]{0}', space=sflag, size = 0x4, scoped, tag = 'scoped memory for tpu_custom_call.1']
    #allocation4 [shape = 's32[1]{0}', space=sflag, size = 0x4, scoped, tag = 'scoped memory for tpu_custom_call.1']
    #allocation5 [shape = 'u8[3145728]{0}', space=vmem, size = 0x300000, scoped, tag = 'input window, operand 1, single buffered']
    #allocation6 [shape = 's32[1]{0}', space=sflag, size = 0x4, scoped, tag = 'scoped memory for tpu_custom_call.1']
    #allocation7 [shape = 'u8[2048]{0}', space=vmem, size = 0x800, scoped, tag = 'input window, operand 2, single buffered']
    #allocation8 [shape = 'u8[131072]{0}', space=vmem, size = 0x20000, scoped, tag = 'input window, operand 3, single buffered']
    #allocation9 [shape = 's32[1]{0}', space=sflag, size = 0x4, scoped, tag = 'scoped memory for tpu_custom_call.1']
    #allocation10 [shape = 'u8[512]{0}', space=vmem, size = 0x400, scoped, tag = 'input window, operand 4, single buffered']
    #allocation11 [shape = 'u8[8192]{0}', space=vmem, size = 0x2000, scoped, tag = 'output window, operand 0, single buffered']
    %10 = vsyncpa [#allocation3], 0
    %11 = vsyncpa [#allocation6], 0
    %12 = vsyncpa [#allocation9], 0
    %13 = vsyncpa [#allocation4], 0
    // Predicated region
    $region2: #{tpu_custom_call.1} parent=1 // pred_check
      _
    $region3: #{tpu_custom_call.1} parent=1 // pred_check_branch
      %15 = sbr.rel (0) target = $region5
    $region4: #{tpu_custom_call.1} parent=1 // pred_region
      %17 = vsyncadd [#allocation3], 0
      %s18 = sshll.u32 %s0, 4
      %s19 = int_to_ptr.hbm [resolvable:$true] %s18
      %s20 = sshll.u32 [#allocation2], 4
      %s21 = int_to_ptr.vmem [resolvable:$true] %s20
      %26 = dma.hbm_to_vmem [thread:$0]  %s19, 3072, %s21, [#allocation3], 1536, 1536, 96
    $region5: #{tpu_custom_call.1} parent=1 // pred_fallthru
      _
    // Predicated region
    $region6: #{tpu_custom_call.1} parent=1 // pred_check
      _
    $region7: #{tpu_custom_call.1} parent=1 // pred_check_branch
      %28 = sbr.rel (0) target = $region9
    $region8: #{tpu_custom_call.1} parent=1 // pred_region
      %30 = vsyncadd [#allocation6], 0
      %s31 = sshll.u32 %s1, 4
      %s32 = int_to_ptr.hbm [resolvable:$true] %s31
      %s33 = sshll.u32 [#allocation5], 4
      %s34 = int_to_ptr.vmem [resolvable:$true] %s33
      %39 = dma.hbm_to_vmem [thread:$0]  %s32, 98304, %s34, [#allocation6], 256, 256, 16
    $region9: #{tpu_custom_call.1} parent=1 // pred_fallthru
      _
    // Predicated region
    $region10: #{tpu_custom_call.1} parent=1 // pred_check
      _
    $region11: #{tpu_custom_call.1} parent=1 // pred_check_branch
      %41 = sbr.rel (0) target = $region13
    $region12: #{tpu_custom_call.1} parent=1 // pred_region
      %43 = vsyncadd [#allocation6], 0
      %s45 = sshll.u32 %s2, 4
      %s46 = int_to_ptr.hbm [resolvable:$true] %s45
      %s47 = sshll.u32 [#allocation7], 4
      %s48 = int_to_ptr.vmem [resolvable:$true] %s47
      %50 = dma.hbm_to_vmem [thread:$0]  %s46, 64, %s48, [#allocation6]
    $region13: #{tpu_custom_call.1} parent=1 // pred_fallthru
      _
    // Predicated region
    $region14: #{tpu_custom_call.1} parent=1 // pred_check
      _
    $region15: #{tpu_custom_call.1} parent=1 // pred_check_branch
      %52 = sbr.rel (0) target = $region17
    $region16: #{tpu_custom_call.1} parent=1 // pred_region
      %54 = vsyncadd [#allocation9], 0
      %s55 = sshll.u32 %s3, 4
      %s56 = int_to_ptr.hbm [resolvable:$true] %s55
      %s57 = sshll.u32 [#allocation8], 4
      %s58 = int_to_ptr.vmem [resolvable:$true] %s57
      %63 = dma.hbm_to_vmem [thread:$0]  %s56, 4096, %s58, [#allocation9], 64, 64, 4
    $region17: #{tpu_custom_call.1} parent=1 // pred_fallthru
      _
    // Predicated region
    $region18: #{tpu_custom_call.1} parent=1 // pred_check
      _
    $region19: #{tpu_custom_call.1} parent=1 // pred_check_branch
      %65 = sbr.rel (0) target = $region21
    $region20: #{tpu_custom_call.1} parent=1 // pred_region
      %67 = vsyncadd [#allocation9], 0
      %s69 = sshll.u32 %s4, 4
      %s70 = int_to_ptr.hbm [resolvable:$true] %s69
      %s71 = sshll.u32 [#allocation10], 4
      %s72 = int_to_ptr.vmem [resolvable:$true] %s71
      %74 = dma.hbm_to_vmem [thread:$0]  %s70, 16, %s72, [#allocation9]
    $region21: #{tpu_custom_call.1} parent=1 // pred_fallthru
      _
    // Predicated region
    $region22: #{tpu_custom_call.1} parent=1 // pred_check
      _
    $region23: #{tpu_custom_call.1} parent=1 // pred_check_branch
      %76 = sbr.rel (0) target = $region25
    $region24: #{tpu_custom_call.1} parent=1 // pred_region
      %78 = dma.done [#allocation3], 3072
    $region25: #{tpu_custom_call.1} parent=1 // pred_fallthru
      _
    // Predicated region
    $region26: #{tpu_custom_call.1} parent=1 // pred_check
      _
    $region27: #{tpu_custom_call.1} parent=1 // pred_check_branch
      %80 = sbr.rel (0) target = $region29
    $region28: #{tpu_custom_call.1} parent=1 // pred_region
      %82 = dma.done [#allocation6], 98304
    $region29: #{tpu_custom_call.1} parent=1 // pred_fallthru
      _
    // Predicated region
    $region30: #{tpu_custom_call.1} parent=1 // pred_check
      _
    $region31: #{tpu_custom_call.1} parent=1 // pred_check_branch
      %84 = sbr.rel (0) target = $region33
    $region32: #{tpu_custom_call.1} parent=1 // pred_region
      %86 = dma.done [#allocation6], 64
    $region33: #{tpu_custom_call.1} parent=1 // pred_fallthru
      _
    // Predicated region
    $region34: #{tpu_custom_call.1} parent=1 // pred_check
      _
    $region35: #{tpu_custom_call.1} parent=1 // pred_check_branch
      %88 = sbr.rel (0) target = $region37
    $region36: #{tpu_custom_call.1} parent=1 // pred_region
      %90 = dma.done [#allocation9], 4096
    $region37: #{tpu_custom_call.1} parent=1 // pred_fallthru
      _
    // Predicated region
    $region38: #{tpu_custom_call.1} parent=1 // pred_check
      _
    $region39: #{tpu_custom_call.1} parent=1 // pred_check_branch
      %92 = sbr.rel (0) target = $region41
    $region40: #{tpu_custom_call.1} parent=1 // pred_region
      %94 = dma.done [#allocation9], 16
    $region41: #{tpu_custom_call.1} parent=1 // pred_fallthru
      _
    %v95 = vld [vmem:[#allocation2] sm:$0xff]
    %v96 = vld [vmem:[#allocation2 + $0x8] sm:$0xff]
    %v97 = vld [vmem:[#allocation2 + $0x10] sm:$0xff]
    %v98 = vld [vmem:[#allocation2 + $0x18] sm:$0xff]
    %v99 = vld [vmem:[#allocation2 + $0x20] sm:$0xff]
    %v100 = vld [vmem:[#allocation2 + $0x28] sm:$0xff]
    %v101 = vld [vmem:[#allocation2 + $0x30] sm:$0xff]
    %v102 = vld [vmem:[#allocation2 + $0x38] sm:$0xff]
    %v103 = vld [vmem:[#allocation2 + $0x40] sm:$0xff]
    %v104 = vld [vmem:[#allocation2 + $0x48] sm:$0xff]
    %v105 = vld [vmem:[#allocation2 + $0x50] sm:$0xff]
    %v106 = vld [vmem:[#allocation2 + $0x58] sm:$0xff]
    %v107 = vld [vmem:[#allocation2 + $0x60] sm:$0xff]
    %v108 = vld [vmem:[#allocation2 + $0x68] sm:$0xff]
    %v109 = vld [vmem:[#allocation2 + $0x70] sm:$0xff]
    %v110 = vld [vmem:[#allocation2 + $0x78] sm:$0xff]
    %v111 = vld [vmem:[#allocation2 + $0x80] sm:$0xff]
    %v112 = vld [vmem:[#allocation2 + $0x88] sm:$0xff]
    %v113 = vld [vmem:[#allocation2 + $0x90] sm:$0xff]
    %v114 = vld [vmem:[#allocation2 + $0x98] sm:$0xff]
    %v115 = vld [vmem:[#allocation2 + $0xa0] sm:$0xff]
    %v116 = vld [vmem:[#allocation2 + $0xa8] sm:$0xff]
    %v117 = vld [vmem:[#allocation2 + $0xb0] sm:$0xff]
    %v118 = vld [vmem:[#allocation2 + $0xb8] sm:$0xff]
    %v119 = vld [vmem:[#allocation5] sm:$0xff]
    %v120 = vld [vmem:[#allocation5 + $0x8] sm:$0xff]
    %v121 = vld [vmem:[#allocation5 + $0x10] sm:$0xff]
    %v122 = vld [vmem:[#allocation5 + $0x18] sm:$0xff]
    %v123 = vld [vmem:[#allocation5 + $0x20] sm:$0xff]
    %v124 = vld [vmem:[#allocation5 + $0x28] sm:$0xff]
    %v125 = vld [vmem:[#allocation5 + $0x30] sm:$0xff]
    %v126 = vld [vmem:[#allocation5 + $0x38] sm:$0xff]
    %v127 = vld [vmem:[#allocation5 + $0x40] sm:$0xff]
    %v128 = vld [vmem:[#allocation5 + $0x48] sm:$0xff]
    %v129 = vld [vmem:[#allocation5 + $0x50] sm:$0xff]
    %v130 = vld [vmem:[#allocation5 + $0x58] sm:$0xff]
    %v131 = vld [vmem:[#allocation5 + $0x60] sm:$0xff]
    %v132 = vld [vmem:[#allocation5 + $0x68] sm:$0xff]
    %v133 = vld [vmem:[#allocation5 + $0x70] sm:$0xff]
    %v134 = vld [vmem:[#allocation5 + $0x78] sm:$0xff]
    %v135 = vld [vmem:[#allocation5 + $0x80] sm:$0xff]
    %v136 = vld [vmem:[#allocation5 + $0x88] sm:$0xff]
    %v137 = vld [vmem:[#allocation5 + $0x90] sm:$0xff]
    %v138 = vld [vmem:[#allocation5 + $0x98] sm:$0xff]
    %v139 = vld [vmem:[#allocation5 + $0xa0] sm:$0xff]
    %v140 = vld [vmem:[#allocation5 + $0xa8] sm:$0xff]
    %v141 = vld [vmem:[#allocation5 + $0xb0] sm:$0xff]
    %v142 = vld [vmem:[#allocation5 + $0xb8] sm:$0xff]
    %v143 = vld [vmem:[#allocation5 + $0xc0] sm:$0xff]
    %v144 = vld [vmem:[#allocation5 + $0xc8] sm:$0xff]
    %v145 = vld [vmem:[#allocation5 + $0xd0] sm:$0xff]
    %v146 = vld [vmem:[#allocation5 + $0xd8] sm:$0xff]
    %v147 = vld [vmem:[#allocation5 + $0xe0] sm:$0xff]
    %v148 = vld [vmem:[#allocation5 + $0xe8] sm:$0xff]
    %v149 = vld [vmem:[#allocation5 + $0xf0] sm:$0xff]
    %v150 = vld [vmem:[#allocation5 + $0xf8] sm:$0xff]
    %v151 = vld [vmem:[#allocation5 + $0x100] sm:$0xff]
    %v152 = vld [vmem:[#allocation5 + $0x108] sm:$0xff]
    %v153 = vld [vmem:[#allocation5 + $0x110] sm:$0xff]
    %v154 = vld [vmem:[#allocation5 + $0x118] sm:$0xff]
    %v155 = vld [vmem:[#allocation5 + $0x120] sm:$0xff]
    %v156 = vld [vmem:[#allocation5 + $0x128] sm:$0xff]
    %v157 = vld [vmem:[#allocation5 + $0x130] sm:$0xff]
    %v158 = vld [vmem:[#allocation5 + $0x138] sm:$0xff]
    %v159 = vld [vmem:[#allocation5 + $0x140] sm:$0xff]
    %v160 = vld [vmem:[#allocation5 + $0x148] sm:$0xff]
    %v161 = vld [vmem:[#allocation5 + $0x150] sm:$0xff]
    %v162 = vld [vmem:[#allocation5 + $0x158] sm:$0xff]
    %v163 = vld [vmem:[#allocation5 + $0x160] sm:$0xff]
    %v164 = vld [vmem:[#allocation5 + $0x168] sm:$0xff]
    %v165 = vld [vmem:[#allocation5 + $0x170] sm:$0xff]
    %v166 = vld [vmem:[#allocation5 + $0x178] sm:$0xff]
    %v167 = vld [vmem:[#allocation5 + $0x180] sm:$0xff]
    %v168 = vld [vmem:[#allocation5 + $0x188] sm:$0xff]
    %v169 = vld [vmem:[#allocation5 + $0x190] sm:$0xff]
    %v170 = vld [vmem:[#allocation5 + $0x198] sm:$0xff]
    %v171 = vld [vmem:[#allocation5 + $0x1a0] sm:$0xff]
    %v172 = vld [vmem:[#allocation5 + $0x1a8] sm:$0xff]
    %v173 = vld [vmem:[#allocation5 + $0x1b0] sm:$0xff]
    %v174 = vld [vmem:[#allocation5 + $0x1b8] sm:$0xff]
    %v175 = vld [vmem:[#allocation5 + $0x1c0] sm:$0xff]
    %v176 = vld [vmem:[#allocation5 + $0x1c8] sm:$0xff]
    %v177 = vld [vmem:[#allocation5 + $0x1d0] sm:$0xff]
    %v178 = vld [vmem:[#allocation5 + $0x1d8] sm:$0xff]
    %v179 = vld [vmem:[#allocation5 + $0x1e0] sm:$0xff]
    %v180 = vld [vmem:[#allocation5 + $0x1e8] sm:$0xff]
    %v181 = vld [vmem:[#allocation5 + $0x1f0] sm:$0xff]
    %v182 = vld [vmem:[#allocation5 + $0x1f8] sm:$0xff]
    %v183 = vld [vmem:[#allocation5 + $0x200] sm:$0xff]
    %v184 = vld [vmem:[#allocation5 + $0x208] sm:$0xff]
    %v185 = vld [vmem:[#allocation5 + $0x210] sm:$0xff]
    %v186 = vld [vmem:[#allocation5 + $0x218] sm:$0xff]
    %v187 = vld [vmem:[#allocation5 + $0x220] sm:$0xff]
    %v188 = vld [vmem:[#allocation5 + $0x228] sm:$0xff]
    %v189 = vld [vmem:[#allocation5 + $0x230] sm:$0xff]
    %v190 = vld [vmem:[#allocation5 + $0x238] sm:$0xff]
    %v191 = vld [vmem:[#allocation5 + $0x240] sm:$0xff]
    %v192 = vld [vmem:[#allocation5 + $0x248] sm:$0xff]
    %v193 = vld [vmem:[#allocation5 + $0x250] sm:$0xff]
    %v194 = vld [vmem:[#allocation5 + $0x258] sm:$0xff]
    %v195 = vld [vmem:[#allocation5 + $0x260] sm:$0xff]
    %v196 = vld [vmem:[#allocation5 + $0x268] sm:$0xff]
    %v197 = vld [vmem:[#allocation5 + $0x270] sm:$0xff]
    %v198 = vld [vmem:[#allocation5 + $0x278] sm:$0xff]
    %v199 = vld [vmem:[#allocation5 + $0x280] sm:$0xff]
    %v200 = vld [vmem:[#allocation5 + $0x288] sm:$0xff]
    %v201 = vld [vmem:[#allocation5 + $0x290] sm:$0xff]
    %v202 = vld [vmem:[#allocation5 + $0x298] sm:$0xff]
    %v203 = vld [vmem:[#allocation5 + $0x2a0] sm:$0xff]
    %v204 = vld [vmem:[#allocation5 + $0x2a8] sm:$0xff]
    %v205 = vld [vmem:[#allocation5 + $0x2b0] sm:$0xff]
    %v206 = vld [vmem:[#allocation5 + $0x2b8] sm:$0xff]
    %v207 = vld [vmem:[#allocation5 + $0x2c0] sm:$0xff]
    %v208 = vld [vmem:[#allocation5 + $0x2c8] sm:$0xff]
    %v209 = vld [vmem:[#allocation5 + $0x2d0] sm:$0xff]
    %v210 = vld [vmem:[#allocation5 + $0x2d8] sm:$0xff]
    %v211 = vld [vmem:[#allocation5 + $0x2e0] sm:$0xff]
    %v212 = vld [vmem:[#allocation5 + $0x2e8] sm:$0xff]
    %v213 = vld [vmem:[#allocation5 + $0x2f0] sm:$0xff]
    %v214 = vld [vmem:[#allocation5 + $0x2f8] sm:$0xff]
    %v215 = vld [vmem:[#allocation5 + $0x300] sm:$0xff]
    %v216 = vld [vmem:[#allocation5 + $0x308] sm:$0xff]
    %v217 = vld [vmem:[#allocation5 + $0x310] sm:$0xff]
    %v218 = vld [vmem:[#allocation5 + $0x318] sm:$0xff]
    %v219 = vld [vmem:[#allocation5 + $0x320] sm:$0xff]
    %v220 = vld [vmem:[#allocation5 + $0x328] sm:$0xff]
    %v221 = vld [vmem:[#allocation5 + $0x330] sm:$0xff]
    %v222 = vld [vmem:[#allocation5 + $0x338] sm:$0xff]
    %v223 = vld [vmem:[#allocation5 + $0x340] sm:$0xff]
    %v224 = vld [vmem:[#allocation5 + $0x348] sm:$0xff]
    %v225 = vld [vmem:[#allocation5 + $0x350] sm:$0xff]
    %v226 = vld [vmem:[#allocation5 + $0x358] sm:$0xff]
    %v227 = vld [vmem:[#allocation5 + $0x360] sm:$0xff]
    %v228 = vld [vmem:[#allocation5 + $0x368] sm:$0xff]
    %v229 = vld [vmem:[#allocation5 + $0x370] sm:$0xff]
    %v230 = vld [vmem:[#allocation5 + $0x378] sm:$0xff]
    %v231 = vld [vmem:[#allocation5 + $0x380] sm:$0xff]
    %v232 = vld [vmem:[#allocation5 + $0x388] sm:$0xff]
    %v233 = vld [vmem:[#allocation5 + $0x390] sm:$0xff]
    %v234 = vld [vmem:[#allocation5 + $0x398] sm:$0xff]
    %v235 = vld [vmem:[#allocation5 + $0x3a0] sm:$0xff]
    %v236 = vld [vmem:[#allocation5 + $0x3a8] sm:$0xff]
    %v237 = vld [vmem:[#allocation5 + $0x3b0] sm:$0xff]
    %v238 = vld [vmem:[#allocation5 + $0x3b8] sm:$0xff]
    %v239 = vld [vmem:[#allocation5 + $0x3c0] sm:$0xff]
    %v240 = vld [vmem:[#allocation5 + $0x3c8] sm:$0xff]
    %v241 = vld [vmem:[#allocation5 + $0x3d0] sm:$0xff]
    %v242 = vld [vmem:[#allocation5 + $0x3d8] sm:$0xff]
    %v243 = vld [vmem:[#allocation5 + $0x3e0] sm:$0xff]
    %v244 = vld [vmem:[#allocation5 + $0x3e8] sm:$0xff]
    %v245 = vld [vmem:[#allocation5 + $0x3f0] sm:$0xff]
    %v246 = vld [vmem:[#allocation5 + $0x3f8] sm:$0xff]
    %v247 = vld [vmem:[#allocation5 + $0x400] sm:$0xff]
    %v248 = vld [vmem:[#allocation5 + $0x408] sm:$0xff]
    %v249 = vld [vmem:[#allocation5 + $0x410] sm:$0xff]
    %v250 = vld [vmem:[#allocation5 + $0x418] sm:$0xff]
    %v251 = vld [vmem:[#allocation5 + $0x420] sm:$0xff]
    %v252 = vld [vmem:[#allocation5 + $0x428] sm:$0xff]
    %v253 = vld [vmem:[#allocation5 + $0x430] sm:$0xff]
    %v254 = vld [vmem:[#allocation5 + $0x438] sm:$0xff]
    %v255 = vld [vmem:[#allocation5 + $0x440] sm:$0xff]
    %v256 = vld [vmem:[#allocation5 + $0x448] sm:$0xff]
    %v257 = vld [vmem:[#allocation5 + $0x450] sm:$0xff]
    %v258 = vld [vmem:[#allocation5 + $0x458] sm:$0xff]
    %v259 = vld [vmem:[#allocation5 + $0x460] sm:$0xff]
    %v260 = vld [vmem:[#allocation5 + $0x468] sm:$0xff]
    %v261 = vld [vmem:[#allocation5 + $0x470] sm:$0xff]
    %v262 = vld [vmem:[#allocation5 + $0x478] sm:$0xff]
    %v263 = vld [vmem:[#allocation5 + $0x480] sm:$0xff]
    %v264 = vld [vmem:[#allocation5 + $0x488] sm:$0xff]
    %v265 = vld [vmem:[#allocation5 + $0x490] sm:$0xff]
    %v266 = vld [vmem:[#allocation5 + $0x498] sm:$0xff]
    %v267 = vld [vmem:[#allocation5 + $0x4a0] sm:$0xff]
    %v268 = vld [vmem:[#allocation5 + $0x4a8] sm:$0xff]
    %v269 = vld [vmem:[#allocation5 + $0x4b0] sm:$0xff]
    %v270 = vld [vmem:[#allocation5 + $0x4b8] sm:$0xff]
    %v271 = vld [vmem:[#allocation5 + $0x4c0] sm:$0xff]
    %v272 = vld [vmem:[#allocation5 + $0x4c8] sm:$0xff]
    %v273 = vld [vmem:[#allocation5 + $0x4d0] sm:$0xff]
    %v274 = vld [vmem:[#allocation5 + $0x4d8] sm:$0xff]
    %v275 = vld [vmem:[#allocation5 + $0x4e0] sm:$0xff]
    %v276 = vld [vmem:[#allocation5 + $0x4e8] sm:$0xff]
    %v277 = vld [vmem:[#allocation5 + $0x4f0] sm:$0xff]
    %v278 = vld [vmem:[#allocation5 + $0x4f8] sm:$0xff]
    %v279 = vld [vmem:[#allocation5 + $0x500] sm:$0xff]
    %v280 = vld [vmem:[#allocation5 + $0x508] sm:$0xff]
    %v281 = vld [vmem:[#allocation5 + $0x510] sm:$0xff]
    %v282 = vld [vmem:[#allocation5 + $0x518] sm:$0xff]
    %v283 = vld [vmem:[#allocation5 + $0x520] sm:$0xff]
    %v284 = vld [vmem:[#allocation5 + $0x528] sm:$0xff]
    %v285 = vld [vmem:[#allocation5 + $0x530] sm:$0xff]
    %v286 = vld [vmem:[#allocation5 + $0x538] sm:$0xff]
    %v287 = vld [vmem:[#allocation5 + $0x540] sm:$0xff]
    %v288 = vld [vmem:[#allocation5 + $0x548] sm:$0xff]
    %v289 = vld [vmem:[#allocation5 + $0x550] sm:$0xff]
    %v290 = vld [vmem:[#allocation5 + $0x558] sm:$0xff]
    %v291 = vld [vmem:[#allocation5 + $0x560] sm:$0xff]
    %v292 = vld [vmem:[#allocation5 + $0x568] sm:$0xff]
    %v293 = vld [vmem:[#allocation5 + $0x570] sm:$0xff]
    %v294 = vld [vmem:[#allocation5 + $0x578] sm:$0xff]
    %v295 = vld [vmem:[#allocation5 + $0x580] sm:$0xff]
    %v296 = vld [vmem:[#allocation5 + $0x588] sm:$0xff]
    %v297 = vld [vmem:[#allocation5 + $0x590] sm:$0xff]
    %v298 = vld [vmem:[#allocation5 + $0x598] sm:$0xff]
    %v299 = vld [vmem:[#allocation5 + $0x5a0] sm:$0xff]
    %v300 = vld [vmem:[#allocation5 + $0x5a8] sm:$0xff]
    %v301 = vld [vmem:[#allocation5 + $0x5b0] sm:$0xff]
    %v302 = vld [vmem:[#allocation5 + $0x5b8] sm:$0xff]
    %v303 = vld [vmem:[#allocation5 + $0x5c0] sm:$0xff]
    %v304 = vld [vmem:[#allocation5 + $0x5c8] sm:$0xff]
    %v305 = vld [vmem:[#allocation5 + $0x5d0] sm:$0xff]
    %v306 = vld [vmem:[#allocation5 + $0x5d8] sm:$0xff]
    %v307 = vld [vmem:[#allocation5 + $0x5e0] sm:$0xff]
    %v308 = vld [vmem:[#allocation5 + $0x5e8] sm:$0xff]
    %v309 = vld [vmem:[#allocation5 + $0x5f0] sm:$0xff]
    %v310 = vld [vmem:[#allocation5 + $0x5f8] sm:$0xff]
    %v311 = vld [vmem:[#allocation5 + $0x600] sm:$0xff]
    %v312 = vld [vmem:[#allocation5 + $0x608] sm:$0xff]
    %v313 = vld [vmem:[#allocation5 + $0x610] sm:$0xff]
    %v314 = vld [vmem:[#allocation5 + $0x618] sm:$0xff]
    %v315 = vld [vmem:[#allocation5 + $0x620] sm:$0xff]
    %v316 = vld [vmem:[#allocation5 + $0x628] sm:$0xff]
    %v317 = vld [vmem:[#allocation5 + $0x630] sm:$0xff]
    %v318 = vld [vmem:[#allocation5 + $0x638] sm:$0xff]
    %v319 = vld [vmem:[#allocation5 + $0x640] sm:$0xff]
    %v320 = vld [vmem:[#allocation5 + $0x648] sm:$0xff]
    %v321 = vld [vmem:[#allocation5 + $0x650] sm:$0xff]
    %v322 = vld [vmem:[#allocation5 + $0x658] sm:$0xff]
    %v323 = vld [vmem:[#allocation5 + $0x660] sm:$0xff]
    %v324 = vld [vmem:[#allocation5 + $0x668] sm:$0xff]
    %v325 = vld [vmem:[#allocation5 + $0x670] sm:$0xff]
    %v326 = vld [vmem:[#allocation5 + $0x678] sm:$0xff]
    %v327 = vld [vmem:[#allocation5 + $0x680] sm:$0xff]
    %v328 = vld [vmem:[#allocation5 + $0x688] sm:$0xff]
    %v329 = vld [vmem:[#allocation5 + $0x690] sm:$0xff]
    %v330 = vld [vmem:[#allocation5 + $0x698] sm:$0xff]
    %v331 = vld [vmem:[#allocation5 + $0x6a0] sm:$0xff]
    %v332 = vld [vmem:[#allocation5 + $0x6a8] sm:$0xff]
    %v333 = vld [vmem:[#allocation5 + $0x6b0] sm:$0xff]
    %v334 = vld [vmem:[#allocation5 + $0x6b8] sm:$0xff]
    %v335 = vld [vmem:[#allocation5 + $0x6c0] sm:$0xff]
    %v336 = vld [vmem:[#allocation5 + $0x6c8] sm:$0xff]
    %v337 = vld [vmem:[#allocation5 + $0x6d0] sm:$0xff]
    %v338 = vld [vmem:[#allocation5 + $0x6d8] sm:$0xff]
    %v339 = vld [vmem:[#allocation5 + $0x6e0] sm:$0xff]
    %v340 = vld [vmem:[#allocation5 + $0x6e8] sm:$0xff]
    %v341 = vld [vmem:[#allocation5 + $0x6f0] sm:$0xff]
    %v342 = vld [vmem:[#allocation5 + $0x6f8] sm:$0xff]
    %v343 = vld [vmem:[#allocation5 + $0x700] sm:$0xff]
    %v344 = vld [vmem:[#allocation5 + $0x708] sm:$0xff]
    %v345 = vld [vmem:[#allocation5 + $0x710] sm:$0xff]
    %v346 = vld [vmem:[#allocation5 + $0x718] sm:$0xff]
    %v347 = vld [vmem:[#allocation5 + $0x720] sm:$0xff]
    %v348 = vld [vmem:[#allocation5 + $0x728] sm:$0xff]
    %v349 = vld [vmem:[#allocation5 + $0x730] sm:$0xff]
    %v350 = vld [vmem:[#allocation5 + $0x738] sm:$0xff]
    %v351 = vld [vmem:[#allocation5 + $0x740] sm:$0xff]
    %v352 = vld [vmem:[#allocation5 + $0x748] sm:$0xff]
    %v353 = vld [vmem:[#allocation5 + $0x750] sm:$0xff]
    %v354 = vld [vmem:[#allocation5 + $0x758] sm:$0xff]
    %v355 = vld [vmem:[#allocation5 + $0x760] sm:$0xff]
    %v356 = vld [vmem:[#allocation5 + $0x768] sm:$0xff]
    %v357 = vld [vmem:[#allocation5 + $0x770] sm:$0xff]
    %v358 = vld [vmem:[#allocation5 + $0x778] sm:$0xff]
    %v359 = vld [vmem:[#allocation5 + $0x780] sm:$0xff]
    %v360 = vld [vmem:[#allocation5 + $0x788] sm:$0xff]
    %v361 = vld [vmem:[#allocation5 + $0x790] sm:$0xff]
    %v362 = vld [vmem:[#allocation5 + $0x798] sm:$0xff]
    %v363 = vld [vmem:[#allocation5 + $0x7a0] sm:$0xff]
    %v364 = vld [vmem:[#allocation5 + $0x7a8] sm:$0xff]
    %v365 = vld [vmem:[#allocation5 + $0x7b0] sm:$0xff]
    %v366 = vld [vmem:[#allocation5 + $0x7b8] sm:$0xff]
    %v367 = vld [vmem:[#allocation5 + $0x7c0] sm:$0xff]
    %v368 = vld [vmem:[#allocation5 + $0x7c8] sm:$0xff]
    %v369 = vld [vmem:[#allocation5 + $0x7d0] sm:$0xff]
    %v370 = vld [vmem:[#allocation5 + $0x7d8] sm:$0xff]
    %v371 = vld [vmem:[#allocation5 + $0x7e0] sm:$0xff]
    %v372 = vld [vmem:[#allocation5 + $0x7e8] sm:$0xff]
    %v373 = vld [vmem:[#allocation5 + $0x7f0] sm:$0xff]
    %v374 = vld [vmem:[#allocation5 + $0x7f8] sm:$0xff]
    %v375 = vld [vmem:[#allocation5 + $0x800] sm:$0xff]
    %v376 = vld [vmem:[#allocation5 + $0x808] sm:$0xff]
    %v377 = vld [vmem:[#allocation5 + $0x810] sm:$0xff]
    %v378 = vld [vmem:[#allocation5 + $0x818] sm:$0xff]
    %v379 = vld [vmem:[#allocation5 + $0x820] sm:$0xff]
    %v380 = vld [vmem:[#allocation5 + $0x828] sm:$0xff]
    %v381 = vld [vmem:[#allocation5 + $0x830] sm:$0xff]
    %v382 = vld [vmem:[#allocation5 + $0x838] sm:$0xff]
    %v383 = vld [vmem:[#allocation5 + $0x840] sm:$0xff]
    %v384 = vld [vmem:[#allocation5 + $0x848] sm:$0xff]
    %v385 = vld [vmem:[#allocation5 + $0x850] sm:$0xff]
    %v386 = vld [vmem:[#allocation5 + $0x858] sm:$0xff]
    %v387 = vld [vmem:[#allocation5 + $0x860] sm:$0xff]
    %v388 = vld [vmem:[#allocation5 + $0x868] sm:$0xff]
    %v389 = vld [vmem:[#allocation5 + $0x870] sm:$0xff]
    %v390 = vld [vmem:[#allocation5 + $0x878] sm:$0xff]
    %v391 = vld [vmem:[#allocation5 + $0x880] sm:$0xff]
    %v392 = vld [vmem:[#allocation5 + $0x888] sm:$0xff]
    %v393 = vld [vmem:[#allocation5 + $0x890] sm:$0xff]
    %v394 = vld [vmem:[#allocation5 + $0x898] sm:$0xff]
    %v395 = vld [vmem:[#allocation5 + $0x8a0] sm:$0xff]
    %v396 = vld [vmem:[#allocation5 + $0x8a8] sm:$0xff]
    %v397 = vld [vmem:[#allocation5 + $0x8b0] sm:$0xff]
    %v398 = vld [vmem:[#allocation5 + $0x8b8] sm:$0xff]
    %v399 = vld [vmem:[#allocation5 + $0x8c0] sm:$0xff]
    %v400 = vld [vmem:[#allocation5 + $0x8c8] sm:$0xff]
    %v401 = vld [vmem:[#allocation5 + $0x8d0] sm:$0xff]
    %v402 = vld [vmem:[#allocation5 + $0x8d8] sm:$0xff]
    %v403 = vld [vmem:[#allocation5 + $0x8e0] sm:$0xff]
    %v404 = vld [vmem:[#allocation5 + $0x8e8] sm:$0xff]
    %v405 = vld [vmem:[#allocation5 + $0x8f0] sm:$0xff]
    %v406 = vld [vmem:[#allocation5 + $0x8f8] sm:$0xff]
    %v407 = vld [vmem:[#allocation5 + $0x900] sm:$0xff]
    %v408 = vld [vmem:[#allocation5 + $0x908] sm:$0xff]
    %v409 = vld [vmem:[#allocation5 + $0x910] sm:$0xff]
    %v410 = vld [vmem:[#allocation5 + $0x918] sm:$0xff]
    %v411 = vld [vmem:[#allocation5 + $0x920] sm:$0xff]
    %v412 = vld [vmem:[#allocation5 + $0x928] sm:$0xff]
    %v413 = vld [vmem:[#allocation5 + $0x930] sm:$0xff]
    %v414 = vld [vmem:[#allocation5 + $0x938] sm:$0xff]
    %v415 = vld [vmem:[#allocation5 + $0x940] sm:$0xff]
    %v416 = vld [vmem:[#allocation5 + $0x948] sm:$0xff]
    %v417 = vld [vmem:[#allocation5 + $0x950] sm:$0xff]
    %v418 = vld [vmem:[#allocation5 + $0x958] sm:$0xff]
    %v419 = vld [vmem:[#allocation5 + $0x960] sm:$0xff]
    %v420 = vld [vmem:[#allocation5 + $0x968] sm:$0xff]
    %v421 = vld [vmem:[#allocation5 + $0x970] sm:$0xff]
    %v422 = vld [vmem:[#allocation5 + $0x978] sm:$0xff]
    %v423 = vld [vmem:[#allocation5 + $0x980] sm:$0xff]
    %v424 = vld [vmem:[#allocation5 + $0x988] sm:$0xff]
    %v425 = vld [vmem:[#allocation5 + $0x990] sm:$0xff]
    %v426 = vld [vmem:[#allocation5 + $0x998] sm:$0xff]
    %v427 = vld [vmem:[#allocation5 + $0x9a0] sm:$0xff]
    %v428 = vld [vmem:[#allocation5 + $0x9a8] sm:$0xff]
    %v429 = vld [vmem:[#allocation5 + $0x9b0] sm:$0xff]
    %v430 = vld [vmem:[#allocation5 + $0x9b8] sm:$0xff]
    %v431 = vld [vmem:[#allocation5 + $0x9c0] sm:$0xff]
    %v432 = vld [vmem:[#allocation5 + $0x9c8] sm:$0xff]
    %v433 = vld [vmem:[#allocation5 + $0x9d0] sm:$0xff]
    %v434 = vld [vmem:[#allocation5 + $0x9d8] sm:$0xff]
    %v435 = vld [vmem:[#allocation5 + $0x9e0] sm:$0xff]
    %v436 = vld [vmem:[#allocation5 + $0x9e8] sm:$0xff]
    %v437 = vld [vmem:[#allocation5 + $0x9f0] sm:$0xff]
    %v438 = vld [vmem:[#allocation5 + $0x9f8] sm:$0xff]
    %v439 = vld [vmem:[#allocation5 + $0xa00] sm:$0xff]
    %v440 = vld [vmem:[#allocation5 + $0xa08] sm:$0xff]
    %v441 = vld [vmem:[#allocation5 + $0xa10] sm:$0xff]
    %v442 = vld [vmem:[#allocation5 + $0xa18] sm:$0xff]
    %v443 = vld [vmem:[#allocation5 + $0xa20] sm:$0xff]
    %v444 = vld [vmem:[#allocation5 + $0xa28] sm:$0xff]
    %v445 = vld [vmem:[#allocation5 + $0xa30] sm:$0xff]
    %v446 = vld [vmem:[#allocation5 + $0xa38] sm:$0xff]
    %v447 = vld [vmem:[#allocation5 + $0xa40] sm:$0xff]
    %v448 = vld [vmem:[#allocation5 + $0xa48] sm:$0xff]
    %v449 = vld [vmem:[#allocation5 + $0xa50] sm:$0xff]
    %v450 = vld [vmem:[#allocation5 + $0xa58] sm:$0xff]
    %v451 = vld [vmem:[#allocation5 + $0xa60] sm:$0xff]
    %v452 = vld [vmem:[#allocation5 + $0xa68] sm:$0xff]
    %v453 = vld [vmem:[#allocation5 + $0xa70] sm:$0xff]
    %v454 = vld [vmem:[#allocation5 + $0xa78] sm:$0xff]
    %v455 = vld [vmem:[#allocation5 + $0xa80] sm:$0xff]
    %v456 = vld [vmem:[#allocation5 + $0xa88] sm:$0xff]
    %v457 = vld [vmem:[#allocation5 + $0xa90] sm:$0xff]
    %v458 = vld [vmem:[#allocation5 + $0xa98] sm:$0xff]
    %v459 = vld [vmem:[#allocation5 + $0xaa0] sm:$0xff]
    %v460 = vld [vmem:[#allocation5 + $0xaa8] sm:$0xff]
    %v461 = vld [vmem:[#allocation5 + $0xab0] sm:$0xff]
    %v462 = vld [vmem:[#allocation5 + $0xab8] sm:$0xff]
    %v463 = vld [vmem:[#allocation5 + $0xac0] sm:$0xff]
    %v464 = vld [vmem:[#allocation5 + $0xac8] sm:$0xff]
    %v465 = vld [vmem:[#allocation5 + $0xad0] sm:$0xff]
    %v466 = vld [vmem:[#allocation5 + $0xad8] sm:$0xff]
    %v467 = vld [vmem:[#allocation5 + $0xae0] sm:$0xff]
    %v468 = vld [vmem:[#allocation5 + $0xae8] sm:$0xff]
    %v469 = vld [vmem:[#allocation5 + $0xaf0] sm:$0xff]
    %v470 = vld [vmem:[#allocation5 + $0xaf8] sm:$0xff]
    %v471 = vld [vmem:[#allocation5 + $0xb00] sm:$0xff]
    %v472 = vld [vmem:[#allocation5 + $0xb08] sm:$0xff]
    %v473 = vld [vmem:[#allocation5 + $0xb10] sm:$0xff]
    %v474 = vld [vmem:[#allocation5 + $0xb18] sm:$0xff]
    %v475 = vld [vmem:[#allocation5 + $0xb20] sm:$0xff]
    %v476 = vld [vmem:[#allocation5 + $0xb28] sm:$0xff]
    %v477 = vld [vmem:[#allocation5 + $0xb30] sm:$0xff]
    %v478 = vld [vmem:[#allocation5 + $0xb38] sm:$0xff]
    %v479 = vld [vmem:[#allocation5 + $0xb40] sm:$0xff]
    %v480 = vld [vmem:[#allocation5 + $0xb48] sm:$0xff]
    %v481 = vld [vmem:[#allocation5 + $0xb50] sm:$0xff]
    %v482 = vld [vmem:[#allocation5 + $0xb58] sm:$0xff]
    %v483 = vld [vmem:[#allocation5 + $0xb60] sm:$0xff]
    %v484 = vld [vmem:[#allocation5 + $0xb68] sm:$0xff]
    %v485 = vld [vmem:[#allocation5 + $0xb70] sm:$0xff]
    %v486 = vld [vmem:[#allocation5 + $0xb78] sm:$0xff]
    %v487 = vld [vmem:[#allocation5 + $0xb80] sm:$0xff]
    %v488 = vld [vmem:[#allocation5 + $0xb88] sm:$0xff]
    %v489 = vld [vmem:[#allocation5 + $0xb90] sm:$0xff]
    %v490 = vld [vmem:[#allocation5 + $0xb98] sm:$0xff]
    %v491 = vld [vmem:[#allocation5 + $0xba0] sm:$0xff]
    %v492 = vld [vmem:[#allocation5 + $0xba8] sm:$0xff]
    %v493 = vld [vmem:[#allocation5 + $0xbb0] sm:$0xff]
    %v494 = vld [vmem:[#allocation5 + $0xbb8] sm:$0xff]
    %v495 = vld [vmem:[#allocation5 + $0xbc0] sm:$0xff]
    %v496 = vld [vmem:[#allocation5 + $0xbc8] sm:$0xff]
    %v497 = vld [vmem:[#allocation5 + $0xbd0] sm:$0xff]
    %v498 = vld [vmem:[#allocation5 + $0xbd8] sm:$0xff]
    %v499 = vld [vmem:[#allocation5 + $0xbe0] sm:$0xff]
    %v500 = vld [vmem:[#allocation5 + $0xbe8] sm:$0xff]
    %v501 = vld [vmem:[#allocation5 + $0xbf0] sm:$0xff]
    %v502 = vld [vmem:[#allocation5 + $0xbf8] sm:$0xff]
    %v503 = vld [vmem:[#allocation5 + $0xc00] sm:$0xff]
    %v504 = vld [vmem:[#allocation5 + $0xc08] sm:$0xff]
    %v505 = vld [vmem:[#allocation5 + $0xc10] sm:$0xff]
    %v506 = vld [vmem:[#allocation5 + $0xc18] sm:$0xff]
    %v507 = vld [vmem:[#allocation5 + $0xc20] sm:$0xff]
    %v508 = vld [vmem:[#allocation5 + $0xc28] sm:$0xff]
    %v509 = vld [vmem:[#allocation5 + $0xc30] sm:$0xff]
    %v510 = vld [vmem:[#allocation5 + $0xc38] sm:$0xff]
    %v511 = vld [vmem:[#allocation5 + $0xc40] sm:$0xff]
    %v512 = vld [vmem:[#allocation5 + $0xc48] sm:$0xff]
    %v513 = vld [vmem:[#allocation5 + $0xc50] sm:$0xff]
    %v514 = vld [vmem:[#allocation5 + $0xc58] sm:$0xff]
    %v515 = vld [vmem:[#allocation5 + $0xc60] sm:$0xff]
    %v516 = vld [vmem:[#allocation5 + $0xc68] sm:$0xff]
    %v517 = vld [vmem:[#allocation5 + $0xc70] sm:$0xff]
    %v518 = vld [vmem:[#allocation5 + $0xc78] sm:$0xff]
    %v519 = vld [vmem:[#allocation5 + $0xc80] sm:$0xff]
    %v520 = vld [vmem:[#allocation5 + $0xc88] sm:$0xff]
    %v521 = vld [vmem:[#allocation5 + $0xc90] sm:$0xff]
    %v522 = vld [vmem:[#allocation5 + $0xc98] sm:$0xff]
    %v523 = vld [vmem:[#allocation5 + $0xca0] sm:$0xff]
    %v524 = vld [vmem:[#allocation5 + $0xca8] sm:$0xff]
    %v525 = vld [vmem:[#allocation5 + $0xcb0] sm:$0xff]
    %v526 = vld [vmem:[#allocation5 + $0xcb8] sm:$0xff]
    %v527 = vld [vmem:[#allocation5 + $0xcc0] sm:$0xff]
    %v528 = vld [vmem:[#allocation5 + $0xcc8] sm:$0xff]
    %v529 = vld [vmem:[#allocation5 + $0xcd0] sm:$0xff]
    %v530 = vld [vmem:[#allocation5 + $0xcd8] sm:$0xff]
    %v531 = vld [vmem:[#allocation5 + $0xce0] sm:$0xff]
    %v532 = vld [vmem:[#allocation5 + $0xce8] sm:$0xff]
    %v533 = vld [vmem:[#allocation5 + $0xcf0] sm:$0xff]
    %v534 = vld [vmem:[#allocation5 + $0xcf8] sm:$0xff]
    %v535 = vld [vmem:[#allocation5 + $0xd00] sm:$0xff]
    %v536 = vld [vmem:[#allocation5 + $0xd08] sm:$0xff]
    %v537 = vld [vmem:[#allocation5 + $0xd10] sm:$0xff]
    %v538 = vld [vmem:[#allocation5 + $0xd18] sm:$0xff]
    %v539 = vld [vmem:[#allocation5 + $0xd20] sm:$0xff]
    %v540 = vld [vmem:[#allocation5 + $0xd28] sm:$0xff]
    %v541 = vld [vmem:[#allocation5 + $0xd30] sm:$0xff]
    %v542 = vld [vmem:[#allocation5 + $0xd38] sm:$0xff]
    %v543 = vld [vmem:[#allocation5 + $0xd40] sm:$0xff]
    %v544 = vld [vmem:[#allocation5 + $0xd48] sm:$0xff]
    %v545 = vld [vmem:[#allocation5 + $0xd50] sm:$0xff]
    %v546 = vld [vmem:[#allocation5 + $0xd58] sm:$0xff]
    %v547 = vld [vmem:[#allocation5 + $0xd60] sm:$0xff]
    %v548 = vld [vmem:[#allocation5 + $0xd68] sm:$0xff]
    %v549 = vld [vmem:[#allocation5 + $0xd70] sm:$0xff]
    %v550 = vld [vmem:[#allocation5 + $0xd78] sm:$0xff]
    %v551 = vld [vmem:[#allocation5 + $0xd80] sm:$0xff]
    %v552 = vld [vmem:[#allocation5 + $0xd88] sm:$0xff]
    %v553 = vld [vmem:[#allocation5 + $0xd90] sm:$0xff]
    %v554 = vld [vmem:[#allocation5 + $0xd98] sm:$0xff]
    %v555 = vld [vmem:[#allocation5 + $0xda0] sm:$0xff]
    %v556 = vld [vmem:[#allocation5 + $0xda8] sm:$0xff]
    %v557 = vld [vmem:[#allocation5 + $0xdb0] sm:$0xff]
    %v558 = vld [vmem:[#allocation5 + $0xdb8] sm:$0xff]
    %v559 = vld [vmem:[#allocation5 + $0xdc0] sm:$0xff]
    %v560 = vld [vmem:[#allocation5 + $0xdc8] sm:$0xff]
    %v561 = vld [vmem:[#allocation5 + $0xdd0] sm:$0xff]
    %v562 = vld [vmem:[#allocation5 + $0xdd8] sm:$0xff]
    %v563 = vld [vmem:[#allocation5 + $0xde0] sm:$0xff]
    %v564 = vld [vmem:[#allocation5 + $0xde8] sm:$0xff]
    %v565 = vld [vmem:[#allocation5 + $0xdf0] sm:$0xff]
    %v566 = vld [vmem:[#allocation5 + $0xdf8] sm:$0xff]
    %v567 = vld [vmem:[#allocation5 + $0xe00] sm:$0xff]
    %v568 = vld [vmem:[#allocation5 + $0xe08] sm:$0xff]
    %v569 = vld [vmem:[#allocation5 + $0xe10] sm:$0xff]
    %v570 = vld [vmem:[#allocation5 + $0xe18] sm:$0xff]
    %v571 = vld [vmem:[#allocation5 + $0xe20] sm:$0xff]
    %v572 = vld [vmem:[#allocation5 + $0xe28] sm:$0xff]
    %v573 = vld [vmem:[#allocation5 + $0xe30] sm:$0xff]
    %v574 = vld [vmem:[#allocation5 + $0xe38] sm:$0xff]
    %v575 = vld [vmem:[#allocation5 + $0xe40] sm:$0xff]
    %v576 = vld [vmem:[#allocation5 + $0xe48] sm:$0xff]
    %v577 = vld [vmem:[#allocation5 + $0xe50] sm:$0xff]
    %v578 = vld [vmem:[#allocation5 + $0xe58] sm:$0xff]
    %v579 = vld [vmem:[#allocation5 + $0xe60] sm:$0xff]
    %v580 = vld [vmem:[#allocation5 + $0xe68] sm:$0xff]
    %v581 = vld [vmem:[#allocation5 + $0xe70] sm:$0xff]
    %v582 = vld [vmem:[#allocation5 + $0xe78] sm:$0xff]
    %v583 = vld [vmem:[#allocation5 + $0xe80] sm:$0xff]
    %v584 = vld [vmem:[#allocation5 + $0xe88] sm:$0xff]
    %v585 = vld [vmem:[#allocation5 + $0xe90] sm:$0xff]
    %v586 = vld [vmem:[#allocation5 + $0xe98] sm:$0xff]
    %v587 = vld [vmem:[#allocation5 + $0xea0] sm:$0xff]
    %v588 = vld [vmem:[#allocation5 + $0xea8] sm:$0xff]
    %v589 = vld [vmem:[#allocation5 + $0xeb0] sm:$0xff]
    %v590 = vld [vmem:[#allocation5 + $0xeb8] sm:$0xff]
    %v591 = vld [vmem:[#allocation5 + $0xec0] sm:$0xff]
    %v592 = vld [vmem:[#allocation5 + $0xec8] sm:$0xff]
    %v593 = vld [vmem:[#allocation5 + $0xed0] sm:$0xff]
    %v594 = vld [vmem:[#allocation5 + $0xed8] sm:$0xff]
    %v595 = vld [vmem:[#allocation5 + $0xee0] sm:$0xff]
    %v596 = vld [vmem:[#allocation5 + $0xee8] sm:$0xff]
    %v597 = vld [vmem:[#allocation5 + $0xef0] sm:$0xff]
    %v598 = vld [vmem:[#allocation5 + $0xef8] sm:$0xff]
    %v599 = vld [vmem:[#allocation5 + $0xf00] sm:$0xff]
    %v600 = vld [vmem:[#allocation5 + $0xf08] sm:$0xff]
    %v601 = vld [vmem:[#allocation5 + $0xf10] sm:$0xff]
    %v602 = vld [vmem:[#allocation5 + $0xf18] sm:$0xff]
    %v603 = vld [vmem:[#allocation5 + $0xf20] sm:$0xff]
    %v604 = vld [vmem:[#allocation5 + $0xf28] sm:$0xff]
    %v605 = vld [vmem:[#allocation5 + $0xf30] sm:$0xff]
    %v606 = vld [vmem:[#allocation5 + $0xf38] sm:$0xff]
    %v607 = vld [vmem:[#allocation5 + $0xf40] sm:$0xff]
    %v608 = vld [vmem:[#allocation5 + $0xf48] sm:$0xff]
    %v609 = vld [vmem:[#allocation5 + $0xf50] sm:$0xff]
    %v610 = vld [vmem:[#allocation5 + $0xf58] sm:$0xff]
    %v611 = vld [vmem:[#allocation5 + $0xf60] sm:$0xff]
    %v612 = vld [vmem:[#allocation5 + $0xf68] sm:$0xff]
    %v613 = vld [vmem:[#allocation5 + $0xf70] sm:$0xff]
    %v614 = vld [vmem:[#allocation5 + $0xf78] sm:$0xff]
    %v615 = vld [vmem:[#allocation5 + $0xf80] sm:$0xff]
    %v616 = vld [vmem:[#allocation5 + $0xf88] sm:$0xff]
    %v617 = vld [vmem:[#allocation5 + $0xf90] sm:$0xff]
    %v618 = vld [vmem:[#allocation5 + $0xf98] sm:$0xff]
    %v619 = vld [vmem:[#allocation5 + $0xfa0] sm:$0xff]
    %v620 = vld [vmem:[#allocation5 + $0xfa8] sm:$0xff]
    %v621 = vld [vmem:[#allocation5 + $0xfb0] sm:$0xff]
    %v622 = vld [vmem:[#allocation5 + $0xfb8] sm:$0xff]
    %v623 = vld [vmem:[#allocation5 + $0xfc0] sm:$0xff]
    %v624 = vld [vmem:[#allocation5 + $0xfc8] sm:$0xff]
    %v625 = vld [vmem:[#allocation5 + $0xfd0] sm:$0xff]
    %v626 = vld [vmem:[#allocation5 + $0xfd8] sm:$0xff]
    %v627 = vld [vmem:[#allocation5 + $0xfe0] sm:$0xff]
    %v628 = vld [vmem:[#allocation5 + $0xfe8] sm:$0xff]
    %v629 = vld [vmem:[#allocation5 + $0xff0] sm:$0xff]
    %v630 = vld [vmem:[#allocation5 + $0xff8] sm:$0xff]
    %v631 = vld [vmem:[#allocation5 + $0x1000] sm:$0xff]
    %v632 = vld [vmem:[#allocation5 + $0x1008] sm:$0xff]
    %v633 = vld [vmem:[#allocation5 + $0x1010] sm:$0xff]
    %v634 = vld [vmem:[#allocation5 + $0x1018] sm:$0xff]
    %v635 = vld [vmem:[#allocation5 + $0x1020] sm:$0xff]
    %v636 = vld [vmem:[#allocation5 + $0x1028] sm:$0xff]
    %v637 = vld [vmem:[#allocation5 + $0x1030] sm:$0xff]
    %v638 = vld [vmem:[#allocation5 + $0x1038] sm:$0xff]
    %v639 = vld [vmem:[#allocation5 + $0x1040] sm:$0xff]
    %v640 = vld [vmem:[#allocation5 + $0x1048] sm:$0xff]
    %v641 = vld [vmem:[#allocation5 + $0x1050] sm:$0xff]
    %v642 = vld [vmem:[#allocation5 + $0x1058] sm:$0xff]
    %v643 = vld [vmem:[#allocation5 + $0x1060] sm:$0xff]
    %v644 = vld [vmem:[#allocation5 + $0x1068] sm:$0xff]
    %v645 = vld [vmem:[#allocation5 + $0x1070] sm:$0xff]
    %v646 = vld [vmem:[#allocation5 + $0x1078] sm:$0xff]
    %v647 = vld [vmem:[#allocation5 + $0x1080] sm:$0xff]
    %v648 = vld [vmem:[#allocation5 + $0x1088] sm:$0xff]
    %v649 = vld [vmem:[#allocation5 + $0x1090] sm:$0xff]
    %v650 = vld [vmem:[#allocation5 + $0x1098] sm:$0xff]
    %v651 = vld [vmem:[#allocation5 + $0x10a0] sm:$0xff]
    %v652 = vld [vmem:[#allocation5 + $0x10a8] sm:$0xff]
    %v653 = vld [vmem:[#allocation5 + $0x10b0] sm:$0xff]
    %v654 = vld [vmem:[#allocation5 + $0x10b8] sm:$0xff]
    %v655 = vld [vmem:[#allocation5 + $0x10c0] sm:$0xff]
    %v656 = vld [vmem:[#allocation5 + $0x10c8] sm:$0xff]
    %v657 = vld [vmem:[#allocation5 + $0x10d0] sm:$0xff]
    %v658 = vld [vmem:[#allocation5 + $0x10d8] sm:$0xff]
    %v659 = vld [vmem:[#allocation5 + $0x10e0] sm:$0xff]
    %v660 = vld [vmem:[#allocation5 + $0x10e8] sm:$0xff]
    %v661 = vld [vmem:[#allocation5 + $0x10f0] sm:$0xff]
    %v662 = vld [vmem:[#allocation5 + $0x10f8] sm:$0xff]
    %v663 = vld [vmem:[#allocation5 + $0x1100] sm:$0xff]
    %v664 = vld [vmem:[#allocation5 + $0x1108] sm:$0xff]
    %v665 = vld [vmem:[#allocation5 + $0x1110] sm:$0xff]
    %v666 = vld [vmem:[#allocation5 + $0x1118] sm:$0xff]
    %v667 = vld [vmem:[#allocation5 + $0x1120] sm:$0xff]
    %v668 = vld [vmem:[#allocation5 + $0x1128] sm:$0xff]
    %v669 = vld [vmem:[#allocation5 + $0x1130] sm:$0xff]
    %v670 = vld [vmem:[#allocation5 + $0x1138] sm:$0xff]
    %v671 = vld [vmem:[#allocation5 + $0x1140] sm:$0xff]
    %v672 = vld [vmem:[#allocation5 + $0x1148] sm:$0xff]
    %v673 = vld [vmem:[#allocation5 + $0x1150] sm:$0xff]
    %v674 = vld [vmem:[#allocation5 + $0x1158] sm:$0xff]
    %v675 = vld [vmem:[#allocation5 + $0x1160] sm:$0xff]
    %v676 = vld [vmem:[#allocation5 + $0x1168] sm:$0xff]
    %v677 = vld [vmem:[#allocation5 + $0x1170] sm:$0xff]
    %v678 = vld [vmem:[#allocation5 + $0x1178] sm:$0xff]
    %v679 = vld [vmem:[#allocation5 + $0x1180] sm:$0xff]
    %v680 = vld [vmem:[#allocation5 + $0x1188] sm:$0xff]
    %v681 = vld [vmem:[#allocation5 + $0x1190] sm:$0xff]
    %v682 = vld [vmem:[#allocation5 + $0x1198] sm:$0xff]
    %v683 = vld [vmem:[#allocation5 + $0x11a0] sm:$0xff]
    %v684 = vld [vmem:[#allocation5 + $0x11a8] sm:$0xff]
    %v685 = vld [vmem:[#allocation5 + $0x11b0] sm:$0xff]
    %v686 = vld [vmem:[#allocation5 + $0x11b8] sm:$0xff]
    %v687 = vld [vmem:[#allocation5 + $0x11c0] sm:$0xff]
    %v688 = vld [vmem:[#allocation5 + $0x11c8] sm:$0xff]
    %v689 = vld [vmem:[#allocation5 + $0x11d0] sm:$0xff]
    %v690 = vld [vmem:[#allocation5 + $0x11d8] sm:$0xff]
    %v691 = vld [vmem:[#allocation5 + $0x11e0] sm:$0xff]
    %v692 = vld [vmem:[#allocation5 + $0x11e8] sm:$0xff]
    %v693 = vld [vmem:[#allocation5 + $0x11f0] sm:$0xff]
    %v694 = vld [vmem:[#allocation5 + $0x11f8] sm:$0xff]
    %v695 = vld [vmem:[#allocation5 + $0x1200] sm:$0xff]
    %v696 = vld [vmem:[#allocation5 + $0x1208] sm:$0xff]
    %v697 = vld [vmem:[#allocation5 + $0x1210] sm:$0xff]
    %v698 = vld [vmem:[#allocation5 + $0x1218] sm:$0xff]
    %v699 = vld [vmem:[#allocation5 + $0x1220] sm:$0xff]
    %v700 = vld [vmem:[#allocation5 + $0x1228] sm:$0xff]
    %v701 = vld [vmem:[#allocation5 + $0x1230] sm:$0xff]
    %v702 = vld [vmem:[#allocation5 + $0x1238] sm:$0xff]
    %v703 = vld [vmem:[#allocation5 + $0x1240] sm:$0xff]
    %v704 = vld [vmem:[#allocation5 + $0x1248] sm:$0xff]
    %v705 = vld [vmem:[#allocation5 + $0x1250] sm:$0xff]
    %v706 = vld [vmem:[#allocation5 + $0x1258] sm:$0xff]
    %v707 = vld [vmem:[#allocation5 + $0x1260] sm:$0xff]
    %v708 = vld [vmem:[#allocation5 + $0x1268] sm:$0xff]
    %v709 = vld [vmem:[#allocation5 + $0x1270] sm:$0xff]
    %v710 = vld [vmem:[#allocation5 + $0x1278] sm:$0xff]
    %v711 = vld [vmem:[#allocation5 + $0x1280] sm:$0xff]
    %v712 = vld [vmem:[#allocation5 + $0x1288] sm:$0xff]
    %v713 = vld [vmem:[#allocation5 + $0x1290] sm:$0xff]
    %v714 = vld [vmem:[#allocation5 + $0x1298] sm:$0xff]
    %v715 = vld [vmem:[#allocation5 + $0x12a0] sm:$0xff]
    %v716 = vld [vmem:[#allocation5 + $0x12a8] sm:$0xff]
    %v717 = vld [vmem:[#allocation5 + $0x12b0] sm:$0xff]
    %v718 = vld [vmem:[#allocation5 + $0x12b8] sm:$0xff]
    %v719 = vld [vmem:[#allocation5 + $0x12c0] sm:$0xff]
    %v720 = vld [vmem:[#allocation5 + $0x12c8] sm:$0xff]
    %v721 = vld [vmem:[#allocation5 + $0x12d0] sm:$0xff]
    %v722 = vld [vmem:[#allocation5 + $0x12d8] sm:$0xff]
    %v723 = vld [vmem:[#allocation5 + $0x12e0] sm:$0xff]
    %v724 = vld [vmem:[#allocation5 + $0x12e8] sm:$0xff]
    %v725 = vld [vmem:[#allocation5 + $0x12f0] sm:$0xff]
    %v726 = vld [vmem:[#allocation5 + $0x12f8] sm:$0xff]
    %v727 = vld [vmem:[#allocation5 + $0x1300] sm:$0xff]
    %v728 = vld [vmem:[#allocation5 + $0x1308] sm:$0xff]
    %v729 = vld [vmem:[#allocation5 + $0x1310] sm:$0xff]
    %v730 = vld [vmem:[#allocation5 + $0x1318] sm:$0xff]
    %v731 = vld [vmem:[#allocation5 + $0x1320] sm:$0xff]
    %v732 = vld [vmem:[#allocation5 + $0x1328] sm:$0xff]
    %v733 = vld [vmem:[#allocation5 + $0x1330] sm:$0xff]
    %v734 = vld [vmem:[#allocation5 + $0x1338] sm:$0xff]
    %v735 = vld [vmem:[#allocation5 + $0x1340] sm:$0xff]
    %v736 = vld [vmem:[#allocation5 + $0x1348] sm:$0xff]
    %v737 = vld [vmem:[#allocation5 + $0x1350] sm:$0xff]
    %v738 = vld [vmem:[#allocation5 + $0x1358] sm:$0xff]
    %v739 = vld [vmem:[#allocation5 + $0x1360] sm:$0xff]
    %v740 = vld [vmem:[#allocation5 + $0x1368] sm:$0xff]
    %v741 = vld [vmem:[#allocation5 + $0x1370] sm:$0xff]
    %v742 = vld [vmem:[#allocation5 + $0x1378] sm:$0xff]
    %v743 = vld [vmem:[#allocation5 + $0x1380] sm:$0xff]
    %v744 = vld [vmem:[#allocation5 + $0x1388] sm:$0xff]
    %v745 = vld [vmem:[#allocation5 + $0x1390] sm:$0xff]
    %v746 = vld [vmem:[#allocation5 + $0x1398] sm:$0xff]
    %v747 = vld [vmem:[#allocation5 + $0x13a0] sm:$0xff]
    %v748 = vld [vmem:[#allocation5 + $0x13a8] sm:$0xff]
    %v749 = vld [vmem:[#allocation5 + $0x13b0] sm:$0xff]
    %v750 = vld [vmem:[#allocation5 + $0x13b8] sm:$0xff]
    %v751 = vld [vmem:[#allocation5 + $0x13c0] sm:$0xff]
    %v752 = vld [vmem:[#allocation5 + $0x13c8] sm:$0xff]
    %v753 = vld [vmem:[#allocation5 + $0x13d0] sm:$0xff]
    %v754 = vld [vmem:[#allocation5 + $0x13d8] sm:$0xff]
    %v755 = vld [vmem:[#allocation5 + $0x13e0] sm:$0xff]
    %v756 = vld [vmem:[#allocation5 + $0x13e8] sm:$0xff]
    %v757 = vld [vmem:[#allocation5 + $0x13f0] sm:$0xff]
    %v758 = vld [vmem:[#allocation5 + $0x13f8] sm:$0xff]
    %v759 = vld [vmem:[#allocation5 + $0x1400] sm:$0xff]
    %v760 = vld [vmem:[#allocation5 + $0x1408] sm:$0xff]
    %v761 = vld [vmem:[#allocation5 + $0x1410] sm:$0xff]
    %v762 = vld [vmem:[#allocation5 + $0x1418] sm:$0xff]
    %v763 = vld [vmem:[#allocation5 + $0x1420] sm:$0xff]
    %v764 = vld [vmem:[#allocation5 + $0x1428] sm:$0xff]
    %v765 = vld [vmem:[#allocation5 + $0x1430] sm:$0xff]
    %v766 = vld [vmem:[#allocation5 + $0x1438] sm:$0xff]
    %v767 = vld [vmem:[#allocation5 + $0x1440] sm:$0xff]
    %v768 = vld [vmem:[#allocation5 + $0x1448] sm:$0xff]
    %v769 = vld [vmem:[#allocation5 + $0x1450] sm:$0xff]
    %v770 = vld [vmem:[#allocation5 + $0x1458] sm:$0xff]
    %v771 = vld [vmem:[#allocation5 + $0x1460] sm:$0xff]
    %v772 = vld [vmem:[#allocation5 + $0x1468] sm:$0xff]
    %v773 = vld [vmem:[#allocation5 + $0x1470] sm:$0xff]
    %v774 = vld [vmem:[#allocation5 + $0x1478] sm:$0xff]
    %v775 = vld [vmem:[#allocation5 + $0x1480] sm:$0xff]
    %v776 = vld [vmem:[#allocation5 + $0x1488] sm:$0xff]
    %v777 = vld [vmem:[#allocation5 + $0x1490] sm:$0xff]
    %v778 = vld [vmem:[#allocation5 + $0x1498] sm:$0xff]
    %v779 = vld [vmem:[#allocation5 + $0x14a0] sm:$0xff]
    %v780 = vld [vmem:[#allocation5 + $0x14a8] sm:$0xff]
    %v781 = vld [vmem:[#allocation5 + $0x14b0] sm:$0xff]
    %v782 = vld [vmem:[#allocation5 + $0x14b8] sm:$0xff]
    %v783 = vld [vmem:[#allocation5 + $0x14c0] sm:$0xff]
    %v784 = vld [vmem:[#allocation5 + $0x14c8] sm:$0xff]
    %v785 = vld [vmem:[#allocation5 + $0x14d0] sm:$0xff]
    %v786 = vld [vmem:[#allocation5 + $0x14d8] sm:$0xff]
    %v787 = vld [vmem:[#allocation5 + $0x14e0] sm:$0xff]
    %v788 = vld [vmem:[#allocation5 + $0x14e8] sm:$0xff]
    %v789 = vld [vmem:[#allocation5 + $0x14f0] sm:$0xff]
    %v790 = vld [vmem:[#allocation5 + $0x14f8] sm:$0xff]
    %v791 = vld [vmem:[#allocation5 + $0x1500] sm:$0xff]
    %v792 = vld [vmem:[#allocation5 + $0x1508] sm:$0xff]
    %v793 = vld [vmem:[#allocation5 + $0x1510] sm:$0xff]
    %v794 = vld [vmem:[#allocation5 + $0x1518] sm:$0xff]
    %v795 = vld [vmem:[#allocation5 + $0x1520] sm:$0xff]
    %v796 = vld [vmem:[#allocation5 + $0x1528] sm:$0xff]
    %v797 = vld [vmem:[#allocation5 + $0x1530] sm:$0xff]
    %v798 = vld [vmem:[#allocation5 + $0x1538] sm:$0xff]
    %v799 = vld [vmem:[#allocation5 + $0x1540] sm:$0xff]
    %v800 = vld [vmem:[#allocation5 + $0x1548] sm:$0xff]
    %v801 = vld [vmem:[#allocation5 + $0x1550] sm:$0xff]
    %v802 = vld [vmem:[#allocation5 + $0x1558] sm:$0xff]
    %v803 = vld [vmem:[#allocation5 + $0x1560] sm:$0xff]
    %v804 = vld [vmem:[#allocation5 + $0x1568] sm:$0xff]
    %v805 = vld [vmem:[#allocation5 + $0x1570] sm:$0xff]
    %v806 = vld [vmem:[#allocation5 + $0x1578] sm:$0xff]
    %v807 = vld [vmem:[#allocation5 + $0x1580] sm:$0xff]
    %v808 = vld [vmem:[#allocation5 + $0x1588] sm:$0xff]
    %v809 = vld [vmem:[#allocation5 + $0x1590] sm:$0xff]
    %v810 = vld [vmem:[#allocation5 + $0x1598] sm:$0xff]
    %v811 = vld [vmem:[#allocation5 + $0x15a0] sm:$0xff]
    %v812 = vld [vmem:[#allocation5 + $0x15a8] sm:$0xff]
    %v813 = vld [vmem:[#allocation5 + $0x15b0] sm:$0xff]
    %v814 = vld [vmem:[#allocation5 + $0x15b8] sm:$0xff]
    %v815 = vld [vmem:[#allocation5 + $0x15c0] sm:$0xff]
    %v816 = vld [vmem:[#allocation5 + $0x15c8] sm:$0xff]
    %v817 = vld [vmem:[#allocation5 + $0x15d0] sm:$0xff]
    %v818 = vld [vmem:[#allocation5 + $0x15d8] sm:$0xff]
    %v819 = vld [vmem:[#allocation5 + $0x15e0] sm:$0xff]
    %v820 = vld [vmem:[#allocation5 + $0x15e8] sm:$0xff]
    %v821 = vld [vmem:[#allocation5 + $0x15f0] sm:$0xff]
    %v822 = vld [vmem:[#allocation5 + $0x15f8] sm:$0xff]
    %v823 = vld [vmem:[#allocation5 + $0x1600] sm:$0xff]
    %v824 = vld [vmem:[#allocation5 + $0x1608] sm:$0xff]
    %v825 = vld [vmem:[#allocation5 + $0x1610] sm:$0xff]
    %v826 = vld [vmem:[#allocation5 + $0x1618] sm:$0xff]
    %v827 = vld [vmem:[#allocation5 + $0x1620] sm:$0xff]
    %v828 = vld [vmem:[#allocation5 + $0x1628] sm:$0xff]
    %v829 = vld [vmem:[#allocation5 + $0x1630] sm:$0xff]
    %v830 = vld [vmem:[#allocation5 + $0x1638] sm:$0xff]
    %v831 = vld [vmem:[#allocation5 + $0x1640] sm:$0xff]
    %v832 = vld [vmem:[#allocation5 + $0x1648] sm:$0xff]
    %v833 = vld [vmem:[#allocation5 + $0x1650] sm:$0xff]
    %v834 = vld [vmem:[#allocation5 + $0x1658] sm:$0xff]
    %v835 = vld [vmem:[#allocation5 + $0x1660] sm:$0xff]
    %v836 = vld [vmem:[#allocation5 + $0x1668] sm:$0xff]
    %v837 = vld [vmem:[#allocation5 + $0x1670] sm:$0xff]
    %v838 = vld [vmem:[#allocation5 + $0x1678] sm:$0xff]
    %v839 = vld [vmem:[#allocation5 + $0x1680] sm:$0xff]
    %v840 = vld [vmem:[#allocation5 + $0x1688] sm:$0xff]
    %v841 = vld [vmem:[#allocation5 + $0x1690] sm:$0xff]
    %v842 = vld [vmem:[#allocation5 + $0x1698] sm:$0xff]
    %v843 = vld [vmem:[#allocation5 + $0x16a0] sm:$0xff]
    %v844 = vld [vmem:[#allocation5 + $0x16a8] sm:$0xff]
    %v845 = vld [vmem:[#allocation5 + $0x16b0] sm:$0xff]
    %v846 = vld [vmem:[#allocation5 + $0x16b8] sm:$0xff]
    %v847 = vld [vmem:[#allocation5 + $0x16c0] sm:$0xff]
    %v848 = vld [vmem:[#allocation5 + $0x16c8] sm:$0xff]
    %v849 = vld [vmem:[#allocation5 + $0x16d0] sm:$0xff]
    %v850 = vld [vmem:[#allocation5 + $0x16d8] sm:$0xff]
    %v851 = vld [vmem:[#allocation5 + $0x16e0] sm:$0xff]
    %v852 = vld [vmem:[#allocation5 + $0x16e8] sm:$0xff]
    %v853 = vld [vmem:[#allocation5 + $0x16f0] sm:$0xff]
    %v854 = vld [vmem:[#allocation5 + $0x16f8] sm:$0xff]
    %v855 = vld [vmem:[#allocation5 + $0x1700] sm:$0xff]
    %v856 = vld [vmem:[#allocation5 + $0x1708] sm:$0xff]
    %v857 = vld [vmem:[#allocation5 + $0x1710] sm:$0xff]
    %v858 = vld [vmem:[#allocation5 + $0x1718] sm:$0xff]
    %v859 = vld [vmem:[#allocation5 + $0x1720] sm:$0xff]
    %v860 = vld [vmem:[#allocation5 + $0x1728] sm:$0xff]
    %v861 = vld [vmem:[#allocation5 + $0x1730] sm:$0xff]
    %v862 = vld [vmem:[#allocation5 + $0x1738] sm:$0xff]
    %v863 = vld [vmem:[#allocation5 + $0x1740] sm:$0xff]
    %v864 = vld [vmem:[#allocation5 + $0x1748] sm:$0xff]
    %v865 = vld [vmem:[#allocation5 + $0x1750] sm:$0xff]
    %v866 = vld [vmem:[#allocation5 + $0x1758] sm:$0xff]
    %v867 = vld [vmem:[#allocation5 + $0x1760] sm:$0xff]
    %v868 = vld [vmem:[#allocation5 + $0x1768] sm:$0xff]
    %v869 = vld [vmem:[#allocation5 + $0x1770] sm:$0xff]
    %v870 = vld [vmem:[#allocation5 + $0x1778] sm:$0xff]
    %v871 = vld [vmem:[#allocation5 + $0x1780] sm:$0xff]
    %v872 = vld [vmem:[#allocation5 + $0x1788] sm:$0xff]
    %v873 = vld [vmem:[#allocation5 + $0x1790] sm:$0xff]
    %v874 = vld [vmem:[#allocation5 + $0x1798] sm:$0xff]
    %v875 = vld [vmem:[#allocation5 + $0x17a0] sm:$0xff]
    %v876 = vld [vmem:[#allocation5 + $0x17a8] sm:$0xff]
    %v877 = vld [vmem:[#allocation5 + $0x17b0] sm:$0xff]
    %v878 = vld [vmem:[#allocation5 + $0x17b8] sm:$0xff]
    %v879 = vld [vmem:[#allocation5 + $0x17c0] sm:$0xff]
    %v880 = vld [vmem:[#allocation5 + $0x17c8] sm:$0xff]
    %v881 = vld [vmem:[#allocation5 + $0x17d0] sm:$0xff]
    %v882 = vld [vmem:[#allocation5 + $0x17d8] sm:$0xff]
    %v883 = vld [vmem:[#allocation5 + $0x17e0] sm:$0xff]
    %v884 = vld [vmem:[#allocation5 + $0x17e8] sm:$0xff]
    %v885 = vld [vmem:[#allocation5 + $0x17f0] sm:$0xff]
    %v886 = vld [vmem:[#allocation5 + $0x17f8] sm:$0xff]
    %v887 = vld [vmem:[#allocation7] sm:$0xf]
    %v889 = vperm.slane %v887, 0
    %v890 = vperm.slane %v887, 1
    %v891 = vperm.slane %v887, 2
    %v892 = vperm.slane %v887, 3
    %v921 = vunpack.c.l.b16 %v95
    %v922 = vunpack.c.h.b16 %v95
    %v923 = vunpack.c.l.b16 %v96
    %v924 = vunpack.c.h.b16 %v96
    %v925 = vunpack.c.l.b16 %v97
    %v926 = vunpack.c.h.b16 %v97
    %v927 = vunpack.c.l.b16 %v98
    %v928 = vunpack.c.h.b16 %v98
    %v929 = vunpack.c.l.b16 %v99
    %v930 = vunpack.c.h.b16 %v99
    %v931 = vunpack.c.l.b16 %v100
    %v932 = vunpack.c.h.b16 %v100
    %v933 = vunpack.c.l.b16 %v101
    %v934 = vunpack.c.h.b16 %v101
    %v935 = vunpack.c.l.b16 %v102
    %v936 = vunpack.c.h.b16 %v102
    %v937 = vunpack.c.l.b16 %v103
    %v938 = vunpack.c.h.b16 %v103
    %v939 = vunpack.c.l.b16 %v104
    %v940 = vunpack.c.h.b16 %v104
    %v941 = vunpack.c.l.b16 %v105
    %v942 = vunpack.c.h.b16 %v105
    %v943 = vunpack.c.l.b16 %v106
    %v944 = vunpack.c.h.b16 %v106
    %v945 = vunpack.c.l.b16 %v107
    %v946 = vunpack.c.h.b16 %v107
    %v947 = vunpack.c.l.b16 %v108
    %v948 = vunpack.c.h.b16 %v108
    %v949 = vunpack.c.l.b16 %v109
    %v950 = vunpack.c.h.b16 %v109
    %v951 = vunpack.c.l.b16 %v110
    %v952 = vunpack.c.h.b16 %v110
    %v953 = vunpack.c.l.b16 %v111
    %v954 = vunpack.c.h.b16 %v111
    %v955 = vunpack.c.l.b16 %v112
    %v956 = vunpack.c.h.b16 %v112
    %v957 = vunpack.c.l.b16 %v113
    %v958 = vunpack.c.h.b16 %v113
    %v959 = vunpack.c.l.b16 %v114
    %v960 = vunpack.c.h.b16 %v114
    %v961 = vunpack.c.l.b16 %v115
    %v962 = vunpack.c.h.b16 %v115
    %v963 = vunpack.c.l.b16 %v116
    %v964 = vunpack.c.h.b16 %v116
    %v965 = vunpack.c.l.b16 %v117
    %v966 = vunpack.c.h.b16 %v117
    %v967 = vunpack.c.l.b16 %v118
    %v968 = vunpack.c.h.b16 %v118
    %v969 = vpack.c.b16 %v945, %v921
    %v970 = vpack.c.b16 %v946, %v922
    %v971 = vpack.c.b16 %v947, %v923
    %v972 = vpack.c.b16 %v948, %v924
    %v973 = vpack.c.b16 %v949, %v925
    %v974 = vpack.c.b16 %v950, %v926
    %v975 = vpack.c.b16 %v951, %v927
    %v976 = vpack.c.b16 %v952, %v928
    %v977 = vpack.c.b16 %v953, %v929
    %v978 = vpack.c.b16 %v954, %v930
    %v979 = vpack.c.b16 %v955, %v931
    %v980 = vpack.c.b16 %v956, %v932
    %v981 = vpack.c.b16 %v957, %v933
    %v982 = vpack.c.b16 %v958, %v934
    %v983 = vpack.c.b16 %v959, %v935
    %v984 = vpack.c.b16 %v960, %v936
    %v985 = vpack.c.b16 %v961, %v937
    %v986 = vpack.c.b16 %v962, %v938
    %v987 = vpack.c.b16 %v963, %v939
    %v988 = vpack.c.b16 %v964, %v940
    %v989 = vpack.c.b16 %v965, %v941
    %v990 = vpack.c.b16 %v966, %v942
    %v991 = vpack.c.b16 %v967, %v943
    %v992 = vpack.c.b16 %v968, %v944
    %v1785 = vunpack.c.l.b16 %v119
    %v1786 = vunpack.c.h.b16 %v119
    %v1787 = vunpack.c.l.b16 %v120
    %v1788 = vunpack.c.h.b16 %v120
    %v1789 = vunpack.c.l.b16 %v121
    %v1790 = vunpack.c.h.b16 %v121
    %v1791 = vunpack.c.l.b16 %v122
    %v1792 = vunpack.c.h.b16 %v122
    %v1793 = vunpack.c.l.b16 %v123
    %v1794 = vunpack.c.h.b16 %v123
    %v1795 = vunpack.c.l.b16 %v124
    %v1796 = vunpack.c.h.b16 %v124
    %v1797 = vunpack.c.l.b16 %v125
    %v1798 = vunpack.c.h.b16 %v125
    %v1799 = vunpack.c.l.b16 %v126
    %v1800 = vunpack.c.h.b16 %v126
    %v1801 = vunpack.c.l.b16 %v127
    %v1802 = vunpack.c.h.b16 %v127
    %v1803 = vunpack.c.l.b16 %v128
    %v1804 = vunpack.c.h.b16 %v128
    %v1805 = vunpack.c.l.b16 %v129
    %v1806 = vunpack.c.h.b16 %v129
    %v1807 = vunpack.c.l.b16 %v130
    %v1808 = vunpack.c.h.b16 %v130
    %v1809 = vunpack.c.l.b16 %v131
    %v1810 = vunpack.c.h.b16 %v131
    %v1811 = vunpack.c.l.b16 %v132
    %v1812 = vunpack.c.h.b16 %v132
    %v1813 = vunpack.c.l.b16 %v133
    %v1814 = vunpack.c.h.b16 %v133
    %v1815 = vunpack.c.l.b16 %v134
    %v1816 = vunpack.c.h.b16 %v134
    %v1817 = vunpack.c.l.b16 %v135
    %v1818 = vunpack.c.h.b16 %v135
    %v1819 = vunpack.c.l.b16 %v136
    %v1820 = vunpack.c.h.b16 %v136
    %v1821 = vunpack.c.l.b16 %v137
    %v1822 = vunpack.c.h.b16 %v137
    %v1823 = vunpack.c.l.b16 %v138
    %v1824 = vunpack.c.h.b16 %v138
    %v1825 = vunpack.c.l.b16 %v139
    %v1826 = vunpack.c.h.b16 %v139
    %v1827 = vunpack.c.l.b16 %v140
    %v1828 = vunpack.c.h.b16 %v140
    %v1829 = vunpack.c.l.b16 %v141
    %v1830 = vunpack.c.h.b16 %v141
    %v1831 = vunpack.c.l.b16 %v142
    %v1832 = vunpack.c.h.b16 %v142
    %v1833 = vunpack.c.l.b16 %v143
    %v1834 = vunpack.c.h.b16 %v143
    %v1835 = vunpack.c.l.b16 %v144
    %v1836 = vunpack.c.h.b16 %v144
    %v1837 = vunpack.c.l.b16 %v145
    %v1838 = vunpack.c.h.b16 %v145
    %v1839 = vunpack.c.l.b16 %v146
    %v1840 = vunpack.c.h.b16 %v146
    %v1841 = vunpack.c.l.b16 %v147
    %v1842 = vunpack.c.h.b16 %v147
    %v1843 = vunpack.c.l.b16 %v148
    %v1844 = vunpack.c.h.b16 %v148
    %v1845 = vunpack.c.l.b16 %v149
    %v1846 = vunpack.c.h.b16 %v149
    %v1847 = vunpack.c.l.b16 %v150
    %v1848 = vunpack.c.h.b16 %v150
    %v1849 = vunpack.c.l.b16 %v151
    %v1850 = vunpack.c.h.b16 %v151
    %v1851 = vunpack.c.l.b16 %v152
    %v1852 = vunpack.c.h.b16 %v152
    %v1853 = vunpack.c.l.b16 %v153
    %v1854 = vunpack.c.h.b16 %v153
    %v1855 = vunpack.c.l.b16 %v154
    %v1856 = vunpack.c.h.b16 %v154
    %v1857 = vunpack.c.l.b16 %v155
    %v1858 = vunpack.c.h.b16 %v155
    %v1859 = vunpack.c.l.b16 %v156
    %v1860 = vunpack.c.h.b16 %v156
    %v1861 = vunpack.c.l.b16 %v157
    %v1862 = vunpack.c.h.b16 %v157
    %v1863 = vunpack.c.l.b16 %v158
    %v1864 = vunpack.c.h.b16 %v158
    %v1865 = vunpack.c.l.b16 %v159
    %v1866 = vunpack.c.h.b16 %v159
    %v1867 = vunpack.c.l.b16 %v160
    %v1868 = vunpack.c.h.b16 %v160
    %v1869 = vunpack.c.l.b16 %v161
    %v1870 = vunpack.c.h.b16 %v161
    %v1871 = vunpack.c.l.b16 %v162
    %v1872 = vunpack.c.h.b16 %v162
    %v1873 = vunpack.c.l.b16 %v163
    %v1874 = vunpack.c.h.b16 %v163
    %v1875 = vunpack.c.l.b16 %v164
    %v1876 = vunpack.c.h.b16 %v164
    %v1877 = vunpack.c.l.b16 %v165
    %v1878 = vunpack.c.h.b16 %v165
    %v1879 = vunpack.c.l.b16 %v166
    %v1880 = vunpack.c.h.b16 %v166
    %v1881 = vunpack.c.l.b16 %v167
    %v1882 = vunpack.c.h.b16 %v167
    %v1883 = vunpack.c.l.b16 %v168
    %v1884 = vunpack.c.h.b16 %v168
    %v1885 = vunpack.c.l.b16 %v169
    %v1886 = vunpack.c.h.b16 %v169
    %v1887 = vunpack.c.l.b16 %v170
    %v1888 = vunpack.c.h.b16 %v170
    %v1889 = vunpack.c.l.b16 %v171
    %v1890 = vunpack.c.h.b16 %v171
    %v1891 = vunpack.c.l.b16 %v172
    %v1892 = vunpack.c.h.b16 %v172
    %v1893 = vunpack.c.l.b16 %v173
    %v1894 = vunpack.c.h.b16 %v173
    %v1895 = vunpack.c.l.b16 %v174
    %v1896 = vunpack.c.h.b16 %v174
    %v1897 = vunpack.c.l.b16 %v175
    %v1898 = vunpack.c.h.b16 %v175
    %v1899 = vunpack.c.l.b16 %v176
    %v1900 = vunpack.c.h.b16 %v176
    %v1901 = vunpack.c.l.b16 %v177
    %v1902 = vunpack.c.h.b16 %v177
    %v1903 = vunpack.c.l.b16 %v178
    %v1904 = vunpack.c.h.b16 %v178
    %v1905 = vunpack.c.l.b16 %v179
    %v1906 = vunpack.c.h.b16 %v179
    %v1907 = vunpack.c.l.b16 %v180
    %v1908 = vunpack.c.h.b16 %v180
    %v1909 = vunpack.c.l.b16 %v181
    %v1910 = vunpack.c.h.b16 %v181
    %v1911 = vunpack.c.l.b16 %v182
    %v1912 = vunpack.c.h.b16 %v182
    %v1913 = vunpack.c.l.b16 %v183
    %v1914 = vunpack.c.h.b16 %v183
    %v1915 = vunpack.c.l.b16 %v184
    %v1916 = vunpack.c.h.b16 %v184
    %v1917 = vunpack.c.l.b16 %v185
    %v1918 = vunpack.c.h.b16 %v185
    %v1919 = vunpack.c.l.b16 %v186
    %v1920 = vunpack.c.h.b16 %v186
    %v1921 = vunpack.c.l.b16 %v187
    %v1922 = vunpack.c.h.b16 %v187
    %v1923 = vunpack.c.l.b16 %v188
    %v1924 = vunpack.c.h.b16 %v188
    %v1925 = vunpack.c.l.b16 %v189
    %v1926 = vunpack.c.h.b16 %v189
    %v1927 = vunpack.c.l.b16 %v190
    %v1928 = vunpack.c.h.b16 %v190
    %v1929 = vunpack.c.l.b16 %v191
    %v1930 = vunpack.c.h.b16 %v191
    %v1931 = vunpack.c.l.b16 %v192
    %v1932 = vunpack.c.h.b16 %v192
    %v1933 = vunpack.c.l.b16 %v193
    %v1934 = vunpack.c.h.b16 %v193
    %v1935 = vunpack.c.l.b16 %v194
    %v1936 = vunpack.c.h.b16 %v194
    %v1937 = vunpack.c.l.b16 %v195
    %v1938 = vunpack.c.h.b16 %v195
    %v1939 = vunpack.c.l.b16 %v196
    %v1940 = vunpack.c.h.b16 %v196
    %v1941 = vunpack.c.l.b16 %v197
    %v1942 = vunpack.c.h.b16 %v197
    %v1943 = vunpack.c.l.b16 %v198
    %v1944 = vunpack.c.h.b16 %v198
    %v1945 = vunpack.c.l.b16 %v199
    %v1946 = vunpack.c.h.b16 %v199
    %v1947 = vunpack.c.l.b16 %v200
    %v1948 = vunpack.c.h.b16 %v200
    %v1949 = vunpack.c.l.b16 %v201
    %v1950 = vunpack.c.h.b16 %v201
    %v1951 = vunpack.c.l.b16 %v202
    %v1952 = vunpack.c.h.b16 %v202
    %v1953 = vunpack.c.l.b16 %v203
    %v1954 = vunpack.c.h.b16 %v203
    %v1955 = vunpack.c.l.b16 %v204
    %v1956 = vunpack.c.h.b16 %v204
    %v1957 = vunpack.c.l.b16 %v205
    %v1958 = vunpack.c.h.b16 %v205
    %v1959 = vunpack.c.l.b16 %v206
    %v1960 = vunpack.c.h.b16 %v206
    %v1961 = vunpack.c.l.b16 %v207
    %v1962 = vunpack.c.h.b16 %v207
    %v1963 = vunpack.c.l.b16 %v208
    %v1964 = vunpack.c.h.b16 %v208
    %v1965 = vunpack.c.l.b16 %v209
    %v1966 = vunpack.c.h.b16 %v209
    %v1967 = vunpack.c.l.b16 %v210
    %v1968 = vunpack.c.h.b16 %v210
    %v1969 = vunpack.c.l.b16 %v211
    %v1970 = vunpack.c.h.b16 %v211
    %v1971 = vunpack.c.l.b16 %v212
    %v1972 = vunpack.c.h.b16 %v212
    %v1973 = vunpack.c.l.b16 %v213
    %v1974 = vunpack.c.h.b16 %v213
    %v1975 = vunpack.c.l.b16 %v214
    %v1976 = vunpack.c.h.b16 %v214
    %v1977 = vunpack.c.l.b16 %v215
    %v1978 = vunpack.c.h.b16 %v215
    %v1979 = vunpack.c.l.b16 %v216
    %v1980 = vunpack.c.h.b16 %v216
    %v1981 = vunpack.c.l.b16 %v217
    %v1982 = vunpack.c.h.b16 %v217
    %v1983 = vunpack.c.l.b16 %v218
    %v1984 = vunpack.c.h.b16 %v218
    %v1985 = vunpack.c.l.b16 %v219
    %v1986 = vunpack.c.h.b16 %v219
    %v1987 = vunpack.c.l.b16 %v220
    %v1988 = vunpack.c.h.b16 %v220
    %v1989 = vunpack.c.l.b16 %v221
    %v1990 = vunpack.c.h.b16 %v221
    %v1991 = vunpack.c.l.b16 %v222
    %v1992 = vunpack.c.h.b16 %v222
    %v1993 = vunpack.c.l.b16 %v223
    %v1994 = vunpack.c.h.b16 %v223
    %v1995 = vunpack.c.l.b16 %v224
    %v1996 = vunpack.c.h.b16 %v224
    %v1997 = vunpack.c.l.b16 %v225
    %v1998 = vunpack.c.h.b16 %v225
    %v1999 = vunpack.c.l.b16 %v226
    %v2000 = vunpack.c.h.b16 %v226
    %v2001 = vunpack.c.l.b16 %v227
    %v2002 = vunpack.c.h.b16 %v227
    %v2003 = vunpack.c.l.b16 %v228
    %v2004 = vunpack.c.h.b16 %v228
    %v2005 = vunpack.c.l.b16 %v229
    %v2006 = vunpack.c.h.b16 %v229
    %v2007 = vunpack.c.l.b16 %v230
    %v2008 = vunpack.c.h.b16 %v230
    %v2009 = vunpack.c.l.b16 %v231
    %v2010 = vunpack.c.h.b16 %v231
    %v2011 = vunpack.c.l.b16 %v232
    %v2012 = vunpack.c.h.b16 %v232
    %v2013 = vunpack.c.l.b16 %v233
    %v2014 = vunpack.c.h.b16 %v233
    %v2015 = vunpack.c.l.b16 %v234
    %v2016 = vunpack.c.h.b16 %v234
    %v2017 = vunpack.c.l.b16 %v235
    %v2018 = vunpack.c.h.b16 %v235
    %v2019 = vunpack.c.l.b16 %v236
    %v2020 = vunpack.c.h.b16 %v236
    %v2021 = vunpack.c.l.b16 %v237
    %v2022 = vunpack.c.h.b16 %v237
    %v2023 = vunpack.c.l.b16 %v238
    %v2024 = vunpack.c.h.b16 %v238
    %v2025 = vunpack.c.l.b16 %v239
    %v2026 = vunpack.c.h.b16 %v239
    %v2027 = vunpack.c.l.b16 %v240
    %v2028 = vunpack.c.h.b16 %v240
    %v2029 = vunpack.c.l.b16 %v241
    %v2030 = vunpack.c.h.b16 %v241
    %v2031 = vunpack.c.l.b16 %v242
    %v2032 = vunpack.c.h.b16 %v242
    %v2033 = vunpack.c.l.b16 %v243
    %v2034 = vunpack.c.h.b16 %v243
    %v2035 = vunpack.c.l.b16 %v244
    %v2036 = vunpack.c.h.b16 %v244
    %v2037 = vunpack.c.l.b16 %v245
    %v2038 = vunpack.c.h.b16 %v245
    %v2039 = vunpack.c.l.b16 %v246
    %v2040 = vunpack.c.h.b16 %v246
    %v2041 = vunpack.c.l.b16 %v247
    %v2042 = vunpack.c.h.b16 %v247
    %v2043 = vunpack.c.l.b16 %v248
    %v2044 = vunpack.c.h.b16 %v248
    %v2045 = vunpack.c.l.b16 %v249
    %v2046 = vunpack.c.h.b16 %v249
    %v2047 = vunpack.c.l.b16 %v250
    %v2048 = vunpack.c.h.b16 %v250
    %v2049 = vunpack.c.l.b16 %v251
    %v2050 = vunpack.c.h.b16 %v251
    %v2051 = vunpack.c.l.b16 %v252
    %v2052 = vunpack.c.h.b16 %v252
    %v2053 = vunpack.c.l.b16 %v253
    %v2054 = vunpack.c.h.b16 %v253
    %v2055 = vunpack.c.l.b16 %v254
    %v2056 = vunpack.c.h.b16 %v254
    %v2057 = vunpack.c.l.b16 %v255
    %v2058 = vunpack.c.h.b16 %v255
    %v2059 = vunpack.c.l.b16 %v256
    %v2060 = vunpack.c.h.b16 %v256
    %v2061 = vunpack.c.l.b16 %v257
    %v2062 = vunpack.c.h.b16 %v257
    %v2063 = vunpack.c.l.b16 %v258
    %v2064 = vunpack.c.h.b16 %v258
    %v2065 = vunpack.c.l.b16 %v259
    %v2066 = vunpack.c.h.b16 %v259
    %v2067 = vunpack.c.l.b16 %v260
    %v2068 = vunpack.c.h.b16 %v260
    %v2069 = vunpack.c.l.b16 %v261
    %v2070 = vunpack.c.h.b16 %v261
    %v2071 = vunpack.c.l.b16 %v262
    %v2072 = vunpack.c.h.b16 %v262
    %v2073 = vunpack.c.l.b16 %v263
    %v2074 = vunpack.c.h.b16 %v263
    %v2075 = vunpack.c.l.b16 %v264
    %v2076 = vunpack.c.h.b16 %v264
    %v2077 = vunpack.c.l.b16 %v265
    %v2078 = vunpack.c.h.b16 %v265
    %v2079 = vunpack.c.l.b16 %v266
    %v2080 = vunpack.c.h.b16 %v266
    %v2081 = vunpack.c.l.b16 %v267
    %v2082 = vunpack.c.h.b16 %v267
    %v2083 = vunpack.c.l.b16 %v268
    %v2084 = vunpack.c.h.b16 %v268
    %v2085 = vunpack.c.l.b16 %v269
    %v2086 = vunpack.c.h.b16 %v269
    %v2087 = vunpack.c.l.b16 %v270
    %v2088 = vunpack.c.h.b16 %v270
    %v2089 = vunpack.c.l.b16 %v271
    %v2090 = vunpack.c.h.b16 %v271
    %v2091 = vunpack.c.l.b16 %v272
    %v2092 = vunpack.c.h.b16 %v272
    %v2093 = vunpack.c.l.b16 %v273
    %v2094 = vunpack.c.h.b16 %v273
    %v2095 = vunpack.c.l.b16 %v274
    %v2096 = vunpack.c.h.b16 %v274
    %v2097 = vunpack.c.l.b16 %v275
    %v2098 = vunpack.c.h.b16 %v275
    %v2099 = vunpack.c.l.b16 %v276
    %v2100 = vunpack.c.h.b16 %v276
    %v2101 = vunpack.c.l.b16 %v277
    %v2102 = vunpack.c.h.b16 %v277
    %v2103 = vunpack.c.l.b16 %v278
    %v2104 = vunpack.c.h.b16 %v278
    %v2105 = vunpack.c.l.b16 %v279
    %v2106 = vunpack.c.h.b16 %v279
    %v2107 = vunpack.c.l.b16 %v280
    %v2108 = vunpack.c.h.b16 %v280
    %v2109 = vunpack.c.l.b16 %v281
    %v2110 = vunpack.c.h.b16 %v281
    %v2111 = vunpack.c.l.b16 %v282
    %v2112 = vunpack.c.h.b16 %v282
    %v2113 = vunpack.c.l.b16 %v283
    %v2114 = vunpack.c.h.b16 %v283
    %v2115 = vunpack.c.l.b16 %v284
    %v2116 = vunpack.c.h.b16 %v284
    %v2117 = vunpack.c.l.b16 %v285
    %v2118 = vunpack.c.h.b16 %v285
    %v2119 = vunpack.c.l.b16 %v286
    %v2120 = vunpack.c.h.b16 %v286
    %v2121 = vunpack.c.l.b16 %v287
    %v2122 = vunpack.c.h.b16 %v287
    %v2123 = vunpack.c.l.b16 %v288
    %v2124 = vunpack.c.h.b16 %v288
    %v2125 = vunpack.c.l.b16 %v289
    %v2126 = vunpack.c.h.b16 %v289
    %v2127 = vunpack.c.l.b16 %v290
    %v2128 = vunpack.c.h.b16 %v290
    %v2129 = vunpack.c.l.b16 %v291
    %v2130 = vunpack.c.h.b16 %v291
    %v2131 = vunpack.c.l.b16 %v292
    %v2132 = vunpack.c.h.b16 %v292
    %v2133 = vunpack.c.l.b16 %v293
    %v2134 = vunpack.c.h.b16 %v293
    %v2135 = vunpack.c.l.b16 %v294
    %v2136 = vunpack.c.h.b16 %v294
    %v2137 = vunpack.c.l.b16 %v295
    %v2138 = vunpack.c.h.b16 %v295
    %v2139 = vunpack.c.l.b16 %v296
    %v2140 = vunpack.c.h.b16 %v296
    %v2141 = vunpack.c.l.b16 %v297
    %v2142 = vunpack.c.h.b16 %v297
    %v2143 = vunpack.c.l.b16 %v298
    %v2144 = vunpack.c.h.b16 %v298
    %v2145 = vunpack.c.l.b16 %v299
    %v2146 = vunpack.c.h.b16 %v299
    %v2147 = vunpack.c.l.b16 %v300
    %v2148 = vunpack.c.h.b16 %v300
    %v2149 = vunpack.c.l.b16 %v301
    %v2150 = vunpack.c.h.b16 %v301
    %v2151 = vunpack.c.l.b16 %v302
    %v2152 = vunpack.c.h.b16 %v302
    %v2153 = vunpack.c.l.b16 %v303
    %v2154 = vunpack.c.h.b16 %v303
    %v2155 = vunpack.c.l.b16 %v304
    %v2156 = vunpack.c.h.b16 %v304
    %v2157 = vunpack.c.l.b16 %v305
    %v2158 = vunpack.c.h.b16 %v305
    %v2159 = vunpack.c.l.b16 %v306
    %v2160 = vunpack.c.h.b16 %v306
    %v2161 = vunpack.c.l.b16 %v307
    %v2162 = vunpack.c.h.b16 %v307
    %v2163 = vunpack.c.l.b16 %v308
    %v2164 = vunpack.c.h.b16 %v308
    %v2165 = vunpack.c.l.b16 %v309
    %v2166 = vunpack.c.h.b16 %v309
    %v2167 = vunpack.c.l.b16 %v310
    %v2168 = vunpack.c.h.b16 %v310
    %v2169 = vunpack.c.l.b16 %v311
    %v2170 = vunpack.c.h.b16 %v311
    %v2171 = vunpack.c.l.b16 %v312
    %v2172 = vunpack.c.h.b16 %v312
    %v2173 = vunpack.c.l.b16 %v313
    %v2174 = vunpack.c.h.b16 %v313
    %v2175 = vunpack.c.l.b16 %v314
    %v2176 = vunpack.c.h.b16 %v314
    %v2177 = vunpack.c.l.b16 %v315
    %v2178 = vunpack.c.h.b16 %v315
    %v2179 = vunpack.c.l.b16 %v316
    %v2180 = vunpack.c.h.b16 %v316
    %v2181 = vunpack.c.l.b16 %v317
    %v2182 = vunpack.c.h.b16 %v317
    %v2183 = vunpack.c.l.b16 %v318
    %v2184 = vunpack.c.h.b16 %v318
    %v2185 = vunpack.c.l.b16 %v319
    %v2186 = vunpack.c.h.b16 %v319
    %v2187 = vunpack.c.l.b16 %v320
    %v2188 = vunpack.c.h.b16 %v320
    %v2189 = vunpack.c.l.b16 %v321
    %v2190 = vunpack.c.h.b16 %v321
    %v2191 = vunpack.c.l.b16 %v322
    %v2192 = vunpack.c.h.b16 %v322
    %v2193 = vunpack.c.l.b16 %v323
    %v2194 = vunpack.c.h.b16 %v323
    %v2195 = vunpack.c.l.b16 %v324
    %v2196 = vunpack.c.h.b16 %v324
    %v2197 = vunpack.c.l.b16 %v325
    %v2198 = vunpack.c.h.b16 %v325
    %v2199 = vunpack.c.l.b16 %v326
    %v2200 = vunpack.c.h.b16 %v326
    %v2201 = vunpack.c.l.b16 %v327
    %v2202 = vunpack.c.h.b16 %v327
    %v2203 = vunpack.c.l.b16 %v328
    %v2204 = vunpack.c.h.b16 %v328
    %v2205 = vunpack.c.l.b16 %v329
    %v2206 = vunpack.c.h.b16 %v329
    %v2207 = vunpack.c.l.b16 %v330
    %v2208 = vunpack.c.h.b16 %v330
    %v2209 = vunpack.c.l.b16 %v331
    %v2210 = vunpack.c.h.b16 %v331
    %v2211 = vunpack.c.l.b16 %v332
    %v2212 = vunpack.c.h.b16 %v332
    %v2213 = vunpack.c.l.b16 %v333
    %v2214 = vunpack.c.h.b16 %v333
    %v2215 = vunpack.c.l.b16 %v334
    %v2216 = vunpack.c.h.b16 %v334
    %v2217 = vunpack.c.l.b16 %v335
    %v2218 = vunpack.c.h.b16 %v335
    %v2219 = vunpack.c.l.b16 %v336
    %v2220 = vunpack.c.h.b16 %v336
    %v2221 = vunpack.c.l.b16 %v337
    %v2222 = vunpack.c.h.b16 %v337
    %v2223 = vunpack.c.l.b16 %v338
    %v2224 = vunpack.c.h.b16 %v338
    %v2225 = vunpack.c.l.b16 %v339
    %v2226 = vunpack.c.h.b16 %v339
    %v2227 = vunpack.c.l.b16 %v340
    %v2228 = vunpack.c.h.b16 %v340
    %v2229 = vunpack.c.l.b16 %v341
    %v2230 = vunpack.c.h.b16 %v341
    %v2231 = vunpack.c.l.b16 %v342
    %v2232 = vunpack.c.h.b16 %v342
    %v2233 = vunpack.c.l.b16 %v343
    %v2234 = vunpack.c.h.b16 %v343
    %v2235 = vunpack.c.l.b16 %v344
    %v2236 = vunpack.c.h.b16 %v344
    %v2237 = vunpack.c.l.b16 %v345
    %v2238 = vunpack.c.h.b16 %v345
    %v2239 = vunpack.c.l.b16 %v346
    %v2240 = vunpack.c.h.b16 %v346
    %v2241 = vunpack.c.l.b16 %v347
    %v2242 = vunpack.c.h.b16 %v347
    %v2243 = vunpack.c.l.b16 %v348
    %v2244 = vunpack.c.h.b16 %v348
    %v2245 = vunpack.c.l.b16 %v349
    %v2246 = vunpack.c.h.b16 %v349
    %v2247 = vunpack.c.l.b16 %v350
    %v2248 = vunpack.c.h.b16 %v350
    %v2249 = vunpack.c.l.b16 %v351
    %v2250 = vunpack.c.h.b16 %v351
    %v2251 = vunpack.c.l.b16 %v352
    %v2252 = vunpack.c.h.b16 %v352
    %v2253 = vunpack.c.l.b16 %v353
    %v2254 = vunpack.c.h.b16 %v353
    %v2255 = vunpack.c.l.b16 %v354
    %v2256 = vunpack.c.h.b16 %v354
    %v2257 = vunpack.c.l.b16 %v355
    %v2258 = vunpack.c.h.b16 %v355
    %v2259 = vunpack.c.l.b16 %v356
    %v2260 = vunpack.c.h.b16 %v356
    %v2261 = vunpack.c.l.b16 %v357
    %v2262 = vunpack.c.h.b16 %v357
    %v2263 = vunpack.c.l.b16 %v358
    %v2264 = vunpack.c.h.b16 %v358
    %v2265 = vunpack.c.l.b16 %v359
    %v2266 = vunpack.c.h.b16 %v359
    %v2267 = vunpack.c.l.b16 %v360
    %v2268 = vunpack.c.h.b16 %v360
    %v2269 = vunpack.c.l.b16 %v361
    %v2270 = vunpack.c.h.b16 %v361
    %v2271 = vunpack.c.l.b16 %v362
    %v2272 = vunpack.c.h.b16 %v362
    %v2273 = vunpack.c.l.b16 %v363
    %v2274 = vunpack.c.h.b16 %v363
    %v2275 = vunpack.c.l.b16 %v364
    %v2276 = vunpack.c.h.b16 %v364
    %v2277 = vunpack.c.l.b16 %v365
    %v2278 = vunpack.c.h.b16 %v365
    %v2279 = vunpack.c.l.b16 %v366
    %v2280 = vunpack.c.h.b16 %v366
    %v2281 = vunpack.c.l.b16 %v367
    %v2282 = vunpack.c.h.b16 %v367
    %v2283 = vunpack.c.l.b16 %v368
    %v2284 = vunpack.c.h.b16 %v368
    %v2285 = vunpack.c.l.b16 %v369
    %v2286 = vunpack.c.h.b16 %v369
    %v2287 = vunpack.c.l.b16 %v370
    %v2288 = vunpack.c.h.b16 %v370
    %v2289 = vunpack.c.l.b16 %v371
    %v2290 = vunpack.c.h.b16 %v371
    %v2291 = vunpack.c.l.b16 %v372
    %v2292 = vunpack.c.h.b16 %v372
    %v2293 = vunpack.c.l.b16 %v373
    %v2294 = vunpack.c.h.b16 %v373
    %v2295 = vunpack.c.l.b16 %v374
    %v2296 = vunpack.c.h.b16 %v374
    %v2297 = vunpack.c.l.b16 %v375
    %v2298 = vunpack.c.h.b16 %v375
    %v2299 = vunpack.c.l.b16 %v376
    %v2300 = vunpack.c.h.b16 %v376
    %v2301 = vunpack.c.l.b16 %v377
    %v2302 = vunpack.c.h.b16 %v377
    %v2303 = vunpack.c.l.b16 %v378
    %v2304 = vunpack.c.h.b16 %v378
    %v2305 = vunpack.c.l.b16 %v379
    %v2306 = vunpack.c.h.b16 %v379
    %v2307 = vunpack.c.l.b16 %v380
    %v2308 = vunpack.c.h.b16 %v380
    %v2309 = vunpack.c.l.b16 %v381
    %v2310 = vunpack.c.h.b16 %v381
    %v2311 = vunpack.c.l.b16 %v382
    %v2312 = vunpack.c.h.b16 %v382
    %v2313 = vunpack.c.l.b16 %v383
    %v2314 = vunpack.c.h.b16 %v383
    %v2315 = vunpack.c.l.b16 %v384
    %v2316 = vunpack.c.h.b16 %v384
    %v2317 = vunpack.c.l.b16 %v385
    %v2318 = vunpack.c.h.b16 %v385
    %v2319 = vunpack.c.l.b16 %v386
    %v2320 = vunpack.c.h.b16 %v386
    %v2321 = vunpack.c.l.b16 %v387
    %v2322 = vunpack.c.h.b16 %v387
    %v2323 = vunpack.c.l.b16 %v388
    %v2324 = vunpack.c.h.b16 %v388
    %v2325 = vunpack.c.l.b16 %v389
    %v2326 = vunpack.c.h.b16 %v389
    %v2327 = vunpack.c.l.b16 %v390
    %v2328 = vunpack.c.h.b16 %v390
    %v2329 = vunpack.c.l.b16 %v391
    %v2330 = vunpack.c.h.b16 %v391
    %v2331 = vunpack.c.l.b16 %v392
    %v2332 = vunpack.c.h.b16 %v392
    %v2333 = vunpack.c.l.b16 %v393
    %v2334 = vunpack.c.h.b16 %v393
    %v2335 = vunpack.c.l.b16 %v394
    %v2336 = vunpack.c.h.b16 %v394
    %v2337 = vunpack.c.l.b16 %v395
    %v2338 = vunpack.c.h.b16 %v395
    %v2339 = vunpack.c.l.b16 %v396
    %v2340 = vunpack.c.h.b16 %v396
    %v2341 = vunpack.c.l.b16 %v397
    %v2342 = vunpack.c.h.b16 %v397
    %v2343 = vunpack.c.l.b16 %v398
    %v2344 = vunpack.c.h.b16 %v398
    %v2345 = vunpack.c.l.b16 %v399
    %v2346 = vunpack.c.h.b16 %v399
    %v2347 = vunpack.c.l.b16 %v400
    %v2348 = vunpack.c.h.b16 %v400
    %v2349 = vunpack.c.l.b16 %v401
    %v2350 = vunpack.c.h.b16 %v401
    %v2351 = vunpack.c.l.b16 %v402
    %v2352 = vunpack.c.h.b16 %v402
    %v2353 = vunpack.c.l.b16 %v403
    %v2354 = vunpack.c.h.b16 %v403
    %v2355 = vunpack.c.l.b16 %v404
    %v2356 = vunpack.c.h.b16 %v404
    %v2357 = vunpack.c.l.b16 %v405
    %v2358 = vunpack.c.h.b16 %v405
    %v2359 = vunpack.c.l.b16 %v406
    %v2360 = vunpack.c.h.b16 %v406
    %v2361 = vunpack.c.l.b16 %v407
    %v2362 = vunpack.c.h.b16 %v407
    %v2363 = vunpack.c.l.b16 %v408
    %v2364 = vunpack.c.h.b16 %v408
    %v2365 = vunpack.c.l.b16 %v409
    %v2366 = vunpack.c.h.b16 %v409
    %v2367 = vunpack.c.l.b16 %v410
    %v2368 = vunpack.c.h.b16 %v410
    %v2369 = vunpack.c.l.b16 %v411
    %v2370 = vunpack.c.h.b16 %v411
    %v2371 = vunpack.c.l.b16 %v412
    %v2372 = vunpack.c.h.b16 %v412
    %v2373 = vunpack.c.l.b16 %v413
    %v2374 = vunpack.c.h.b16 %v413
    %v2375 = vunpack.c.l.b16 %v414
    %v2376 = vunpack.c.h.b16 %v414
    %v2377 = vunpack.c.l.b16 %v415
    %v2378 = vunpack.c.h.b16 %v415
    %v2379 = vunpack.c.l.b16 %v416
    %v2380 = vunpack.c.h.b16 %v416
    %v2381 = vunpack.c.l.b16 %v417
    %v2382 = vunpack.c.h.b16 %v417
    %v2383 = vunpack.c.l.b16 %v418
    %v2384 = vunpack.c.h.b16 %v418
    %v2385 = vunpack.c.l.b16 %v419
    %v2386 = vunpack.c.h.b16 %v419
    %v2387 = vunpack.c.l.b16 %v420
    %v2388 = vunpack.c.h.b16 %v420
    %v2389 = vunpack.c.l.b16 %v421
    %v2390 = vunpack.c.h.b16 %v421
    %v2391 = vunpack.c.l.b16 %v422
    %v2392 = vunpack.c.h.b16 %v422
    %v2393 = vunpack.c.l.b16 %v423
    %v2394 = vunpack.c.h.b16 %v423
    %v2395 = vunpack.c.l.b16 %v424
    %v2396 = vunpack.c.h.b16 %v424
    %v2397 = vunpack.c.l.b16 %v425
    %v2398 = vunpack.c.h.b16 %v425
    %v2399 = vunpack.c.l.b16 %v426
    %v2400 = vunpack.c.h.b16 %v426
    %v2401 = vunpack.c.l.b16 %v427
    %v2402 = vunpack.c.h.b16 %v427
    %v2403 = vunpack.c.l.b16 %v428
    %v2404 = vunpack.c.h.b16 %v428
    %v2405 = vunpack.c.l.b16 %v429
    %v2406 = vunpack.c.h.b16 %v429
    %v2407 = vunpack.c.l.b16 %v430
    %v2408 = vunpack.c.h.b16 %v430
    %v2409 = vunpack.c.l.b16 %v431
    %v2410 = vunpack.c.h.b16 %v431
    %v2411 = vunpack.c.l.b16 %v432
    %v2412 = vunpack.c.h.b16 %v432
    %v2413 = vunpack.c.l.b16 %v433
    %v2414 = vunpack.c.h.b16 %v433
    %v2415 = vunpack.c.l.b16 %v434
    %v2416 = vunpack.c.h.b16 %v434
    %v2417 = vunpack.c.l.b16 %v435
    %v2418 = vunpack.c.h.b16 %v435
    %v2419 = vunpack.c.l.b16 %v436
    %v2420 = vunpack.c.h.b16 %v436
    %v2421 = vunpack.c.l.b16 %v437
    %v2422 = vunpack.c.h.b16 %v437
    %v2423 = vunpack.c.l.b16 %v438
    %v2424 = vunpack.c.h.b16 %v438
    %v2425 = vunpack.c.l.b16 %v439
    %v2426 = vunpack.c.h.b16 %v439
    %v2427 = vunpack.c.l.b16 %v440
    %v2428 = vunpack.c.h.b16 %v440
    %v2429 = vunpack.c.l.b16 %v441
    %v2430 = vunpack.c.h.b16 %v441
    %v2431 = vunpack.c.l.b16 %v442
    %v2432 = vunpack.c.h.b16 %v442
    %v2433 = vunpack.c.l.b16 %v443
    %v2434 = vunpack.c.h.b16 %v443
    %v2435 = vunpack.c.l.b16 %v444
    %v2436 = vunpack.c.h.b16 %v444
    %v2437 = vunpack.c.l.b16 %v445
    %v2438 = vunpack.c.h.b16 %v445
    %v2439 = vunpack.c.l.b16 %v446
    %v2440 = vunpack.c.h.b16 %v446
    %v2441 = vunpack.c.l.b16 %v447
    %v2442 = vunpack.c.h.b16 %v447
    %v2443 = vunpack.c.l.b16 %v448
    %v2444 = vunpack.c.h.b16 %v448
    %v2445 = vunpack.c.l.b16 %v449
    %v2446 = vunpack.c.h.b16 %v449
    %v2447 = vunpack.c.l.b16 %v450
    %v2448 = vunpack.c.h.b16 %v450
    %v2449 = vunpack.c.l.b16 %v451
    %v2450 = vunpack.c.h.b16 %v451
    %v2451 = vunpack.c.l.b16 %v452
    %v2452 = vunpack.c.h.b16 %v452
    %v2453 = vunpack.c.l.b16 %v453
    %v2454 = vunpack.c.h.b16 %v453
    %v2455 = vunpack.c.l.b16 %v454
    %v2456 = vunpack.c.h.b16 %v454
    %v2457 = vunpack.c.l.b16 %v455
    %v2458 = vunpack.c.h.b16 %v455
    %v2459 = vunpack.c.l.b16 %v456
    %v2460 = vunpack.c.h.b16 %v456
    %v2461 = vunpack.c.l.b16 %v457
    %v2462 = vunpack.c.h.b16 %v457
    %v2463 = vunpack.c.l.b16 %v458
    %v2464 = vunpack.c.h.b16 %v458
    %v2465 = vunpack.c.l.b16 %v459
    %v2466 = vunpack.c.h.b16 %v459
    %v2467 = vunpack.c.l.b16 %v460
    %v2468 = vunpack.c.h.b16 %v460
    %v2469 = vunpack.c.l.b16 %v461
    %v2470 = vunpack.c.h.b16 %v461
    %v2471 = vunpack.c.l.b16 %v462
    %v2472 = vunpack.c.h.b16 %v462
    %v2473 = vunpack.c.l.b16 %v463
    %v2474 = vunpack.c.h.b16 %v463
    %v2475 = vunpack.c.l.b16 %v464
    %v2476 = vunpack.c.h.b16 %v464
    %v2477 = vunpack.c.l.b16 %v465
    %v2478 = vunpack.c.h.b16 %v465
    %v2479 = vunpack.c.l.b16 %v466
    %v2480 = vunpack.c.h.b16 %v466
    %v2481 = vunpack.c.l.b16 %v467
    %v2482 = vunpack.c.h.b16 %v467
    %v2483 = vunpack.c.l.b16 %v468
    %v2484 = vunpack.c.h.b16 %v468
    %v2485 = vunpack.c.l.b16 %v469
    %v2486 = vunpack.c.h.b16 %v469
    %v2487 = vunpack.c.l.b16 %v470
    %v2488 = vunpack.c.h.b16 %v470
    %v2489 = vunpack.c.l.b16 %v471
    %v2490 = vunpack.c.h.b16 %v471
    %v2491 = vunpack.c.l.b16 %v472
    %v2492 = vunpack.c.h.b16 %v472
    %v2493 = vunpack.c.l.b16 %v473
    %v2494 = vunpack.c.h.b16 %v473
    %v2495 = vunpack.c.l.b16 %v474
    %v2496 = vunpack.c.h.b16 %v474
    %v2497 = vunpack.c.l.b16 %v475
    %v2498 = vunpack.c.h.b16 %v475
    %v2499 = vunpack.c.l.b16 %v476
    %v2500 = vunpack.c.h.b16 %v476
    %v2501 = vunpack.c.l.b16 %v477
    %v2502 = vunpack.c.h.b16 %v477
    %v2503 = vunpack.c.l.b16 %v478
    %v2504 = vunpack.c.h.b16 %v478
    %v2505 = vunpack.c.l.b16 %v479
    %v2506 = vunpack.c.h.b16 %v479
    %v2507 = vunpack.c.l.b16 %v480
    %v2508 = vunpack.c.h.b16 %v480
    %v2509 = vunpack.c.l.b16 %v481
    %v2510 = vunpack.c.h.b16 %v481
    %v2511 = vunpack.c.l.b16 %v482
    %v2512 = vunpack.c.h.b16 %v482
    %v2513 = vunpack.c.l.b16 %v483
    %v2514 = vunpack.c.h.b16 %v483
    %v2515 = vunpack.c.l.b16 %v484
    %v2516 = vunpack.c.h.b16 %v484
    %v2517 = vunpack.c.l.b16 %v485
    %v2518 = vunpack.c.h.b16 %v485
    %v2519 = vunpack.c.l.b16 %v486
    %v2520 = vunpack.c.h.b16 %v486
    %v2521 = vunpack.c.l.b16 %v487
    %v2522 = vunpack.c.h.b16 %v487
    %v2523 = vunpack.c.l.b16 %v488
    %v2524 = vunpack.c.h.b16 %v488
    %v2525 = vunpack.c.l.b16 %v489
    %v2526 = vunpack.c.h.b16 %v489
    %v2527 = vunpack.c.l.b16 %v490
    %v2528 = vunpack.c.h.b16 %v490
    %v2529 = vunpack.c.l.b16 %v491
    %v2530 = vunpack.c.h.b16 %v491
    %v2531 = vunpack.c.l.b16 %v492
    %v2532 = vunpack.c.h.b16 %v492
    %v2533 = vunpack.c.l.b16 %v493
    %v2534 = vunpack.c.h.b16 %v493
    %v2535 = vunpack.c.l.b16 %v494
    %v2536 = vunpack.c.h.b16 %v494
    %v2537 = vunpack.c.l.b16 %v495
    %v2538 = vunpack.c.h.b16 %v495
    %v2539 = vunpack.c.l.b16 %v496
    %v2540 = vunpack.c.h.b16 %v496
    %v2541 = vunpack.c.l.b16 %v497
    %v2542 = vunpack.c.h.b16 %v497
    %v2543 = vunpack.c.l.b16 %v498
    %v2544 = vunpack.c.h.b16 %v498
    %v2545 = vunpack.c.l.b16 %v499
    %v2546 = vunpack.c.h.b16 %v499
    %v2547 = vunpack.c.l.b16 %v500
    %v2548 = vunpack.c.h.b16 %v500
    %v2549 = vunpack.c.l.b16 %v501
    %v2550 = vunpack.c.h.b16 %v501
    %v2551 = vunpack.c.l.b16 %v502
    %v2552 = vunpack.c.h.b16 %v502
    %v2553 = vunpack.c.l.b16 %v503
    %v2554 = vunpack.c.h.b16 %v503
    %v2555 = vunpack.c.l.b16 %v504
    %v2556 = vunpack.c.h.b16 %v504
    %v2557 = vunpack.c.l.b16 %v505
    %v2558 = vunpack.c.h.b16 %v505
    %v2559 = vunpack.c.l.b16 %v506
    %v2560 = vunpack.c.h.b16 %v506
    %v2561 = vunpack.c.l.b16 %v507
    %v2562 = vunpack.c.h.b16 %v507
    %v2563 = vunpack.c.l.b16 %v508
    %v2564 = vunpack.c.h.b16 %v508
    %v2565 = vunpack.c.l.b16 %v509
    %v2566 = vunpack.c.h.b16 %v509
    %v2567 = vunpack.c.l.b16 %v510
    %v2568 = vunpack.c.h.b16 %v510
    %v2569 = vunpack.c.l.b16 %v511
    %v2570 = vunpack.c.h.b16 %v511
    %v2571 = vunpack.c.l.b16 %v512
    %v2572 = vunpack.c.h.b16 %v512
    %v2573 = vunpack.c.l.b16 %v513
    %v2574 = vunpack.c.h.b16 %v513
    %v2575 = vunpack.c.l.b16 %v514
    %v2576 = vunpack.c.h.b16 %v514
    %v2577 = vunpack.c.l.b16 %v515
    %v2578 = vunpack.c.h.b16 %v515
    %v2579 = vunpack.c.l.b16 %v516
    %v2580 = vunpack.c.h.b16 %v516
    %v2581 = vunpack.c.l.b16 %v517
    %v2582 = vunpack.c.h.b16 %v517
    %v2583 = vunpack.c.l.b16 %v518
    %v2584 = vunpack.c.h.b16 %v518
    %v2585 = vunpack.c.l.b16 %v519
    %v2586 = vunpack.c.h.b16 %v519
    %v2587 = vunpack.c.l.b16 %v520
    %v2588 = vunpack.c.h.b16 %v520
    %v2589 = vunpack.c.l.b16 %v521
    %v2590 = vunpack.c.h.b16 %v521
    %v2591 = vunpack.c.l.b16 %v522
    %v2592 = vunpack.c.h.b16 %v522
    %v2593 = vunpack.c.l.b16 %v523
    %v2594 = vunpack.c.h.b16 %v523
    %v2595 = vunpack.c.l.b16 %v524
    %v2596 = vunpack.c.h.b16 %v524
    %v2597 = vunpack.c.l.b16 %v525
    %v2598 = vunpack.c.h.b16 %v525
    %v2599 = vunpack.c.l.b16 %v526
    %v2600 = vunpack.c.h.b16 %v526
    %v2601 = vunpack.c.l.b16 %v527
    %v2602 = vunpack.c.h.b16 %v527
    %v2603 = vunpack.c.l.b16 %v528
    %v2604 = vunpack.c.h.b16 %v528
    %v2605 = vunpack.c.l.b16 %v529
    %v2606 = vunpack.c.h.b16 %v529
    %v2607 = vunpack.c.l.b16 %v530
    %v2608 = vunpack.c.h.b16 %v530
    %v2609 = vunpack.c.l.b16 %v531
    %v2610 = vunpack.c.h.b16 %v531
    %v2611 = vunpack.c.l.b16 %v532
    %v2612 = vunpack.c.h.b16 %v532
    %v2613 = vunpack.c.l.b16 %v533
    %v2614 = vunpack.c.h.b16 %v533
    %v2615 = vunpack.c.l.b16 %v534
    %v2616 = vunpack.c.h.b16 %v534
    %v2617 = vunpack.c.l.b16 %v535
    %v2618 = vunpack.c.h.b16 %v535
    %v2619 = vunpack.c.l.b16 %v536
    %v2620 = vunpack.c.h.b16 %v536
    %v2621 = vunpack.c.l.b16 %v537
    %v2622 = vunpack.c.h.b16 %v537
    %v2623 = vunpack.c.l.b16 %v538
    %v2624 = vunpack.c.h.b16 %v538
    %v2625 = vunpack.c.l.b16 %v539
    %v2626 = vunpack.c.h.b16 %v539
    %v2627 = vunpack.c.l.b16 %v540
    %v2628 = vunpack.c.h.b16 %v540
    %v2629 = vunpack.c.l.b16 %v541
    %v2630 = vunpack.c.h.b16 %v541
    %v2631 = vunpack.c.l.b16 %v542
    %v2632 = vunpack.c.h.b16 %v542
    %v2633 = vunpack.c.l.b16 %v543
    %v2634 = vunpack.c.h.b16 %v543
    %v2635 = vunpack.c.l.b16 %v544
    %v2636 = vunpack.c.h.b16 %v544
    %v2637 = vunpack.c.l.b16 %v545
    %v2638 = vunpack.c.h.b16 %v545
    %v2639 = vunpack.c.l.b16 %v546
    %v2640 = vunpack.c.h.b16 %v546
    %v2641 = vunpack.c.l.b16 %v547
    %v2642 = vunpack.c.h.b16 %v547
    %v2643 = vunpack.c.l.b16 %v548
    %v2644 = vunpack.c.h.b16 %v548
    %v2645 = vunpack.c.l.b16 %v549
    %v2646 = vunpack.c.h.b16 %v549
    %v2647 = vunpack.c.l.b16 %v550
    %v2648 = vunpack.c.h.b16 %v550
    %v2649 = vunpack.c.l.b16 %v551
    %v2650 = vunpack.c.h.b16 %v551
    %v2651 = vunpack.c.l.b16 %v552
    %v2652 = vunpack.c.h.b16 %v552
    %v2653 = vunpack.c.l.b16 %v553
    %v2654 = vunpack.c.h.b16 %v553
    %v2655 = vunpack.c.l.b16 %v554
    %v2656 = vunpack.c.h.b16 %v554
    %v2657 = vunpack.c.l.b16 %v555
    %v2658 = vunpack.c.h.b16 %v555
    %v2659 = vunpack.c.l.b16 %v556
    %v2660 = vunpack.c.h.b16 %v556
    %v2661 = vunpack.c.l.b16 %v557
    %v2662 = vunpack.c.h.b16 %v557
    %v2663 = vunpack.c.l.b16 %v558
    %v2664 = vunpack.c.h.b16 %v558
    %v2665 = vunpack.c.l.b16 %v559
    %v2666 = vunpack.c.h.b16 %v559
    %v2667 = vunpack.c.l.b16 %v560
    %v2668 = vunpack.c.h.b16 %v560
    %v2669 = vunpack.c.l.b16 %v561
    %v2670 = vunpack.c.h.b16 %v561
    %v2671 = vunpack.c.l.b16 %v562
    %v2672 = vunpack.c.h.b16 %v562
    %v2673 = vunpack.c.l.b16 %v563
    %v2674 = vunpack.c.h.b16 %v563
    %v2675 = vunpack.c.l.b16 %v564
    %v2676 = vunpack.c.h.b16 %v564
    %v2677 = vunpack.c.l.b16 %v565
    %v2678 = vunpack.c.h.b16 %v565
    %v2679 = vunpack.c.l.b16 %v566
    %v2680 = vunpack.c.h.b16 %v566
    %v2681 = vunpack.c.l.b16 %v567
    %v2682 = vunpack.c.h.b16 %v567
    %v2683 = vunpack.c.l.b16 %v568
    %v2684 = vunpack.c.h.b16 %v568
    %v2685 = vunpack.c.l.b16 %v569
    %v2686 = vunpack.c.h.b16 %v569
    %v2687 = vunpack.c.l.b16 %v570
    %v2688 = vunpack.c.h.b16 %v570
    %v2689 = vunpack.c.l.b16 %v571
    %v2690 = vunpack.c.h.b16 %v571
    %v2691 = vunpack.c.l.b16 %v572
    %v2692 = vunpack.c.h.b16 %v572
    %v2693 = vunpack.c.l.b16 %v573
    %v2694 = vunpack.c.h.b16 %v573
    %v2695 = vunpack.c.l.b16 %v574
    %v2696 = vunpack.c.h.b16 %v574
    %v2697 = vunpack.c.l.b16 %v575
    %v2698 = vunpack.c.h.b16 %v575
    %v2699 = vunpack.c.l.b16 %v576
    %v2700 = vunpack.c.h.b16 %v576
    %v2701 = vunpack.c.l.b16 %v577
    %v2702 = vunpack.c.h.b16 %v577
    %v2703 = vunpack.c.l.b16 %v578
    %v2704 = vunpack.c.h.b16 %v578
    %v2705 = vunpack.c.l.b16 %v579
    %v2706 = vunpack.c.h.b16 %v579
    %v2707 = vunpack.c.l.b16 %v580
    %v2708 = vunpack.c.h.b16 %v580
    %v2709 = vunpack.c.l.b16 %v581
    %v2710 = vunpack.c.h.b16 %v581
    %v2711 = vunpack.c.l.b16 %v582
    %v2712 = vunpack.c.h.b16 %v582
    %v2713 = vunpack.c.l.b16 %v583
    %v2714 = vunpack.c.h.b16 %v583
    %v2715 = vunpack.c.l.b16 %v584
    %v2716 = vunpack.c.h.b16 %v584
    %v2717 = vunpack.c.l.b16 %v585
    %v2718 = vunpack.c.h.b16 %v585
    %v2719 = vunpack.c.l.b16 %v586
    %v2720 = vunpack.c.h.b16 %v586
    %v2721 = vunpack.c.l.b16 %v587
    %v2722 = vunpack.c.h.b16 %v587
    %v2723 = vunpack.c.l.b16 %v588
    %v2724 = vunpack.c.h.b16 %v588
    %v2725 = vunpack.c.l.b16 %v589
    %v2726 = vunpack.c.h.b16 %v589
    %v2727 = vunpack.c.l.b16 %v590
    %v2728 = vunpack.c.h.b16 %v590
    %v2729 = vunpack.c.l.b16 %v591
    %v2730 = vunpack.c.h.b16 %v591
    %v2731 = vunpack.c.l.b16 %v592
    %v2732 = vunpack.c.h.b16 %v592
    %v2733 = vunpack.c.l.b16 %v593
    %v2734 = vunpack.c.h.b16 %v593
    %v2735 = vunpack.c.l.b16 %v594
    %v2736 = vunpack.c.h.b16 %v594
    %v2737 = vunpack.c.l.b16 %v595
    %v2738 = vunpack.c.h.b16 %v595
    %v2739 = vunpack.c.l.b16 %v596
    %v2740 = vunpack.c.h.b16 %v596
    %v2741 = vunpack.c.l.b16 %v597
    %v2742 = vunpack.c.h.b16 %v597
    %v2743 = vunpack.c.l.b16 %v598
    %v2744 = vunpack.c.h.b16 %v598
    %v2745 = vunpack.c.l.b16 %v599
    %v2746 = vunpack.c.h.b16 %v599
    %v2747 = vunpack.c.l.b16 %v600
    %v2748 = vunpack.c.h.b16 %v600
    %v2749 = vunpack.c.l.b16 %v601
    %v2750 = vunpack.c.h.b16 %v601
    %v2751 = vunpack.c.l.b16 %v602
    %v2752 = vunpack.c.h.b16 %v602
    %v2753 = vunpack.c.l.b16 %v603
    %v2754 = vunpack.c.h.b16 %v603
    %v2755 = vunpack.c.l.b16 %v604
    %v2756 = vunpack.c.h.b16 %v604
    %v2757 = vunpack.c.l.b16 %v605
    %v2758 = vunpack.c.h.b16 %v605
    %v2759 = vunpack.c.l.b16 %v606
    %v2760 = vunpack.c.h.b16 %v606
    %v2761 = vunpack.c.l.b16 %v607
    %v2762 = vunpack.c.h.b16 %v607
    %v2763 = vunpack.c.l.b16 %v608
    %v2764 = vunpack.c.h.b16 %v608
    %v2765 = vunpack.c.l.b16 %v609
    %v2766 = vunpack.c.h.b16 %v609
    %v2767 = vunpack.c.l.b16 %v610
    %v2768 = vunpack.c.h.b16 %v610
    %v2769 = vunpack.c.l.b16 %v611
    %v2770 = vunpack.c.h.b16 %v611
    %v2771 = vunpack.c.l.b16 %v612
    %v2772 = vunpack.c.h.b16 %v612
    %v2773 = vunpack.c.l.b16 %v613
    %v2774 = vunpack.c.h.b16 %v613
    %v2775 = vunpack.c.l.b16 %v614
    %v2776 = vunpack.c.h.b16 %v614
    %v2777 = vunpack.c.l.b16 %v615
    %v2778 = vunpack.c.h.b16 %v615
    %v2779 = vunpack.c.l.b16 %v616
    %v2780 = vunpack.c.h.b16 %v616
    %v2781 = vunpack.c.l.b16 %v617
    %v2782 = vunpack.c.h.b16 %v617
    %v2783 = vunpack.c.l.b16 %v618
    %v2784 = vunpack.c.h.b16 %v618
    %v2785 = vunpack.c.l.b16 %v619
    %v2786 = vunpack.c.h.b16 %v619
    %v2787 = vunpack.c.l.b16 %v620
    %v2788 = vunpack.c.h.b16 %v620
    %v2789 = vunpack.c.l.b16 %v621
    %v2790 = vunpack.c.h.b16 %v621
    %v2791 = vunpack.c.l.b16 %v622
    %v2792 = vunpack.c.h.b16 %v622
    %v2793 = vunpack.c.l.b16 %v623
    %v2794 = vunpack.c.h.b16 %v623
    %v2795 = vunpack.c.l.b16 %v624
    %v2796 = vunpack.c.h.b16 %v624
    %v2797 = vunpack.c.l.b16 %v625
    %v2798 = vunpack.c.h.b16 %v625
    %v2799 = vunpack.c.l.b16 %v626
    %v2800 = vunpack.c.h.b16 %v626
    %v2801 = vunpack.c.l.b16 %v627
    %v2802 = vunpack.c.h.b16 %v627
    %v2803 = vunpack.c.l.b16 %v628
    %v2804 = vunpack.c.h.b16 %v628
    %v2805 = vunpack.c.l.b16 %v629
    %v2806 = vunpack.c.h.b16 %v629
    %v2807 = vunpack.c.l.b16 %v630
    %v2808 = vunpack.c.h.b16 %v630
    %v2809 = vunpack.c.l.b16 %v631
    %v2810 = vunpack.c.h.b16 %v631
    %v2811 = vunpack.c.l.b16 %v632
    %v2812 = vunpack.c.h.b16 %v632
    %v2813 = vunpack.c.l.b16 %v633
    %v2814 = vunpack.c.h.b16 %v633
    %v2815 = vunpack.c.l.b16 %v634
    %v2816 = vunpack.c.h.b16 %v634
    %v2817 = vunpack.c.l.b16 %v635
    %v2818 = vunpack.c.h.b16 %v635
    %v2819 = vunpack.c.l.b16 %v636
    %v2820 = vunpack.c.h.b16 %v636
    %v2821 = vunpack.c.l.b16 %v637
    %v2822 = vunpack.c.h.b16 %v637
    %v2823 = vunpack.c.l.b16 %v638
    %v2824 = vunpack.c.h.b16 %v638
    %v2825 = vunpack.c.l.b16 %v639
    %v2826 = vunpack.c.h.b16 %v639
    %v2827 = vunpack.c.l.b16 %v640
    %v2828 = vunpack.c.h.b16 %v640
    %v2829 = vunpack.c.l.b16 %v641
    %v2830 = vunpack.c.h.b16 %v641
    %v2831 = vunpack.c.l.b16 %v642
    %v2832 = vunpack.c.h.b16 %v642
    %v2833 = vunpack.c.l.b16 %v643
    %v2834 = vunpack.c.h.b16 %v643
    %v2835 = vunpack.c.l.b16 %v644
    %v2836 = vunpack.c.h.b16 %v644
    %v2837 = vunpack.c.l.b16 %v645
    %v2838 = vunpack.c.h.b16 %v645
    %v2839 = vunpack.c.l.b16 %v646
    %v2840 = vunpack.c.h.b16 %v646
    %v2841 = vunpack.c.l.b16 %v647
    %v2842 = vunpack.c.h.b16 %v647
    %v2843 = vunpack.c.l.b16 %v648
    %v2844 = vunpack.c.h.b16 %v648
    %v2845 = vunpack.c.l.b16 %v649
    %v2846 = vunpack.c.h.b16 %v649
    %v2847 = vunpack.c.l.b16 %v650
    %v2848 = vunpack.c.h.b16 %v650
    %v2849 = vunpack.c.l.b16 %v651
    %v2850 = vunpack.c.h.b16 %v651
    %v2851 = vunpack.c.l.b16 %v652
    %v2852 = vunpack.c.h.b16 %v652
    %v2853 = vunpack.c.l.b16 %v653
    %v2854 = vunpack.c.h.b16 %v653
    %v2855 = vunpack.c.l.b16 %v654
    %v2856 = vunpack.c.h.b16 %v654
    %v2857 = vunpack.c.l.b16 %v655
    %v2858 = vunpack.c.h.b16 %v655
    %v2859 = vunpack.c.l.b16 %v656
    %v2860 = vunpack.c.h.b16 %v656
    %v2861 = vunpack.c.l.b16 %v657
    %v2862 = vunpack.c.h.b16 %v657
    %v2863 = vunpack.c.l.b16 %v658
    %v2864 = vunpack.c.h.b16 %v658
    %v2865 = vunpack.c.l.b16 %v659
    %v2866 = vunpack.c.h.b16 %v659
    %v2867 = vunpack.c.l.b16 %v660
    %v2868 = vunpack.c.h.b16 %v660
    %v2869 = vunpack.c.l.b16 %v661
    %v2870 = vunpack.c.h.b16 %v661
    %v2871 = vunpack.c.l.b16 %v662
    %v2872 = vunpack.c.h.b16 %v662
    %v2873 = vunpack.c.l.b16 %v663
    %v2874 = vunpack.c.h.b16 %v663
    %v2875 = vunpack.c.l.b16 %v664
    %v2876 = vunpack.c.h.b16 %v664
    %v2877 = vunpack.c.l.b16 %v665
    %v2878 = vunpack.c.h.b16 %v665
    %v2879 = vunpack.c.l.b16 %v666
    %v2880 = vunpack.c.h.b16 %v666
    %v2881 = vunpack.c.l.b16 %v667
    %v2882 = vunpack.c.h.b16 %v667
    %v2883 = vunpack.c.l.b16 %v668
    %v2884 = vunpack.c.h.b16 %v668
    %v2885 = vunpack.c.l.b16 %v669
    %v2886 = vunpack.c.h.b16 %v669
    %v2887 = vunpack.c.l.b16 %v670
    %v2888 = vunpack.c.h.b16 %v670
    %v2889 = vunpack.c.l.b16 %v671
    %v2890 = vunpack.c.h.b16 %v671
    %v2891 = vunpack.c.l.b16 %v672
    %v2892 = vunpack.c.h.b16 %v672
    %v2893 = vunpack.c.l.b16 %v673
    %v2894 = vunpack.c.h.b16 %v673
    %v2895 = vunpack.c.l.b16 %v674
    %v2896 = vunpack.c.h.b16 %v674
    %v2897 = vunpack.c.l.b16 %v675
    %v2898 = vunpack.c.h.b16 %v675
    %v2899 = vunpack.c.l.b16 %v676
    %v2900 = vunpack.c.h.b16 %v676
    %v2901 = vunpack.c.l.b16 %v677
    %v2902 = vunpack.c.h.b16 %v677
    %v2903 = vunpack.c.l.b16 %v678
    %v2904 = vunpack.c.h.b16 %v678
    %v2905 = vunpack.c.l.b16 %v679
    %v2906 = vunpack.c.h.b16 %v679
    %v2907 = vunpack.c.l.b16 %v680
    %v2908 = vunpack.c.h.b16 %v680
    %v2909 = vunpack.c.l.b16 %v681
    %v2910 = vunpack.c.h.b16 %v681
    %v2911 = vunpack.c.l.b16 %v682
    %v2912 = vunpack.c.h.b16 %v682
    %v2913 = vunpack.c.l.b16 %v683
    %v2914 = vunpack.c.h.b16 %v683
    %v2915 = vunpack.c.l.b16 %v684
    %v2916 = vunpack.c.h.b16 %v684
    %v2917 = vunpack.c.l.b16 %v685
    %v2918 = vunpack.c.h.b16 %v685
    %v2919 = vunpack.c.l.b16 %v686
    %v2920 = vunpack.c.h.b16 %v686
    %v2921 = vunpack.c.l.b16 %v687
    %v2922 = vunpack.c.h.b16 %v687
    %v2923 = vunpack.c.l.b16 %v688
    %v2924 = vunpack.c.h.b16 %v688
    %v2925 = vunpack.c.l.b16 %v689
    %v2926 = vunpack.c.h.b16 %v689
    %v2927 = vunpack.c.l.b16 %v690
    %v2928 = vunpack.c.h.b16 %v690
    %v2929 = vunpack.c.l.b16 %v691
    %v2930 = vunpack.c.h.b16 %v691
    %v2931 = vunpack.c.l.b16 %v692
    %v2932 = vunpack.c.h.b16 %v692
    %v2933 = vunpack.c.l.b16 %v693
    %v2934 = vunpack.c.h.b16 %v693
    %v2935 = vunpack.c.l.b16 %v694
    %v2936 = vunpack.c.h.b16 %v694
    %v2937 = vunpack.c.l.b16 %v695
    %v2938 = vunpack.c.h.b16 %v695
    %v2939 = vunpack.c.l.b16 %v696
    %v2940 = vunpack.c.h.b16 %v696
    %v2941 = vunpack.c.l.b16 %v697
    %v2942 = vunpack.c.h.b16 %v697
    %v2943 = vunpack.c.l.b16 %v698
    %v2944 = vunpack.c.h.b16 %v698
    %v2945 = vunpack.c.l.b16 %v699
    %v2946 = vunpack.c.h.b16 %v699
    %v2947 = vunpack.c.l.b16 %v700
    %v2948 = vunpack.c.h.b16 %v700
    %v2949 = vunpack.c.l.b16 %v701
    %v2950 = vunpack.c.h.b16 %v701
    %v2951 = vunpack.c.l.b16 %v702
    %v2952 = vunpack.c.h.b16 %v702
    %v2953 = vunpack.c.l.b16 %v703
    %v2954 = vunpack.c.h.b16 %v703
    %v2955 = vunpack.c.l.b16 %v704
    %v2956 = vunpack.c.h.b16 %v704
    %v2957 = vunpack.c.l.b16 %v705
    %v2958 = vunpack.c.h.b16 %v705
    %v2959 = vunpack.c.l.b16 %v706
    %v2960 = vunpack.c.h.b16 %v706
    %v2961 = vunpack.c.l.b16 %v707
    %v2962 = vunpack.c.h.b16 %v707
    %v2963 = vunpack.c.l.b16 %v708
    %v2964 = vunpack.c.h.b16 %v708
    %v2965 = vunpack.c.l.b16 %v709
    %v2966 = vunpack.c.h.b16 %v709
    %v2967 = vunpack.c.l.b16 %v710
    %v2968 = vunpack.c.h.b16 %v710
    %v2969 = vunpack.c.l.b16 %v711
    %v2970 = vunpack.c.h.b16 %v711
    %v2971 = vunpack.c.l.b16 %v712
    %v2972 = vunpack.c.h.b16 %v712
    %v2973 = vunpack.c.l.b16 %v713
    %v2974 = vunpack.c.h.b16 %v713
    %v2975 = vunpack.c.l.b16 %v714
    %v2976 = vunpack.c.h.b16 %v714
    %v2977 = vunpack.c.l.b16 %v715
    %v2978 = vunpack.c.h.b16 %v715
    %v2979 = vunpack.c.l.b16 %v716
    %v2980 = vunpack.c.h.b16 %v716
    %v2981 = vunpack.c.l.b16 %v717
    %v2982 = vunpack.c.h.b16 %v717
    %v2983 = vunpack.c.l.b16 %v718
    %v2984 = vunpack.c.h.b16 %v718
    %v2985 = vunpack.c.l.b16 %v719
    %v2986 = vunpack.c.h.b16 %v719
    %v2987 = vunpack.c.l.b16 %v720
    %v2988 = vunpack.c.h.b16 %v720
    %v2989 = vunpack.c.l.b16 %v721
    %v2990 = vunpack.c.h.b16 %v721
    %v2991 = vunpack.c.l.b16 %v722
    %v2992 = vunpack.c.h.b16 %v722
    %v2993 = vunpack.c.l.b16 %v723
    %v2994 = vunpack.c.h.b16 %v723
    %v2995 = vunpack.c.l.b16 %v724
    %v2996 = vunpack.c.h.b16 %v724
    %v2997 = vunpack.c.l.b16 %v725
    %v2998 = vunpack.c.h.b16 %v725
    %v2999 = vunpack.c.l.b16 %v726
    %v3000 = vunpack.c.h.b16 %v726
    %v3001 = vunpack.c.l.b16 %v727
    %v3002 = vunpack.c.h.b16 %v727
    %v3003 = vunpack.c.l.b16 %v728
    %v3004 = vunpack.c.h.b16 %v728
    %v3005 = vunpack.c.l.b16 %v729
    %v3006 = vunpack.c.h.b16 %v729
    %v3007 = vunpack.c.l.b16 %v730
    %v3008 = vunpack.c.h.b16 %v730
    %v3009 = vunpack.c.l.b16 %v731
    %v3010 = vunpack.c.h.b16 %v731
    %v3011 = vunpack.c.l.b16 %v732
    %v3012 = vunpack.c.h.b16 %v732
    %v3013 = vunpack.c.l.b16 %v733
    %v3014 = vunpack.c.h.b16 %v733
    %v3015 = vunpack.c.l.b16 %v734
    %v3016 = vunpack.c.h.b16 %v734
    %v3017 = vunpack.c.l.b16 %v735
    %v3018 = vunpack.c.h.b16 %v735
    %v3019 = vunpack.c.l.b16 %v736
    %v3020 = vunpack.c.h.b16 %v736
    %v3021 = vunpack.c.l.b16 %v737
    %v3022 = vunpack.c.h.b16 %v737
    %v3023 = vunpack.c.l.b16 %v738
    %v3024 = vunpack.c.h.b16 %v738
    %v3025 = vunpack.c.l.b16 %v739
    %v3026 = vunpack.c.h.b16 %v739
    %v3027 = vunpack.c.l.b16 %v740
    %v3028 = vunpack.c.h.b16 %v740
    %v3029 = vunpack.c.l.b16 %v741
    %v3030 = vunpack.c.h.b16 %v741
    %v3031 = vunpack.c.l.b16 %v742
    %v3032 = vunpack.c.h.b16 %v742
    %v3033 = vunpack.c.l.b16 %v743
    %v3034 = vunpack.c.h.b16 %v743
    %v3035 = vunpack.c.l.b16 %v744
    %v3036 = vunpack.c.h.b16 %v744
    %v3037 = vunpack.c.l.b16 %v745
    %v3038 = vunpack.c.h.b16 %v745
    %v3039 = vunpack.c.l.b16 %v746
    %v3040 = vunpack.c.h.b16 %v746
    %v3041 = vunpack.c.l.b16 %v747
    %v3042 = vunpack.c.h.b16 %v747
    %v3043 = vunpack.c.l.b16 %v748
    %v3044 = vunpack.c.h.b16 %v748
    %v3045 = vunpack.c.l.b16 %v749
    %v3046 = vunpack.c.h.b16 %v749
    %v3047 = vunpack.c.l.b16 %v750
    %v3048 = vunpack.c.h.b16 %v750
    %v3049 = vunpack.c.l.b16 %v751
    %v3050 = vunpack.c.h.b16 %v751
    %v3051 = vunpack.c.l.b16 %v752
    %v3052 = vunpack.c.h.b16 %v752
    %v3053 = vunpack.c.l.b16 %v753
    %v3054 = vunpack.c.h.b16 %v753
    %v3055 = vunpack.c.l.b16 %v754
    %v3056 = vunpack.c.h.b16 %v754
    %v3057 = vunpack.c.l.b16 %v755
    %v3058 = vunpack.c.h.b16 %v755
    %v3059 = vunpack.c.l.b16 %v756
    %v3060 = vunpack.c.h.b16 %v756
    %v3061 = vunpack.c.l.b16 %v757
    %v3062 = vunpack.c.h.b16 %v757
    %v3063 = vunpack.c.l.b16 %v758
    %v3064 = vunpack.c.h.b16 %v758
    %v3065 = vunpack.c.l.b16 %v759
    %v3066 = vunpack.c.h.b16 %v759
    %v3067 = vunpack.c.l.b16 %v760
    %v3068 = vunpack.c.h.b16 %v760
    %v3069 = vunpack.c.l.b16 %v761
    %v3070 = vunpack.c.h.b16 %v761
    %v3071 = vunpack.c.l.b16 %v762
    %v3072 = vunpack.c.h.b16 %v762
    %v3073 = vunpack.c.l.b16 %v763
    %v3074 = vunpack.c.h.b16 %v763
    %v3075 = vunpack.c.l.b16 %v764
    %v3076 = vunpack.c.h.b16 %v764
    %v3077 = vunpack.c.l.b16 %v765
    %v3078 = vunpack.c.h.b16 %v765
    %v3079 = vunpack.c.l.b16 %v766
    %v3080 = vunpack.c.h.b16 %v766
    %v3081 = vunpack.c.l.b16 %v767
    %v3082 = vunpack.c.h.b16 %v767
    %v3083 = vunpack.c.l.b16 %v768
    %v3084 = vunpack.c.h.b16 %v768
    %v3085 = vunpack.c.l.b16 %v769
    %v3086 = vunpack.c.h.b16 %v769
    %v3087 = vunpack.c.l.b16 %v770
    %v3088 = vunpack.c.h.b16 %v770
    %v3089 = vunpack.c.l.b16 %v771
    %v3090 = vunpack.c.h.b16 %v771
    %v3091 = vunpack.c.l.b16 %v772
    %v3092 = vunpack.c.h.b16 %v772
    %v3093 = vunpack.c.l.b16 %v773
    %v3094 = vunpack.c.h.b16 %v773
    %v3095 = vunpack.c.l.b16 %v774
    %v3096 = vunpack.c.h.b16 %v774
    %v3097 = vunpack.c.l.b16 %v775
    %v3098 = vunpack.c.h.b16 %v775
    %v3099 = vunpack.c.l.b16 %v776
    %v3100 = vunpack.c.h.b16 %v776
    %v3101 = vunpack.c.l.b16 %v777
    %v3102 = vunpack.c.h.b16 %v777
    %v3103 = vunpack.c.l.b16 %v778
    %v3104 = vunpack.c.h.b16 %v778
    %v3105 = vunpack.c.l.b16 %v779
    %v3106 = vunpack.c.h.b16 %v779
    %v3107 = vunpack.c.l.b16 %v780
    %v3108 = vunpack.c.h.b16 %v780
    %v3109 = vunpack.c.l.b16 %v781
    %v3110 = vunpack.c.h.b16 %v781
    %v3111 = vunpack.c.l.b16 %v782
    %v3112 = vunpack.c.h.b16 %v782
    %v3113 = vunpack.c.l.b16 %v783
    %v3114 = vunpack.c.h.b16 %v783
    %v3115 = vunpack.c.l.b16 %v784
    %v3116 = vunpack.c.h.b16 %v784
    %v3117 = vunpack.c.l.b16 %v785
    %v3118 = vunpack.c.h.b16 %v785
    %v3119 = vunpack.c.l.b16 %v786
    %v3120 = vunpack.c.h.b16 %v786
    %v3121 = vunpack.c.l.b16 %v787
    %v3122 = vunpack.c.h.b16 %v787
    %v3123 = vunpack.c.l.b16 %v788
    %v3124 = vunpack.c.h.b16 %v788
    %v3125 = vunpack.c.l.b16 %v789
    %v3126 = vunpack.c.h.b16 %v789
    %v3127 = vunpack.c.l.b16 %v790
    %v3128 = vunpack.c.h.b16 %v790
    %v3129 = vunpack.c.l.b16 %v791
    %v3130 = vunpack.c.h.b16 %v791
    %v3131 = vunpack.c.l.b16 %v792
    %v3132 = vunpack.c.h.b16 %v792
    %v3133 = vunpack.c.l.b16 %v793
    %v3134 = vunpack.c.h.b16 %v793
    %v3135 = vunpack.c.l.b16 %v794
    %v3136 = vunpack.c.h.b16 %v794
    %v3137 = vunpack.c.l.b16 %v795
    %v3138 = vunpack.c.h.b16 %v795
    %v3139 = vunpack.c.l.b16 %v796
    %v3140 = vunpack.c.h.b16 %v796
    %v3141 = vunpack.c.l.b16 %v797
    %v3142 = vunpack.c.h.b16 %v797
    %v3143 = vunpack.c.l.b16 %v798
    %v3144 = vunpack.c.h.b16 %v798
    %v3145 = vunpack.c.l.b16 %v799
    %v3146 = vunpack.c.h.b16 %v799
    %v3147 = vunpack.c.l.b16 %v800
    %v3148 = vunpack.c.h.b16 %v800
    %v3149 = vunpack.c.l.b16 %v801
    %v3150 = vunpack.c.h.b16 %v801
    %v3151 = vunpack.c.l.b16 %v802
    %v3152 = vunpack.c.h.b16 %v802
    %v3153 = vunpack.c.l.b16 %v803
    %v3154 = vunpack.c.h.b16 %v803
    %v3155 = vunpack.c.l.b16 %v804
    %v3156 = vunpack.c.h.b16 %v804
    %v3157 = vunpack.c.l.b16 %v805
    %v3158 = vunpack.c.h.b16 %v805
    %v3159 = vunpack.c.l.b16 %v806
    %v3160 = vunpack.c.h.b16 %v806
    %v3161 = vunpack.c.l.b16 %v807
    %v3162 = vunpack.c.h.b16 %v807
    %v3163 = vunpack.c.l.b16 %v808
    %v3164 = vunpack.c.h.b16 %v808
    %v3165 = vunpack.c.l.b16 %v809
    %v3166 = vunpack.c.h.b16 %v809
    %v3167 = vunpack.c.l.b16 %v810
    %v3168 = vunpack.c.h.b16 %v810
    %v3169 = vunpack.c.l.b16 %v811
    %v3170 = vunpack.c.h.b16 %v811
    %v3171 = vunpack.c.l.b16 %v812
    %v3172 = vunpack.c.h.b16 %v812
    %v3173 = vunpack.c.l.b16 %v813
    %v3174 = vunpack.c.h.b16 %v813
    %v3175 = vunpack.c.l.b16 %v814
    %v3176 = vunpack.c.h.b16 %v814
    %v3177 = vunpack.c.l.b16 %v815
    %v3178 = vunpack.c.h.b16 %v815
    %v3179 = vunpack.c.l.b16 %v816
    %v3180 = vunpack.c.h.b16 %v816
    %v3181 = vunpack.c.l.b16 %v817
    %v3182 = vunpack.c.h.b16 %v817
    %v3183 = vunpack.c.l.b16 %v818
    %v3184 = vunpack.c.h.b16 %v818
    %v3185 = vunpack.c.l.b16 %v819
    %v3186 = vunpack.c.h.b16 %v819
    %v3187 = vunpack.c.l.b16 %v820
    %v3188 = vunpack.c.h.b16 %v820
    %v3189 = vunpack.c.l.b16 %v821
    %v3190 = vunpack.c.h.b16 %v821
    %v3191 = vunpack.c.l.b16 %v822
    %v3192 = vunpack.c.h.b16 %v822
    %v3193 = vunpack.c.l.b16 %v823
    %v3194 = vunpack.c.h.b16 %v823
    %v3195 = vunpack.c.l.b16 %v824
    %v3196 = vunpack.c.h.b16 %v824
    %v3197 = vunpack.c.l.b16 %v825
    %v3198 = vunpack.c.h.b16 %v825
    %v3199 = vunpack.c.l.b16 %v826
    %v3200 = vunpack.c.h.b16 %v826
    %v3201 = vunpack.c.l.b16 %v827
    %v3202 = vunpack.c.h.b16 %v827
    %v3203 = vunpack.c.l.b16 %v828
    %v3204 = vunpack.c.h.b16 %v828
    %v3205 = vunpack.c.l.b16 %v829
    %v3206 = vunpack.c.h.b16 %v829
    %v3207 = vunpack.c.l.b16 %v830
    %v3208 = vunpack.c.h.b16 %v830
    %v3209 = vunpack.c.l.b16 %v831
    %v3210 = vunpack.c.h.b16 %v831
    %v3211 = vunpack.c.l.b16 %v832
    %v3212 = vunpack.c.h.b16 %v832
    %v3213 = vunpack.c.l.b16 %v833
    %v3214 = vunpack.c.h.b16 %v833
    %v3215 = vunpack.c.l.b16 %v834
    %v3216 = vunpack.c.h.b16 %v834
    %v3217 = vunpack.c.l.b16 %v835
    %v3218 = vunpack.c.h.b16 %v835
    %v3219 = vunpack.c.l.b16 %v836
    %v3220 = vunpack.c.h.b16 %v836
    %v3221 = vunpack.c.l.b16 %v837
    %v3222 = vunpack.c.h.b16 %v837
    %v3223 = vunpack.c.l.b16 %v838
    %v3224 = vunpack.c.h.b16 %v838
    %v3225 = vunpack.c.l.b16 %v839
    %v3226 = vunpack.c.h.b16 %v839
    %v3227 = vunpack.c.l.b16 %v840
    %v3228 = vunpack.c.h.b16 %v840
    %v3229 = vunpack.c.l.b16 %v841
    %v3230 = vunpack.c.h.b16 %v841
    %v3231 = vunpack.c.l.b16 %v842
    %v3232 = vunpack.c.h.b16 %v842
    %v3233 = vunpack.c.l.b16 %v843
    %v3234 = vunpack.c.h.b16 %v843
    %v3235 = vunpack.c.l.b16 %v844
    %v3236 = vunpack.c.h.b16 %v844
    %v3237 = vunpack.c.l.b16 %v845
    %v3238 = vunpack.c.h.b16 %v845
    %v3239 = vunpack.c.l.b16 %v846
    %v3240 = vunpack.c.h.b16 %v846
    %v3241 = vunpack.c.l.b16 %v847
    %v3242 = vunpack.c.h.b16 %v847
    %v3243 = vunpack.c.l.b16 %v848
    %v3244 = vunpack.c.h.b16 %v848
    %v3245 = vunpack.c.l.b16 %v849
    %v3246 = vunpack.c.h.b16 %v849
    %v3247 = vunpack.c.l.b16 %v850
    %v3248 = vunpack.c.h.b16 %v850
    %v3249 = vunpack.c.l.b16 %v851
    %v3250 = vunpack.c.h.b16 %v851
    %v3251 = vunpack.c.l.b16 %v852
    %v3252 = vunpack.c.h.b16 %v852
    %v3253 = vunpack.c.l.b16 %v853
    %v3254 = vunpack.c.h.b16 %v853
    %v3255 = vunpack.c.l.b16 %v854
    %v3256 = vunpack.c.h.b16 %v854
    %v3257 = vunpack.c.l.b16 %v855
    %v3258 = vunpack.c.h.b16 %v855
    %v3259 = vunpack.c.l.b16 %v856
    %v3260 = vunpack.c.h.b16 %v856
    %v3261 = vunpack.c.l.b16 %v857
    %v3262 = vunpack.c.h.b16 %v857
    %v3263 = vunpack.c.l.b16 %v858
    %v3264 = vunpack.c.h.b16 %v858
    %v3265 = vunpack.c.l.b16 %v859
    %v3266 = vunpack.c.h.b16 %v859
    %v3267 = vunpack.c.l.b16 %v860
    %v3268 = vunpack.c.h.b16 %v860
    %v3269 = vunpack.c.l.b16 %v861
    %v3270 = vunpack.c.h.b16 %v861
    %v3271 = vunpack.c.l.b16 %v862
    %v3272 = vunpack.c.h.b16 %v862
    %v3273 = vunpack.c.l.b16 %v863
    %v3274 = vunpack.c.h.b16 %v863
    %v3275 = vunpack.c.l.b16 %v864
    %v3276 = vunpack.c.h.b16 %v864
    %v3277 = vunpack.c.l.b16 %v865
    %v3278 = vunpack.c.h.b16 %v865
    %v3279 = vunpack.c.l.b16 %v866
    %v3280 = vunpack.c.h.b16 %v866
    %v3281 = vunpack.c.l.b16 %v867
    %v3282 = vunpack.c.h.b16 %v867
    %v3283 = vunpack.c.l.b16 %v868
    %v3284 = vunpack.c.h.b16 %v868
    %v3285 = vunpack.c.l.b16 %v869
    %v3286 = vunpack.c.h.b16 %v869
    %v3287 = vunpack.c.l.b16 %v870
    %v3288 = vunpack.c.h.b16 %v870
    %v3289 = vunpack.c.l.b16 %v871
    %v3290 = vunpack.c.h.b16 %v871
    %v3291 = vunpack.c.l.b16 %v872
    %v3292 = vunpack.c.h.b16 %v872
    %v3293 = vunpack.c.l.b16 %v873
    %v3294 = vunpack.c.h.b16 %v873
    %v3295 = vunpack.c.l.b16 %v874
    %v3296 = vunpack.c.h.b16 %v874
    %v3297 = vunpack.c.l.b16 %v875
    %v3298 = vunpack.c.h.b16 %v875
    %v3299 = vunpack.c.l.b16 %v876
    %v3300 = vunpack.c.h.b16 %v876
    %v3301 = vunpack.c.l.b16 %v877
    %v3302 = vunpack.c.h.b16 %v877
    %v3303 = vunpack.c.l.b16 %v878
    %v3304 = vunpack.c.h.b16 %v878
    %v3305 = vunpack.c.l.b16 %v879
    %v3306 = vunpack.c.h.b16 %v879
    %v3307 = vunpack.c.l.b16 %v880
    %v3308 = vunpack.c.h.b16 %v880
    %v3309 = vunpack.c.l.b16 %v881
    %v3310 = vunpack.c.h.b16 %v881
    %v3311 = vunpack.c.l.b16 %v882
    %v3312 = vunpack.c.h.b16 %v882
    %v3313 = vunpack.c.l.b16 %v883
    %v3314 = vunpack.c.h.b16 %v883
    %v3315 = vunpack.c.l.b16 %v884
    %v3316 = vunpack.c.h.b16 %v884
    %v3317 = vunpack.c.l.b16 %v885
    %v3318 = vunpack.c.h.b16 %v885
    %v3319 = vunpack.c.l.b16 %v886
    %v3320 = vunpack.c.h.b16 %v886
    %v3321 = vpack.c.b16 %v1789, %v1785
    %v3322 = vpack.c.b16 %v1790, %v1786
    %v3323 = vpack.c.b16 %v1791, %v1787
    %v3324 = vpack.c.b16 %v1792, %v1788
    %v3325 = vpack.c.b16 %v1797, %v1793
    %v3326 = vpack.c.b16 %v1798, %v1794
    %v3327 = vpack.c.b16 %v1799, %v1795
    %v3328 = vpack.c.b16 %v1800, %v1796
    %v3329 = vpack.c.b16 %v1805, %v1801
    %v3330 = vpack.c.b16 %v1806, %v1802
    %v3331 = vpack.c.b16 %v1807, %v1803
    %v3332 = vpack.c.b16 %v1808, %v1804
    %v3333 = vpack.c.b16 %v1813, %v1809
    %v3334 = vpack.c.b16 %v1814, %v1810
    %v3335 = vpack.c.b16 %v1815, %v1811
    %v3336 = vpack.c.b16 %v1816, %v1812
    %v3337 = vpack.c.b16 %v1821, %v1817
    %v3338 = vpack.c.b16 %v1822, %v1818
    %v3339 = vpack.c.b16 %v1823, %v1819
    %v3340 = vpack.c.b16 %v1824, %v1820
    %v3341 = vpack.c.b16 %v1829, %v1825
    %v3342 = vpack.c.b16 %v1830, %v1826
    %v3343 = vpack.c.b16 %v1831, %v1827
    %v3344 = vpack.c.b16 %v1832, %v1828
    %v3345 = vpack.c.b16 %v1837, %v1833
    %v3346 = vpack.c.b16 %v1838, %v1834
    %v3347 = vpack.c.b16 %v1839, %v1835
    %v3348 = vpack.c.b16 %v1840, %v1836
    %v3349 = vpack.c.b16 %v1845, %v1841
    %v3350 = vpack.c.b16 %v1846, %v1842
    %v3351 = vpack.c.b16 %v1847, %v1843
    %v3352 = vpack.c.b16 %v1848, %v1844
    %v3353 = vpack.c.b16 %v1853, %v1849
    %v3354 = vpack.c.b16 %v1854, %v1850
    %v3355 = vpack.c.b16 %v1855, %v1851
    %v3356 = vpack.c.b16 %v1856, %v1852
    %v3357 = vpack.c.b16 %v1861, %v1857
    %v3358 = vpack.c.b16 %v1862, %v1858
    %v3359 = vpack.c.b16 %v1863, %v1859
    %v3360 = vpack.c.b16 %v1864, %v1860
    %v3361 = vpack.c.b16 %v1869, %v1865
    %v3362 = vpack.c.b16 %v1870, %v1866
    %v3363 = vpack.c.b16 %v1871, %v1867
    %v3364 = vpack.c.b16 %v1872, %v1868
    %v3365 = vpack.c.b16 %v1877, %v1873
    %v3366 = vpack.c.b16 %v1878, %v1874
    %v3367 = vpack.c.b16 %v1879, %v1875
    %v3368 = vpack.c.b16 %v1880, %v1876
    %v3369 = vpack.c.b16 %v1885, %v1881
    %v3370 = vpack.c.b16 %v1886, %v1882
    %v3371 = vpack.c.b16 %v1887, %v1883
    %v3372 = vpack.c.b16 %v1888, %v1884
    %v3373 = vpack.c.b16 %v1893, %v1889
    %v3374 = vpack.c.b16 %v1894, %v1890
    %v3375 = vpack.c.b16 %v1895, %v1891
    %v3376 = vpack.c.b16 %v1896, %v1892
    %v3377 = vpack.c.b16 %v1901, %v1897
    %v3378 = vpack.c.b16 %v1902, %v1898
    %v3379 = vpack.c.b16 %v1903, %v1899
    %v3380 = vpack.c.b16 %v1904, %v1900
    %v3381 = vpack.c.b16 %v1909, %v1905
    %v3382 = vpack.c.b16 %v1910, %v1906
    %v3383 = vpack.c.b16 %v1911, %v1907
    %v3384 = vpack.c.b16 %v1912, %v1908
    %v3385 = vpack.c.b16 %v1917, %v1913
    %v3386 = vpack.c.b16 %v1918, %v1914
    %v3387 = vpack.c.b16 %v1919, %v1915
    %v3388 = vpack.c.b16 %v1920, %v1916
    %v3389 = vpack.c.b16 %v1925, %v1921
    %v3390 = vpack.c.b16 %v1926, %v1922
    %v3391 = vpack.c.b16 %v1927, %v1923
    %v3392 = vpack.c.b16 %v1928, %v1924
    %v3393 = vpack.c.b16 %v1933, %v1929
    %v3394 = vpack.c.b16 %v1934, %v1930
    %v3395 = vpack.c.b16 %v1935, %v1931
    %v3396 = vpack.c.b16 %v1936, %v1932
    %v3397 = vpack.c.b16 %v1941, %v1937
    %v3398 = vpack.c.b16 %v1942, %v1938
    %v3399 = vpack.c.b16 %v1943, %v1939
    %v3400 = vpack.c.b16 %v1944, %v1940
    %v3401 = vpack.c.b16 %v1949, %v1945
    %v3402 = vpack.c.b16 %v1950, %v1946
    %v3403 = vpack.c.b16 %v1951, %v1947
    %v3404 = vpack.c.b16 %v1952, %v1948
    %v3405 = vpack.c.b16 %v1957, %v1953
    %v3406 = vpack.c.b16 %v1958, %v1954
    %v3407 = vpack.c.b16 %v1959, %v1955
    %v3408 = vpack.c.b16 %v1960, %v1956
    %v3409 = vpack.c.b16 %v1965, %v1961
    %v3410 = vpack.c.b16 %v1966, %v1962
    %v3411 = vpack.c.b16 %v1967, %v1963
    %v3412 = vpack.c.b16 %v1968, %v1964
    %v3413 = vpack.c.b16 %v1973, %v1969
    %v3414 = vpack.c.b16 %v1974, %v1970
    %v3415 = vpack.c.b16 %v1975, %v1971
    %v3416 = vpack.c.b16 %v1976, %v1972
    %v3417 = vpack.c.b16 %v1981, %v1977
    %v3418 = vpack.c.b16 %v1982, %v1978
    %v3419 = vpack.c.b16 %v1983, %v1979
    %v3420 = vpack.c.b16 %v1984, %v1980
    %v3421 = vpack.c.b16 %v1989, %v1985
    %v3422 = vpack.c.b16 %v1990, %v1986
    %v3423 = vpack.c.b16 %v1991, %v1987
    %v3424 = vpack.c.b16 %v1992, %v1988
    %v3425 = vpack.c.b16 %v1997, %v1993
    %v3426 = vpack.c.b16 %v1998, %v1994
    %v3427 = vpack.c.b16 %v1999, %v1995
    %v3428 = vpack.c.b16 %v2000, %v1996
    %v3429 = vpack.c.b16 %v2005, %v2001
    %v3430 = vpack.c.b16 %v2006, %v2002
    %v3431 = vpack.c.b16 %v2007, %v2003
    %v3432 = vpack.c.b16 %v2008, %v2004
    %v3433 = vpack.c.b16 %v2013, %v2009
    %v3434 = vpack.c.b16 %v2014, %v2010
    %v3435 = vpack.c.b16 %v2015, %v2011
    %v3436 = vpack.c.b16 %v2016, %v2012
    %v3437 = vpack.c.b16 %v2021, %v2017
    %v3438 = vpack.c.b16 %v2022, %v2018
    %v3439 = vpack.c.b16 %v2023, %v2019
    %v3440 = vpack.c.b16 %v2024, %v2020
    %v3441 = vpack.c.b16 %v2029, %v2025
    %v3442 = vpack.c.b16 %v2030, %v2026
    %v3443 = vpack.c.b16 %v2031, %v2027
    %v3444 = vpack.c.b16 %v2032, %v2028
    %v3445 = vpack.c.b16 %v2037, %v2033
    %v3446 = vpack.c.b16 %v2038, %v2034
    %v3447 = vpack.c.b16 %v2039, %v2035
    %v3448 = vpack.c.b16 %v2040, %v2036
    %v3449 = vpack.c.b16 %v2045, %v2041
    %v3450 = vpack.c.b16 %v2046, %v2042
    %v3451 = vpack.c.b16 %v2047, %v2043
    %v3452 = vpack.c.b16 %v2048, %v2044
    %v3453 = vpack.c.b16 %v2053, %v2049
    %v3454 = vpack.c.b16 %v2054, %v2050
    %v3455 = vpack.c.b16 %v2055, %v2051
    %v3456 = vpack.c.b16 %v2056, %v2052
    %v3457 = vpack.c.b16 %v2061, %v2057
    %v3458 = vpack.c.b16 %v2062, %v2058
    %v3459 = vpack.c.b16 %v2063, %v2059
    %v3460 = vpack.c.b16 %v2064, %v2060
    %v3461 = vpack.c.b16 %v2069, %v2065
    %v3462 = vpack.c.b16 %v2070, %v2066
    %v3463 = vpack.c.b16 %v2071, %v2067
    %v3464 = vpack.c.b16 %v2072, %v2068
    %v3465 = vpack.c.b16 %v2077, %v2073
    %v3466 = vpack.c.b16 %v2078, %v2074
    %v3467 = vpack.c.b16 %v2079, %v2075
    %v3468 = vpack.c.b16 %v2080, %v2076
    %v3469 = vpack.c.b16 %v2085, %v2081
    %v3470 = vpack.c.b16 %v2086, %v2082
    %v3471 = vpack.c.b16 %v2087, %v2083
    %v3472 = vpack.c.b16 %v2088, %v2084
    %v3473 = vpack.c.b16 %v2093, %v2089
    %v3474 = vpack.c.b16 %v2094, %v2090
    %v3475 = vpack.c.b16 %v2095, %v2091
    %v3476 = vpack.c.b16 %v2096, %v2092
    %v3477 = vpack.c.b16 %v2101, %v2097
    %v3478 = vpack.c.b16 %v2102, %v2098
    %v3479 = vpack.c.b16 %v2103, %v2099
    %v3480 = vpack.c.b16 %v2104, %v2100
    %v3481 = vpack.c.b16 %v2109, %v2105
    %v3482 = vpack.c.b16 %v2110, %v2106
    %v3483 = vpack.c.b16 %v2111, %v2107
    %v3484 = vpack.c.b16 %v2112, %v2108
    %v3485 = vpack.c.b16 %v2117, %v2113
    %v3486 = vpack.c.b16 %v2118, %v2114
    %v3487 = vpack.c.b16 %v2119, %v2115
    %v3488 = vpack.c.b16 %v2120, %v2116
    %v3489 = vpack.c.b16 %v2125, %v2121
    %v3490 = vpack.c.b16 %v2126, %v2122
    %v3491 = vpack.c.b16 %v2127, %v2123
    %v3492 = vpack.c.b16 %v2128, %v2124
    %v3493 = vpack.c.b16 %v2133, %v2129
    %v3494 = vpack.c.b16 %v2134, %v2130
    %v3495 = vpack.c.b16 %v2135, %v2131
    %v3496 = vpack.c.b16 %v2136, %v2132
    %v3497 = vpack.c.b16 %v2141, %v2137
    %v3498 = vpack.c.b16 %v2142, %v2138
    %v3499 = vpack.c.b16 %v2143, %v2139
    %v3500 = vpack.c.b16 %v2144, %v2140
    %v3501 = vpack.c.b16 %v2149, %v2145
    %v3502 = vpack.c.b16 %v2150, %v2146
    %v3503 = vpack.c.b16 %v2151, %v2147
    %v3504 = vpack.c.b16 %v2152, %v2148
    %v3505 = vpack.c.b16 %v2157, %v2153
    %v3506 = vpack.c.b16 %v2158, %v2154
    %v3507 = vpack.c.b16 %v2159, %v2155
    %v3508 = vpack.c.b16 %v2160, %v2156
    %v3509 = vpack.c.b16 %v2165, %v2161
    %v3510 = vpack.c.b16 %v2166, %v2162
    %v3511 = vpack.c.b16 %v2167, %v2163
    %v3512 = vpack.c.b16 %v2168, %v2164
    %v3513 = vpack.c.b16 %v2173, %v2169
    %v3514 = vpack.c.b16 %v2174, %v2170
    %v3515 = vpack.c.b16 %v2175, %v2171
    %v3516 = vpack.c.b16 %v2176, %v2172
    %v3517 = vpack.c.b16 %v2181, %v2177
    %v3518 = vpack.c.b16 %v2182, %v2178
    %v3519 = vpack.c.b16 %v2183, %v2179
    %v3520 = vpack.c.b16 %v2184, %v2180
    %v3521 = vpack.c.b16 %v2189, %v2185
    %v3522 = vpack.c.b16 %v2190, %v2186
    %v3523 = vpack.c.b16 %v2191, %v2187
    %v3524 = vpack.c.b16 %v2192, %v2188
    %v3525 = vpack.c.b16 %v2197, %v2193
    %v3526 = vpack.c.b16 %v2198, %v2194
    %v3527 = vpack.c.b16 %v2199, %v2195
    %v3528 = vpack.c.b16 %v2200, %v2196
    %v3529 = vpack.c.b16 %v2205, %v2201
    %v3530 = vpack.c.b16 %v2206, %v2202
    %v3531 = vpack.c.b16 %v2207, %v2203
    %v3532 = vpack.c.b16 %v2208, %v2204
    %v3533 = vpack.c.b16 %v2213, %v2209
    %v3534 = vpack.c.b16 %v2214, %v2210
    %v3535 = vpack.c.b16 %v2215, %v2211
    %v3536 = vpack.c.b16 %v2216, %v2212
    %v3537 = vpack.c.b16 %v2221, %v2217
    %v3538 = vpack.c.b16 %v2222, %v2218
    %v3539 = vpack.c.b16 %v2223, %v2219
    %v3540 = vpack.c.b16 %v2224, %v2220
    %v3541 = vpack.c.b16 %v2229, %v2225
    %v3542 = vpack.c.b16 %v2230, %v2226
    %v3543 = vpack.c.b16 %v2231, %v2227
    %v3544 = vpack.c.b16 %v2232, %v2228
    %v3545 = vpack.c.b16 %v2237, %v2233
    %v3546 = vpack.c.b16 %v2238, %v2234
    %v3547 = vpack.c.b16 %v2239, %v2235
    %v3548 = vpack.c.b16 %v2240, %v2236
    %v3549 = vpack.c.b16 %v2245, %v2241
    %v3550 = vpack.c.b16 %v2246, %v2242
    %v3551 = vpack.c.b16 %v2247, %v2243
    %v3552 = vpack.c.b16 %v2248, %v2244
    %v3553 = vpack.c.b16 %v2253, %v2249
    %v3554 = vpack.c.b16 %v2254, %v2250
    %v3555 = vpack.c.b16 %v2255, %v2251
    %v3556 = vpack.c.b16 %v2256, %v2252
    %v3557 = vpack.c.b16 %v2261, %v2257
    %v3558 = vpack.c.b16 %v2262, %v2258
    %v3559 = vpack.c.b16 %v2263, %v2259
    %v3560 = vpack.c.b16 %v2264, %v2260
    %v3561 = vpack.c.b16 %v2269, %v2265
    %v3562 = vpack.c.b16 %v2270, %v2266
    %v3563 = vpack.c.b16 %v2271, %v2267
    %v3564 = vpack.c.b16 %v2272, %v2268
    %v3565 = vpack.c.b16 %v2277, %v2273
    %v3566 = vpack.c.b16 %v2278, %v2274
    %v3567 = vpack.c.b16 %v2279, %v2275
    %v3568 = vpack.c.b16 %v2280, %v2276
    %v3569 = vpack.c.b16 %v2285, %v2281
    %v3570 = vpack.c.b16 %v2286, %v2282
    %v3571 = vpack.c.b16 %v2287, %v2283
    %v3572 = vpack.c.b16 %v2288, %v2284
    %v3573 = vpack.c.b16 %v2293, %v2289
    %v3574 = vpack.c.b16 %v2294, %v2290
    %v3575 = vpack.c.b16 %v2295, %v2291
    %v3576 = vpack.c.b16 %v2296, %v2292
    %v3577 = vpack.c.b16 %v2301, %v2297
    %v3578 = vpack.c.b16 %v2302, %v2298
    %v3579 = vpack.c.b16 %v2303, %v2299
    %v3580 = vpack.c.b16 %v2304, %v2300
    %v3581 = vpack.c.b16 %v2309, %v2305
    %v3582 = vpack.c.b16 %v2310, %v2306
    %v3583 = vpack.c.b16 %v2311, %v2307
    %v3584 = vpack.c.b16 %v2312, %v2308
    %v3585 = vpack.c.b16 %v2317, %v2313
    %v3586 = vpack.c.b16 %v2318, %v2314
    %v3587 = vpack.c.b16 %v2319, %v2315
    %v3588 = vpack.c.b16 %v2320, %v2316
    %v3589 = vpack.c.b16 %v2325, %v2321
    %v3590 = vpack.c.b16 %v2326, %v2322
    %v3591 = vpack.c.b16 %v2327, %v2323
    %v3592 = vpack.c.b16 %v2328, %v2324
    %v3593 = vpack.c.b16 %v2333, %v2329
    %v3594 = vpack.c.b16 %v2334, %v2330
    %v3595 = vpack.c.b16 %v2335, %v2331
    %v3596 = vpack.c.b16 %v2336, %v2332
    %v3597 = vpack.c.b16 %v2341, %v2337
    %v3598 = vpack.c.b16 %v2342, %v2338
    %v3599 = vpack.c.b16 %v2343, %v2339
    %v3600 = vpack.c.b16 %v2344, %v2340
    %v3601 = vpack.c.b16 %v2349, %v2345
    %v3602 = vpack.c.b16 %v2350, %v2346
    %v3603 = vpack.c.b16 %v2351, %v2347
    %v3604 = vpack.c.b16 %v2352, %v2348
    %v3605 = vpack.c.b16 %v2357, %v2353
    %v3606 = vpack.c.b16 %v2358, %v2354
    %v3607 = vpack.c.b16 %v2359, %v2355
    %v3608 = vpack.c.b16 %v2360, %v2356
    %v3609 = vpack.c.b16 %v2365, %v2361
    %v3610 = vpack.c.b16 %v2366, %v2362
    %v3611 = vpack.c.b16 %v2367, %v2363
    %v3612 = vpack.c.b16 %v2368, %v2364
    %v3613 = vpack.c.b16 %v2373, %v2369
    %v3614 = vpack.c.b16 %v2374, %v2370
    %v3615 = vpack.c.b16 %v2375, %v2371
    %v3616 = vpack.c.b16 %v2376, %v2372
    %v3617 = vpack.c.b16 %v2381, %v2377
    %v3618 = vpack.c.b16 %v2382, %v2378
    %v3619 = vpack.c.b16 %v2383, %v2379
    %v3620 = vpack.c.b16 %v2384, %v2380
    %v3621 = vpack.c.b16 %v2389, %v2385
    %v3622 = vpack.c.b16 %v2390, %v2386
    %v3623 = vpack.c.b16 %v2391, %v2387
    %v3624 = vpack.c.b16 %v2392, %v2388
    %v3625 = vpack.c.b16 %v2397, %v2393
    %v3626 = vpack.c.b16 %v2398, %v2394
    %v3627 = vpack.c.b16 %v2399, %v2395
    %v3628 = vpack.c.b16 %v2400, %v2396
    %v3629 = vpack.c.b16 %v2405, %v2401
    %v3630 = vpack.c.b16 %v2406, %v2402
    %v3631 = vpack.c.b16 %v2407, %v2403
    %v3632 = vpack.c.b16 %v2408, %v2404
    %v3633 = vpack.c.b16 %v2413, %v2409
    %v3634 = vpack.c.b16 %v2414, %v2410
    %v3635 = vpack.c.b16 %v2415, %v2411
    %v3636 = vpack.c.b16 %v2416, %v2412
    %v3637 = vpack.c.b16 %v2421, %v2417
    %v3638 = vpack.c.b16 %v2422, %v2418
    %v3639 = vpack.c.b16 %v2423, %v2419
    %v3640 = vpack.c.b16 %v2424, %v2420
    %v3641 = vpack.c.b16 %v2429, %v2425
    %v3642 = vpack.c.b16 %v2430, %v2426
    %v3643 = vpack.c.b16 %v2431, %v2427
    %v3644 = vpack.c.b16 %v2432, %v2428
    %v3645 = vpack.c.b16 %v2437, %v2433
    %v3646 = vpack.c.b16 %v2438, %v2434
    %v3647 = vpack.c.b16 %v2439, %v2435
    %v3648 = vpack.c.b16 %v2440, %v2436
    %v3649 = vpack.c.b16 %v2445, %v2441
    %v3650 = vpack.c.b16 %v2446, %v2442
    %v3651 = vpack.c.b16 %v2447, %v2443
    %v3652 = vpack.c.b16 %v2448, %v2444
    %v3653 = vpack.c.b16 %v2453, %v2449
    %v3654 = vpack.c.b16 %v2454, %v2450
    %v3655 = vpack.c.b16 %v2455, %v2451
    %v3656 = vpack.c.b16 %v2456, %v2452
    %v3657 = vpack.c.b16 %v2461, %v2457
    %v3658 = vpack.c.b16 %v2462, %v2458
    %v3659 = vpack.c.b16 %v2463, %v2459
    %v3660 = vpack.c.b16 %v2464, %v2460
    %v3661 = vpack.c.b16 %v2469, %v2465
    %v3662 = vpack.c.b16 %v2470, %v2466
    %v3663 = vpack.c.b16 %v2471, %v2467
    %v3664 = vpack.c.b16 %v2472, %v2468
    %v3665 = vpack.c.b16 %v2477, %v2473
    %v3666 = vpack.c.b16 %v2478, %v2474
    %v3667 = vpack.c.b16 %v2479, %v2475
    %v3668 = vpack.c.b16 %v2480, %v2476
    %v3669 = vpack.c.b16 %v2485, %v2481
    %v3670 = vpack.c.b16 %v2486, %v2482
    %v3671 = vpack.c.b16 %v2487, %v2483
    %v3672 = vpack.c.b16 %v2488, %v2484
    %v3673 = vpack.c.b16 %v2493, %v2489
    %v3674 = vpack.c.b16 %v2494, %v2490
    %v3675 = vpack.c.b16 %v2495, %v2491
    %v3676 = vpack.c.b16 %v2496, %v2492
    %v3677 = vpack.c.b16 %v2501, %v2497
    %v3678 = vpack.c.b16 %v2502, %v2498
    %v3679 = vpack.c.b16 %v2503, %v2499
    %v3680 = vpack.c.b16 %v2504, %v2500
    %v3681 = vpack.c.b16 %v2509, %v2505
    %v3682 = vpack.c.b16 %v2510, %v2506
    %v3683 = vpack.c.b16 %v2511, %v2507
    %v3684 = vpack.c.b16 %v2512, %v2508
    %v3685 = vpack.c.b16 %v2517, %v2513
    %v3686 = vpack.c.b16 %v2518, %v2514
    %v3687 = vpack.c.b16 %v2519, %v2515
    %v3688 = vpack.c.b16 %v2520, %v2516
    %v3689 = vpack.c.b16 %v2525, %v2521
    %v3690 = vpack.c.b16 %v2526, %v2522
    %v3691 = vpack.c.b16 %v2527, %v2523
    %v3692 = vpack.c.b16 %v2528, %v2524
    %v3693 = vpack.c.b16 %v2533, %v2529
    %v3694 = vpack.c.b16 %v2534, %v2530
    %v3695 = vpack.c.b16 %v2535, %v2531
    %v3696 = vpack.c.b16 %v2536, %v2532
    %v3697 = vpack.c.b16 %v2541, %v2537
    %v3698 = vpack.c.b16 %v2542, %v2538
    %v3699 = vpack.c.b16 %v2543, %v2539
    %v3700 = vpack.c.b16 %v2544, %v2540
    %v3701 = vpack.c.b16 %v2549, %v2545
    %v3702 = vpack.c.b16 %v2550, %v2546
    %v3703 = vpack.c.b16 %v2551, %v2547
    %v3704 = vpack.c.b16 %v2552, %v2548
    %v3705 = vpack.c.b16 %v2557, %v2553
    %v3706 = vpack.c.b16 %v2558, %v2554
    %v3707 = vpack.c.b16 %v2559, %v2555
    %v3708 = vpack.c.b16 %v2560, %v2556
    %v3709 = vpack.c.b16 %v2565, %v2561
    %v3710 = vpack.c.b16 %v2566, %v2562
    %v3711 = vpack.c.b16 %v2567, %v2563
    %v3712 = vpack.c.b16 %v2568, %v2564
    %v3713 = vpack.c.b16 %v2573, %v2569
    %v3714 = vpack.c.b16 %v2574, %v2570
    %v3715 = vpack.c.b16 %v2575, %v2571
    %v3716 = vpack.c.b16 %v2576, %v2572
    %v3717 = vpack.c.b16 %v2581, %v2577
    %v3718 = vpack.c.b16 %v2582, %v2578
    %v3719 = vpack.c.b16 %v2583, %v2579
    %v3720 = vpack.c.b16 %v2584, %v2580
    %v3721 = vpack.c.b16 %v2589, %v2585
    %v3722 = vpack.c.b16 %v2590, %v2586
    %v3723 = vpack.c.b16 %v2591, %v2587
    %v3724 = vpack.c.b16 %v2592, %v2588
    %v3725 = vpack.c.b16 %v2597, %v2593
    %v3726 = vpack.c.b16 %v2598, %v2594
    %v3727 = vpack.c.b16 %v2599, %v2595
    %v3728 = vpack.c.b16 %v2600, %v2596
    %v3729 = vpack.c.b16 %v2605, %v2601
    %v3730 = vpack.c.b16 %v2606, %v2602
    %v3731 = vpack.c.b16 %v2607, %v2603
    %v3732 = vpack.c.b16 %v2608, %v2604
    %v3733 = vpack.c.b16 %v2613, %v2609
    %v3734 = vpack.c.b16 %v2614, %v2610
    %v3735 = vpack.c.b16 %v2615, %v2611
    %v3736 = vpack.c.b16 %v2616, %v2612
    %v3737 = vpack.c.b16 %v2621, %v2617
    %v3738 = vpack.c.b16 %v2622, %v2618
    %v3739 = vpack.c.b16 %v2623, %v2619
    %v3740 = vpack.c.b16 %v2624, %v2620
    %v3741 = vpack.c.b16 %v2629, %v2625
    %v3742 = vpack.c.b16 %v2630, %v2626
    %v3743 = vpack.c.b16 %v2631, %v2627
    %v3744 = vpack.c.b16 %v2632, %v2628
    %v3745 = vpack.c.b16 %v2637, %v2633
    %v3746 = vpack.c.b16 %v2638, %v2634
    %v3747 = vpack.c.b16 %v2639, %v2635
    %v3748 = vpack.c.b16 %v2640, %v2636
    %v3749 = vpack.c.b16 %v2645, %v2641
    %v3750 = vpack.c.b16 %v2646, %v2642
    %v3751 = vpack.c.b16 %v2647, %v2643
    %v3752 = vpack.c.b16 %v2648, %v2644
    %v3753 = vpack.c.b16 %v2653, %v2649
    %v3754 = vpack.c.b16 %v2654, %v2650
    %v3755 = vpack.c.b16 %v2655, %v2651
    %v3756 = vpack.c.b16 %v2656, %v2652
    %v3757 = vpack.c.b16 %v2661, %v2657
    %v3758 = vpack.c.b16 %v2662, %v2658
    %v3759 = vpack.c.b16 %v2663, %v2659
    %v3760 = vpack.c.b16 %v2664, %v2660
    %v3761 = vpack.c.b16 %v2669, %v2665
    %v3762 = vpack.c.b16 %v2670, %v2666
    %v3763 = vpack.c.b16 %v2671, %v2667
    %v3764 = vpack.c.b16 %v2672, %v2668
    %v3765 = vpack.c.b16 %v2677, %v2673
    %v3766 = vpack.c.b16 %v2678, %v2674
    %v3767 = vpack.c.b16 %v2679, %v2675
    %v3768 = vpack.c.b16 %v2680, %v2676
    %v3769 = vpack.c.b16 %v2685, %v2681
    %v3770 = vpack.c.b16 %v2686, %v2682
    %v3771 = vpack.c.b16 %v2687, %v2683
    %v3772 = vpack.c.b16 %v2688, %v2684
    %v3773 = vpack.c.b16 %v2693, %v2689
    %v3774 = vpack.c.b16 %v2694, %v2690
    %v3775 = vpack.c.b16 %v2695, %v2691
    %v3776 = vpack.c.b16 %v2696, %v2692
    %v3777 = vpack.c.b16 %v2701, %v2697
    %v3778 = vpack.c.b16 %v2702, %v2698
    %v3779 = vpack.c.b16 %v2703, %v2699
    %v3780 = vpack.c.b16 %v2704, %v2700
    %v3781 = vpack.c.b16 %v2709, %v2705
    %v3782 = vpack.c.b16 %v2710, %v2706
    %v3783 = vpack.c.b16 %v2711, %v2707
    %v3784 = vpack.c.b16 %v2712, %v2708
    %v3785 = vpack.c.b16 %v2717, %v2713
    %v3786 = vpack.c.b16 %v2718, %v2714
    %v3787 = vpack.c.b16 %v2719, %v2715
    %v3788 = vpack.c.b16 %v2720, %v2716
    %v3789 = vpack.c.b16 %v2725, %v2721
    %v3790 = vpack.c.b16 %v2726, %v2722
    %v3791 = vpack.c.b16 %v2727, %v2723
    %v3792 = vpack.c.b16 %v2728, %v2724
    %v3793 = vpack.c.b16 %v2733, %v2729
    %v3794 = vpack.c.b16 %v2734, %v2730
    %v3795 = vpack.c.b16 %v2735, %v2731
    %v3796 = vpack.c.b16 %v2736, %v2732
    %v3797 = vpack.c.b16 %v2741, %v2737
    %v3798 = vpack.c.b16 %v2742, %v2738
    %v3799 = vpack.c.b16 %v2743, %v2739
    %v3800 = vpack.c.b16 %v2744, %v2740
    %v3801 = vpack.c.b16 %v2749, %v2745
    %v3802 = vpack.c.b16 %v2750, %v2746
    %v3803 = vpack.c.b16 %v2751, %v2747
    %v3804 = vpack.c.b16 %v2752, %v2748
    %v3805 = vpack.c.b16 %v2757, %v2753
    %v3806 = vpack.c.b16 %v2758, %v2754
    %v3807 = vpack.c.b16 %v2759, %v2755
    %v3808 = vpack.c.b16 %v2760, %v2756
    %v3809 = vpack.c.b16 %v2765, %v2761
    %v3810 = vpack.c.b16 %v2766, %v2762
    %v3811 = vpack.c.b16 %v2767, %v2763
    %v3812 = vpack.c.b16 %v2768, %v2764
    %v3813 = vpack.c.b16 %v2773, %v2769
    %v3814 = vpack.c.b16 %v2774, %v2770
    %v3815 = vpack.c.b16 %v2775, %v2771
    %v3816 = vpack.c.b16 %v2776, %v2772
    %v3817 = vpack.c.b16 %v2781, %v2777
    %v3818 = vpack.c.b16 %v2782, %v2778
    %v3819 = vpack.c.b16 %v2783, %v2779
    %v3820 = vpack.c.b16 %v2784, %v2780
    %v3821 = vpack.c.b16 %v2789, %v2785
    %v3822 = vpack.c.b16 %v2790, %v2786
    %v3823 = vpack.c.b16 %v2791, %v2787
    %v3824 = vpack.c.b16 %v2792, %v2788
    %v3825 = vpack.c.b16 %v2797, %v2793
    %v3826 = vpack.c.b16 %v2798, %v2794
    %v3827 = vpack.c.b16 %v2799, %v2795
    %v3828 = vpack.c.b16 %v2800, %v2796
    %v3829 = vpack.c.b16 %v2805, %v2801
    %v3830 = vpack.c.b16 %v2806, %v2802
    %v3831 = vpack.c.b16 %v2807, %v2803
    %v3832 = vpack.c.b16 %v2808, %v2804
    %v3833 = vpack.c.b16 %v2813, %v2809
    %v3834 = vpack.c.b16 %v2814, %v2810
    %v3835 = vpack.c.b16 %v2815, %v2811
    %v3836 = vpack.c.b16 %v2816, %v2812
    %v3837 = vpack.c.b16 %v2821, %v2817
    %v3838 = vpack.c.b16 %v2822, %v2818
    %v3839 = vpack.c.b16 %v2823, %v2819
    %v3840 = vpack.c.b16 %v2824, %v2820
    %v3841 = vpack.c.b16 %v2829, %v2825
    %v3842 = vpack.c.b16 %v2830, %v2826
    %v3843 = vpack.c.b16 %v2831, %v2827
    %v3844 = vpack.c.b16 %v2832, %v2828
    %v3845 = vpack.c.b16 %v2837, %v2833
    %v3846 = vpack.c.b16 %v2838, %v2834
    %v3847 = vpack.c.b16 %v2839, %v2835
    %v3848 = vpack.c.b16 %v2840, %v2836
    %v3849 = vpack.c.b16 %v2845, %v2841
    %v3850 = vpack.c.b16 %v2846, %v2842
    %v3851 = vpack.c.b16 %v2847, %v2843
    %v3852 = vpack.c.b16 %v2848, %v2844
    %v3853 = vpack.c.b16 %v2853, %v2849
    %v3854 = vpack.c.b16 %v2854, %v2850
    %v3855 = vpack.c.b16 %v2855, %v2851
    %v3856 = vpack.c.b16 %v2856, %v2852
    %v3857 = vpack.c.b16 %v2861, %v2857
    %v3858 = vpack.c.b16 %v2862, %v2858
    %v3859 = vpack.c.b16 %v2863, %v2859
    %v3860 = vpack.c.b16 %v2864, %v2860
    %v3861 = vpack.c.b16 %v2869, %v2865
    %v3862 = vpack.c.b16 %v2870, %v2866
    %v3863 = vpack.c.b16 %v2871, %v2867
    %v3864 = vpack.c.b16 %v2872, %v2868
    %v3865 = vpack.c.b16 %v2877, %v2873
    %v3866 = vpack.c.b16 %v2878, %v2874
    %v3867 = vpack.c.b16 %v2879, %v2875
    %v3868 = vpack.c.b16 %v2880, %v2876
    %v3869 = vpack.c.b16 %v2885, %v2881
    %v3870 = vpack.c.b16 %v2886, %v2882
    %v3871 = vpack.c.b16 %v2887, %v2883
    %v3872 = vpack.c.b16 %v2888, %v2884
    %v3873 = vpack.c.b16 %v2893, %v2889
    %v3874 = vpack.c.b16 %v2894, %v2890
    %v3875 = vpack.c.b16 %v2895, %v2891
    %v3876 = vpack.c.b16 %v2896, %v2892
    %v3877 = vpack.c.b16 %v2901, %v2897
    %v3878 = vpack.c.b16 %v2902, %v2898
    %v3879 = vpack.c.b16 %v2903, %v2899
    %v3880 = vpack.c.b16 %v2904, %v2900
    %v3881 = vpack.c.b16 %v2909, %v2905
    %v3882 = vpack.c.b16 %v2910, %v2906
    %v3883 = vpack.c.b16 %v2911, %v2907
    %v3884 = vpack.c.b16 %v2912, %v2908
    %v3885 = vpack.c.b16 %v2917, %v2913
    %v3886 = vpack.c.b16 %v2918, %v2914
    %v3887 = vpack.c.b16 %v2919, %v2915
    %v3888 = vpack.c.b16 %v2920, %v2916
    %v3889 = vpack.c.b16 %v2925, %v2921
    %v3890 = vpack.c.b16 %v2926, %v2922
    %v3891 = vpack.c.b16 %v2927, %v2923
    %v3892 = vpack.c.b16 %v2928, %v2924
    %v3893 = vpack.c.b16 %v2933, %v2929
    %v3894 = vpack.c.b16 %v2934, %v2930
    %v3895 = vpack.c.b16 %v2935, %v2931
    %v3896 = vpack.c.b16 %v2936, %v2932
    %v3897 = vpack.c.b16 %v2941, %v2937
    %v3898 = vpack.c.b16 %v2942, %v2938
    %v3899 = vpack.c.b16 %v2943, %v2939
    %v3900 = vpack.c.b16 %v2944, %v2940
    %v3901 = vpack.c.b16 %v2949, %v2945
    %v3902 = vpack.c.b16 %v2950, %v2946
    %v3903 = vpack.c.b16 %v2951, %v2947
    %v3904 = vpack.c.b16 %v2952, %v2948
    %v3905 = vpack.c.b16 %v2957, %v2953
    %v3906 = vpack.c.b16 %v2958, %v2954
    %v3907 = vpack.c.b16 %v2959, %v2955
    %v3908 = vpack.c.b16 %v2960, %v2956
    %v3909 = vpack.c.b16 %v2965, %v2961
    %v3910 = vpack.c.b16 %v2966, %v2962
    %v3911 = vpack.c.b16 %v2967, %v2963
    %v3912 = vpack.c.b16 %v2968, %v2964
    %v3913 = vpack.c.b16 %v2973, %v2969
    %v3914 = vpack.c.b16 %v2974, %v2970
    %v3915 = vpack.c.b16 %v2975, %v2971
    %v3916 = vpack.c.b16 %v2976, %v2972
    %v3917 = vpack.c.b16 %v2981, %v2977
    %v3918 = vpack.c.b16 %v2982, %v2978
    %v3919 = vpack.c.b16 %v2983, %v2979
    %v3920 = vpack.c.b16 %v2984, %v2980
    %v3921 = vpack.c.b16 %v2989, %v2985
    %v3922 = vpack.c.b16 %v2990, %v2986
    %v3923 = vpack.c.b16 %v2991, %v2987
    %v3924 = vpack.c.b16 %v2992, %v2988
    %v3925 = vpack.c.b16 %v2997, %v2993
    %v3926 = vpack.c.b16 %v2998, %v2994
    %v3927 = vpack.c.b16 %v2999, %v2995
    %v3928 = vpack.c.b16 %v3000, %v2996
    %v3929 = vpack.c.b16 %v3005, %v3001
    %v3930 = vpack.c.b16 %v3006, %v3002
    %v3931 = vpack.c.b16 %v3007, %v3003
    %v3932 = vpack.c.b16 %v3008, %v3004
    %v3933 = vpack.c.b16 %v3013, %v3009
    %v3934 = vpack.c.b16 %v3014, %v3010
    %v3935 = vpack.c.b16 %v3015, %v3011
    %v3936 = vpack.c.b16 %v3016, %v3012
    %v3937 = vpack.c.b16 %v3021, %v3017
    %v3938 = vpack.c.b16 %v3022, %v3018
    %v3939 = vpack.c.b16 %v3023, %v3019
    %v3940 = vpack.c.b16 %v3024, %v3020
    %v3941 = vpack.c.b16 %v3029, %v3025
    %v3942 = vpack.c.b16 %v3030, %v3026
    %v3943 = vpack.c.b16 %v3031, %v3027
    %v3944 = vpack.c.b16 %v3032, %v3028
    %v3945 = vpack.c.b16 %v3037, %v3033
    %v3946 = vpack.c.b16 %v3038, %v3034
    %v3947 = vpack.c.b16 %v3039, %v3035
    %v3948 = vpack.c.b16 %v3040, %v3036
    %v3949 = vpack.c.b16 %v3045, %v3041
    %v3950 = vpack.c.b16 %v3046, %v3042
    %v3951 = vpack.c.b16 %v3047, %v3043
    %v3952 = vpack.c.b16 %v3048, %v3044
    %v3953 = vpack.c.b16 %v3053, %v3049
    %v3954 = vpack.c.b16 %v3054, %v3050
    %v3955 = vpack.c.b16 %v3055, %v3051
    %v3956 = vpack.c.b16 %v3056, %v3052
    %v3957 = vpack.c.b16 %v3061, %v3057
    %v3958 = vpack.c.b16 %v3062, %v3058
    %v3959 = vpack.c.b16 %v3063, %v3059
    %v3960 = vpack.c.b16 %v3064, %v3060
    %v3961 = vpack.c.b16 %v3069, %v3065
    %v3962 = vpack.c.b16 %v3070, %v3066
    %v3963 = vpack.c.b16 %v3071, %v3067
    %v3964 = vpack.c.b16 %v3072, %v3068
    %v3965 = vpack.c.b16 %v3077, %v3073
    %v3966 = vpack.c.b16 %v3078, %v3074
    %v3967 = vpack.c.b16 %v3079, %v3075
    %v3968 = vpack.c.b16 %v3080, %v3076
    %v3969 = vpack.c.b16 %v3085, %v3081
    %v3970 = vpack.c.b16 %v3086, %v3082
    %v3971 = vpack.c.b16 %v3087, %v3083
    %v3972 = vpack.c.b16 %v3088, %v3084
    %v3973 = vpack.c.b16 %v3093, %v3089
    %v3974 = vpack.c.b16 %v3094, %v3090
    %v3975 = vpack.c.b16 %v3095, %v3091
    %v3976 = vpack.c.b16 %v3096, %v3092
    %v3977 = vpack.c.b16 %v3101, %v3097
    %v3978 = vpack.c.b16 %v3102, %v3098
    %v3979 = vpack.c.b16 %v3103, %v3099
    %v3980 = vpack.c.b16 %v3104, %v3100
    %v3981 = vpack.c.b16 %v3109, %v3105
    %v3982 = vpack.c.b16 %v3110, %v3106
    %v3983 = vpack.c.b16 %v3111, %v3107
    %v3984 = vpack.c.b16 %v3112, %v3108
    %v3985 = vpack.c.b16 %v3117, %v3113
    %v3986 = vpack.c.b16 %v3118, %v3114
    %v3987 = vpack.c.b16 %v3119, %v3115
    %v3988 = vpack.c.b16 %v3120, %v3116
    %v3989 = vpack.c.b16 %v3125, %v3121
    %v3990 = vpack.c.b16 %v3126, %v3122
    %v3991 = vpack.c.b16 %v3127, %v3123
    %v3992 = vpack.c.b16 %v3128, %v3124
    %v3993 = vpack.c.b16 %v3133, %v3129
    %v3994 = vpack.c.b16 %v3134, %v3130
    %v3995 = vpack.c.b16 %v3135, %v3131
    %v3996 = vpack.c.b16 %v3136, %v3132
    %v3997 = vpack.c.b16 %v3141, %v3137
    %v3998 = vpack.c.b16 %v3142, %v3138
    %v3999 = vpack.c.b16 %v3143, %v3139
    %v4000 = vpack.c.b16 %v3144, %v3140
    %v4001 = vpack.c.b16 %v3149, %v3145
    %v4002 = vpack.c.b16 %v3150, %v3146
    %v4003 = vpack.c.b16 %v3151, %v3147
    %v4004 = vpack.c.b16 %v3152, %v3148
    %v4005 = vpack.c.b16 %v3157, %v3153
    %v4006 = vpack.c.b16 %v3158, %v3154
    %v4007 = vpack.c.b16 %v3159, %v3155
    %v4008 = vpack.c.b16 %v3160, %v3156
    %v4009 = vpack.c.b16 %v3165, %v3161
    %v4010 = vpack.c.b16 %v3166, %v3162
    %v4011 = vpack.c.b16 %v3167, %v3163
    %v4012 = vpack.c.b16 %v3168, %v3164
    %v4013 = vpack.c.b16 %v3173, %v3169
    %v4014 = vpack.c.b16 %v3174, %v3170
    %v4015 = vpack.c.b16 %v3175, %v3171
    %v4016 = vpack.c.b16 %v3176, %v3172
    %v4017 = vpack.c.b16 %v3181, %v3177
    %v4018 = vpack.c.b16 %v3182, %v3178
    %v4019 = vpack.c.b16 %v3183, %v3179
    %v4020 = vpack.c.b16 %v3184, %v3180
    %v4021 = vpack.c.b16 %v3189, %v3185
    %v4022 = vpack.c.b16 %v3190, %v3186
    %v4023 = vpack.c.b16 %v3191, %v3187
    %v4024 = vpack.c.b16 %v3192, %v3188
    %v4025 = vpack.c.b16 %v3197, %v3193
    %v4026 = vpack.c.b16 %v3198, %v3194
    %v4027 = vpack.c.b16 %v3199, %v3195
    %v4028 = vpack.c.b16 %v3200, %v3196
    %v4029 = vpack.c.b16 %v3205, %v3201
    %v4030 = vpack.c.b16 %v3206, %v3202
    %v4031 = vpack.c.b16 %v3207, %v3203
    %v4032 = vpack.c.b16 %v3208, %v3204
    %v4033 = vpack.c.b16 %v3213, %v3209
    %v4034 = vpack.c.b16 %v3214, %v3210
    %v4035 = vpack.c.b16 %v3215, %v3211
    %v4036 = vpack.c.b16 %v3216, %v3212
    %v4037 = vpack.c.b16 %v3221, %v3217
    %v4038 = vpack.c.b16 %v3222, %v3218
    %v4039 = vpack.c.b16 %v3223, %v3219
    %v4040 = vpack.c.b16 %v3224, %v3220
    %v4041 = vpack.c.b16 %v3229, %v3225
    %v4042 = vpack.c.b16 %v3230, %v3226
    %v4043 = vpack.c.b16 %v3231, %v3227
    %v4044 = vpack.c.b16 %v3232, %v3228
    %v4045 = vpack.c.b16 %v3237, %v3233
    %v4046 = vpack.c.b16 %v3238, %v3234
    %v4047 = vpack.c.b16 %v3239, %v3235
    %v4048 = vpack.c.b16 %v3240, %v3236
    %v4049 = vpack.c.b16 %v3245, %v3241
    %v4050 = vpack.c.b16 %v3246, %v3242
    %v4051 = vpack.c.b16 %v3247, %v3243
    %v4052 = vpack.c.b16 %v3248, %v3244
    %v4053 = vpack.c.b16 %v3253, %v3249
    %v4054 = vpack.c.b16 %v3254, %v3250
    %v4055 = vpack.c.b16 %v3255, %v3251
    %v4056 = vpack.c.b16 %v3256, %v3252
    %v4057 = vpack.c.b16 %v3261, %v3257
    %v4058 = vpack.c.b16 %v3262, %v3258
    %v4059 = vpack.c.b16 %v3263, %v3259
    %v4060 = vpack.c.b16 %v3264, %v3260
    %v4061 = vpack.c.b16 %v3269, %v3265
    %v4062 = vpack.c.b16 %v3270, %v3266
    %v4063 = vpack.c.b16 %v3271, %v3267
    %v4064 = vpack.c.b16 %v3272, %v3268
    %v4065 = vpack.c.b16 %v3277, %v3273
    %v4066 = vpack.c.b16 %v3278, %v3274
    %v4067 = vpack.c.b16 %v3279, %v3275
    %v4068 = vpack.c.b16 %v3280, %v3276
    %v4069 = vpack.c.b16 %v3285, %v3281
    %v4070 = vpack.c.b16 %v3286, %v3282
    %v4071 = vpack.c.b16 %v3287, %v3283
    %v4072 = vpack.c.b16 %v3288, %v3284
    %v4073 = vpack.c.b16 %v3293, %v3289
    %v4074 = vpack.c.b16 %v3294, %v3290
    %v4075 = vpack.c.b16 %v3295, %v3291
    %v4076 = vpack.c.b16 %v3296, %v3292
    %v4077 = vpack.c.b16 %v3301, %v3297
    %v4078 = vpack.c.b16 %v3302, %v3298
    %v4079 = vpack.c.b16 %v3303, %v3299
    %v4080 = vpack.c.b16 %v3304, %v3300
    %v4081 = vpack.c.b16 %v3309, %v3305
    %v4082 = vpack.c.b16 %v3310, %v3306
    %v4083 = vpack.c.b16 %v3311, %v3307
    %v4084 = vpack.c.b16 %v3312, %v3308
    %v4085 = vpack.c.b16 %v3317, %v3313
    %v4086 = vpack.c.b16 %v3318, %v3314
    %v4087 = vpack.c.b16 %v3319, %v3315
    %v4088 = vpack.c.b16 %v3320, %v3316
    %4857 = vmatpush.bf16.msra.mxu0 %v3349
    %4858 = vmatpush.bf16.msra.mxu0 %v3345
    %4859 = vmatpush.bf16.msra.mxu0 %v3341
    %4860 = vmatpush.bf16.msra.mxu0 %v3337
    %4861 = vmatpush.bf16.msra.mxu0 %v3333
    %4862 = vmatpush.bf16.msra.mxu0 %v3329
    %4863 = vmatpush.bf16.msra.mxu0 %v3325
    %4864 = vmatpush.bf16.msra.mxu0 %v3321
    %4865 = vmatmul.bf16.gmra.mxu0 %v969
    %v4866 = vpop.f32.mrf.mxu0
    %v4867 = vadd.f32 %v889, %v4866
    %v4868 = vpop.f32.mrf.mxu0
    %v4869 = vadd.f32 %v889, %v4868
    %4870 = vdwg.mxu0
    %4871 = vmatpush.bf16.msra.mxu0 %v3381
    %4872 = vmatpush.bf16.msra.mxu0 %v3377
    %4873 = vmatpush.bf16.msra.mxu0 %v3373
    %4874 = vmatpush.bf16.msra.mxu0 %v3369
    %4875 = vmatpush.bf16.msra.mxu0 %v3365
    %4876 = vmatpush.bf16.msra.mxu0 %v3361
    %4877 = vmatpush.bf16.msra.mxu0 %v3357
    %4878 = vmatpush.bf16.msra.mxu0 %v3353
    %4879 = vmatmul.bf16.gmra.mxu0 %v970
    %v4880 = vpop.f32.mrf.mxu0
    %v4881 = vadd.f32 %v4867, %v4880
    %v4882 = vpop.f32.mrf.mxu0
    %v4883 = vadd.f32 %v4869, %v4882
    %4884 = vdwg.mxu0
    %4885 = vmatpush.bf16.msra.mxu0 %v3413
    %4886 = vmatpush.bf16.msra.mxu0 %v3409
    %4887 = vmatpush.bf16.msra.mxu0 %v3405
    %4888 = vmatpush.bf16.msra.mxu0 %v3401
    %4889 = vmatpush.bf16.msra.mxu0 %v3397
    %4890 = vmatpush.bf16.msra.mxu0 %v3393
    %4891 = vmatpush.bf16.msra.mxu0 %v3389
    %4892 = vmatpush.bf16.msra.mxu0 %v3385
    %4893 = vmatmul.bf16.gmra.mxu0 %v971
    %v4894 = vpop.f32.mrf.mxu0
    %v4895 = vadd.f32 %v4881, %v4894
    %v4896 = vpop.f32.mrf.mxu0
    %v4897 = vadd.f32 %v4883, %v4896
    %4898 = vdwg.mxu0
    %4899 = vmatpush.bf16.msra.mxu0 %v3445
    %4900 = vmatpush.bf16.msra.mxu0 %v3441
    %4901 = vmatpush.bf16.msra.mxu0 %v3437
    %4902 = vmatpush.bf16.msra.mxu0 %v3433
    %4903 = vmatpush.bf16.msra.mxu0 %v3429
    %4904 = vmatpush.bf16.msra.mxu0 %v3425
    %4905 = vmatpush.bf16.msra.mxu0 %v3421
    %4906 = vmatpush.bf16.msra.mxu0 %v3417
    %4907 = vmatmul.bf16.gmra.mxu0 %v972
    %v4908 = vpop.f32.mrf.mxu0
    %v4909 = vadd.f32 %v4895, %v4908
    %v4910 = vpop.f32.mrf.mxu0
    %v4911 = vadd.f32 %v4897, %v4910
    %4912 = vdwg.mxu0
    %4913 = vmatpush.bf16.msra.mxu0 %v3477
    %4914 = vmatpush.bf16.msra.mxu0 %v3473
    %4915 = vmatpush.bf16.msra.mxu0 %v3469
    %4916 = vmatpush.bf16.msra.mxu0 %v3465
    %4917 = vmatpush.bf16.msra.mxu0 %v3461
    %4918 = vmatpush.bf16.msra.mxu0 %v3457
    %4919 = vmatpush.bf16.msra.mxu0 %v3453
    %4920 = vmatpush.bf16.msra.mxu0 %v3449
    %4921 = vmatmul.bf16.gmra.mxu0 %v973
    %v4922 = vpop.f32.mrf.mxu0
    %v4923 = vadd.f32 %v4909, %v4922
    %v4924 = vpop.f32.mrf.mxu0
    %v4925 = vadd.f32 %v4911, %v4924
    %4926 = vdwg.mxu0
    %4927 = vmatpush.bf16.msra.mxu0 %v3509
    %4928 = vmatpush.bf16.msra.mxu0 %v3505
    %4929 = vmatpush.bf16.msra.mxu0 %v3501
    %4930 = vmatpush.bf16.msra.mxu0 %v3497
    %4931 = vmatpush.bf16.msra.mxu0 %v3493
    %4932 = vmatpush.bf16.msra.mxu0 %v3489
    %4933 = vmatpush.bf16.msra.mxu0 %v3485
    %4934 = vmatpush.bf16.msra.mxu0 %v3481
    %4935 = vmatmul.bf16.gmra.mxu0 %v974
    %v4936 = vpop.f32.mrf.mxu0
    %v4937 = vadd.f32 %v4923, %v4936
    %v4938 = vpop.f32.mrf.mxu0
    %v4939 = vadd.f32 %v4925, %v4938
    %4940 = vdwg.mxu0
    %4941 = vmatpush.bf16.msra.mxu0 %v3541
    %4942 = vmatpush.bf16.msra.mxu0 %v3537
    %4943 = vmatpush.bf16.msra.mxu0 %v3533
    %4944 = vmatpush.bf16.msra.mxu0 %v3529
    %4945 = vmatpush.bf16.msra.mxu0 %v3525
    %4946 = vmatpush.bf16.msra.mxu0 %v3521
    %4947 = vmatpush.bf16.msra.mxu0 %v3517
    %4948 = vmatpush.bf16.msra.mxu0 %v3513
    %4949 = vmatmul.bf16.gmra.mxu0 %v975
    %v4950 = vpop.f32.mrf.mxu0
    %v4951 = vadd.f32 %v4937, %v4950
    %v4952 = vpop.f32.mrf.mxu0
    %v4953 = vadd.f32 %v4939, %v4952
    %4954 = vdwg.mxu0
    %4955 = vmatpush.bf16.msra.mxu0 %v3573
    %4956 = vmatpush.bf16.msra.mxu0 %v3569
    %4957 = vmatpush.bf16.msra.mxu0 %v3565
    %4958 = vmatpush.bf16.msra.mxu0 %v3561
    %4959 = vmatpush.bf16.msra.mxu0 %v3557
    %4960 = vmatpush.bf16.msra.mxu0 %v3553
    %4961 = vmatpush.bf16.msra.mxu0 %v3549
    %4962 = vmatpush.bf16.msra.mxu0 %v3545
    %4963 = vmatmul.bf16.gmra.mxu0 %v976
    %v4964 = vpop.f32.mrf.mxu0
    %v4965 = vadd.f32 %v4951, %v4964
    %v4966 = vpop.f32.mrf.mxu0
    %v4967 = vadd.f32 %v4953, %v4966
    %4968 = vdwg.mxu0
    %4969 = vmatpush.bf16.msra.mxu0 %v3605
    %4970 = vmatpush.bf16.msra.mxu0 %v3601
    %4971 = vmatpush.bf16.msra.mxu0 %v3597
    %4972 = vmatpush.bf16.msra.mxu0 %v3593
    %4973 = vmatpush.bf16.msra.mxu0 %v3589
    %4974 = vmatpush.bf16.msra.mxu0 %v3585
    %4975 = vmatpush.bf16.msra.mxu0 %v3581
    %4976 = vmatpush.bf16.msra.mxu0 %v3577
    %4977 = vmatmul.bf16.gmra.mxu0 %v977
    %v4978 = vpop.f32.mrf.mxu0
    %v4979 = vadd.f32 %v4965, %v4978
    %v4980 = vpop.f32.mrf.mxu0
    %v4981 = vadd.f32 %v4967, %v4980
    %4982 = vdwg.mxu0
    %4983 = vmatpush.bf16.msra.mxu0 %v3637
    %4984 = vmatpush.bf16.msra.mxu0 %v3633
    %4985 = vmatpush.bf16.msra.mxu0 %v3629
    %4986 = vmatpush.bf16.msra.mxu0 %v3625
    %4987 = vmatpush.bf16.msra.mxu0 %v3621
    %4988 = vmatpush.bf16.msra.mxu0 %v3617
    %4989 = vmatpush.bf16.msra.mxu0 %v3613
    %4990 = vmatpush.bf16.msra.mxu0 %v3609
    %4991 = vmatmul.bf16.gmra.mxu0 %v978
    %v4992 = vpop.f32.mrf.mxu0
    %v4993 = vadd.f32 %v4979, %v4992
    %v4994 = vpop.f32.mrf.mxu0
    %v4995 = vadd.f32 %v4981, %v4994
    %4996 = vdwg.mxu0
    %4997 = vmatpush.bf16.msra.mxu0 %v3669
    %4998 = vmatpush.bf16.msra.mxu0 %v3665
    %4999 = vmatpush.bf16.msra.mxu0 %v3661
    %5000 = vmatpush.bf16.msra.mxu0 %v3657
    %5001 = vmatpush.bf16.msra.mxu0 %v3653
    %5002 = vmatpush.bf16.msra.mxu0 %v3649
    %5003 = vmatpush.bf16.msra.mxu0 %v3645
    %5004 = vmatpush.bf16.msra.mxu0 %v3641
    %5005 = vmatmul.bf16.gmra.mxu0 %v979
    %v5006 = vpop.f32.mrf.mxu0
    %v5007 = vadd.f32 %v4993, %v5006
    %v5008 = vpop.f32.mrf.mxu0
    %v5009 = vadd.f32 %v4995, %v5008
    %5010 = vdwg.mxu0
    %5011 = vmatpush.bf16.msra.mxu0 %v3701
    %5012 = vmatpush.bf16.msra.mxu0 %v3697
    %5013 = vmatpush.bf16.msra.mxu0 %v3693
    %5014 = vmatpush.bf16.msra.mxu0 %v3689
    %5015 = vmatpush.bf16.msra.mxu0 %v3685
    %5016 = vmatpush.bf16.msra.mxu0 %v3681
    %5017 = vmatpush.bf16.msra.mxu0 %v3677
    %5018 = vmatpush.bf16.msra.mxu0 %v3673
    %5019 = vmatmul.bf16.gmra.mxu0 %v980
    %v5020 = vpop.f32.mrf.mxu0
    %v5021 = vadd.f32 %v5007, %v5020
    %v5022 = vpop.f32.mrf.mxu0
    %v5023 = vadd.f32 %v5009, %v5022
    %5024 = vdwg.mxu0
    %5025 = vmatpush.bf16.msra.mxu0 %v3733
    %5026 = vmatpush.bf16.msra.mxu0 %v3729
    %5027 = vmatpush.bf16.msra.mxu0 %v3725
    %5028 = vmatpush.bf16.msra.mxu0 %v3721
    %5029 = vmatpush.bf16.msra.mxu0 %v3717
    %5030 = vmatpush.bf16.msra.mxu0 %v3713
    %5031 = vmatpush.bf16.msra.mxu0 %v3709
    %5032 = vmatpush.bf16.msra.mxu0 %v3705
    %5033 = vmatmul.bf16.gmra.mxu0 %v981
    %v5034 = vpop.f32.mrf.mxu0
    %v5035 = vadd.f32 %v5021, %v5034
    %v5036 = vpop.f32.mrf.mxu0
    %v5037 = vadd.f32 %v5023, %v5036
    %5038 = vdwg.mxu0
    %5039 = vmatpush.bf16.msra.mxu0 %v3765
    %5040 = vmatpush.bf16.msra.mxu0 %v3761
    %5041 = vmatpush.bf16.msra.mxu0 %v3757
    %5042 = vmatpush.bf16.msra.mxu0 %v3753
    %5043 = vmatpush.bf16.msra.mxu0 %v3749
    %5044 = vmatpush.bf16.msra.mxu0 %v3745
    %5045 = vmatpush.bf16.msra.mxu0 %v3741
    %5046 = vmatpush.bf16.msra.mxu0 %v3737
    %5047 = vmatmul.bf16.gmra.mxu0 %v982
    %v5048 = vpop.f32.mrf.mxu0
    %v5049 = vadd.f32 %v5035, %v5048
    %v5050 = vpop.f32.mrf.mxu0
    %v5051 = vadd.f32 %v5037, %v5050
    %5052 = vdwg.mxu0
    %5053 = vmatpush.bf16.msra.mxu0 %v3797
    %5054 = vmatpush.bf16.msra.mxu0 %v3793
    %5055 = vmatpush.bf16.msra.mxu0 %v3789
    %5056 = vmatpush.bf16.msra.mxu0 %v3785
    %5057 = vmatpush.bf16.msra.mxu0 %v3781
    %5058 = vmatpush.bf16.msra.mxu0 %v3777
    %5059 = vmatpush.bf16.msra.mxu0 %v3773
    %5060 = vmatpush.bf16.msra.mxu0 %v3769
    %5061 = vmatmul.bf16.gmra.mxu0 %v983
    %v5062 = vpop.f32.mrf.mxu0
    %v5063 = vadd.f32 %v5049, %v5062
    %v5064 = vpop.f32.mrf.mxu0
    %v5065 = vadd.f32 %v5051, %v5064
    %5066 = vdwg.mxu0
    %5067 = vmatpush.bf16.msra.mxu0 %v3829
    %5068 = vmatpush.bf16.msra.mxu0 %v3825
    %5069 = vmatpush.bf16.msra.mxu0 %v3821
    %5070 = vmatpush.bf16.msra.mxu0 %v3817
    %5071 = vmatpush.bf16.msra.mxu0 %v3813
    %5072 = vmatpush.bf16.msra.mxu0 %v3809
    %5073 = vmatpush.bf16.msra.mxu0 %v3805
    %5074 = vmatpush.bf16.msra.mxu0 %v3801
    %5075 = vmatmul.bf16.gmra.mxu0 %v984
    %v5076 = vpop.f32.mrf.mxu0
    %v5077 = vadd.f32 %v5063, %v5076
    %v5078 = vpop.f32.mrf.mxu0
    %v5079 = vadd.f32 %v5065, %v5078
    %5080 = vdwg.mxu0
    %5081 = vmatpush.bf16.msra.mxu0 %v3861
    %5082 = vmatpush.bf16.msra.mxu0 %v3857
    %5083 = vmatpush.bf16.msra.mxu0 %v3853
    %5084 = vmatpush.bf16.msra.mxu0 %v3849
    %5085 = vmatpush.bf16.msra.mxu0 %v3845
    %5086 = vmatpush.bf16.msra.mxu0 %v3841
    %5087 = vmatpush.bf16.msra.mxu0 %v3837
    %5088 = vmatpush.bf16.msra.mxu0 %v3833
    %5089 = vmatmul.bf16.gmra.mxu0 %v985
    %v5090 = vpop.f32.mrf.mxu0
    %v5091 = vadd.f32 %v5077, %v5090
    %v5092 = vpop.f32.mrf.mxu0
    %v5093 = vadd.f32 %v5079, %v5092
    %5094 = vdwg.mxu0
    %5095 = vmatpush.bf16.msra.mxu0 %v3893
    %5096 = vmatpush.bf16.msra.mxu0 %v3889
    %5097 = vmatpush.bf16.msra.mxu0 %v3885
    %5098 = vmatpush.bf16.msra.mxu0 %v3881
    %5099 = vmatpush.bf16.msra.mxu0 %v3877
    %5100 = vmatpush.bf16.msra.mxu0 %v3873
    %5101 = vmatpush.bf16.msra.mxu0 %v3869
    %5102 = vmatpush.bf16.msra.mxu0 %v3865
    %5103 = vmatmul.bf16.gmra.mxu0 %v986
    %v5104 = vpop.f32.mrf.mxu0
    %v5105 = vadd.f32 %v5091, %v5104
    %v5106 = vpop.f32.mrf.mxu0
    %v5107 = vadd.f32 %v5093, %v5106
    %5108 = vdwg.mxu0
    %5109 = vmatpush.bf16.msra.mxu0 %v3925
    %5110 = vmatpush.bf16.msra.mxu0 %v3921
    %5111 = vmatpush.bf16.msra.mxu0 %v3917
    %5112 = vmatpush.bf16.msra.mxu0 %v3913
    %5113 = vmatpush.bf16.msra.mxu0 %v3909
    %5114 = vmatpush.bf16.msra.mxu0 %v3905
    %5115 = vmatpush.bf16.msra.mxu0 %v3901
    %5116 = vmatpush.bf16.msra.mxu0 %v3897
    %5117 = vmatmul.bf16.gmra.mxu0 %v987
    %v5118 = vpop.f32.mrf.mxu0
    %v5119 = vadd.f32 %v5105, %v5118
    %v5120 = vpop.f32.mrf.mxu0
    %v5121 = vadd.f32 %v5107, %v5120
    %5122 = vdwg.mxu0
    %5123 = vmatpush.bf16.msra.mxu0 %v3957
    %5124 = vmatpush.bf16.msra.mxu0 %v3953
    %5125 = vmatpush.bf16.msra.mxu0 %v3949
    %5126 = vmatpush.bf16.msra.mxu0 %v3945
    %5127 = vmatpush.bf16.msra.mxu0 %v3941
    %5128 = vmatpush.bf16.msra.mxu0 %v3937
    %5129 = vmatpush.bf16.msra.mxu0 %v3933
    %5130 = vmatpush.bf16.msra.mxu0 %v3929
    %5131 = vmatmul.bf16.gmra.mxu0 %v988
    %v5132 = vpop.f32.mrf.mxu0
    %v5133 = vadd.f32 %v5119, %v5132
    %v5134 = vpop.f32.mrf.mxu0
    %v5135 = vadd.f32 %v5121, %v5134
    %5136 = vdwg.mxu0
    %5137 = vmatpush.bf16.msra.mxu0 %v3989
    %5138 = vmatpush.bf16.msra.mxu0 %v3985
    %5139 = vmatpush.bf16.msra.mxu0 %v3981
    %5140 = vmatpush.bf16.msra.mxu0 %v3977
    %5141 = vmatpush.bf16.msra.mxu0 %v3973
    %5142 = vmatpush.bf16.msra.mxu0 %v3969
    %5143 = vmatpush.bf16.msra.mxu0 %v3965
    %5144 = vmatpush.bf16.msra.mxu0 %v3961
    %5145 = vmatmul.bf16.gmra.mxu0 %v989
    %v5146 = vpop.f32.mrf.mxu0
    %v5147 = vadd.f32 %v5133, %v5146
    %v5148 = vpop.f32.mrf.mxu0
    %v5149 = vadd.f32 %v5135, %v5148
    %5150 = vdwg.mxu0
    %5151 = vmatpush.bf16.msra.mxu0 %v4021
    %5152 = vmatpush.bf16.msra.mxu0 %v4017
    %5153 = vmatpush.bf16.msra.mxu0 %v4013
    %5154 = vmatpush.bf16.msra.mxu0 %v4009
    %5155 = vmatpush.bf16.msra.mxu0 %v4005
    %5156 = vmatpush.bf16.msra.mxu0 %v4001
    %5157 = vmatpush.bf16.msra.mxu0 %v3997
    %5158 = vmatpush.bf16.msra.mxu0 %v3993
    %5159 = vmatmul.bf16.gmra.mxu0 %v990
    %v5160 = vpop.f32.mrf.mxu0
    %v5161 = vadd.f32 %v5147, %v5160
    %v5162 = vpop.f32.mrf.mxu0
    %v5163 = vadd.f32 %v5149, %v5162
    %5164 = vdwg.mxu0
    %5165 = vmatpush.bf16.msra.mxu0 %v4053
    %5166 = vmatpush.bf16.msra.mxu0 %v4049
    %5167 = vmatpush.bf16.msra.mxu0 %v4045
    %5168 = vmatpush.bf16.msra.mxu0 %v4041
    %5169 = vmatpush.bf16.msra.mxu0 %v4037
    %5170 = vmatpush.bf16.msra.mxu0 %v4033
    %5171 = vmatpush.bf16.msra.mxu0 %v4029
    %5172 = vmatpush.bf16.msra.mxu0 %v4025
    %5173 = vmatmul.bf16.gmra.mxu0 %v991
    %v5174 = vpop.f32.mrf.mxu0
    %v5175 = vadd.f32 %v5161, %v5174
    %v5176 = vpop.f32.mrf.mxu0
    %v5177 = vadd.f32 %v5163, %v5176
    %5178 = vdwg.mxu0
    %5179 = vmatpush.bf16.msra.mxu0 %v4085
    %5180 = vmatpush.bf16.msra.mxu0 %v4081
    %5181 = vmatpush.bf16.msra.mxu0 %v4077
    %5182 = vmatpush.bf16.msra.mxu0 %v4073
    %5183 = vmatpush.bf16.msra.mxu0 %v4069
    %5184 = vmatpush.bf16.msra.mxu0 %v4065
    %5185 = vmatpush.bf16.msra.mxu0 %v4061
    %5186 = vmatpush.bf16.msra.mxu0 %v4057
    %5187 = vmatmul.bf16.gmra.mxu0 %v992
    %v5188 = vpop.f32.mrf.mxu0
    %v5189 = vadd.f32 %v5175, %v5188
    %v5190 = vpop.f32.mrf.mxu0
    %v5191 = vadd.f32 %v5177, %v5190
    %5192 = vdwg.mxu0
    %5193 = vmatpush.bf16.msra.mxu0 %v3350
    %5194 = vmatpush.bf16.msra.mxu0 %v3346
    %5195 = vmatpush.bf16.msra.mxu0 %v3342
    %5196 = vmatpush.bf16.msra.mxu0 %v3338
    %5197 = vmatpush.bf16.msra.mxu0 %v3334
    %5198 = vmatpush.bf16.msra.mxu0 %v3330
    %5199 = vmatpush.bf16.msra.mxu0 %v3326
    %5200 = vmatpush.bf16.msra.mxu0 %v3322
    %5201 = vmatmul.bf16.gmra.mxu0 %v969
    %v5202 = vpop.f32.mrf.mxu0
    %v5203 = vadd.f32 %v890, %v5202
    %v5204 = vpop.f32.mrf.mxu0
    %v5205 = vadd.f32 %v890, %v5204
    %5206 = vdwg.mxu0
    %5207 = vmatpush.bf16.msra.mxu0 %v3382
    %5208 = vmatpush.bf16.msra.mxu0 %v3378
    %5209 = vmatpush.bf16.msra.mxu0 %v3374
    %5210 = vmatpush.bf16.msra.mxu0 %v3370
    %5211 = vmatpush.bf16.msra.mxu0 %v3366
    %5212 = vmatpush.bf16.msra.mxu0 %v3362
    %5213 = vmatpush.bf16.msra.mxu0 %v3358
    %5214 = vmatpush.bf16.msra.mxu0 %v3354
    %5215 = vmatmul.bf16.gmra.mxu0 %v970
    %v5216 = vpop.f32.mrf.mxu0
    %v5217 = vadd.f32 %v5203, %v5216
    %v5218 = vpop.f32.mrf.mxu0
    %v5219 = vadd.f32 %v5205, %v5218
    %5220 = vdwg.mxu0
    %5221 = vmatpush.bf16.msra.mxu0 %v3414
    %5222 = vmatpush.bf16.msra.mxu0 %v3410
    %5223 = vmatpush.bf16.msra.mxu0 %v3406
    %5224 = vmatpush.bf16.msra.mxu0 %v3402
    %5225 = vmatpush.bf16.msra.mxu0 %v3398
    %5226 = vmatpush.bf16.msra.mxu0 %v3394
    %5227 = vmatpush.bf16.msra.mxu0 %v3390
    %5228 = vmatpush.bf16.msra.mxu0 %v3386
    %5229 = vmatmul.bf16.gmra.mxu0 %v971
    %v5230 = vpop.f32.mrf.mxu0
    %v5231 = vadd.f32 %v5217, %v5230
    %v5232 = vpop.f32.mrf.mxu0
    %v5233 = vadd.f32 %v5219, %v5232
    %5234 = vdwg.mxu0
    %5235 = vmatpush.bf16.msra.mxu0 %v3446
    %5236 = vmatpush.bf16.msra.mxu0 %v3442
    %5237 = vmatpush.bf16.msra.mxu0 %v3438
    %5238 = vmatpush.bf16.msra.mxu0 %v3434
    %5239 = vmatpush.bf16.msra.mxu0 %v3430
    %5240 = vmatpush.bf16.msra.mxu0 %v3426
    %5241 = vmatpush.bf16.msra.mxu0 %v3422
    %5242 = vmatpush.bf16.msra.mxu0 %v3418
    %5243 = vmatmul.bf16.gmra.mxu0 %v972
    %v5244 = vpop.f32.mrf.mxu0
    %v5245 = vadd.f32 %v5231, %v5244
    %v5246 = vpop.f32.mrf.mxu0
    %v5247 = vadd.f32 %v5233, %v5246
    %5248 = vdwg.mxu0
    %5249 = vmatpush.bf16.msra.mxu0 %v3478
    %5250 = vmatpush.bf16.msra.mxu0 %v3474
    %5251 = vmatpush.bf16.msra.mxu0 %v3470
    %5252 = vmatpush.bf16.msra.mxu0 %v3466
    %5253 = vmatpush.bf16.msra.mxu0 %v3462
    %5254 = vmatpush.bf16.msra.mxu0 %v3458
    %5255 = vmatpush.bf16.msra.mxu0 %v3454
    %5256 = vmatpush.bf16.msra.mxu0 %v3450
    %5257 = vmatmul.bf16.gmra.mxu0 %v973
    %v5258 = vpop.f32.mrf.mxu0
    %v5259 = vadd.f32 %v5245, %v5258
    %v5260 = vpop.f32.mrf.mxu0
    %v5261 = vadd.f32 %v5247, %v5260
    %5262 = vdwg.mxu0
    %5263 = vmatpush.bf16.msra.mxu0 %v3510
    %5264 = vmatpush.bf16.msra.mxu0 %v3506
    %5265 = vmatpush.bf16.msra.mxu0 %v3502
    %5266 = vmatpush.bf16.msra.mxu0 %v3498
    %5267 = vmatpush.bf16.msra.mxu0 %v3494
    %5268 = vmatpush.bf16.msra.mxu0 %v3490
    %5269 = vmatpush.bf16.msra.mxu0 %v3486
    %5270 = vmatpush.bf16.msra.mxu0 %v3482
    %5271 = vmatmul.bf16.gmra.mxu0 %v974
    %v5272 = vpop.f32.mrf.mxu0
    %v5273 = vadd.f32 %v5259, %v5272
    %v5274 = vpop.f32.mrf.mxu0
    %v5275 = vadd.f32 %v5261, %v5274
    %5276 = vdwg.mxu0
    %5277 = vmatpush.bf16.msra.mxu0 %v3542
    %5278 = vmatpush.bf16.msra.mxu0 %v3538
    %5279 = vmatpush.bf16.msra.mxu0 %v3534
    %5280 = vmatpush.bf16.msra.mxu0 %v3530
    %5281 = vmatpush.bf16.msra.mxu0 %v3526
    %5282 = vmatpush.bf16.msra.mxu0 %v3522
    %5283 = vmatpush.bf16.msra.mxu0 %v3518
    %5284 = vmatpush.bf16.msra.mxu0 %v3514
    %5285 = vmatmul.bf16.gmra.mxu0 %v975
    %v5286 = vpop.f32.mrf.mxu0
    %v5287 = vadd.f32 %v5273, %v5286
    %v5288 = vpop.f32.mrf.mxu0
    %v5289 = vadd.f32 %v5275, %v5288
    %5290 = vdwg.mxu0
    %5291 = vmatpush.bf16.msra.mxu0 %v3574
    %5292 = vmatpush.bf16.msra.mxu0 %v3570
    %5293 = vmatpush.bf16.msra.mxu0 %v3566
    %5294 = vmatpush.bf16.msra.mxu0 %v3562
    %5295 = vmatpush.bf16.msra.mxu0 %v3558
    %5296 = vmatpush.bf16.msra.mxu0 %v3554
    %5297 = vmatpush.bf16.msra.mxu0 %v3550
    %5298 = vmatpush.bf16.msra.mxu0 %v3546
    %5299 = vmatmul.bf16.gmra.mxu0 %v976
    %v5300 = vpop.f32.mrf.mxu0
    %v5301 = vadd.f32 %v5287, %v5300
    %v5302 = vpop.f32.mrf.mxu0
    %v5303 = vadd.f32 %v5289, %v5302
    %5304 = vdwg.mxu0
    %5305 = vmatpush.bf16.msra.mxu0 %v3606
    %5306 = vmatpush.bf16.msra.mxu0 %v3602
    %5307 = vmatpush.bf16.msra.mxu0 %v3598
    %5308 = vmatpush.bf16.msra.mxu0 %v3594
    %5309 = vmatpush.bf16.msra.mxu0 %v3590
    %5310 = vmatpush.bf16.msra.mxu0 %v3586
    %5311 = vmatpush.bf16.msra.mxu0 %v3582
    %5312 = vmatpush.bf16.msra.mxu0 %v3578
    %5313 = vmatmul.bf16.gmra.mxu0 %v977
    %v5314 = vpop.f32.mrf.mxu0
    %v5315 = vadd.f32 %v5301, %v5314
    %v5316 = vpop.f32.mrf.mxu0
    %v5317 = vadd.f32 %v5303, %v5316
    %5318 = vdwg.mxu0
    %5319 = vmatpush.bf16.msra.mxu0 %v3638
    %5320 = vmatpush.bf16.msra.mxu0 %v3634
    %5321 = vmatpush.bf16.msra.mxu0 %v3630
    %5322 = vmatpush.bf16.msra.mxu0 %v3626
    %5323 = vmatpush.bf16.msra.mxu0 %v3622
    %5324 = vmatpush.bf16.msra.mxu0 %v3618
    %5325 = vmatpush.bf16.msra.mxu0 %v3614
    %5326 = vmatpush.bf16.msra.mxu0 %v3610
    %5327 = vmatmul.bf16.gmra.mxu0 %v978
    %v5328 = vpop.f32.mrf.mxu0
    %v5329 = vadd.f32 %v5315, %v5328
    %v5330 = vpop.f32.mrf.mxu0
    %v5331 = vadd.f32 %v5317, %v5330
    %5332 = vdwg.mxu0
    %5333 = vmatpush.bf16.msra.mxu0 %v3670
    %5334 = vmatpush.bf16.msra.mxu0 %v3666
    %5335 = vmatpush.bf16.msra.mxu0 %v3662
    %5336 = vmatpush.bf16.msra.mxu0 %v3658
    %5337 = vmatpush.bf16.msra.mxu0 %v3654
    %5338 = vmatpush.bf16.msra.mxu0 %v3650
    %5339 = vmatpush.bf16.msra.mxu0 %v3646
    %5340 = vmatpush.bf16.msra.mxu0 %v3642
    %5341 = vmatmul.bf16.gmra.mxu0 %v979
    %v5342 = vpop.f32.mrf.mxu0
    %v5343 = vadd.f32 %v5329, %v5342
    %v5344 = vpop.f32.mrf.mxu0
    %v5345 = vadd.f32 %v5331, %v5344
    %5346 = vdwg.mxu0
    %5347 = vmatpush.bf16.msra.mxu0 %v3702
    %5348 = vmatpush.bf16.msra.mxu0 %v3698
    %5349 = vmatpush.bf16.msra.mxu0 %v3694
    %5350 = vmatpush.bf16.msra.mxu0 %v3690
    %5351 = vmatpush.bf16.msra.mxu0 %v3686
    %5352 = vmatpush.bf16.msra.mxu0 %v3682
    %5353 = vmatpush.bf16.msra.mxu0 %v3678
    %5354 = vmatpush.bf16.msra.mxu0 %v3674
    %5355 = vmatmul.bf16.gmra.mxu0 %v980
    %v5356 = vpop.f32.mrf.mxu0
    %v5357 = vadd.f32 %v5343, %v5356
    %v5358 = vpop.f32.mrf.mxu0
    %v5359 = vadd.f32 %v5345, %v5358
    %5360 = vdwg.mxu0
    %5361 = vmatpush.bf16.msra.mxu0 %v3734
    %5362 = vmatpush.bf16.msra.mxu0 %v3730
    %5363 = vmatpush.bf16.msra.mxu0 %v3726
    %5364 = vmatpush.bf16.msra.mxu0 %v3722
    %5365 = vmatpush.bf16.msra.mxu0 %v3718
    %5366 = vmatpush.bf16.msra.mxu0 %v3714
    %5367 = vmatpush.bf16.msra.mxu0 %v3710
    %5368 = vmatpush.bf16.msra.mxu0 %v3706
    %5369 = vmatmul.bf16.gmra.mxu0 %v981
    %v5370 = vpop.f32.mrf.mxu0
    %v5371 = vadd.f32 %v5357, %v5370
    %v5372 = vpop.f32.mrf.mxu0
    %v5373 = vadd.f32 %v5359, %v5372
    %5374 = vdwg.mxu0
    %5375 = vmatpush.bf16.msra.mxu0 %v3766
    %5376 = vmatpush.bf16.msra.mxu0 %v3762
    %5377 = vmatpush.bf16.msra.mxu0 %v3758
    %5378 = vmatpush.bf16.msra.mxu0 %v3754
    %5379 = vmatpush.bf16.msra.mxu0 %v3750
    %5380 = vmatpush.bf16.msra.mxu0 %v3746
    %5381 = vmatpush.bf16.msra.mxu0 %v3742
    %5382 = vmatpush.bf16.msra.mxu0 %v3738
    %5383 = vmatmul.bf16.gmra.mxu0 %v982
    %v5384 = vpop.f32.mrf.mxu0
    %v5385 = vadd.f32 %v5371, %v5384
    %v5386 = vpop.f32.mrf.mxu0
    %v5387 = vadd.f32 %v5373, %v5386
    %5388 = vdwg.mxu0
    %5389 = vmatpush.bf16.msra.mxu0 %v3798
    %5390 = vmatpush.bf16.msra.mxu0 %v3794
    %5391 = vmatpush.bf16.msra.mxu0 %v3790
    %5392 = vmatpush.bf16.msra.mxu0 %v3786
    %5393 = vmatpush.bf16.msra.mxu0 %v3782
    %5394 = vmatpush.bf16.msra.mxu0 %v3778
    %5395 = vmatpush.bf16.msra.mxu0 %v3774
    %5396 = vmatpush.bf16.msra.mxu0 %v3770
    %5397 = vmatmul.bf16.gmra.mxu0 %v983
    %v5398 = vpop.f32.mrf.mxu0
    %v5399 = vadd.f32 %v5385, %v5398
    %v5400 = vpop.f32.mrf.mxu0
    %v5401 = vadd.f32 %v5387, %v5400
    %5402 = vdwg.mxu0
    %5403 = vmatpush.bf16.msra.mxu0 %v3830
    %5404 = vmatpush.bf16.msra.mxu0 %v3826
    %5405 = vmatpush.bf16.msra.mxu0 %v3822
    %5406 = vmatpush.bf16.msra.mxu0 %v3818
    %5407 = vmatpush.bf16.msra.mxu0 %v3814
    %5408 = vmatpush.bf16.msra.mxu0 %v3810
    %5409 = vmatpush.bf16.msra.mxu0 %v3806
    %5410 = vmatpush.bf16.msra.mxu0 %v3802
    %5411 = vmatmul.bf16.gmra.mxu0 %v984
    %v5412 = vpop.f32.mrf.mxu0
    %v5413 = vadd.f32 %v5399, %v5412
    %v5414 = vpop.f32.mrf.mxu0
    %v5415 = vadd.f32 %v5401, %v5414
    %5416 = vdwg.mxu0
    %5417 = vmatpush.bf16.msra.mxu0 %v3862
    %5418 = vmatpush.bf16.msra.mxu0 %v3858
    %5419 = vmatpush.bf16.msra.mxu0 %v3854
    %5420 = vmatpush.bf16.msra.mxu0 %v3850
    %5421 = vmatpush.bf16.msra.mxu0 %v3846
    %5422 = vmatpush.bf16.msra.mxu0 %v3842
    %5423 = vmatpush.bf16.msra.mxu0 %v3838
    %5424 = vmatpush.bf16.msra.mxu0 %v3834
    %5425 = vmatmul.bf16.gmra.mxu0 %v985
    %v5426 = vpop.f32.mrf.mxu0
    %v5427 = vadd.f32 %v5413, %v5426
    %v5428 = vpop.f32.mrf.mxu0
    %v5429 = vadd.f32 %v5415, %v5428
    %5430 = vdwg.mxu0
    %5431 = vmatpush.bf16.msra.mxu0 %v3894
    %5432 = vmatpush.bf16.msra.mxu0 %v3890
    %5433 = vmatpush.bf16.msra.mxu0 %v3886
    %5434 = vmatpush.bf16.msra.mxu0 %v3882
    %5435 = vmatpush.bf16.msra.mxu0 %v3878
    %5436 = vmatpush.bf16.msra.mxu0 %v3874
    %5437 = vmatpush.bf16.msra.mxu0 %v3870
    %5438 = vmatpush.bf16.msra.mxu0 %v3866
    %5439 = vmatmul.bf16.gmra.mxu0 %v986
    %v5440 = vpop.f32.mrf.mxu0
    %v5441 = vadd.f32 %v5427, %v5440
    %v5442 = vpop.f32.mrf.mxu0
    %v5443 = vadd.f32 %v5429, %v5442
    %5444 = vdwg.mxu0
    %5445 = vmatpush.bf16.msra.mxu0 %v3926
    %5446 = vmatpush.bf16.msra.mxu0 %v3922
    %5447 = vmatpush.bf16.msra.mxu0 %v3918
    %5448 = vmatpush.bf16.msra.mxu0 %v3914
    %5449 = vmatpush.bf16.msra.mxu0 %v3910
    %5450 = vmatpush.bf16.msra.mxu0 %v3906
    %5451 = vmatpush.bf16.msra.mxu0 %v3902
    %5452 = vmatpush.bf16.msra.mxu0 %v3898
    %5453 = vmatmul.bf16.gmra.mxu0 %v987
    %v5454 = vpop.f32.mrf.mxu0
    %v5455 = vadd.f32 %v5441, %v5454
    %v5456 = vpop.f32.mrf.mxu0
    %v5457 = vadd.f32 %v5443, %v5456
    %5458 = vdwg.mxu0
    %5459 = vmatpush.bf16.msra.mxu0 %v3958
    %5460 = vmatpush.bf16.msra.mxu0 %v3954
    %5461 = vmatpush.bf16.msra.mxu0 %v3950
    %5462 = vmatpush.bf16.msra.mxu0 %v3946
    %5463 = vmatpush.bf16.msra.mxu0 %v3942
    %5464 = vmatpush.bf16.msra.mxu0 %v3938
    %5465 = vmatpush.bf16.msra.mxu0 %v3934
    %5466 = vmatpush.bf16.msra.mxu0 %v3930
    %5467 = vmatmul.bf16.gmra.mxu0 %v988
    %v5468 = vpop.f32.mrf.mxu0
    %v5469 = vadd.f32 %v5455, %v5468
    %v5470 = vpop.f32.mrf.mxu0
    %v5471 = vadd.f32 %v5457, %v5470
    %5472 = vdwg.mxu0
    %5473 = vmatpush.bf16.msra.mxu0 %v3990
    %5474 = vmatpush.bf16.msra.mxu0 %v3986
    %5475 = vmatpush.bf16.msra.mxu0 %v3982
    %5476 = vmatpush.bf16.msra.mxu0 %v3978
    %5477 = vmatpush.bf16.msra.mxu0 %v3974
    %5478 = vmatpush.bf16.msra.mxu0 %v3970
    %5479 = vmatpush.bf16.msra.mxu0 %v3966
    %5480 = vmatpush.bf16.msra.mxu0 %v3962
    %5481 = vmatmul.bf16.gmra.mxu0 %v989
    %v5482 = vpop.f32.mrf.mxu0
    %v5483 = vadd.f32 %v5469, %v5482
    %v5484 = vpop.f32.mrf.mxu0
    %v5485 = vadd.f32 %v5471, %v5484
    %5486 = vdwg.mxu0
    %5487 = vmatpush.bf16.msra.mxu0 %v4022
    %5488 = vmatpush.bf16.msra.mxu0 %v4018
    %5489 = vmatpush.bf16.msra.mxu0 %v4014
    %5490 = vmatpush.bf16.msra.mxu0 %v4010
    %5491 = vmatpush.bf16.msra.mxu0 %v4006
    %5492 = vmatpush.bf16.msra.mxu0 %v4002
    %5493 = vmatpush.bf16.msra.mxu0 %v3998
    %5494 = vmatpush.bf16.msra.mxu0 %v3994
    %5495 = vmatmul.bf16.gmra.mxu0 %v990
    %v5496 = vpop.f32.mrf.mxu0
    %v5497 = vadd.f32 %v5483, %v5496
    %v5498 = vpop.f32.mrf.mxu0
    %v5499 = vadd.f32 %v5485, %v5498
    %5500 = vdwg.mxu0
    %5501 = vmatpush.bf16.msra.mxu0 %v4054
    %5502 = vmatpush.bf16.msra.mxu0 %v4050
    %5503 = vmatpush.bf16.msra.mxu0 %v4046
    %5504 = vmatpush.bf16.msra.mxu0 %v4042
    %5505 = vmatpush.bf16.msra.mxu0 %v4038
    %5506 = vmatpush.bf16.msra.mxu0 %v4034
    %5507 = vmatpush.bf16.msra.mxu0 %v4030
    %5508 = vmatpush.bf16.msra.mxu0 %v4026
    %5509 = vmatmul.bf16.gmra.mxu0 %v991
    %v5510 = vpop.f32.mrf.mxu0
    %v5511 = vadd.f32 %v5497, %v5510
    %v5512 = vpop.f32.mrf.mxu0
    %v5513 = vadd.f32 %v5499, %v5512
    %5514 = vdwg.mxu0
    %5515 = vmatpush.bf16.msra.mxu0 %v4086
    %5516 = vmatpush.bf16.msra.mxu0 %v4082
    %5517 = vmatpush.bf16.msra.mxu0 %v4078
    %5518 = vmatpush.bf16.msra.mxu0 %v4074
    %5519 = vmatpush.bf16.msra.mxu0 %v4070
    %5520 = vmatpush.bf16.msra.mxu0 %v4066
    %5521 = vmatpush.bf16.msra.mxu0 %v4062
    %5522 = vmatpush.bf16.msra.mxu0 %v4058
    %5523 = vmatmul.bf16.gmra.mxu0 %v992
    %v5524 = vpop.f32.mrf.mxu0
    %v5525 = vadd.f32 %v5511, %v5524
    %v5526 = vpop.f32.mrf.mxu0
    %v5527 = vadd.f32 %v5513, %v5526
    %5528 = vdwg.mxu0
    %5529 = vmatpush.bf16.msra.mxu0 %v3351
    %5530 = vmatpush.bf16.msra.mxu0 %v3347
    %5531 = vmatpush.bf16.msra.mxu0 %v3343
    %5532 = vmatpush.bf16.msra.mxu0 %v3339
    %5533 = vmatpush.bf16.msra.mxu0 %v3335
    %5534 = vmatpush.bf16.msra.mxu0 %v3331
    %5535 = vmatpush.bf16.msra.mxu0 %v3327
    %5536 = vmatpush.bf16.msra.mxu0 %v3323
    %5537 = vmatmul.bf16.gmra.mxu0 %v969
    %v5538 = vpop.f32.mrf.mxu0
    %v5539 = vadd.f32 %v891, %v5538
    %v5540 = vpop.f32.mrf.mxu0
    %v5541 = vadd.f32 %v891, %v5540
    %5542 = vdwg.mxu0
    %5543 = vmatpush.bf16.msra.mxu0 %v3383
    %5544 = vmatpush.bf16.msra.mxu0 %v3379
    %5545 = vmatpush.bf16.msra.mxu0 %v3375
    %5546 = vmatpush.bf16.msra.mxu0 %v3371
    %5547 = vmatpush.bf16.msra.mxu0 %v3367
    %5548 = vmatpush.bf16.msra.mxu0 %v3363
    %5549 = vmatpush.bf16.msra.mxu0 %v3359
    %5550 = vmatpush.bf16.msra.mxu0 %v3355
    %5551 = vmatmul.bf16.gmra.mxu0 %v970
    %v5552 = vpop.f32.mrf.mxu0
    %v5553 = vadd.f32 %v5539, %v5552
    %v5554 = vpop.f32.mrf.mxu0
    %v5555 = vadd.f32 %v5541, %v5554
    %5556 = vdwg.mxu0
    %5557 = vmatpush.bf16.msra.mxu0 %v3415
    %5558 = vmatpush.bf16.msra.mxu0 %v3411
    %5559 = vmatpush.bf16.msra.mxu0 %v3407
    %5560 = vmatpush.bf16.msra.mxu0 %v3403
    %5561 = vmatpush.bf16.msra.mxu0 %v3399
    %5562 = vmatpush.bf16.msra.mxu0 %v3395
    %5563 = vmatpush.bf16.msra.mxu0 %v3391
    %5564 = vmatpush.bf16.msra.mxu0 %v3387
    %5565 = vmatmul.bf16.gmra.mxu0 %v971
    %v5566 = vpop.f32.mrf.mxu0
    %v5567 = vadd.f32 %v5553, %v5566
    %v5568 = vpop.f32.mrf.mxu0
    %v5569 = vadd.f32 %v5555, %v5568
    %5570 = vdwg.mxu0
    %5571 = vmatpush.bf16.msra.mxu0 %v3447
    %5572 = vmatpush.bf16.msra.mxu0 %v3443
    %5573 = vmatpush.bf16.msra.mxu0 %v3439
    %5574 = vmatpush.bf16.msra.mxu0 %v3435
    %5575 = vmatpush.bf16.msra.mxu0 %v3431
    %5576 = vmatpush.bf16.msra.mxu0 %v3427
    %5577 = vmatpush.bf16.msra.mxu0 %v3423
    %5578 = vmatpush.bf16.msra.mxu0 %v3419
    %5579 = vmatmul.bf16.gmra.mxu0 %v972
    %v5580 = vpop.f32.mrf.mxu0
    %v5581 = vadd.f32 %v5567, %v5580
    %v5582 = vpop.f32.mrf.mxu0
    %v5583 = vadd.f32 %v5569, %v5582
    %5584 = vdwg.mxu0
    %5585 = vmatpush.bf16.msra.mxu0 %v3479
    %5586 = vmatpush.bf16.msra.mxu0 %v3475
    %5587 = vmatpush.bf16.msra.mxu0 %v3471
    %5588 = vmatpush.bf16.msra.mxu0 %v3467
    %5589 = vmatpush.bf16.msra.mxu0 %v3463
    %5590 = vmatpush.bf16.msra.mxu0 %v3459
    %5591 = vmatpush.bf16.msra.mxu0 %v3455
    %5592 = vmatpush.bf16.msra.mxu0 %v3451
    %5593 = vmatmul.bf16.gmra.mxu0 %v973
    %v5594 = vpop.f32.mrf.mxu0
    %v5595 = vadd.f32 %v5581, %v5594
    %v5596 = vpop.f32.mrf.mxu0
    %v5597 = vadd.f32 %v5583, %v5596
    %5598 = vdwg.mxu0
    %5599 = vmatpush.bf16.msra.mxu0 %v3511
    %5600 = vmatpush.bf16.msra.mxu0 %v3507
    %5601 = vmatpush.bf16.msra.mxu0 %v3503
    %5602 = vmatpush.bf16.msra.mxu0 %v3499
    %5603 = vmatpush.bf16.msra.mxu0 %v3495
    %5604 = vmatpush.bf16.msra.mxu0 %v3491
    %5605 = vmatpush.bf16.msra.mxu0 %v3487
    %5606 = vmatpush.bf16.msra.mxu0 %v3483
    %5607 = vmatmul.bf16.gmra.mxu0 %v974
    %v5608 = vpop.f32.mrf.mxu0
    %v5609 = vadd.f32 %v5595, %v5608
    %v5610 = vpop.f32.mrf.mxu0
    %v5611 = vadd.f32 %v5597, %v5610
    %5612 = vdwg.mxu0
    %5613 = vmatpush.bf16.msra.mxu0 %v3543
    %5614 = vmatpush.bf16.msra.mxu0 %v3539
    %5615 = vmatpush.bf16.msra.mxu0 %v3535
    %5616 = vmatpush.bf16.msra.mxu0 %v3531
    %5617 = vmatpush.bf16.msra.mxu0 %v3527
    %5618 = vmatpush.bf16.msra.mxu0 %v3523
    %5619 = vmatpush.bf16.msra.mxu0 %v3519
    %5620 = vmatpush.bf16.msra.mxu0 %v3515
    %5621 = vmatmul.bf16.gmra.mxu0 %v975
    %v5622 = vpop.f32.mrf.mxu0
    %v5623 = vadd.f32 %v5609, %v5622
    %v5624 = vpop.f32.mrf.mxu0
    %v5625 = vadd.f32 %v5611, %v5624
    %5626 = vdwg.mxu0
    %5627 = vmatpush.bf16.msra.mxu0 %v3575
    %5628 = vmatpush.bf16.msra.mxu0 %v3571
    %5629 = vmatpush.bf16.msra.mxu0 %v3567
    %5630 = vmatpush.bf16.msra.mxu0 %v3563
    %5631 = vmatpush.bf16.msra.mxu0 %v3559
    %5632 = vmatpush.bf16.msra.mxu0 %v3555
    %5633 = vmatpush.bf16.msra.mxu0 %v3551
    %5634 = vmatpush.bf16.msra.mxu0 %v3547
    %5635 = vmatmul.bf16.gmra.mxu0 %v976
    %v5636 = vpop.f32.mrf.mxu0
    %v5637 = vadd.f32 %v5623, %v5636
    %v5638 = vpop.f32.mrf.mxu0
    %v5639 = vadd.f32 %v5625, %v5638
    %5640 = vdwg.mxu0
    %5641 = vmatpush.bf16.msra.mxu0 %v3607
    %5642 = vmatpush.bf16.msra.mxu0 %v3603
    %5643 = vmatpush.bf16.msra.mxu0 %v3599
    %5644 = vmatpush.bf16.msra.mxu0 %v3595
    %5645 = vmatpush.bf16.msra.mxu0 %v3591
    %5646 = vmatpush.bf16.msra.mxu0 %v3587
    %5647 = vmatpush.bf16.msra.mxu0 %v3583
    %5648 = vmatpush.bf16.msra.mxu0 %v3579
    %5649 = vmatmul.bf16.gmra.mxu0 %v977
    %v5650 = vpop.f32.mrf.mxu0
    %v5651 = vadd.f32 %v5637, %v5650
    %v5652 = vpop.f32.mrf.mxu0
    %v5653 = vadd.f32 %v5639, %v5652
    %5654 = vdwg.mxu0
    %5655 = vmatpush.bf16.msra.mxu0 %v3639
    %5656 = vmatpush.bf16.msra.mxu0 %v3635
    %5657 = vmatpush.bf16.msra.mxu0 %v3631
    %5658 = vmatpush.bf16.msra.mxu0 %v3627
    %5659 = vmatpush.bf16.msra.mxu0 %v3623
    %5660 = vmatpush.bf16.msra.mxu0 %v3619
    %5661 = vmatpush.bf16.msra.mxu0 %v3615
    %5662 = vmatpush.bf16.msra.mxu0 %v3611
    %5663 = vmatmul.bf16.gmra.mxu0 %v978
    %v5664 = vpop.f32.mrf.mxu0
    %v5665 = vadd.f32 %v5651, %v5664
    %v5666 = vpop.f32.mrf.mxu0
    %v5667 = vadd.f32 %v5653, %v5666
    %5668 = vdwg.mxu0
    %5669 = vmatpush.bf16.msra.mxu0 %v3671
    %5670 = vmatpush.bf16.msra.mxu0 %v3667
    %5671 = vmatpush.bf16.msra.mxu0 %v3663
    %5672 = vmatpush.bf16.msra.mxu0 %v3659
    %5673 = vmatpush.bf16.msra.mxu0 %v3655
    %5674 = vmatpush.bf16.msra.mxu0 %v3651
    %5675 = vmatpush.bf16.msra.mxu0 %v3647
    %5676 = vmatpush.bf16.msra.mxu0 %v3643
    %5677 = vmatmul.bf16.gmra.mxu0 %v979
    %v5678 = vpop.f32.mrf.mxu0
    %v5679 = vadd.f32 %v5665, %v5678
    %v5680 = vpop.f32.mrf.mxu0
    %v5681 = vadd.f32 %v5667, %v5680
    %5682 = vdwg.mxu0
    %5683 = vmatpush.bf16.msra.mxu0 %v3703
    %5684 = vmatpush.bf16.msra.mxu0 %v3699
    %5685 = vmatpush.bf16.msra.mxu0 %v3695
    %5686 = vmatpush.bf16.msra.mxu0 %v3691
    %5687 = vmatpush.bf16.msra.mxu0 %v3687
    %5688 = vmatpush.bf16.msra.mxu0 %v3683
    %5689 = vmatpush.bf16.msra.mxu0 %v3679
    %5690 = vmatpush.bf16.msra.mxu0 %v3675
    %5691 = vmatmul.bf16.gmra.mxu0 %v980
    %v5692 = vpop.f32.mrf.mxu0
    %v5693 = vadd.f32 %v5679, %v5692
    %v5694 = vpop.f32.mrf.mxu0
    %v5695 = vadd.f32 %v5681, %v5694
    %5696 = vdwg.mxu0
    %5697 = vmatpush.bf16.msra.mxu0 %v3735
    %5698 = vmatpush.bf16.msra.mxu0 %v3731
    %5699 = vmatpush.bf16.msra.mxu0 %v3727
    %5700 = vmatpush.bf16.msra.mxu0 %v3723
    %5701 = vmatpush.bf16.msra.mxu0 %v3719
    %5702 = vmatpush.bf16.msra.mxu0 %v3715
    %5703 = vmatpush.bf16.msra.mxu0 %v3711
    %5704 = vmatpush.bf16.msra.mxu0 %v3707
    %5705 = vmatmul.bf16.gmra.mxu0 %v981
    %v5706 = vpop.f32.mrf.mxu0
    %v5707 = vadd.f32 %v5693, %v5706
    %v5708 = vpop.f32.mrf.mxu0
    %v5709 = vadd.f32 %v5695, %v5708
    %5710 = vdwg.mxu0
    %5711 = vmatpush.bf16.msra.mxu0 %v3767
    %5712 = vmatpush.bf16.msra.mxu0 %v3763
    %5713 = vmatpush.bf16.msra.mxu0 %v3759
    %5714 = vmatpush.bf16.msra.mxu0 %v3755
    %5715 = vmatpush.bf16.msra.mxu0 %v3751
    %5716 = vmatpush.bf16.msra.mxu0 %v3747
    %5717 = vmatpush.bf16.msra.mxu0 %v3743
    %5718 = vmatpush.bf16.msra.mxu0 %v3739
    %5719 = vmatmul.bf16.gmra.mxu0 %v982
    %v5720 = vpop.f32.mrf.mxu0
    %v5721 = vadd.f32 %v5707, %v5720
    %v5722 = vpop.f32.mrf.mxu0
    %v5723 = vadd.f32 %v5709, %v5722
    %5724 = vdwg.mxu0
    %5725 = vmatpush.bf16.msra.mxu0 %v3799
    %5726 = vmatpush.bf16.msra.mxu0 %v3795
    %5727 = vmatpush.bf16.msra.mxu0 %v3791
    %5728 = vmatpush.bf16.msra.mxu0 %v3787
    %5729 = vmatpush.bf16.msra.mxu0 %v3783
    %5730 = vmatpush.bf16.msra.mxu0 %v3779
    %5731 = vmatpush.bf16.msra.mxu0 %v3775
    %5732 = vmatpush.bf16.msra.mxu0 %v3771
    %5733 = vmatmul.bf16.gmra.mxu0 %v983
    %v5734 = vpop.f32.mrf.mxu0
    %v5735 = vadd.f32 %v5721, %v5734
    %v5736 = vpop.f32.mrf.mxu0
    %v5737 = vadd.f32 %v5723, %v5736
    %5738 = vdwg.mxu0
    %5739 = vmatpush.bf16.msra.mxu0 %v3831
    %5740 = vmatpush.bf16.msra.mxu0 %v3827
    %5741 = vmatpush.bf16.msra.mxu0 %v3823
    %5742 = vmatpush.bf16.msra.mxu0 %v3819
    %5743 = vmatpush.bf16.msra.mxu0 %v3815
    %5744 = vmatpush.bf16.msra.mxu0 %v3811
    %5745 = vmatpush.bf16.msra.mxu0 %v3807
    %5746 = vmatpush.bf16.msra.mxu0 %v3803
    %5747 = vmatmul.bf16.gmra.mxu0 %v984
    %v5748 = vpop.f32.mrf.mxu0
    %v5749 = vadd.f32 %v5735, %v5748
    %v5750 = vpop.f32.mrf.mxu0
    %v5751 = vadd.f32 %v5737, %v5750
    %5752 = vdwg.mxu0
    %5753 = vmatpush.bf16.msra.mxu0 %v3863
    %5754 = vmatpush.bf16.msra.mxu0 %v3859
    %5755 = vmatpush.bf16.msra.mxu0 %v3855
    %5756 = vmatpush.bf16.msra.mxu0 %v3851
    %5757 = vmatpush.bf16.msra.mxu0 %v3847
    %5758 = vmatpush.bf16.msra.mxu0 %v3843
    %5759 = vmatpush.bf16.msra.mxu0 %v3839
    %5760 = vmatpush.bf16.msra.mxu0 %v3835
    %5761 = vmatmul.bf16.gmra.mxu0 %v985
    %v5762 = vpop.f32.mrf.mxu0
    %v5763 = vadd.f32 %v5749, %v5762
    %v5764 = vpop.f32.mrf.mxu0
    %v5765 = vadd.f32 %v5751, %v5764
    %5766 = vdwg.mxu0
    %5767 = vmatpush.bf16.msra.mxu0 %v3895
    %5768 = vmatpush.bf16.msra.mxu0 %v3891
    %5769 = vmatpush.bf16.msra.mxu0 %v3887
    %5770 = vmatpush.bf16.msra.mxu0 %v3883
    %5771 = vmatpush.bf16.msra.mxu0 %v3879
    %5772 = vmatpush.bf16.msra.mxu0 %v3875
    %5773 = vmatpush.bf16.msra.mxu0 %v3871
    %5774 = vmatpush.bf16.msra.mxu0 %v3867
    %5775 = vmatmul.bf16.gmra.mxu0 %v986
    %v5776 = vpop.f32.mrf.mxu0
    %v5777 = vadd.f32 %v5763, %v5776
    %v5778 = vpop.f32.mrf.mxu0
    %v5779 = vadd.f32 %v5765, %v5778
    %5780 = vdwg.mxu0
    %5781 = vmatpush.bf16.msra.mxu0 %v3927
    %5782 = vmatpush.bf16.msra.mxu0 %v3923
    %5783 = vmatpush.bf16.msra.mxu0 %v3919
    %5784 = vmatpush.bf16.msra.mxu0 %v3915
    %5785 = vmatpush.bf16.msra.mxu0 %v3911
    %5786 = vmatpush.bf16.msra.mxu0 %v3907
    %5787 = vmatpush.bf16.msra.mxu0 %v3903
    %5788 = vmatpush.bf16.msra.mxu0 %v3899
    %5789 = vmatmul.bf16.gmra.mxu0 %v987
    %v5790 = vpop.f32.mrf.mxu0
    %v5791 = vadd.f32 %v5777, %v5790
    %v5792 = vpop.f32.mrf.mxu0
    %v5793 = vadd.f32 %v5779, %v5792
    %5794 = vdwg.mxu0
    %5795 = vmatpush.bf16.msra.mxu0 %v3959
    %5796 = vmatpush.bf16.msra.mxu0 %v3955
    %5797 = vmatpush.bf16.msra.mxu0 %v3951
    %5798 = vmatpush.bf16.msra.mxu0 %v3947
    %5799 = vmatpush.bf16.msra.mxu0 %v3943
    %5800 = vmatpush.bf16.msra.mxu0 %v3939
    %5801 = vmatpush.bf16.msra.mxu0 %v3935
    %5802 = vmatpush.bf16.msra.mxu0 %v3931
    %5803 = vmatmul.bf16.gmra.mxu0 %v988
    %v5804 = vpop.f32.mrf.mxu0
    %v5805 = vadd.f32 %v5791, %v5804
    %v5806 = vpop.f32.mrf.mxu0
    %v5807 = vadd.f32 %v5793, %v5806
    %5808 = vdwg.mxu0
    %5809 = vmatpush.bf16.msra.mxu0 %v3991
    %5810 = vmatpush.bf16.msra.mxu0 %v3987
    %5811 = vmatpush.bf16.msra.mxu0 %v3983
    %5812 = vmatpush.bf16.msra.mxu0 %v3979
    %5813 = vmatpush.bf16.msra.mxu0 %v3975
    %5814 = vmatpush.bf16.msra.mxu0 %v3971
    %5815 = vmatpush.bf16.msra.mxu0 %v3967
    %5816 = vmatpush.bf16.msra.mxu0 %v3963
    %5817 = vmatmul.bf16.gmra.mxu0 %v989
    %v5818 = vpop.f32.mrf.mxu0
    %v5819 = vadd.f32 %v5805, %v5818
    %v5820 = vpop.f32.mrf.mxu0
    %v5821 = vadd.f32 %v5807, %v5820
    %5822 = vdwg.mxu0
    %5823 = vmatpush.bf16.msra.mxu0 %v4023
    %5824 = vmatpush.bf16.msra.mxu0 %v4019
    %5825 = vmatpush.bf16.msra.mxu0 %v4015
    %5826 = vmatpush.bf16.msra.mxu0 %v4011
    %5827 = vmatpush.bf16.msra.mxu0 %v4007
    %5828 = vmatpush.bf16.msra.mxu0 %v4003
    %5829 = vmatpush.bf16.msra.mxu0 %v3999
    %5830 = vmatpush.bf16.msra.mxu0 %v3995
    %5831 = vmatmul.bf16.gmra.mxu0 %v990
    %v5832 = vpop.f32.mrf.mxu0
    %v5833 = vadd.f32 %v5819, %v5832
    %v5834 = vpop.f32.mrf.mxu0
    %v5835 = vadd.f32 %v5821, %v5834
    %5836 = vdwg.mxu0
    %5837 = vmatpush.bf16.msra.mxu0 %v4055
    %5838 = vmatpush.bf16.msra.mxu0 %v4051
    %5839 = vmatpush.bf16.msra.mxu0 %v4047
    %5840 = vmatpush.bf16.msra.mxu0 %v4043
    %5841 = vmatpush.bf16.msra.mxu0 %v4039
    %5842 = vmatpush.bf16.msra.mxu0 %v4035
    %5843 = vmatpush.bf16.msra.mxu0 %v4031
    %5844 = vmatpush.bf16.msra.mxu0 %v4027
    %5845 = vmatmul.bf16.gmra.mxu0 %v991
    %v5846 = vpop.f32.mrf.mxu0
    %v5847 = vadd.f32 %v5833, %v5846
    %v5848 = vpop.f32.mrf.mxu0
    %v5849 = vadd.f32 %v5835, %v5848
    %5850 = vdwg.mxu0
    %5851 = vmatpush.bf16.msra.mxu0 %v4087
    %5852 = vmatpush.bf16.msra.mxu0 %v4083
    %5853 = vmatpush.bf16.msra.mxu0 %v4079
    %5854 = vmatpush.bf16.msra.mxu0 %v4075
    %5855 = vmatpush.bf16.msra.mxu0 %v4071
    %5856 = vmatpush.bf16.msra.mxu0 %v4067
    %5857 = vmatpush.bf16.msra.mxu0 %v4063
    %5858 = vmatpush.bf16.msra.mxu0 %v4059
    %5859 = vmatmul.bf16.gmra.mxu0 %v992
    %v5860 = vpop.f32.mrf.mxu0
    %v5861 = vadd.f32 %v5847, %v5860
    %v5862 = vpop.f32.mrf.mxu0
    %v5863 = vadd.f32 %v5849, %v5862
    %5864 = vdwg.mxu0
    %5865 = vmatpush.bf16.msra.mxu0 %v3352
    %5866 = vmatpush.bf16.msra.mxu0 %v3348
    %5867 = vmatpush.bf16.msra.mxu0 %v3344
    %5868 = vmatpush.bf16.msra.mxu0 %v3340
    %5869 = vmatpush.bf16.msra.mxu0 %v3336
    %5870 = vmatpush.bf16.msra.mxu0 %v3332
    %5871 = vmatpush.bf16.msra.mxu0 %v3328
    %5872 = vmatpush.bf16.msra.mxu0 %v3324
    %5873 = vmatmul.bf16.gmra.mxu0 %v969
    %v5874 = vpop.f32.mrf.mxu0
    %v5875 = vadd.f32 %v892, %v5874
    %v5876 = vpop.f32.mrf.mxu0
    %v5877 = vadd.f32 %v892, %v5876
    %5878 = vdwg.mxu0
    %5879 = vmatpush.bf16.msra.mxu0 %v3384
    %5880 = vmatpush.bf16.msra.mxu0 %v3380
    %5881 = vmatpush.bf16.msra.mxu0 %v3376
    %5882 = vmatpush.bf16.msra.mxu0 %v3372
    %5883 = vmatpush.bf16.msra.mxu0 %v3368
    %5884 = vmatpush.bf16.msra.mxu0 %v3364
    %5885 = vmatpush.bf16.msra.mxu0 %v3360
    %5886 = vmatpush.bf16.msra.mxu0 %v3356
    %5887 = vmatmul.bf16.gmra.mxu0 %v970
    %v5888 = vpop.f32.mrf.mxu0
    %v5889 = vadd.f32 %v5875, %v5888
    %v5890 = vpop.f32.mrf.mxu0
    %v5891 = vadd.f32 %v5877, %v5890
    %5892 = vdwg.mxu0
    %5893 = vmatpush.bf16.msra.mxu0 %v3416
    %5894 = vmatpush.bf16.msra.mxu0 %v3412
    %5895 = vmatpush.bf16.msra.mxu0 %v3408
    %5896 = vmatpush.bf16.msra.mxu0 %v3404
    %5897 = vmatpush.bf16.msra.mxu0 %v3400
    %5898 = vmatpush.bf16.msra.mxu0 %v3396
    %5899 = vmatpush.bf16.msra.mxu0 %v3392
    %5900 = vmatpush.bf16.msra.mxu0 %v3388
    %5901 = vmatmul.bf16.gmra.mxu0 %v971
    %v5902 = vpop.f32.mrf.mxu0
    %v5903 = vadd.f32 %v5889, %v5902
    %v5904 = vpop.f32.mrf.mxu0
    %v5905 = vadd.f32 %v5891, %v5904
    %5906 = vdwg.mxu0
    %5907 = vmatpush.bf16.msra.mxu0 %v3448
    %5908 = vmatpush.bf16.msra.mxu0 %v3444
    %5909 = vmatpush.bf16.msra.mxu0 %v3440
    %5910 = vmatpush.bf16.msra.mxu0 %v3436
    %5911 = vmatpush.bf16.msra.mxu0 %v3432
    %5912 = vmatpush.bf16.msra.mxu0 %v3428
    %5913 = vmatpush.bf16.msra.mxu0 %v3424
    %5914 = vmatpush.bf16.msra.mxu0 %v3420
    %5915 = vmatmul.bf16.gmra.mxu0 %v972
    %v5916 = vpop.f32.mrf.mxu0
    %v5917 = vadd.f32 %v5903, %v5916
    %v5918 = vpop.f32.mrf.mxu0
    %v5919 = vadd.f32 %v5905, %v5918
    %5920 = vdwg.mxu0
    %5921 = vmatpush.bf16.msra.mxu0 %v3480
    %5922 = vmatpush.bf16.msra.mxu0 %v3476
    %5923 = vmatpush.bf16.msra.mxu0 %v3472
    %5924 = vmatpush.bf16.msra.mxu0 %v3468
    %5925 = vmatpush.bf16.msra.mxu0 %v3464
    %5926 = vmatpush.bf16.msra.mxu0 %v3460
    %5927 = vmatpush.bf16.msra.mxu0 %v3456
    %5928 = vmatpush.bf16.msra.mxu0 %v3452
    %5929 = vmatmul.bf16.gmra.mxu0 %v973
    %v5930 = vpop.f32.mrf.mxu0
    %v5931 = vadd.f32 %v5917, %v5930
    %v5932 = vpop.f32.mrf.mxu0
    %v5933 = vadd.f32 %v5919, %v5932
    %5934 = vdwg.mxu0
    %5935 = vmatpush.bf16.msra.mxu0 %v3512
    %5936 = vmatpush.bf16.msra.mxu0 %v3508
    %5937 = vmatpush.bf16.msra.mxu0 %v3504
    %5938 = vmatpush.bf16.msra.mxu0 %v3500
    %5939 = vmatpush.bf16.msra.mxu0 %v3496
    %5940 = vmatpush.bf16.msra.mxu0 %v3492
    %5941 = vmatpush.bf16.msra.mxu0 %v3488
    %5942 = vmatpush.bf16.msra.mxu0 %v3484
    %5943 = vmatmul.bf16.gmra.mxu0 %v974
    %v5944 = vpop.f32.mrf.mxu0
    %v5945 = vadd.f32 %v5931, %v5944
    %v5946 = vpop.f32.mrf.mxu0
    %v5947 = vadd.f32 %v5933, %v5946
    %5948 = vdwg.mxu0
    %5949 = vmatpush.bf16.msra.mxu0 %v3544
    %5950 = vmatpush.bf16.msra.mxu0 %v3540
    %5951 = vmatpush.bf16.msra.mxu0 %v3536
    %5952 = vmatpush.bf16.msra.mxu0 %v3532
    %5953 = vmatpush.bf16.msra.mxu0 %v3528
    %5954 = vmatpush.bf16.msra.mxu0 %v3524
    %5955 = vmatpush.bf16.msra.mxu0 %v3520
    %5956 = vmatpush.bf16.msra.mxu0 %v3516
    %5957 = vmatmul.bf16.gmra.mxu0 %v975
    %v5958 = vpop.f32.mrf.mxu0
    %v5959 = vadd.f32 %v5945, %v5958
    %v5960 = vpop.f32.mrf.mxu0
    %v5961 = vadd.f32 %v5947, %v5960
    %5962 = vdwg.mxu0
    %5963 = vmatpush.bf16.msra.mxu0 %v3576
    %5964 = vmatpush.bf16.msra.mxu0 %v3572
    %5965 = vmatpush.bf16.msra.mxu0 %v3568
    %5966 = vmatpush.bf16.msra.mxu0 %v3564
    %5967 = vmatpush.bf16.msra.mxu0 %v3560
    %5968 = vmatpush.bf16.msra.mxu0 %v3556
    %5969 = vmatpush.bf16.msra.mxu0 %v3552
    %5970 = vmatpush.bf16.msra.mxu0 %v3548
    %5971 = vmatmul.bf16.gmra.mxu0 %v976
    %v5972 = vpop.f32.mrf.mxu0
    %v5973 = vadd.f32 %v5959, %v5972
    %v5974 = vpop.f32.mrf.mxu0
    %v5975 = vadd.f32 %v5961, %v5974
    %5976 = vdwg.mxu0
    %5977 = vmatpush.bf16.msra.mxu0 %v3608
    %5978 = vmatpush.bf16.msra.mxu0 %v3604
    %5979 = vmatpush.bf16.msra.mxu0 %v3600
    %5980 = vmatpush.bf16.msra.mxu0 %v3596
    %5981 = vmatpush.bf16.msra.mxu0 %v3592
    %5982 = vmatpush.bf16.msra.mxu0 %v3588
    %5983 = vmatpush.bf16.msra.mxu0 %v3584
    %5984 = vmatpush.bf16.msra.mxu0 %v3580
    %5985 = vmatmul.bf16.gmra.mxu0 %v977
    %v5986 = vpop.f32.mrf.mxu0
    %v5987 = vadd.f32 %v5973, %v5986
    %v5988 = vpop.f32.mrf.mxu0
    %v5989 = vadd.f32 %v5975, %v5988
    %5990 = vdwg.mxu0
    %5991 = vmatpush.bf16.msra.mxu0 %v3640
    %5992 = vmatpush.bf16.msra.mxu0 %v3636
    %5993 = vmatpush.bf16.msra.mxu0 %v3632
    %5994 = vmatpush.bf16.msra.mxu0 %v3628
    %5995 = vmatpush.bf16.msra.mxu0 %v3624
    %5996 = vmatpush.bf16.msra.mxu0 %v3620
    %5997 = vmatpush.bf16.msra.mxu0 %v3616
    %5998 = vmatpush.bf16.msra.mxu0 %v3612
    %5999 = vmatmul.bf16.gmra.mxu0 %v978
    %v6000 = vpop.f32.mrf.mxu0
    %v6001 = vadd.f32 %v5987, %v6000
    %v6002 = vpop.f32.mrf.mxu0
    %v6003 = vadd.f32 %v5989, %v6002
    %6004 = vdwg.mxu0
    %6005 = vmatpush.bf16.msra.mxu0 %v3672
    %6006 = vmatpush.bf16.msra.mxu0 %v3668
    %6007 = vmatpush.bf16.msra.mxu0 %v3664
    %6008 = vmatpush.bf16.msra.mxu0 %v3660
    %6009 = vmatpush.bf16.msra.mxu0 %v3656
    %6010 = vmatpush.bf16.msra.mxu0 %v3652
    %6011 = vmatpush.bf16.msra.mxu0 %v3648
    %6012 = vmatpush.bf16.msra.mxu0 %v3644
    %6013 = vmatmul.bf16.gmra.mxu0 %v979
    %v6014 = vpop.f32.mrf.mxu0
    %v6015 = vadd.f32 %v6001, %v6014
    %v6016 = vpop.f32.mrf.mxu0
    %v6017 = vadd.f32 %v6003, %v6016
    %6018 = vdwg.mxu0
    %6019 = vmatpush.bf16.msra.mxu0 %v3704
    %6020 = vmatpush.bf16.msra.mxu0 %v3700
    %6021 = vmatpush.bf16.msra.mxu0 %v3696
    %6022 = vmatpush.bf16.msra.mxu0 %v3692
    %6023 = vmatpush.bf16.msra.mxu0 %v3688
    %6024 = vmatpush.bf16.msra.mxu0 %v3684
    %6025 = vmatpush.bf16.msra.mxu0 %v3680
    %6026 = vmatpush.bf16.msra.mxu0 %v3676
    %6027 = vmatmul.bf16.gmra.mxu0 %v980
    %v6028 = vpop.f32.mrf.mxu0
    %v6029 = vadd.f32 %v6015, %v6028
    %v6030 = vpop.f32.mrf.mxu0
    %v6031 = vadd.f32 %v6017, %v6030
    %6032 = vdwg.mxu0
    %6033 = vmatpush.bf16.msra.mxu0 %v3736
    %6034 = vmatpush.bf16.msra.mxu0 %v3732
    %6035 = vmatpush.bf16.msra.mxu0 %v3728
    %6036 = vmatpush.bf16.msra.mxu0 %v3724
    %6037 = vmatpush.bf16.msra.mxu0 %v3720
    %6038 = vmatpush.bf16.msra.mxu0 %v3716
    %6039 = vmatpush.bf16.msra.mxu0 %v3712
    %6040 = vmatpush.bf16.msra.mxu0 %v3708
    %6041 = vmatmul.bf16.gmra.mxu0 %v981
    %v6042 = vpop.f32.mrf.mxu0
    %v6043 = vadd.f32 %v6029, %v6042
    %v6044 = vpop.f32.mrf.mxu0
    %v6045 = vadd.f32 %v6031, %v6044
    %6046 = vdwg.mxu0
    %6047 = vmatpush.bf16.msra.mxu0 %v3768
    %6048 = vmatpush.bf16.msra.mxu0 %v3764
    %6049 = vmatpush.bf16.msra.mxu0 %v3760
    %6050 = vmatpush.bf16.msra.mxu0 %v3756
    %6051 = vmatpush.bf16.msra.mxu0 %v3752
    %6052 = vmatpush.bf16.msra.mxu0 %v3748
    %6053 = vmatpush.bf16.msra.mxu0 %v3744
    %6054 = vmatpush.bf16.msra.mxu0 %v3740
    %6055 = vmatmul.bf16.gmra.mxu0 %v982
    %v6056 = vpop.f32.mrf.mxu0
    %v6057 = vadd.f32 %v6043, %v6056
    %v6058 = vpop.f32.mrf.mxu0
    %v6059 = vadd.f32 %v6045, %v6058
    %6060 = vdwg.mxu0
    %6061 = vmatpush.bf16.msra.mxu0 %v3800
    %6062 = vmatpush.bf16.msra.mxu0 %v3796
    %6063 = vmatpush.bf16.msra.mxu0 %v3792
    %6064 = vmatpush.bf16.msra.mxu0 %v3788
    %6065 = vmatpush.bf16.msra.mxu0 %v3784
    %6066 = vmatpush.bf16.msra.mxu0 %v3780
    %6067 = vmatpush.bf16.msra.mxu0 %v3776
    %6068 = vmatpush.bf16.msra.mxu0 %v3772
    %6069 = vmatmul.bf16.gmra.mxu0 %v983
    %v6070 = vpop.f32.mrf.mxu0
    %v6071 = vadd.f32 %v6057, %v6070
    %v6072 = vpop.f32.mrf.mxu0
    %v6073 = vadd.f32 %v6059, %v6072
    %6074 = vdwg.mxu0
    %6075 = vmatpush.bf16.msra.mxu0 %v3832
    %6076 = vmatpush.bf16.msra.mxu0 %v3828
    %6077 = vmatpush.bf16.msra.mxu0 %v3824
    %6078 = vmatpush.bf16.msra.mxu0 %v3820
    %6079 = vmatpush.bf16.msra.mxu0 %v3816
    %6080 = vmatpush.bf16.msra.mxu0 %v3812
    %6081 = vmatpush.bf16.msra.mxu0 %v3808
    %6082 = vmatpush.bf16.msra.mxu0 %v3804
    %6083 = vmatmul.bf16.gmra.mxu0 %v984
    %v6084 = vpop.f32.mrf.mxu0
    %v6085 = vadd.f32 %v6071, %v6084
    %v6086 = vpop.f32.mrf.mxu0
    %v6087 = vadd.f32 %v6073, %v6086
    %6088 = vdwg.mxu0
    %6089 = vmatpush.bf16.msra.mxu0 %v3864
    %6090 = vmatpush.bf16.msra.mxu0 %v3860
    %6091 = vmatpush.bf16.msra.mxu0 %v3856
    %6092 = vmatpush.bf16.msra.mxu0 %v3852
    %6093 = vmatpush.bf16.msra.mxu0 %v3848
    %6094 = vmatpush.bf16.msra.mxu0 %v3844
    %6095 = vmatpush.bf16.msra.mxu0 %v3840
    %6096 = vmatpush.bf16.msra.mxu0 %v3836
    %6097 = vmatmul.bf16.gmra.mxu0 %v985
    %v6098 = vpop.f32.mrf.mxu0
    %v6099 = vadd.f32 %v6085, %v6098
    %v6100 = vpop.f32.mrf.mxu0
    %v6101 = vadd.f32 %v6087, %v6100
    %6102 = vdwg.mxu0
    %6103 = vmatpush.bf16.msra.mxu0 %v3896
    %6104 = vmatpush.bf16.msra.mxu0 %v3892
    %6105 = vmatpush.bf16.msra.mxu0 %v3888
    %6106 = vmatpush.bf16.msra.mxu0 %v3884
    %6107 = vmatpush.bf16.msra.mxu0 %v3880
    %6108 = vmatpush.bf16.msra.mxu0 %v3876
    %6109 = vmatpush.bf16.msra.mxu0 %v3872
    %6110 = vmatpush.bf16.msra.mxu0 %v3868
    %6111 = vmatmul.bf16.gmra.mxu0 %v986
    %v6112 = vpop.f32.mrf.mxu0
    %v6113 = vadd.f32 %v6099, %v6112
    %v6114 = vpop.f32.mrf.mxu0
    %v6115 = vadd.f32 %v6101, %v6114
    %6116 = vdwg.mxu0
    %6117 = vmatpush.bf16.msra.mxu0 %v3928
    %6118 = vmatpush.bf16.msra.mxu0 %v3924
    %6119 = vmatpush.bf16.msra.mxu0 %v3920
    %6120 = vmatpush.bf16.msra.mxu0 %v3916
    %6121 = vmatpush.bf16.msra.mxu0 %v3912
    %6122 = vmatpush.bf16.msra.mxu0 %v3908
    %6123 = vmatpush.bf16.msra.mxu0 %v3904
    %6124 = vmatpush.bf16.msra.mxu0 %v3900
    %6125 = vmatmul.bf16.gmra.mxu0 %v987
    %v6126 = vpop.f32.mrf.mxu0
    %v6127 = vadd.f32 %v6113, %v6126
    %v6128 = vpop.f32.mrf.mxu0
    %v6129 = vadd.f32 %v6115, %v6128
    %6130 = vdwg.mxu0
    %6131 = vmatpush.bf16.msra.mxu0 %v3960
    %6132 = vmatpush.bf16.msra.mxu0 %v3956
    %6133 = vmatpush.bf16.msra.mxu0 %v3952
    %6134 = vmatpush.bf16.msra.mxu0 %v3948
    %6135 = vmatpush.bf16.msra.mxu0 %v3944
    %6136 = vmatpush.bf16.msra.mxu0 %v3940
    %6137 = vmatpush.bf16.msra.mxu0 %v3936
    %6138 = vmatpush.bf16.msra.mxu0 %v3932
    %6139 = vmatmul.bf16.gmra.mxu0 %v988
    %v6140 = vpop.f32.mrf.mxu0
    %v6141 = vadd.f32 %v6127, %v6140
    %v6142 = vpop.f32.mrf.mxu0
    %v6143 = vadd.f32 %v6129, %v6142
    %6144 = vdwg.mxu0
    %6145 = vmatpush.bf16.msra.mxu0 %v3992
    %6146 = vmatpush.bf16.msra.mxu0 %v3988
    %6147 = vmatpush.bf16.msra.mxu0 %v3984
    %6148 = vmatpush.bf16.msra.mxu0 %v3980
    %6149 = vmatpush.bf16.msra.mxu0 %v3976
    %6150 = vmatpush.bf16.msra.mxu0 %v3972
    %6151 = vmatpush.bf16.msra.mxu0 %v3968
    %6152 = vmatpush.bf16.msra.mxu0 %v3964
    %6153 = vmatmul.bf16.gmra.mxu0 %v989
    %v6154 = vpop.f32.mrf.mxu0
    %v6155 = vadd.f32 %v6141, %v6154
    %v6156 = vpop.f32.mrf.mxu0
    %v6157 = vadd.f32 %v6143, %v6156
    %6158 = vdwg.mxu0
    %6159 = vmatpush.bf16.msra.mxu0 %v4024
    %6160 = vmatpush.bf16.msra.mxu0 %v4020
    %6161 = vmatpush.bf16.msra.mxu0 %v4016
    %6162 = vmatpush.bf16.msra.mxu0 %v4012
    %6163 = vmatpush.bf16.msra.mxu0 %v4008
    %6164 = vmatpush.bf16.msra.mxu0 %v4004
    %6165 = vmatpush.bf16.msra.mxu0 %v4000
    %6166 = vmatpush.bf16.msra.mxu0 %v3996
    %6167 = vmatmul.bf16.gmra.mxu0 %v990
    %v6168 = vpop.f32.mrf.mxu0
    %v6169 = vadd.f32 %v6155, %v6168
    %v6170 = vpop.f32.mrf.mxu0
    %v6171 = vadd.f32 %v6157, %v6170
    %6172 = vdwg.mxu0
    %6173 = vmatpush.bf16.msra.mxu0 %v4056
    %6174 = vmatpush.bf16.msra.mxu0 %v4052
    %6175 = vmatpush.bf16.msra.mxu0 %v4048
    %6176 = vmatpush.bf16.msra.mxu0 %v4044
    %6177 = vmatpush.bf16.msra.mxu0 %v4040
    %6178 = vmatpush.bf16.msra.mxu0 %v4036
    %6179 = vmatpush.bf16.msra.mxu0 %v4032
    %6180 = vmatpush.bf16.msra.mxu0 %v4028
    %6181 = vmatmul.bf16.gmra.mxu0 %v991
    %v6182 = vpop.f32.mrf.mxu0
    %v6183 = vadd.f32 %v6169, %v6182
    %v6184 = vpop.f32.mrf.mxu0
    %v6185 = vadd.f32 %v6171, %v6184
    %6186 = vdwg.mxu0
    %6187 = vmatpush.bf16.msra.mxu0 %v4088
    %6188 = vmatpush.bf16.msra.mxu0 %v4084
    %6189 = vmatpush.bf16.msra.mxu0 %v4080
    %6190 = vmatpush.bf16.msra.mxu0 %v4076
    %6191 = vmatpush.bf16.msra.mxu0 %v4072
    %6192 = vmatpush.bf16.msra.mxu0 %v4068
    %6193 = vmatpush.bf16.msra.mxu0 %v4064
    %6194 = vmatpush.bf16.msra.mxu0 %v4060
    %6195 = vmatmul.bf16.gmra.mxu0 %v992
    %v6196 = vpop.f32.mrf.mxu0
    %v6197 = vadd.f32 %v6183, %v6196
    %v6198 = vpop.f32.mrf.mxu0
    %v6199 = vadd.f32 %v6185, %v6198
    %6200 = vdwg.mxu0
    %v6201 = vmax.f32 %v5189, 0.0
    %v6202 = vmax.f32 %v5525, 0.0
    %v6203 = vmax.f32 %v5861, 0.0
    %v6204 = vmax.f32 %v6197, 0.0
    %v6205 = vmax.f32 %v5191, 0.0
    %v6206 = vmax.f32 %v5527, 0.0
    %v6207 = vmax.f32 %v5863, 0.0
    %v6208 = vmax.f32 %v6199, 0.0
    %v6209 = vpack.c.bf16 %v6205, %v6201
    %v6210 = vpack.c.bf16 %v6206, %v6202
    %v6211 = vpack.c.bf16 %v6207, %v6203
    %v6212 = vpack.c.bf16 %v6208, %v6204
    %v6213 = vld [vmem:[#allocation8] sm:$0xf]
    %v6214 = vld [vmem:[#allocation8 + $0x4] sm:$0xf]
    %v6215 = vld [vmem:[#allocation8 + $0x8] sm:$0xf]
    %v6216 = vld [vmem:[#allocation8 + $0xc] sm:$0xf]
    %v6217 = vld [vmem:[#allocation8 + $0x10] sm:$0xf]
    %v6218 = vld [vmem:[#allocation8 + $0x14] sm:$0xf]
    %v6219 = vld [vmem:[#allocation8 + $0x18] sm:$0xf]
    %v6220 = vld [vmem:[#allocation8 + $0x1c] sm:$0xf]
    %v6221 = vld [vmem:[#allocation8 + $0x20] sm:$0xf]
    %v6222 = vld [vmem:[#allocation8 + $0x24] sm:$0xf]
    %v6223 = vld [vmem:[#allocation8 + $0x28] sm:$0xf]
    %v6224 = vld [vmem:[#allocation8 + $0x2c] sm:$0xf]
    %v6225 = vld [vmem:[#allocation8 + $0x30] sm:$0xf]
    %v6226 = vld [vmem:[#allocation8 + $0x34] sm:$0xf]
    %v6227 = vld [vmem:[#allocation8 + $0x38] sm:$0xf]
    %v6228 = vld [vmem:[#allocation8 + $0x3c] sm:$0xf]
    %v6229 = vld [vmem:[#allocation8 + $0x40] sm:$0xf]
    %v6230 = vld [vmem:[#allocation8 + $0x44] sm:$0xf]
    %v6231 = vld [vmem:[#allocation8 + $0x48] sm:$0xf]
    %v6232 = vld [vmem:[#allocation8 + $0x4c] sm:$0xf]
    %v6233 = vld [vmem:[#allocation8 + $0x50] sm:$0xf]
    %v6234 = vld [vmem:[#allocation8 + $0x54] sm:$0xf]
    %v6235 = vld [vmem:[#allocation8 + $0x58] sm:$0xf]
    %v6236 = vld [vmem:[#allocation8 + $0x5c] sm:$0xf]
    %v6237 = vld [vmem:[#allocation8 + $0x60] sm:$0xf]
    %v6238 = vld [vmem:[#allocation8 + $0x64] sm:$0xf]
    %v6239 = vld [vmem:[#allocation8 + $0x68] sm:$0xf]
    %v6240 = vld [vmem:[#allocation8 + $0x6c] sm:$0xf]
    %v6241 = vld [vmem:[#allocation8 + $0x70] sm:$0xf]
    %v6242 = vld [vmem:[#allocation8 + $0x74] sm:$0xf]
    %v6243 = vld [vmem:[#allocation8 + $0x78] sm:$0xf]
    %v6244 = vld [vmem:[#allocation8 + $0x7c] sm:$0xf]
    %v6245 = vld [vmem:[#allocation8 + $0x80] sm:$0xf]
    %v6246 = vld [vmem:[#allocation8 + $0x84] sm:$0xf]
    %v6247 = vld [vmem:[#allocation8 + $0x88] sm:$0xf]
    %v6248 = vld [vmem:[#allocation8 + $0x8c] sm:$0xf]
    %v6249 = vld [vmem:[#allocation8 + $0x90] sm:$0xf]
    %v6250 = vld [vmem:[#allocation8 + $0x94] sm:$0xf]
    %v6251 = vld [vmem:[#allocation8 + $0x98] sm:$0xf]
    %v6252 = vld [vmem:[#allocation8 + $0x9c] sm:$0xf]
    %v6253 = vld [vmem:[#allocation8 + $0xa0] sm:$0xf]
    %v6254 = vld [vmem:[#allocation8 + $0xa4] sm:$0xf]
    %v6255 = vld [vmem:[#allocation8 + $0xa8] sm:$0xf]
    %v6256 = vld [vmem:[#allocation8 + $0xac] sm:$0xf]
    %v6257 = vld [vmem:[#allocation8 + $0xb0] sm:$0xf]
    %v6258 = vld [vmem:[#allocation8 + $0xb4] sm:$0xf]
    %v6259 = vld [vmem:[#allocation8 + $0xb8] sm:$0xf]
    %v6260 = vld [vmem:[#allocation8 + $0xbc] sm:$0xf]
    %v6261 = vld [vmem:[#allocation8 + $0xc0] sm:$0xf]
    %v6262 = vld [vmem:[#allocation8 + $0xc4] sm:$0xf]
    %v6263 = vld [vmem:[#allocation8 + $0xc8] sm:$0xf]
    %v6264 = vld [vmem:[#allocation8 + $0xcc] sm:$0xf]
    %v6265 = vld [vmem:[#allocation8 + $0xd0] sm:$0xf]
    %v6266 = vld [vmem:[#allocation8 + $0xd4] sm:$0xf]
    %v6267 = vld [vmem:[#allocation8 + $0xd8] sm:$0xf]
    %v6268 = vld [vmem:[#allocation8 + $0xdc] sm:$0xf]
    %v6269 = vld [vmem:[#allocation8 + $0xe0] sm:$0xf]
    %v6270 = vld [vmem:[#allocation8 + $0xe4] sm:$0xf]
    %v6271 = vld [vmem:[#allocation8 + $0xe8] sm:$0xf]
    %v6272 = vld [vmem:[#allocation8 + $0xec] sm:$0xf]
    %v6273 = vld [vmem:[#allocation8 + $0xf0] sm:$0xf]
    %v6274 = vld [vmem:[#allocation8 + $0xf4] sm:$0xf]
    %v6275 = vld [vmem:[#allocation8 + $0xf8] sm:$0xf]
    %v6276 = vld [vmem:[#allocation8 + $0xfc] sm:$0xf]
    %v6277 = vld [vmem:[#allocation10] sm:$0x1]
    %v6279 = vperm.slane %v6277, 0
    %v6345 = vunpack.c.l.b16 %v6213
    %v6346 = vunpack.c.l.b16 %v6214
    %v6347 = vunpack.c.l.b16 %v6215
    %v6348 = vunpack.c.l.b16 %v6216
    %v6349 = vunpack.c.l.b16 %v6217
    %v6350 = vunpack.c.l.b16 %v6218
    %v6351 = vunpack.c.l.b16 %v6219
    %v6352 = vunpack.c.l.b16 %v6220
    %v6353 = vunpack.c.l.b16 %v6221
    %v6354 = vunpack.c.l.b16 %v6222
    %v6355 = vunpack.c.l.b16 %v6223
    %v6356 = vunpack.c.l.b16 %v6224
    %v6357 = vunpack.c.l.b16 %v6225
    %v6358 = vunpack.c.l.b16 %v6226
    %v6359 = vunpack.c.l.b16 %v6227
    %v6360 = vunpack.c.l.b16 %v6228
    %v6361 = vunpack.c.l.b16 %v6229
    %v6362 = vunpack.c.l.b16 %v6230
    %v6363 = vunpack.c.l.b16 %v6231
    %v6364 = vunpack.c.l.b16 %v6232
    %v6365 = vunpack.c.l.b16 %v6233
    %v6366 = vunpack.c.l.b16 %v6234
    %v6367 = vunpack.c.l.b16 %v6235
    %v6368 = vunpack.c.l.b16 %v6236
    %v6369 = vunpack.c.l.b16 %v6237
    %v6370 = vunpack.c.l.b16 %v6238
    %v6371 = vunpack.c.l.b16 %v6239
    %v6372 = vunpack.c.l.b16 %v6240
    %v6373 = vunpack.c.l.b16 %v6241
    %v6374 = vunpack.c.l.b16 %v6242
    %v6375 = vunpack.c.l.b16 %v6243
    %v6376 = vunpack.c.l.b16 %v6244
    %v6377 = vunpack.c.l.b16 %v6245
    %v6378 = vunpack.c.l.b16 %v6246
    %v6379 = vunpack.c.l.b16 %v6247
    %v6380 = vunpack.c.l.b16 %v6248
    %v6381 = vunpack.c.l.b16 %v6249
    %v6382 = vunpack.c.l.b16 %v6250
    %v6383 = vunpack.c.l.b16 %v6251
    %v6384 = vunpack.c.l.b16 %v6252
    %v6385 = vunpack.c.l.b16 %v6253
    %v6386 = vunpack.c.l.b16 %v6254
    %v6387 = vunpack.c.l.b16 %v6255
    %v6388 = vunpack.c.l.b16 %v6256
    %v6389 = vunpack.c.l.b16 %v6257
    %v6390 = vunpack.c.l.b16 %v6258
    %v6391 = vunpack.c.l.b16 %v6259
    %v6392 = vunpack.c.l.b16 %v6260
    %v6393 = vunpack.c.l.b16 %v6261
    %v6394 = vunpack.c.l.b16 %v6262
    %v6395 = vunpack.c.l.b16 %v6263
    %v6396 = vunpack.c.l.b16 %v6264
    %v6397 = vunpack.c.l.b16 %v6265
    %v6398 = vunpack.c.l.b16 %v6266
    %v6399 = vunpack.c.l.b16 %v6267
    %v6400 = vunpack.c.l.b16 %v6268
    %v6401 = vunpack.c.l.b16 %v6269
    %v6402 = vunpack.c.l.b16 %v6270
    %v6403 = vunpack.c.l.b16 %v6271
    %v6404 = vunpack.c.l.b16 %v6272
    %v6405 = vunpack.c.l.b16 %v6273
    %v6406 = vunpack.c.l.b16 %v6274
    %v6407 = vunpack.c.l.b16 %v6275
    %v6408 = vunpack.c.l.b16 %v6276
    %v6409 = vpack.c.b16 %v6346, %v6345
    %v6410 = vpack.c.b16 %v6348, %v6347
    %v6411 = vpack.c.b16 %v6350, %v6349
    %v6412 = vpack.c.b16 %v6352, %v6351
    %v6413 = vpack.c.b16 %v6354, %v6353
    %v6414 = vpack.c.b16 %v6356, %v6355
    %v6415 = vpack.c.b16 %v6358, %v6357
    %v6416 = vpack.c.b16 %v6360, %v6359
    %v6417 = vpack.c.b16 %v6362, %v6361
    %v6418 = vpack.c.b16 %v6364, %v6363
    %v6419 = vpack.c.b16 %v6366, %v6365
    %v6420 = vpack.c.b16 %v6368, %v6367
    %v6421 = vpack.c.b16 %v6370, %v6369
    %v6422 = vpack.c.b16 %v6372, %v6371
    %v6423 = vpack.c.b16 %v6374, %v6373
    %v6424 = vpack.c.b16 %v6376, %v6375
    %v6425 = vpack.c.b16 %v6378, %v6377
    %v6426 = vpack.c.b16 %v6380, %v6379
    %v6427 = vpack.c.b16 %v6382, %v6381
    %v6428 = vpack.c.b16 %v6384, %v6383
    %v6429 = vpack.c.b16 %v6386, %v6385
    %v6430 = vpack.c.b16 %v6388, %v6387
    %v6431 = vpack.c.b16 %v6390, %v6389
    %v6432 = vpack.c.b16 %v6392, %v6391
    %v6433 = vpack.c.b16 %v6394, %v6393
    %v6434 = vpack.c.b16 %v6396, %v6395
    %v6435 = vpack.c.b16 %v6398, %v6397
    %v6436 = vpack.c.b16 %v6400, %v6399
    %v6437 = vpack.c.b16 %v6402, %v6401
    %v6438 = vpack.c.b16 %v6404, %v6403
    %v6439 = vpack.c.b16 %v6406, %v6405
    %v6440 = vpack.c.b16 %v6408, %v6407
    %6473 = vmatpush.bf16.msra.mxu0 %v6416
    %6474 = vmatpush.bf16.msra.mxu0 %v6415
    %6475 = vmatpush.bf16.msra.mxu0 %v6414
    %6476 = vmatpush.bf16.msra.mxu0 %v6413
    %6477 = vmatpush.bf16.msra.mxu0 %v6412
    %6478 = vmatpush.bf16.msra.mxu0 %v6411
    %6479 = vmatpush.bf16.msra.mxu0 %v6410
    %6480 = vmatpush.bf16.msra.mxu0 %v6409
    %6481 = vmatmul.bf16.gmra.mxu0 %v6209
    %v6482 = vpop.f32.mrf.mxu0
    %v6483 = vadd.f32 %v6279, %v6482
    %v6484 = vpop.f32.mrf.mxu0
    %v6485 = vadd.f32 %v6279, %v6484
    %6486 = vdwg.mxu0
    %6487 = vmatpush.bf16.msra.mxu0 %v6424
    %6488 = vmatpush.bf16.msra.mxu0 %v6423
    %6489 = vmatpush.bf16.msra.mxu0 %v6422
    %6490 = vmatpush.bf16.msra.mxu0 %v6421
    %6491 = vmatpush.bf16.msra.mxu0 %v6420
    %6492 = vmatpush.bf16.msra.mxu0 %v6419
    %6493 = vmatpush.bf16.msra.mxu0 %v6418
    %6494 = vmatpush.bf16.msra.mxu0 %v6417
    %6495 = vmatmul.bf16.gmra.mxu0 %v6210
    %v6496 = vpop.f32.mrf.mxu0
    %v6497 = vadd.f32 %v6483, %v6496
    %v6498 = vpop.f32.mrf.mxu0
    %v6499 = vadd.f32 %v6485, %v6498
    %6500 = vdwg.mxu0
    %6501 = vmatpush.bf16.msra.mxu0 %v6432
    %6502 = vmatpush.bf16.msra.mxu0 %v6431
    %6503 = vmatpush.bf16.msra.mxu0 %v6430
    %6504 = vmatpush.bf16.msra.mxu0 %v6429
    %6505 = vmatpush.bf16.msra.mxu0 %v6428
    %6506 = vmatpush.bf16.msra.mxu0 %v6427
    %6507 = vmatpush.bf16.msra.mxu0 %v6426
    %6508 = vmatpush.bf16.msra.mxu0 %v6425
    %6509 = vmatmul.bf16.gmra.mxu0 %v6211
    %v6510 = vpop.f32.mrf.mxu0
    %v6511 = vadd.f32 %v6497, %v6510
    %v6512 = vpop.f32.mrf.mxu0
    %v6513 = vadd.f32 %v6499, %v6512
    %6514 = vdwg.mxu0
    %6515 = vmatpush.bf16.msra.mxu0 %v6440
    %6516 = vmatpush.bf16.msra.mxu0 %v6439
    %6517 = vmatpush.bf16.msra.mxu0 %v6438
    %6518 = vmatpush.bf16.msra.mxu0 %v6437
    %6519 = vmatpush.bf16.msra.mxu0 %v6436
    %6520 = vmatpush.bf16.msra.mxu0 %v6435
    %6521 = vmatpush.bf16.msra.mxu0 %v6434
    %6522 = vmatpush.bf16.msra.mxu0 %v6433
    %6523 = vmatmul.bf16.gmra.mxu0 %v6212
    %v6524 = vpop.f32.mrf.mxu0
    %v6525 = vadd.f32 %v6511, %v6524
    %v6526 = vpop.f32.mrf.mxu0
    %v6527 = vadd.f32 %v6513, %v6526
    %6528 = vdwg.mxu0
    %6529 = vst [vmem:[#allocation11] sm:$0xff] %v6525
    %6530 = vst [vmem:[#allocation11 + $0x8] sm:$0xff] %v6527
    // Predicated region
    $region42: #{tpu_custom_call.1} parent=1 // pred_check
      _
    $region43: #{tpu_custom_call.1} parent=1 // pred_check_branch
      %6532 = sbr.rel (0) target = $region45
    $region44: #{tpu_custom_call.1} parent=1 // pred_region
      %6534 = vsyncadd [#allocation4], 0
      %s6535 = sshll.u32 [#allocation11], 4
      %s6536 = int_to_ptr.vmem [resolvable:$true] %s6535
      %s6537 = sshll.u32 %s5, 4
      %s6538 = int_to_ptr.hbm [resolvable:$true] %s6537
      %6543 = dma.vmem_to_hbm [thread:$0]  %s6536, 256, %s6538, [#allocation4], 128, 128, 8
    $region45: #{tpu_custom_call.1} parent=1 // pred_fallthru
      _
    // Predicated region
    $region46: #{tpu_custom_call.1} parent=1 // pred_check
      _
    $region47: #{tpu_custom_call.1} parent=1 // pred_check_branch
      %6545 = sbr.rel (0) target = $region49
    $region48: #{tpu_custom_call.1} parent=1 // pred_region
      %6547 = dma.done [#allocation4], 256
    $region49: #{tpu_custom_call.1} parent=1 // pred_fallthru
      _
    %6548 = vsyncpa [#allocation3], 1
    %6549 = vsyncpa [#allocation6], 1
    %6550 = vsyncpa [#allocation9], 1
    %6551 = vsyncpa [#allocation4], 1

// kernel: tpu_custom_call.1
$region0: #{tpu_custom_call.1}
  #allocation0 [shape = 'u32[]', space=smem, size = 0x4, offset = 0x4, fixed_abs, tag = 'smem constant byte address 0x4 - core index']
  #allocation1 [shape = 'u32[72,128]{1,0:T(1,128)}', space=vmem, size = 0x9000, scoped, tag = 'internal scratch']
  %s0 = inlined_call_operand.hbm [shape: bf16[16,3072], index: 0, kind: input, shape index: {}]
  %s1 = inlined_call_operand.hbm [shape: bf16[3072,512], index: 1, kind: input, shape index: {}]
  %s2 = inlined_call_operand.hbm [shape: f32[1,512], index: 2, kind: input, shape index: {}]
  %s3 = inlined_call_operand.hbm [shape: bf16[512,128], index: 3, kind: input, shape index: {}]
  %s4 = inlined_call_operand.hbm [shape: f32[1,128], index: 4, kind: input, shape index: {}]
  %s5 = inlined_call_operand.hbm [shape: f32[16,128], index: 5, kind: output, shape index: {}]
  %s6 = sld [smem:[#allocation0]]
  $region50: #{tpu_custom_call.1} parent=0
    _
  %s8 = ssub.s32 1, %s6
  %s9 = scalar_select 0, %s8, %s6
  $region1: #{tpu_custom_call.1} parent=0
    #allocation2 [shape = 'u8[98304]{0}', space=vmem, size = 0x18000, scoped, tag = 'input window, operand 0, single buffered']
    #allocation3 [shape = 's32[1]{0}', space=sflag, size = 0x4, scoped, tag = 'scoped memory for tpu_custom_call.1']
    #allocation4 [shape = 's32[1]{0}', space=sflag, size = 0x4, scoped, tag = 'scoped memory for tpu_custom_call.1']
    #allocation5 [shape = 'u8[3145728]{0}', space=vmem, size = 0x300000, scoped, tag = 'input window, operand 1, single buffered']
    #allocation6 [shape = 's32[1]{0}', space=sflag, size = 0x4, scoped, tag = 'scoped memory for tpu_custom_call.1']
    #allocation7 [shape = 'u8[2048]{0}', space=vmem, size = 0x800, scoped, tag = 'input window, operand 2, single buffered']
    #allocation8 [shape = 'u8[131072]{0}', space=vmem, size = 0x20000, scoped, tag = 'input window, operand 3, single buffered']
    #allocation9 [shape = 's32[1]{0}', space=sflag, size = 0x4, scoped, tag = 'scoped memory for tpu_custom_call.1']
    #allocation10 [shape = 'u8[512]{0}', space=vmem, size = 0x400, scoped, tag = 'input window, operand 4, single buffered']
    #allocation11 [shape = 'u8[8192]{0}', space=vmem, size = 0x2000, scoped, tag = 'output window, operand 0, single buffered']
    %10 = vsyncpa [#allocation3], 0
    %11 = vsyncpa [#allocation6], 0
    %12 = vsyncpa [#allocation9], 0
    %13 = vsyncpa [#allocation4], 0
    // Predicated region
    $region2: #{tpu_custom_call.1} parent=1 // pred_check
      _
    $region3: #{tpu_custom_call.1} parent=1 // pred_check_branch
      %15 = sbr.rel (0) target = $region5
    $region4: #{tpu_custom_call.1} parent=1 // pred_region
      %17 = vsyncadd [#allocation3], 0
      %s18 = sshll.u32 %s0, 4
      %s19 = int_to_ptr.hbm [resolvable:$true] %s18
      %s20 = sshll.u32 [#allocation2], 4
      %s21 = int_to_ptr.vmem [resolvable:$true] %s20
      %26 = dma.hbm_to_vmem [thread:$0]  %s19, 3072, %s21, [#allocation3], 1536, 1536, 96
    $region5: #{tpu_custom_call.1} parent=1 // pred_fallthru
      _
    // Predicated region
    $region6: #{tpu_custom_call.1} parent=1 // pred_check
      _
    $region7: #{tpu_custom_call.1} parent=1 // pred_check_branch
      %28 = sbr.rel (0) target = $region9
    $region8: #{tpu_custom_call.1} parent=1 // pred_region
      %30 = vsyncadd [#allocation6], 0
      %s31 = sshll.u32 %s1, 4
      %s32 = int_to_ptr.hbm [resolvable:$true] %s31
      %s33 = sshll.u32 [#allocation5], 4
      %s34 = int_to_ptr.vmem [resolvable:$true] %s33
      %39 = dma.hbm_to_vmem [thread:$0]  %s32, 98304, %s34, [#allocation6], 256, 256, 16
    $region9: #{tpu_custom_call.1} parent=1 // pred_fallthru
      _
    // Predicated region
    $region10: #{tpu_custom_call.1} parent=1 // pred_check
      _
    $region11: #{tpu_custom_call.1} parent=1 // pred_check_branch
      %41 = sbr.rel (0) target = $region13
    $region12: #{tpu_custom_call.1} parent=1 // pred_region
      %43 = vsyncadd [#allocation6], 0
      %s45 = sshll.u32 %s2, 4
      %s46 = int_to_ptr.hbm [resolvable:$true] %s45
      %s47 = sshll.u32 [#allocation7], 4
      %s48 = int_to_ptr.vmem [resolvable:$true] %s47
      %50 = dma.hbm_to_vmem [thread:$0]  %s46, 64, %s48, [#allocation6]
    $region13: #{tpu_custom_call.1} parent=1 // pred_fallthru
      _
    // Predicated region
    $region14: #{tpu_custom_call.1} parent=1 // pred_check
      _
    $region15: #{tpu_custom_call.1} parent=1 // pred_check_branch
      %52 = sbr.rel (0) target = $region17
    $region16: #{tpu_custom_call.1} parent=1 // pred_region
      %54 = vsyncadd [#allocation9], 0
      %s55 = sshll.u32 %s3, 4
      %s56 = int_to_ptr.hbm [resolvable:$true] %s55
      %s57 = sshll.u32 [#allocation8], 4
      %s58 = int_to_ptr.vmem [resolvable:$true] %s57
      %63 = dma.hbm_to_vmem [thread:$0]  %s56, 4096, %s58, [#allocation9], 64, 64, 4
    $region17: #{tpu_custom_call.1} parent=1 // pred_fallthru
      _
    // Predicated region
    $region18: #{tpu_custom_call.1} parent=1 // pred_check
      _
    $region19: #{tpu_custom_call.1} parent=1 // pred_check_branch
      %65 = sbr.rel (0) target = $region21
    $region20: #{tpu_custom_call.1} parent=1 // pred_region
      %67 = vsyncadd [#allocation9], 0
      %s69 = sshll.u32 %s4, 4
      %s70 = int_to_ptr.hbm [resolvable:$true] %s69
      %s71 = sshll.u32 [#allocation10], 4
      %s72 = int_to_ptr.vmem [resolvable:$true] %s71
      %74 = dma.hbm_to_vmem [thread:$0]  %s70, 16, %s72, [#allocation9]
    $region21: #{tpu_custom_call.1} parent=1 // pred_fallthru
      _
    // Predicated region
    $region22: #{tpu_custom_call.1} parent=1 // pred_check
      _
    $region23: #{tpu_custom_call.1} parent=1 // pred_check_branch
      %76 = sbr.rel (0) target = $region25
    $region24: #{tpu_custom_call.1} parent=1 // pred_region
      %78 = dma.done [#allocation3], 3072
    $region25: #{tpu_custom_call.1} parent=1 // pred_fallthru
      _
    // Predicated region
    $region26: #{tpu_custom_call.1} parent=1 // pred_check
      _
    $region27: #{tpu_custom_call.1} parent=1 // pred_check_branch
      %80 = sbr.rel (0) target = $region29
    $region28: #{tpu_custom_call.1} parent=1 // pred_region
      %82 = dma.done [#allocation6], 98304
    $region29: #{tpu_custom_call.1} parent=1 // pred_fallthru
      _
    // Predicated region
    $region30: #{tpu_custom_call.1} parent=1 // pred_check
      _
    $region31: #{tpu_custom_call.1} parent=1 // pred_check_branch
      %84 = sbr.rel (0) target = $region33
    $region32: #{tpu_custom_call.1} parent=1 // pred_region
      %86 = dma.done [#allocation6], 64
    $region33: #{tpu_custom_call.1} parent=1 // pred_fallthru
      _
    // Predicated region
    $region34: #{tpu_custom_call.1} parent=1 // pred_check
      _
    $region35: #{tpu_custom_call.1} parent=1 // pred_check_branch
      %88 = sbr.rel (0) target = $region37
    $region36: #{tpu_custom_call.1} parent=1 // pred_region
      %90 = dma.done [#allocation9], 4096
    $region37: #{tpu_custom_call.1} parent=1 // pred_fallthru
      _
    // Predicated region
    $region38: #{tpu_custom_call.1} parent=1 // pred_check
      _
    $region39: #{tpu_custom_call.1} parent=1 // pred_check_branch
      %92 = sbr.rel (0) target = $region41
    $region40: #{tpu_custom_call.1} parent=1 // pred_region
      %94 = dma.done [#allocation9], 16
    $region41: #{tpu_custom_call.1} parent=1 // pred_fallthru
      _
    %v95 = vld [vmem:[#allocation2] sm:$0xff]
    %v96 = vld [vmem:[#allocation2 + $0x8] sm:$0xff]
    %v97 = vld [vmem:[#allocation2 + $0x10] sm:$0xff]
    %v98 = vld [vmem:[#allocation2 + $0x18] sm:$0xff]
    %v99 = vld [vmem:[#allocation2 + $0x20] sm:$0xff]
    %v100 = vld [vmem:[#allocation2 + $0x28] sm:$0xff]
    %v101 = vld [vmem:[#allocation2 + $0x30] sm:$0xff]
    %v102 = vld [vmem:[#allocation2 + $0x38] sm:$0xff]
    %v103 = vld [vmem:[#allocation2 + $0x40] sm:$0xff]
    %v104 = vld [vmem:[#allocation2 + $0x48] sm:$0xff]
    %v105 = vld [vmem:[#allocation2 + $0x50] sm:$0xff]
    %v106 = vld [vmem:[#allocation2 + $0x58] sm:$0xff]
    %v107 = vld [vmem:[#allocation2 + $0x60] sm:$0xff]
    %v108 = vld [vmem:[#allocation2 + $0x68] sm:$0xff]
    %v109 = vld [vmem:[#allocation2 + $0x70] sm:$0xff]
    %v110 = vld [vmem:[#allocation2 + $0x78] sm:$0xff]
    %v111 = vld [vmem:[#allocation2 + $0x80] sm:$0xff]
    %v112 = vld [vmem:[#allocation2 + $0x88] sm:$0xff]
    %v113 = vld [vmem:[#allocation2 + $0x90] sm:$0xff]
    %v114 = vld [vmem:[#allocation2 + $0x98] sm:$0xff]
    %v115 = vld [vmem:[#allocation2 + $0xa0] sm:$0xff]
    %v116 = vld [vmem:[#allocation2 + $0xa8] sm:$0xff]
    %v117 = vld [vmem:[#allocation2 + $0xb0] sm:$0xff]
    %v118 = vld [vmem:[#allocation2 + $0xb8] sm:$0xff]
    %v119 = vld [vmem:[#allocation5] sm:$0xff]
    %v120 = vld [vmem:[#allocation5 + $0x8] sm:$0xff]
    %v121 = vld [vmem:[#allocation5 + $0x10] sm:$0xff]
    %v122 = vld [vmem:[#allocation5 + $0x18] sm:$0xff]
    %v123 = vld [vmem:[#allocation5 + $0x20] sm:$0xff]
    %v124 = vld [vmem:[#allocation5 + $0x28] sm:$0xff]
    %v125 = vld [vmem:[#allocation5 + $0x30] sm:$0xff]
    %v126 = vld [vmem:[#allocation5 + $0x38] sm:$0xff]
    %v127 = vld [vmem:[#allocation5 + $0x40] sm:$0xff]
    %v128 = vld [vmem:[#allocation5 + $0x48] sm:$0xff]
    %v129 = vld [vmem:[#allocation5 + $0x50] sm:$0xff]
    %v130 = vld [vmem:[#allocation5 + $0x58] sm:$0xff]
    %v131 = vld [vmem:[#allocation5 + $0x60] sm:$0xff]
    %v132 = vld [vmem:[#allocation5 + $0x68] sm:$0xff]
    %v133 = vld [vmem:[#allocation5 + $0x70] sm:$0xff]
    %v134 = vld [vmem:[#allocation5 + $0x78] sm:$0xff]
    %v135 = vld [vmem:[#allocation5 + $0x80] sm:$0xff]
    %v136 = vld [vmem:[#allocation5 + $0x88] sm:$0xff]
    %v137 = vld [vmem:[#allocation5 + $0x90] sm:$0xff]
    %v138 = vld [vmem:[#allocation5 + $0x98] sm:$0xff]
    %v139 = vld [vmem:[#allocation5 + $0xa0] sm:$0xff]
    %v140 = vld [vmem:[#allocation5 + $0xa8] sm:$0xff]
    %v141 = vld [vmem:[#allocation5 + $0xb0] sm:$0xff]
    %v142 = vld [vmem:[#allocation5 + $0xb8] sm:$0xff]
    %v143 = vld [vmem:[#allocation5 + $0xc0] sm:$0xff]
    %v144 = vld [vmem:[#allocation5 + $0xc8] sm:$0xff]
    %v145 = vld [vmem:[#allocation5 + $0xd0] sm:$0xff]
    %v146 = vld [vmem:[#allocation5 + $0xd8] sm:$0xff]
    %v147 = vld [vmem:[#allocation5 + $0xe0] sm:$0xff]
    %v148 = vld [vmem:[#allocation5 + $0xe8] sm:$0xff]
    %v149 = vld [vmem:[#allocation5 + $0xf0] sm:$0xff]
    %v150 = vld [vmem:[#allocation5 + $0xf8] sm:$0xff]
    %v151 = vld [vmem:[#allocation5 + $0x100] sm:$0xff]
    %v152 = vld [vmem:[#allocation5 + $0x108] sm:$0xff]
    %v153 = vld [vmem:[#allocation5 + $0x110] sm:$0xff]
    %v154 = vld [vmem:[#allocation5 + $0x118] sm:$0xff]
    %v155 = vld [vmem:[#allocation5 + $0x120] sm:$0xff]
    %v156 = vld [vmem:[#allocation5 + $0x128] sm:$0xff]
    %v157 = vld [vmem:[#allocation5 + $0x130] sm:$0xff]
    %v158 = vld [vmem:[#allocation5 + $0x138] sm:$0xff]
    %v159 = vld [vmem:[#allocation5 + $0x140] sm:$0xff]
    %v160 = vld [vmem:[#allocation5 + $0x148] sm:$0xff]
    %v161 = vld [vmem:[#allocation5 + $0x150] sm:$0xff]
    %v162 = vld [vmem:[#allocation5 + $0x158] sm:$0xff]
    %v163 = vld [vmem:[#allocation5 + $0x160] sm:$0xff]
    %v164 = vld [vmem:[#allocation5 + $0x168] sm:$0xff]
    %v165 = vld [vmem:[#allocation5 + $0x170] sm:$0xff]
    %v166 = vld [vmem:[#allocation5 + $0x178] sm:$0xff]
    %v167 = vld [vmem:[#allocation5 + $0x180] sm:$0xff]
    %v168 = vld [vmem:[#allocation5 + $0x188] sm:$0xff]
    %v169 = vld [vmem:[#allocation5 + $0x190] sm:$0xff]
    %v170 = vld [vmem:[#allocation5 + $0x198] sm:$0xff]
    %v171 = vld [vmem:[#allocation5 + $0x1a0] sm:$0xff]
    %v172 = vld [vmem:[#allocation5 + $0x1a8] sm:$0xff]
    %v173 = vld [vmem:[#allocation5 + $0x1b0] sm:$0xff]
    %v174 = vld [vmem:[#allocation5 + $0x1b8] sm:$0xff]
    %v175 = vld [vmem:[#allocation5 + $0x1c0] sm:$0xff]
    %v176 = vld [vmem:[#allocation5 + $0x1c8] sm:$0xff]
    %v177 = vld [vmem:[#allocation5 + $0x1d0] sm:$0xff]
    %v178 = vld [vmem:[#allocation5 + $0x1d8] sm:$0xff]
    %v179 = vld [vmem:[#allocation5 + $0x1e0] sm:$0xff]
    %v180 = vld [vmem:[#allocation5 + $0x1e8] sm:$0xff]
    %v181 = vld [vmem:[#allocation5 + $0x1f0] sm:$0xff]
    %v182 = vld [vmem:[#allocation5 + $0x1f8] sm:$0xff]
    %v183 = vld [vmem:[#allocation5 + $0x200] sm:$0xff]
    %v184 = vld [vmem:[#allocation5 + $0x208] sm:$0xff]
    %v185 = vld [vmem:[#allocation5 + $0x210] sm:$0xff]
    %v186 = vld [vmem:[#allocation5 + $0x218] sm:$0xff]
    %v187 = vld [vmem:[#allocation5 + $0x220] sm:$0xff]
    %v188 = vld [vmem:[#allocation5 + $0x228] sm:$0xff]
    %v189 = vld [vmem:[#allocation5 + $0x230] sm:$0xff]
    %v190 = vld [vmem:[#allocation5 + $0x238] sm:$0xff]
    %v191 = vld [vmem:[#allocation5 + $0x240] sm:$0xff]
    %v192 = vld [vmem:[#allocation5 + $0x248] sm:$0xff]
    %v193 = vld [vmem:[#allocation5 + $0x250] sm:$0xff]
    %v194 = vld [vmem:[#allocation5 + $0x258] sm:$0xff]
    %v195 = vld [vmem:[#allocation5 + $0x260] sm:$0xff]
    %v196 = vld [vmem:[#allocation5 + $0x268] sm:$0xff]
    %v197 = vld [vmem:[#allocation5 + $0x270] sm:$0xff]
    %v198 = vld [vmem:[#allocation5 + $0x278] sm:$0xff]
    %v199 = vld [vmem:[#allocation5 + $0x280] sm:$0xff]
    %v200 = vld [vmem:[#allocation5 + $0x288] sm:$0xff]
    %v201 = vld [vmem:[#allocation5 + $0x290] sm:$0xff]
    %v202 = vld [vmem:[#allocation5 + $0x298] sm:$0xff]
    %v203 = vld [vmem:[#allocation5 + $0x2a0] sm:$0xff]
    %v204 = vld [vmem:[#allocation5 + $0x2a8] sm:$0xff]
    %v205 = vld [vmem:[#allocation5 + $0x2b0] sm:$0xff]
    %v206 = vld [vmem:[#allocation5 + $0x2b8] sm:$0xff]
    %v207 = vld [vmem:[#allocation5 + $0x2c0] sm:$0xff]
    %v208 = vld [vmem:[#allocation5 + $0x2c8] sm:$0xff]
    %v209 = vld [vmem:[#allocation5 + $0x2d0] sm:$0xff]
    %v210 = vld [vmem:[#allocation5 + $0x2d8] sm:$0xff]
    %v211 = vld [vmem:[#allocation5 + $0x2e0] sm:$0xff]
    %v212 = vld [vmem:[#allocation5 + $0x2e8] sm:$0xff]
    %v213 = vld [vmem:[#allocation5 + $0x2f0] sm:$0xff]
    %v214 = vld [vmem:[#allocation5 + $0x2f8] sm:$0xff]
    %v215 = vld [vmem:[#allocation5 + $0x300] sm:$0xff]
    %v216 = vld [vmem:[#allocation5 + $0x308] sm:$0xff]
    %v217 = vld [vmem:[#allocation5 + $0x310] sm:$0xff]
    %v218 = vld [vmem:[#allocation5 + $0x318] sm:$0xff]
    %v219 = vld [vmem:[#allocation5 + $0x320] sm:$0xff]
    %v220 = vld [vmem:[#allocation5 + $0x328] sm:$0xff]
    %v221 = vld [vmem:[#allocation5 + $0x330] sm:$0xff]
    %v222 = vld [vmem:[#allocation5 + $0x338] sm:$0xff]
    %v223 = vld [vmem:[#allocation5 + $0x340] sm:$0xff]
    %v224 = vld [vmem:[#allocation5 + $0x348] sm:$0xff]
    %v225 = vld [vmem:[#allocation5 + $0x350] sm:$0xff]
    %v226 = vld [vmem:[#allocation5 + $0x358] sm:$0xff]
    %v227 = vld [vmem:[#allocation5 + $0x360] sm:$0xff]
    %v228 = vld [vmem:[#allocation5 + $0x368] sm:$0xff]
    %v229 = vld [vmem:[#allocation5 + $0x370] sm:$0xff]
    %v230 = vld [vmem:[#allocation5 + $0x378] sm:$0xff]
    %v231 = vld [vmem:[#allocation5 + $0x380] sm:$0xff]
    %v232 = vld [vmem:[#allocation5 + $0x388] sm:$0xff]
    %v233 = vld [vmem:[#allocation5 + $0x390] sm:$0xff]
    %v234 = vld [vmem:[#allocation5 + $0x398] sm:$0xff]
    %v235 = vld [vmem:[#allocation5 + $0x3a0] sm:$0xff]
    %v236 = vld [vmem:[#allocation5 + $0x3a8] sm:$0xff]
    %v237 = vld [vmem:[#allocation5 + $0x3b0] sm:$0xff]
    %v238 = vld [vmem:[#allocation5 + $0x3b8] sm:$0xff]
    %v239 = vld [vmem:[#allocation5 + $0x3c0] sm:$0xff]
    %v240 = vld [vmem:[#allocation5 + $0x3c8] sm:$0xff]
    %v241 = vld [vmem:[#allocation5 + $0x3d0] sm:$0xff]
    %v242 = vld [vmem:[#allocation5 + $0x3d8] sm:$0xff]
    %v243 = vld [vmem:[#allocation5 + $0x3e0] sm:$0xff]
    %v244 = vld [vmem:[#allocation5 + $0x3e8] sm:$0xff]
    %v245 = vld [vmem:[#allocation5 + $0x3f0] sm:$0xff]
    %v246 = vld [vmem:[#allocation5 + $0x3f8] sm:$0xff]
    %v247 = vld [vmem:[#allocation5 + $0x400] sm:$0xff]
    %v248 = vld [vmem:[#allocation5 + $0x408] sm:$0xff]
    %v249 = vld [vmem:[#allocation5 + $0x410] sm:$0xff]
    %v250 = vld [vmem:[#allocation5 + $0x418] sm:$0xff]
    %v251 = vld [vmem:[#allocation5 + $0x420] sm:$0xff]
    %v252 = vld [vmem:[#allocation5 + $0x428] sm:$0xff]
    %v253 = vld [vmem:[#allocation5 + $0x430] sm:$0xff]
    %v254 = vld [vmem:[#allocation5 + $0x438] sm:$0xff]
    %v255 = vld [vmem:[#allocation5 + $0x440] sm:$0xff]
    %v256 = vld [vmem:[#allocation5 + $0x448] sm:$0xff]
    %v257 = vld [vmem:[#allocation5 + $0x450] sm:$0xff]
    %v258 = vld [vmem:[#allocation5 + $0x458] sm:$0xff]
    %v259 = vld [vmem:[#allocation5 + $0x460] sm:$0xff]
    %v260 = vld [vmem:[#allocation5 + $0x468] sm:$0xff]
    %v261 = vld [vmem:[#allocation5 + $0x470] sm:$0xff]
    %v262 = vld [vmem:[#allocation5 + $0x478] sm:$0xff]
    %v263 = vld [vmem:[#allocation5 + $0x480] sm:$0xff]
    %v264 = vld [vmem:[#allocation5 + $0x488] sm:$0xff]
    %v265 = vld [vmem:[#allocation5 + $0x490] sm:$0xff]
    %v266 = vld [vmem:[#allocation5 + $0x498] sm:$0xff]
    %v267 = vld [vmem:[#allocation5 + $0x4a0] sm:$0xff]
    %v268 = vld [vmem:[#allocation5 + $0x4a8] sm:$0xff]
    %v269 = vld [vmem:[#allocation5 + $0x4b0] sm:$0xff]
    %v270 = vld [vmem:[#allocation5 + $0x4b8] sm:$0xff]
    %v271 = vld [vmem:[#allocation5 + $0x4c0] sm:$0xff]
    %v272 = vld [vmem:[#allocation5 + $0x4c8] sm:$0xff]
    %v273 = vld [vmem:[#allocation5 + $0x4d0] sm:$0xff]
    %v274 = vld [vmem:[#allocation5 + $0x4d8] sm:$0xff]
    %v275 = vld [vmem:[#allocation5 + $0x4e0] sm:$0xff]
    %v276 = vld [vmem:[#allocation5 + $0x4e8] sm:$0xff]
    %v277 = vld [vmem:[#allocation5 + $0x4f0] sm:$0xff]
    %v278 = vld [vmem:[#allocation5 + $0x4f8] sm:$0xff]
    %v279 = vld [vmem:[#allocation5 + $0x500] sm:$0xff]
    %v280 = vld [vmem:[#allocation5 + $0x508] sm:$0xff]
    %v281 = vld [vmem:[#allocation5 + $0x510] sm:$0xff]
    %v282 = vld [vmem:[#allocation5 + $0x518] sm:$0xff]
    %v283 = vld [vmem:[#allocation5 + $0x520] sm:$0xff]
    %v284 = vld [vmem:[#allocation5 + $0x528] sm:$0xff]
    %v285 = vld [vmem:[#allocation5 + $0x530] sm:$0xff]
    %v286 = vld [vmem:[#allocation5 + $0x538] sm:$0xff]
    %v287 = vld [vmem:[#allocation5 + $0x540] sm:$0xff]
    %v288 = vld [vmem:[#allocation5 + $0x548] sm:$0xff]
    %v289 = vld [vmem:[#allocation5 + $0x550] sm:$0xff]
    %v290 = vld [vmem:[#allocation5 + $0x558] sm:$0xff]
    %v291 = vld [vmem:[#allocation5 + $0x560] sm:$0xff]
    %v292 = vld [vmem:[#allocation5 + $0x568] sm:$0xff]
    %v293 = vld [vmem:[#allocation5 + $0x570] sm:$0xff]
    %v294 = vld [vmem:[#allocation5 + $0x578] sm:$0xff]
    %v295 = vld [vmem:[#allocation5 + $0x580] sm:$0xff]
    %v296 = vld [vmem:[#allocation5 + $0x588] sm:$0xff]
    %v297 = vld [vmem:[#allocation5 + $0x590] sm:$0xff]
    %v298 = vld [vmem:[#allocation5 + $0x598] sm:$0xff]
    %v299 = vld [vmem:[#allocation5 + $0x5a0] sm:$0xff]
    %v300 = vld [vmem:[#allocation5 + $0x5a8] sm:$0xff]
    %v301 = vld [vmem:[#allocation5 + $0x5b0] sm:$0xff]
    %v302 = vld [vmem:[#allocation5 + $0x5b8] sm:$0xff]
    %v303 = vld [vmem:[#allocation5 + $0x5c0] sm:$0xff]
    %v304 = vld [vmem:[#allocation5 + $0x5c8] sm:$0xff]
    %v305 = vld [vmem:[#allocation5 + $0x5d0] sm:$0xff]
    %v306 = vld [vmem:[#allocation5 + $0x5d8] sm:$0xff]
    %v307 = vld [vmem:[#allocation5 + $0x5e0] sm:$0xff]
    %v308 = vld [vmem:[#allocation5 + $0x5e8] sm:$0xff]
    %v309 = vld [vmem:[#allocation5 + $0x5f0] sm:$0xff]
    %v310 = vld [vmem:[#allocation5 + $0x5f8] sm:$0xff]
    %v311 = vld [vmem:[#allocation5 + $0x600] sm:$0xff]
    %v312 = vld [vmem:[#allocation5 + $0x608] sm:$0xff]
    %v313 = vld [vmem:[#allocation5 + $0x610] sm:$0xff]
    %v314 = vld [vmem:[#allocation5 + $0x618] sm:$0xff]
    %v315 = vld [vmem:[#allocation5 + $0x620] sm:$0xff]
    %v316 = vld [vmem:[#allocation5 + $0x628] sm:$0xff]
    %v317 = vld [vmem:[#allocation5 + $0x630] sm:$0xff]
    %v318 = vld [vmem:[#allocation5 + $0x638] sm:$0xff]
    %v319 = vld [vmem:[#allocation5 + $0x640] sm:$0xff]
    %v320 = vld [vmem:[#allocation5 + $0x648] sm:$0xff]
    %v321 = vld [vmem:[#allocation5 + $0x650] sm:$0xff]
    %v322 = vld [vmem:[#allocation5 + $0x658] sm:$0xff]
    %v323 = vld [vmem:[#allocation5 + $0x660] sm:$0xff]
    %v324 = vld [vmem:[#allocation5 + $0x668] sm:$0xff]
    %v325 = vld [vmem:[#allocation5 + $0x670] sm:$0xff]
    %v326 = vld [vmem:[#allocation5 + $0x678] sm:$0xff]
    %v327 = vld [vmem:[#allocation5 + $0x680] sm:$0xff]
    %v328 = vld [vmem:[#allocation5 + $0x688] sm:$0xff]
    %v329 = vld [vmem:[#allocation5 + $0x690] sm:$0xff]
    %v330 = vld [vmem:[#allocation5 + $0x698] sm:$0xff]
    %v331 = vld [vmem:[#allocation5 + $0x6a0] sm:$0xff]
    %v332 = vld [vmem:[#allocation5 + $0x6a8] sm:$0xff]
    %v333 = vld [vmem:[#allocation5 + $0x6b0] sm:$0xff]
    %v334 = vld [vmem:[#allocation5 + $0x6b8] sm:$0xff]
    %v335 = vld [vmem:[#allocation5 + $0x6c0] sm:$0xff]
    %v336 = vld [vmem:[#allocation5 + $0x6c8] sm:$0xff]
    %v337 = vld [vmem:[#allocation5 + $0x6d0] sm:$0xff]
    %v338 = vld [vmem:[#allocation5 + $0x6d8] sm:$0xff]
    %v339 = vld [vmem:[#allocation5 + $0x6e0] sm:$0xff]
    %v340 = vld [vmem:[#allocation5 + $0x6e8] sm:$0xff]
    %v341 = vld [vmem:[#allocation5 + $0x6f0] sm:$0xff]
    %v342 = vld [vmem:[#allocation5 + $0x6f8] sm:$0xff]
    %v343 = vld [vmem:[#allocation5 + $0x700] sm:$0xff]
    %v344 = vld [vmem:[#allocation5 + $0x708] sm:$0xff]
    %v345 = vld [vmem:[#allocation5 + $0x710] sm:$0xff]
    %v346 = vld [vmem:[#allocation5 + $0x718] sm:$0xff]
    %v347 = vld [vmem:[#allocation5 + $0x720] sm:$0xff]
    %v348 = vld [vmem:[#allocation5 + $0x728] sm:$0xff]
    %v349 = vld [vmem:[#allocation5 + $0x730] sm:$0xff]
    %v350 = vld [vmem:[#allocation5 + $0x738] sm:$0xff]
    %v351 = vld [vmem:[#allocation5 + $0x740] sm:$0xff]
    %v352 = vld [vmem:[#allocation5 + $0x748] sm:$0xff]
    %v353 = vld [vmem:[#allocation5 + $0x750] sm:$0xff]
    %v354 = vld [vmem:[#allocation5 + $0x758] sm:$0xff]
    %v355 = vld [vmem:[#allocation5 + $0x760] sm:$0xff]
    %v356 = vld [vmem:[#allocation5 + $0x768] sm:$0xff]
    %v357 = vld [vmem:[#allocation5 + $0x770] sm:$0xff]
    %v358 = vld [vmem:[#allocation5 + $0x778] sm:$0xff]
    %v359 = vld [vmem:[#allocation5 + $0x780] sm:$0xff]
    %v360 = vld [vmem:[#allocation5 + $0x788] sm:$0xff]
    %v361 = vld [vmem:[#allocation5 + $0x790] sm:$0xff]
    %v362 = vld [vmem:[#allocation5 + $0x798] sm:$0xff]
    %v363 = vld [vmem:[#allocation5 + $0x7a0] sm:$0xff]
    %v364 = vld [vmem:[#allocation5 + $0x7a8] sm:$0xff]
    %v365 = vld [vmem:[#allocation5 + $0x7b0] sm:$0xff]
    %v366 = vld [vmem:[#allocation5 + $0x7b8] sm:$0xff]
    %v367 = vld [vmem:[#allocation5 + $0x7c0] sm:$0xff]
    %v368 = vld [vmem:[#allocation5 + $0x7c8] sm:$0xff]
    %v369 = vld [vmem:[#allocation5 + $0x7d0] sm:$0xff]
    %v370 = vld [vmem:[#allocation5 + $0x7d8] sm:$0xff]
    %v371 = vld [vmem:[#allocation5 + $0x7e0] sm:$0xff]
    %v372 = vld [vmem:[#allocation5 + $0x7e8] sm:$0xff]
    %v373 = vld [vmem:[#allocation5 + $0x7f0] sm:$0xff]
    %v374 = vld [vmem:[#allocation5 + $0x7f8] sm:$0xff]
    %v375 = vld [vmem:[#allocation5 + $0x800] sm:$0xff]
    %v376 = vld [vmem:[#allocation5 + $0x808] sm:$0xff]
    %v377 = vld [vmem:[#allocation5 + $0x810] sm:$0xff]
    %v378 = vld [vmem:[#allocation5 + $0x818] sm:$0xff]
    %v379 = vld [vmem:[#allocation5 + $0x820] sm:$0xff]
    %v380 = vld [vmem:[#allocation5 + $0x828] sm:$0xff]
    %v381 = vld [vmem:[#allocation5 + $0x830] sm:$0xff]
    %v382 = vld [vmem:[#allocation5 + $0x838] sm:$0xff]
    %v383 = vld [vmem:[#allocation5 + $0x840] sm:$0xff]
    %v384 = vld [vmem:[#allocation5 + $0x848] sm:$0xff]
    %v385 = vld [vmem:[#allocation5 + $0x850] sm:$0xff]
    %v386 = vld [vmem:[#allocation5 + $0x858] sm:$0xff]
    %v387 = vld [vmem:[#allocation5 + $0x860] sm:$0xff]
    %v388 = vld [vmem:[#allocation5 + $0x868] sm:$0xff]
    %v389 = vld [vmem:[#allocation5 + $0x870] sm:$0xff]
    %v390 = vld [vmem:[#allocation5 + $0x878] sm:$0xff]
    %v391 = vld [vmem:[#allocation5 + $0x880] sm:$0xff]
    %v392 = vld [vmem:[#allocation5 + $0x888] sm:$0xff]
    %v393 = vld [vmem:[#allocation5 + $0x890] sm:$0xff]
    %v394 = vld [vmem:[#allocation5 + $0x898] sm:$0xff]
    %v395 = vld [vmem:[#allocation5 + $0x8a0] sm:$0xff]
    %v396 = vld [vmem:[#allocation5 + $0x8a8] sm:$0xff]
    %v397 = vld [vmem:[#allocation5 + $0x8b0] sm:$0xff]
    %v398 = vld [vmem:[#allocation5 + $0x8b8] sm:$0xff]
    %v399 = vld [vmem:[#allocation5 + $0x8c0] sm:$0xff]
    %v400 = vld [vmem:[#allocation5 + $0x8c8] sm:$0xff]
    %v401 = vld [vmem:[#allocation5 + $0x8d0] sm:$0xff]
    %v402 = vld [vmem:[#allocation5 + $0x8d8] sm:$0xff]
    %v403 = vld [vmem:[#allocation5 + $0x8e0] sm:$0xff]
    %v404 = vld [vmem:[#allocation5 + $0x8e8] sm:$0xff]
    %v405 = vld [vmem:[#allocation5 + $0x8f0] sm:$0xff]
    %v406 = vld [vmem:[#allocation5 + $0x8f8] sm:$0xff]
    %v407 = vld [vmem:[#allocation5 + $0x900] sm:$0xff]
    %v408 = vld [vmem:[#allocation5 + $0x908] sm:$0xff]
    %v409 = vld [vmem:[#allocation5 + $0x910] sm:$0xff]
    %v410 = vld [vmem:[#allocation5 + $0x918] sm:$0xff]
    %v411 = vld [vmem:[#allocation5 + $0x920] sm:$0xff]
    %v412 = vld [vmem:[#allocation5 + $0x928] sm:$0xff]
    %v413 = vld [vmem:[#allocation5 + $0x930] sm:$0xff]
    %v414 = vld [vmem:[#allocation5 + $0x938] sm:$0xff]
    %v415 = vld [vmem:[#allocation5 + $0x940] sm:$0xff]
    %v416 = vld [vmem:[#allocation5 + $0x948] sm:$0xff]
    %v417 = vld [vmem:[#allocation5 + $0x950] sm:$0xff]
    %v418 = vld [vmem:[#allocation5 + $0x958] sm:$0xff]
    %v419 = vld [vmem:[#allocation5 + $0x960] sm:$0xff]
    %v420 = vld [vmem:[#allocation5 + $0x968] sm:$0xff]
    %v421 = vld [vmem:[#allocation5 + $0x970] sm:$0xff]
    %v422 = vld [vmem:[#allocation5 + $0x978] sm:$0xff]
    %v423 = vld [vmem:[#allocation5 + $0x980] sm:$0xff]
    %v424 = vld [vmem:[#allocation5 + $0x988] sm:$0xff]
    %v425 = vld [vmem:[#allocation5 + $0x990] sm:$0xff]
    %v426 = vld [vmem:[#allocation5 + $0x998] sm:$0xff]
    %v427 = vld [vmem:[#allocation5 + $0x9a0] sm:$0xff]
    %v428 = vld [vmem:[#allocation5 + $0x9a8] sm:$0xff]
    %v429 = vld [vmem:[#allocation5 + $0x9b0] sm:$0xff]
    %v430 = vld [vmem:[#allocation5 + $0x9b8] sm:$0xff]
    %v431 = vld [vmem:[#allocation5 + $0x9c0] sm:$0xff]
    %v432 = vld [vmem:[#allocation5 + $0x9c8] sm:$0xff]
    %v433 = vld [vmem:[#allocation5 + $0x9d0] sm:$0xff]
    %v434 = vld [vmem:[#allocation5 + $0x9d8] sm:$0xff]
    %v435 = vld [vmem:[#allocation5 + $0x9e0] sm:$0xff]
    %v436 = vld [vmem:[#allocation5 + $0x9e8] sm:$0xff]
    %v437 = vld [vmem:[#allocation5 + $0x9f0] sm:$0xff]
    %v438 = vld [vmem:[#allocation5 + $0x9f8] sm:$0xff]
    %v439 = vld [vmem:[#allocation5 + $0xa00] sm:$0xff]
    %v440 = vld [vmem:[#allocation5 + $0xa08] sm:$0xff]
    %v441 = vld [vmem:[#allocation5 + $0xa10] sm:$0xff]
    %v442 = vld [vmem:[#allocation5 + $0xa18] sm:$0xff]
    %v443 = vld [vmem:[#allocation5 + $0xa20] sm:$0xff]
    %v444 = vld [vmem:[#allocation5 + $0xa28] sm:$0xff]
    %v445 = vld [vmem:[#allocation5 + $0xa30] sm:$0xff]
    %v446 = vld [vmem:[#allocation5 + $0xa38] sm:$0xff]
    %v447 = vld [vmem:[#allocation5 + $0xa40] sm:$0xff]
    %v448 = vld [vmem:[#allocation5 + $0xa48] sm:$0xff]
    %v449 = vld [vmem:[#allocation5 + $0xa50] sm:$0xff]
    %v450 = vld [vmem:[#allocation5 + $0xa58] sm:$0xff]
    %v451 = vld [vmem:[#allocation5 + $0xa60] sm:$0xff]
    %v452 = vld [vmem:[#allocation5 + $0xa68] sm:$0xff]
    %v453 = vld [vmem:[#allocation5 + $0xa70] sm:$0xff]
    %v454 = vld [vmem:[#allocation5 + $0xa78] sm:$0xff]
    %v455 = vld [vmem:[#allocation5 + $0xa80] sm:$0xff]
    %v456 = vld [vmem:[#allocation5 + $0xa88] sm:$0xff]
    %v457 = vld [vmem:[#allocation5 + $0xa90] sm:$0xff]
    %v458 = vld [vmem:[#allocation5 + $0xa98] sm:$0xff]
    %v459 = vld [vmem:[#allocation5 + $0xaa0] sm:$0xff]
    %v460 = vld [vmem:[#allocation5 + $0xaa8] sm:$0xff]
    %v461 = vld [vmem:[#allocation5 + $0xab0] sm:$0xff]
    %v462 = vld [vmem:[#allocation5 + $0xab8] sm:$0xff]
    %v463 = vld [vmem:[#allocation5 + $0xac0] sm:$0xff]
    %v464 = vld [vmem:[#allocation5 + $0xac8] sm:$0xff]
    %v465 = vld [vmem:[#allocation5 + $0xad0] sm:$0xff]
    %v466 = vld [vmem:[#allocation5 + $0xad8] sm:$0xff]
    %v467 = vld [vmem:[#allocation5 + $0xae0] sm:$0xff]
    %v468 = vld [vmem:[#allocation5 + $0xae8] sm:$0xff]
    %v469 = vld [vmem:[#allocation5 + $0xaf0] sm:$0xff]
    %v470 = vld [vmem:[#allocation5 + $0xaf8] sm:$0xff]
    %v471 = vld [vmem:[#allocation5 + $0xb00] sm:$0xff]
    %v472 = vld [vmem:[#allocation5 + $0xb08] sm:$0xff]
    %v473 = vld [vmem:[#allocation5 + $0xb10] sm:$0xff]
    %v474 = vld [vmem:[#allocation5 + $0xb18] sm:$0xff]
    %v475 = vld [vmem:[#allocation5 + $0xb20] sm:$0xff]
    %v476 = vld [vmem:[#allocation5 + $0xb28] sm:$0xff]
    %v477 = vld [vmem:[#allocation5 + $0xb30] sm:$0xff]
    %v478 = vld [vmem:[#allocation5 + $0xb38] sm:$0xff]
    %v479 = vld [vmem:[#allocation5 + $0xb40] sm:$0xff]
    %v480 = vld [vmem:[#allocation5 + $0xb48] sm:$0xff]
    %v481 = vld [vmem:[#allocation5 + $0xb50] sm:$0xff]
    %v482 = vld [vmem:[#allocation5 + $0xb58] sm:$0xff]
    %v483 = vld [vmem:[#allocation5 + $0xb60] sm:$0xff]
    %v484 = vld [vmem:[#allocation5 + $0xb68] sm:$0xff]
    %v485 = vld [vmem:[#allocation5 + $0xb70] sm:$0xff]
    %v486 = vld [vmem:[#allocation5 + $0xb78] sm:$0xff]
    %v487 = vld [vmem:[#allocation5 + $0xb80] sm:$0xff]
    %v488 = vld [vmem:[#allocation5 + $0xb88] sm:$0xff]
    %v489 = vld [vmem:[#allocation5 + $0xb90] sm:$0xff]
    %v490 = vld [vmem:[#allocation5 + $0xb98] sm:$0xff]
    %v491 = vld [vmem:[#allocation5 + $0xba0] sm:$0xff]
    %v492 = vld [vmem:[#allocation5 + $0xba8] sm:$0xff]
    %v493 = vld [vmem:[#allocation5 + $0xbb0] sm:$0xff]
    %v494 = vld [vmem:[#allocation5 + $0xbb8] sm:$0xff]
    %v495 = vld [vmem:[#allocation5 + $0xbc0] sm:$0xff]
    %v496 = vld [vmem:[#allocation5 + $0xbc8] sm:$0xff]
    %v497 = vld [vmem:[#allocation5 + $0xbd0] sm:$0xff]
    %v498 = vld [vmem:[#allocation5 + $0xbd8] sm:$0xff]
    %v499 = vld [vmem:[#allocation5 + $0xbe0] sm:$0xff]
    %v500 = vld [vmem:[#allocation5 + $0xbe8] sm:$0xff]
    %v501 = vld [vmem:[#allocation5 + $0xbf0] sm:$0xff]
    %v502 = vld [vmem:[#allocation5 + $0xbf8] sm:$0xff]
    %v503 = vld [vmem:[#allocation5 + $0xc00] sm:$0xff]
    %v504 = vld [vmem:[#allocation5 + $0xc08] sm:$0xff]
    %v505 = vld [vmem:[#allocation5 + $0xc10] sm:$0xff]
    %v506 = vld [vmem:[#allocation5 + $0xc18] sm:$0xff]
    %v507 = vld [vmem:[#allocation5 + $0xc20] sm:$0xff]
    %v508 = vld [vmem:[#allocation5 + $0xc28] sm:$0xff]
    %v509 = vld [vmem:[#allocation5 + $0xc30] sm:$0xff]
    %v510 = vld [vmem:[#allocation5 + $0xc38] sm:$0xff]
    %v511 = vld [vmem:[#allocation5 + $0xc40] sm:$0xff]
    %v512 = vld [vmem:[#allocation5 + $0xc48] sm:$0xff]
    %v513 = vld [vmem:[#allocation5 + $0xc50] sm:$0xff]
    %v514 = vld [vmem:[#allocation5 + $0xc58] sm:$0xff]
    %v515 = vld [vmem:[#allocation5 + $0xc60] sm:$0xff]
    %v516 = vld [vmem:[#allocation5 + $0xc68] sm:$0xff]
    %v517 = vld [vmem:[#allocation5 + $0xc70] sm:$0xff]
    %v518 = vld [vmem:[#allocation5 + $0xc78] sm:$0xff]
    %v519 = vld [vmem:[#allocation5 + $0xc80] sm:$0xff]
    %v520 = vld [vmem:[#allocation5 + $0xc88] sm:$0xff]
    %v521 = vld [vmem:[#allocation5 + $0xc90] sm:$0xff]
    %v522 = vld [vmem:[#allocation5 + $0xc98] sm:$0xff]
    %v523 = vld [vmem:[#allocation5 + $0xca0] sm:$0xff]
    %v524 = vld [vmem:[#allocation5 + $0xca8] sm:$0xff]
    %v525 = vld [vmem:[#allocation5 + $0xcb0] sm:$0xff]
    %v526 = vld [vmem:[#allocation5 + $0xcb8] sm:$0xff]
    %v527 = vld [vmem:[#allocation5 + $0xcc0] sm:$0xff]
    %v528 = vld [vmem:[#allocation5 + $0xcc8] sm:$0xff]
    %v529 = vld [vmem:[#allocation5 + $0xcd0] sm:$0xff]
    %v530 = vld [vmem:[#allocation5 + $0xcd8] sm:$0xff]
    %v531 = vld [vmem:[#allocation5 + $0xce0] sm:$0xff]
    %v532 = vld [vmem:[#allocation5 + $0xce8] sm:$0xff]
    %v533 = vld [vmem:[#allocation5 + $0xcf0] sm:$0xff]
    %v534 = vld [vmem:[#allocation5 + $0xcf8] sm:$0xff]
    %v535 = vld [vmem:[#allocation5 + $0xd00] sm:$0xff]
    %v536 = vld [vmem:[#allocation5 + $0xd08] sm:$0xff]
    %v537 = vld [vmem:[#allocation5 + $0xd10] sm:$0xff]
    %v538 = vld [vmem:[#allocation5 + $0xd18] sm:$0xff]
    %v539 = vld [vmem:[#allocation5 + $0xd20] sm:$0xff]
    %v540 = vld [vmem:[#allocation5 + $0xd28] sm:$0xff]
    %v541 = vld [vmem:[#allocation5 + $0xd30] sm:$0xff]
    %v542 = vld [vmem:[#allocation5 + $0xd38] sm:$0xff]
    %v543 = vld [vmem:[#allocation5 + $0xd40] sm:$0xff]
    %v544 = vld [vmem:[#allocation5 + $0xd48] sm:$0xff]
    %v545 = vld [vmem:[#allocation5 + $0xd50] sm:$0xff]
    %v546 = vld [vmem:[#allocation5 + $0xd58] sm:$0xff]
    %v547 = vld [vmem:[#allocation5 + $0xd60] sm:$0xff]
    %v548 = vld [vmem:[#allocation5 + $0xd68] sm:$0xff]
    %v549 = vld [vmem:[#allocation5 + $0xd70] sm:$0xff]
    %v550 = vld [vmem:[#allocation5 + $0xd78] sm:$0xff]
    %v551 = vld [vmem:[#allocation5 + $0xd80] sm:$0xff]
    %v552 = vld [vmem:[#allocation5 + $0xd88] sm:$0xff]
    %v553 = vld [vmem:[#allocation5 + $0xd90] sm:$0xff]
    %v554 = vld [vmem:[#allocation5 + $0xd98] sm:$0xff]
    %v555 = vld [vmem:[#allocation5 + $0xda0] sm:$0xff]
    %v556 = vld [vmem:[#allocation5 + $0xda8] sm:$0xff]
    %v557 = vld [vmem:[#allocation5 + $0xdb0] sm:$0xff]
    %v558 = vld [vmem:[#allocation5 + $0xdb8] sm:$0xff]
    %v559 = vld [vmem:[#allocation5 + $0xdc0] sm:$0xff]
    %v560 = vld [vmem:[#allocation5 + $0xdc8] sm:$0xff]
    %v561 = vld [vmem:[#allocation5 + $0xdd0] sm:$0xff]
    %v562 = vld [vmem:[#allocation5 + $0xdd8] sm:$0xff]
    %v563 = vld [vmem:[#allocation5 + $0xde0] sm:$0xff]
    %v564 = vld [vmem:[#allocation5 + $0xde8] sm:$0xff]
    %v565 = vld [vmem:[#allocation5 + $0xdf0] sm:$0xff]
    %v566 = vld [vmem:[#allocation5 + $0xdf8] sm:$0xff]
    %v567 = vld [vmem:[#allocation5 + $0xe00] sm:$0xff]
    %v568 = vld [vmem:[#allocation5 + $0xe08] sm:$0xff]
    %v569 = vld [vmem:[#allocation5 + $0xe10] sm:$0xff]
    %v570 = vld [vmem:[#allocation5 + $0xe18] sm:$0xff]
    %v571 = vld [vmem:[#allocation5 + $0xe20] sm:$0xff]
    %v572 = vld [vmem:[#allocation5 + $0xe28] sm:$0xff]
    %v573 = vld [vmem:[#allocation5 + $0xe30] sm:$0xff]
    %v574 = vld [vmem:[#allocation5 + $0xe38] sm:$0xff]
    %v575 = vld [vmem:[#allocation5 + $0xe40] sm:$0xff]
    %v576 = vld [vmem:[#allocation5 + $0xe48] sm:$0xff]
    %v577 = vld [vmem:[#allocation5 + $0xe50] sm:$0xff]
    %v578 = vld [vmem:[#allocation5 + $0xe58] sm:$0xff]
    %v579 = vld [vmem:[#allocation5 + $0xe60] sm:$0xff]
    %v580 = vld [vmem:[#allocation5 + $0xe68] sm:$0xff]
    %v581 = vld [vmem:[#allocation5 + $0xe70] sm:$0xff]
    %v582 = vld [vmem:[#allocation5 + $0xe78] sm:$0xff]
    %v583 = vld [vmem:[#allocation5 + $0xe80] sm:$0xff]
    %v584 = vld [vmem:[#allocation5 + $0xe88] sm:$0xff]
    %v585 = vld [vmem:[#allocation5 + $0xe90] sm:$0xff]
    %v586 = vld [vmem:[#allocation5 + $0xe98] sm:$0xff]
    %v587 = vld [vmem:[#allocation5 + $0xea0] sm:$0xff]
    %v588 = vld [vmem:[#allocation5 + $0xea8] sm:$0xff]
    %v589 = vld [vmem:[#allocation5 + $0xeb0] sm:$0xff]
    %v590 = vld [vmem:[#allocation5 + $0xeb8] sm:$0xff]
    %v591 = vld [vmem:[#allocation5 + $0xec0] sm:$0xff]
    %v592 = vld [vmem:[#allocation5 + $0xec8] sm:$0xff]
    %v593 = vld [vmem:[#allocation5 + $0xed0] sm:$0xff]
    %v594 = vld [vmem:[#allocation5 + $0xed8] sm:$0xff]
    %v595 = vld [vmem:[#allocation5 + $0xee0] sm:$0xff]
    %v596 = vld [vmem:[#allocation5 + $0xee8] sm:$0xff]
    %v597 = vld [vmem:[#allocation5 + $0xef0] sm:$0xff]
    %v598 = vld [vmem:[#allocation5 + $0xef8] sm:$0xff]
    %v599 = vld [vmem:[#allocation5 + $0xf00] sm:$0xff]
    %v600 = vld [vmem:[#allocation5 + $0xf08] sm:$0xff]
    %v601 = vld [vmem:[#allocation5 + $0xf10] sm:$0xff]
    %v602 = vld [vmem:[#allocation5 + $0xf18] sm:$0xff]
    %v603 = vld [vmem:[#allocation5 + $0xf20] sm:$0xff]
    %v604 = vld [vmem:[#allocation5 + $0xf28] sm:$0xff]
    %v605 = vld [vmem:[#allocation5 + $0xf30] sm:$0xff]
    %v606 = vld [vmem:[#allocation5 + $0xf38] sm:$0xff]
    %v607 = vld [vmem:[#allocation5 + $0xf40] sm:$0xff]
    %v608 = vld [vmem:[#allocation5 + $0xf48] sm:$0xff]
    %v609 = vld [vmem:[#allocation5 + $0xf50] sm:$0xff]
    %v610 = vld [vmem:[#allocation5 + $0xf58] sm:$0xff]
    %v611 = vld [vmem:[#allocation5 + $0xf60] sm:$0xff]
    %v612 = vld [vmem:[#allocation5 + $0xf68] sm:$0xff]
    %v613 = vld [vmem:[#allocation5 + $0xf70] sm:$0xff]
    %v614 = vld [vmem:[#allocation5 + $0xf78] sm:$0xff]
    %v615 = vld [vmem:[#allocation5 + $0xf80] sm:$0xff]
    %v616 = vld [vmem:[#allocation5 + $0xf88] sm:$0xff]
    %v617 = vld [vmem:[#allocation5 + $0xf90] sm:$0xff]
    %v618 = vld [vmem:[#allocation5 + $0xf98] sm:$0xff]
    %v619 = vld [vmem:[#allocation5 + $0xfa0] sm:$0xff]
    %v620 = vld [vmem:[#allocation5 + $0xfa8] sm:$0xff]
    %v621 = vld [vmem:[#allocation5 + $0xfb0] sm:$0xff]
    %v622 = vld [vmem:[#allocation5 + $0xfb8] sm:$0xff]
    %v623 = vld [vmem:[#allocation5 + $0xfc0] sm:$0xff]
    %v624 = vld [vmem:[#allocation5 + $0xfc8] sm:$0xff]
    %v625 = vld [vmem:[#allocation5 + $0xfd0] sm:$0xff]
    %v626 = vld [vmem:[#allocation5 + $0xfd8] sm:$0xff]
    %v627 = vld [vmem:[#allocation5 + $0xfe0] sm:$0xff]
    %v628 = vld [vmem:[#allocation5 + $0xfe8] sm:$0xff]
    %v629 = vld [vmem:[#allocation5 + $0xff0] sm:$0xff]
    %v630 = vld [vmem:[#allocation5 + $0xff8] sm:$0xff]
    %v631 = vld [vmem:[#allocation5 + $0x1000] sm:$0xff]
    %v632 = vld [vmem:[#allocation5 + $0x1008] sm:$0xff]
    %v633 = vld [vmem:[#allocation5 + $0x1010] sm:$0xff]
    %v634 = vld [vmem:[#allocation5 + $0x1018] sm:$0xff]
    %v635 = vld [vmem:[#allocation5 + $0x1020] sm:$0xff]
    %v636 = vld [vmem:[#allocation5 + $0x1028] sm:$0xff]
    %v637 = vld [vmem:[#allocation5 + $0x1030] sm:$0xff]
    %v638 = vld [vmem:[#allocation5 + $0x1038] sm:$0xff]
    %v639 = vld [vmem:[#allocation5 + $0x1040] sm:$0xff]
    %v640 = vld [vmem:[#allocation5 + $0x1048] sm:$0xff]
    %v641 = vld [vmem:[#allocation5 + $0x1050] sm:$0xff]
    %v642 = vld [vmem:[#allocation5 + $0x1058] sm:$0xff]
    %v643 = vld [vmem:[#allocation5 + $0x1060] sm:$0xff]
    %v644 = vld [vmem:[#allocation5 + $0x1068] sm:$0xff]
    %v645 = vld [vmem:[#allocation5 + $0x1070] sm:$0xff]
    %v646 = vld [vmem:[#allocation5 + $0x1078] sm:$0xff]
    %v647 = vld [vmem:[#allocation5 + $0x1080] sm:$0xff]
    %v648 = vld [vmem:[#allocation5 + $0x1088] sm:$0xff]
    %v649 = vld [vmem:[#allocation5 + $0x1090] sm:$0xff]
    %v650 = vld [vmem:[#allocation5 + $0x1098] sm:$0xff]
    %v651 = vld [vmem:[#allocation5 + $0x10a0] sm:$0xff]
    %v652 = vld [vmem:[#allocation5 + $0x10a8] sm:$0xff]
    %v653 = vld [vmem:[#allocation5 + $0x10b0] sm:$0xff]
    %v654 = vld [vmem:[#allocation5 + $0x10b8] sm:$0xff]
    %v655 = vld [vmem:[#allocation5 + $0x10c0] sm:$0xff]
    %v656 = vld [vmem:[#allocation5 + $0x10c8] sm:$0xff]
    %v657 = vld [vmem:[#allocation5 + $0x10d0] sm:$0xff]
    %v658 = vld [vmem:[#allocation5 + $0x10d8] sm:$0xff]
    %v659 = vld [vmem:[#allocation5 + $0x10e0] sm:$0xff]
    %v660 = vld [vmem:[#allocation5 + $0x10e8] sm:$0xff]
    %v661 = vld [vmem:[#allocation5 + $0x10f0] sm:$0xff]
    %v662 = vld [vmem:[#allocation5 + $0x10f8] sm:$0xff]
    %v663 = vld [vmem:[#allocation5 + $0x1100] sm:$0xff]
    %v664 = vld [vmem:[#allocation5 + $0x1108] sm:$0xff]
    %v665 = vld [vmem:[#allocation5 + $0x1110] sm:$0xff]
    %v666 = vld [vmem:[#allocation5 + $0x1118] sm:$0xff]
    %v667 = vld [vmem:[#allocation5 + $0x1120] sm:$0xff]
    %v668 = vld [vmem:[#allocation5 + $0x1128] sm:$0xff]
    %v669 = vld [vmem:[#allocation5 + $0x1130] sm:$0xff]
    %v670 = vld [vmem:[#allocation5 + $0x1138] sm:$0xff]
    %v671 = vld [vmem:[#allocation5 + $0x1140] sm:$0xff]
    %v672 = vld [vmem:[#allocation5 + $0x1148] sm:$0xff]
    %v673 = vld [vmem:[#allocation5 + $0x1150] sm:$0xff]
    %v674 = vld [vmem:[#allocation5 + $0x1158] sm:$0xff]
    %v675 = vld [vmem:[#allocation5 + $0x1160] sm:$0xff]
    %v676 = vld [vmem:[#allocation5 + $0x1168] sm:$0xff]
    %v677 = vld [vmem:[#allocation5 + $0x1170] sm:$0xff]
    %v678 = vld [vmem:[#allocation5 + $0x1178] sm:$0xff]
    %v679 = vld [vmem:[#allocation5 + $0x1180] sm:$0xff]
    %v680 = vld [vmem:[#allocation5 + $0x1188] sm:$0xff]
    %v681 = vld [vmem:[#allocation5 + $0x1190] sm:$0xff]
    %v682 = vld [vmem:[#allocation5 + $0x1198] sm:$0xff]
    %v683 = vld [vmem:[#allocation5 + $0x11a0] sm:$0xff]
    %v684 = vld [vmem:[#allocation5 + $0x11a8] sm:$0xff]
    %v685 = vld [vmem:[#allocation5 + $0x11b0] sm:$0xff]
    %v686 = vld [vmem:[#allocation5 + $0x11b8] sm:$0xff]
    %v687 = vld [vmem:[#allocation5 + $0x11c0] sm:$0xff]
    %v688 = vld [vmem:[#allocation5 + $0x11c8] sm:$0xff]
    %v689 = vld [vmem:[#allocation5 + $0x11d0] sm:$0xff]
    %v690 = vld [vmem:[#allocation5 + $0x11d8] sm:$0xff]
    %v691 = vld [vmem:[#allocation5 + $0x11e0] sm:$0xff]
    %v692 = vld [vmem:[#allocation5 + $0x11e8] sm:$0xff]
    %v693 = vld [vmem:[#allocation5 + $0x11f0] sm:$0xff]
    %v694 = vld [vmem:[#allocation5 + $0x11f8] sm:$0xff]
    %v695 = vld [vmem:[#allocation5 + $0x1200] sm:$0xff]
    %v696 = vld [vmem:[#allocation5 + $0x1208] sm:$0xff]
    %v697 = vld [vmem:[#allocation5 + $0x1210] sm:$0xff]
    %v698 = vld [vmem:[#allocation5 + $0x1218] sm:$0xff]
    %v699 = vld [vmem:[#allocation5 + $0x1220] sm:$0xff]
    %v700 = vld [vmem:[#allocation5 + $0x1228] sm:$0xff]
    %v701 = vld [vmem:[#allocation5 + $0x1230] sm:$0xff]
    %v702 = vld [vmem:[#allocation5 + $0x1238] sm:$0xff]
    %v703 = vld [vmem:[#allocation5 + $0x1240] sm:$0xff]
    %v704 = vld [vmem:[#allocation5 + $0x1248] sm:$0xff]
    %v705 = vld [vmem:[#allocation5 + $0x1250] sm:$0xff]
    %v706 = vld [vmem:[#allocation5 + $0x1258] sm:$0xff]
    %v707 = vld [vmem:[#allocation5 + $0x1260] sm:$0xff]
    %v708 = vld [vmem:[#allocation5 + $0x1268] sm:$0xff]
    %v709 = vld [vmem:[#allocation5 + $0x1270] sm:$0xff]
    %v710 = vld [vmem:[#allocation5 + $0x1278] sm:$0xff]
    %v711 = vld [vmem:[#allocation5 + $0x1280] sm:$0xff]
    %v712 = vld [vmem:[#allocation5 + $0x1288] sm:$0xff]
    %v713 = vld [vmem:[#allocation5 + $0x1290] sm:$0xff]
    %v714 = vld [vmem:[#allocation5 + $0x1298] sm:$0xff]
    %v715 = vld [vmem:[#allocation5 + $0x12a0] sm:$0xff]
    %v716 = vld [vmem:[#allocation5 + $0x12a8] sm:$0xff]
    %v717 = vld [vmem:[#allocation5 + $0x12b0] sm:$0xff]
    %v718 = vld [vmem:[#allocation5 + $0x12b8] sm:$0xff]
    %v719 = vld [vmem:[#allocation5 + $0x12c0] sm:$0xff]
    %v720 = vld [vmem:[#allocation5 + $0x12c8] sm:$0xff]
    %v721 = vld [vmem:[#allocation5 + $0x12d0] sm:$0xff]
    %v722 = vld [vmem:[#allocation5 + $0x12d8] sm:$0xff]
    %v723 = vld [vmem:[#allocation5 + $0x12e0] sm:$0xff]
    %v724 = vld [vmem:[#allocation5 + $0x12e8] sm:$0xff]
    %v725 = vld [vmem:[#allocation5 + $0x12f0] sm:$0xff]
    %v726 = vld [vmem:[#allocation5 + $0x12f8] sm:$0xff]
    %v727 = vld [vmem:[#allocation5 + $0x1300] sm:$0xff]
    %v728 = vld [vmem:[#allocation5 + $0x1308] sm:$0xff]
    %v729 = vld [vmem:[#allocation5 + $0x1310] sm:$0xff]
    %v730 = vld [vmem:[#allocation5 + $0x1318] sm:$0xff]
    %v731 = vld [vmem:[#allocation5 + $0x1320] sm:$0xff]
    %v732 = vld [vmem:[#allocation5 + $0x1328] sm:$0xff]
    %v733 = vld [vmem:[#allocation5 + $0x1330] sm:$0xff]
    %v734 = vld [vmem:[#allocation5 + $0x1338] sm:$0xff]
    %v735 = vld [vmem:[#allocation5 + $0x1340] sm:$0xff]
    %v736 = vld [vmem:[#allocation5 + $0x1348] sm:$0xff]
    %v737 = vld [vmem:[#allocation5 + $0x1350] sm:$0xff]
    %v738 = vld [vmem:[#allocation5 + $0x1358] sm:$0xff]
    %v739 = vld [vmem:[#allocation5 + $0x1360] sm:$0xff]
    %v740 = vld [vmem:[#allocation5 + $0x1368] sm:$0xff]
    %v741 = vld [vmem:[#allocation5 + $0x1370] sm:$0xff]
    %v742 = vld [vmem:[#allocation5 + $0x1378] sm:$0xff]
    %v743 = vld [vmem:[#allocation5 + $0x1380] sm:$0xff]
    %v744 = vld [vmem:[#allocation5 + $0x1388] sm:$0xff]
    %v745 = vld [vmem:[#allocation5 + $0x1390] sm:$0xff]
    %v746 = vld [vmem:[#allocation5 + $0x1398] sm:$0xff]
    %v747 = vld [vmem:[#allocation5 + $0x13a0] sm:$0xff]
    %v748 = vld [vmem:[#allocation5 + $0x13a8] sm:$0xff]
    %v749 = vld [vmem:[#allocation5 + $0x13b0] sm:$0xff]
    %v750 = vld [vmem:[#allocation5 + $0x13b8] sm:$0xff]
    %v751 = vld [vmem:[#allocation5 + $0x13c0] sm:$0xff]
    %v752 = vld [vmem:[#allocation5 + $0x13c8] sm:$0xff]
    %v753 = vld [vmem:[#allocation5 + $0x13d0] sm:$0xff]
    %v754 = vld [vmem:[#allocation5 + $0x13d8] sm:$0xff]
    %v755 = vld [vmem:[#allocation5 + $0x13e0] sm:$0xff]
    %v756 = vld [vmem:[#allocation5 + $0x13e8] sm:$0xff]
    %v757 = vld [vmem:[#allocation5 + $0x13f0] sm:$0xff]
    %v758 = vld [vmem:[#allocation5 + $0x13f8] sm:$0xff]
    %v759 = vld [vmem:[#allocation5 + $0x1400] sm:$0xff]
    %v760 = vld [vmem:[#allocation5 + $0x1408] sm:$0xff]
    %v761 = vld [vmem:[#allocation5 + $0x1410] sm:$0xff]
    %v762 = vld [vmem:[#allocation5 + $0x1418] sm:$0xff]
    %v763 = vld [vmem:[#allocation5 + $0x1420] sm:$0xff]
    %v764 = vld [vmem:[#allocation5 + $0x1428] sm:$0xff]
    %v765 = vld [vmem:[#allocation5 + $0x1430] sm:$0xff]
    %v766 = vld [vmem:[#allocation5 + $0x1438] sm:$0xff]
    %v767 = vld [vmem:[#allocation5 + $0x1440] sm:$0xff]
    %v768 = vld [vmem:[#allocation5 + $0x1448] sm:$0xff]
    %v769 = vld [vmem:[#allocation5 + $0x1450] sm:$0xff]
    %v770 = vld [vmem:[#allocation5 + $0x1458] sm:$0xff]
    %v771 = vld [vmem:[#allocation5 + $0x1460] sm:$0xff]
    %v772 = vld [vmem:[#allocation5 + $0x1468] sm:$0xff]
    %v773 = vld [vmem:[#allocation5 + $0x1470] sm:$0xff]
    %v774 = vld [vmem:[#allocation5 + $0x1478] sm:$0xff]
    %v775 = vld [vmem:[#allocation5 + $0x1480] sm:$0xff]
    %v776 = vld [vmem:[#allocation5 + $0x1488] sm:$0xff]
    %v777 = vld [vmem:[#allocation5 + $0x1490] sm:$0xff]
    %v778 = vld [vmem:[#allocation5 + $0x1498] sm:$0xff]
    %v779 = vld [vmem:[#allocation5 + $0x14a0] sm:$0xff]
    %v780 = vld [vmem:[#allocation5 + $0x14a8] sm:$0xff]
    %v781 = vld [vmem:[#allocation5 + $0x14b0] sm:$0xff]
    %v782 = vld [vmem:[#allocation5 + $0x14b8] sm:$0xff]
    %v783 = vld [vmem:[#allocation5 + $0x14c0] sm:$0xff]
    %v784 = vld [vmem:[#allocation5 + $0x14c8] sm:$0xff]
    %v785 = vld [vmem:[#allocation5 + $0x14d0] sm:$0xff]
    %v786 = vld [vmem:[#allocation5 + $0x14d8] sm:$0xff]
    %v787 = vld [vmem:[#allocation5 + $0x14e0] sm:$0xff]
    %v788 = vld [vmem:[#allocation5 + $0x14e8] sm:$0xff]
    %v789 = vld [vmem:[#allocation5 + $0x14f0] sm:$0xff]
    %v790 = vld [vmem:[#allocation5 + $0x14f8] sm:$0xff]
    %v791 = vld [vmem:[#allocation5 + $0x1500] sm:$0xff]
    %v792 = vld [vmem:[#allocation5 + $0x1508] sm:$0xff]
    %v793 = vld [vmem:[#allocation5 + $0x1510] sm:$0xff]
    %v794 = vld [vmem:[#allocation5 + $0x1518] sm:$0xff]
    %v795 = vld [vmem:[#allocation5 + $0x1520] sm:$0xff]
    %v796 = vld [vmem:[#allocation5 + $0x1528] sm:$0xff]
    %v797 = vld [vmem:[#allocation5 + $0x1530] sm:$0xff]
    %v798 = vld [vmem:[#allocation5 + $0x1538] sm:$0xff]
    %v799 = vld [vmem:[#allocation5 + $0x1540] sm:$0xff]
    %v800 = vld [vmem:[#allocation5 + $0x1548] sm:$0xff]
    %v801 = vld [vmem:[#allocation5 + $0x1550] sm:$0xff]
    %v802 = vld [vmem:[#allocation5 + $0x1558] sm:$0xff]
    %v803 = vld [vmem:[#allocation5 + $0x1560] sm:$0xff]
    %v804 = vld [vmem:[#allocation5 + $0x1568] sm:$0xff]
    %v805 = vld [vmem:[#allocation5 + $0x1570] sm:$0xff]
    %v806 = vld [vmem:[#allocation5 + $0x1578] sm:$0xff]
    %v807 = vld [vmem:[#allocation5 + $0x1580] sm:$0xff]
    %v808 = vld [vmem:[#allocation5 + $0x1588] sm:$0xff]
    %v809 = vld [vmem:[#allocation5 + $0x1590] sm:$0xff]
    %v810 = vld [vmem:[#allocation5 + $0x1598] sm:$0xff]
    %v811 = vld [vmem:[#allocation5 + $0x15a0] sm:$0xff]
    %v812 = vld [vmem:[#allocation5 + $0x15a8] sm:$0xff]
    %v813 = vld [vmem:[#allocation5 + $0x15b0] sm:$0xff]
    %v814 = vld [vmem:[#allocation5 + $0x15b8] sm:$0xff]
    %v815 = vld [vmem:[#allocation5 + $0x15c0] sm:$0xff]
    %v816 = vld [vmem:[#allocation5 + $0x15c8] sm:$0xff]
    %v817 = vld [vmem:[#allocation5 + $0x15d0] sm:$0xff]
    %v818 = vld [vmem:[#allocation5 + $0x15d8] sm:$0xff]
    %v819 = vld [vmem:[#allocation5 + $0x15e0] sm:$0xff]
    %v820 = vld [vmem:[#allocation5 + $0x15e8] sm:$0xff]
    %v821 = vld [vmem:[#allocation5 + $0x15f0] sm:$0xff]
    %v822 = vld [vmem:[#allocation5 + $0x15f8] sm:$0xff]
    %v823 = vld [vmem:[#allocation5 + $0x1600] sm:$0xff]
    %v824 = vld [vmem:[#allocation5 + $0x1608] sm:$0xff]
    %v825 = vld [vmem:[#allocation5 + $0x1610] sm:$0xff]
    %v826 = vld [vmem:[#allocation5 + $0x1618] sm:$0xff]
    %v827 = vld [vmem:[#allocation5 + $0x1620] sm:$0xff]
    %v828 = vld [vmem:[#allocation5 + $0x1628] sm:$0xff]
    %v829 = vld [vmem:[#allocation5 + $0x1630] sm:$0xff]
    %v830 = vld [vmem:[#allocation5 + $0x1638] sm:$0xff]
    %v831 = vld [vmem:[#allocation5 + $0x1640] sm:$0xff]
    %v832 = vld [vmem:[#allocation5 + $0x1648] sm:$0xff]
    %v833 = vld [vmem:[#allocation5 + $0x1650] sm:$0xff]
    %v834 = vld [vmem:[#allocation5 + $0x1658] sm:$0xff]
    %v835 = vld [vmem:[#allocation5 + $0x1660] sm:$0xff]
    %v836 = vld [vmem:[#allocation5 + $0x1668] sm:$0xff]
    %v837 = vld [vmem:[#allocation5 + $0x1670] sm:$0xff]
    %v838 = vld [vmem:[#allocation5 + $0x1678] sm:$0xff]
    %v839 = vld [vmem:[#allocation5 + $0x1680] sm:$0xff]
    %v840 = vld [vmem:[#allocation5 + $0x1688] sm:$0xff]
    %v841 = vld [vmem:[#allocation5 + $0x1690] sm:$0xff]
    %v842 = vld [vmem:[#allocation5 + $0x1698] sm:$0xff]
    %v843 = vld [vmem:[#allocation5 + $0x16a0] sm:$0xff]
    %v844 = vld [vmem:[#allocation5 + $0x16a8] sm:$0xff]
    %v845 = vld [vmem:[#allocation5 + $0x16b0] sm:$0xff]
    %v846 = vld [vmem:[#allocation5 + $0x16b8] sm:$0xff]
    %v847 = vld [vmem:[#allocation5 + $0x16c0] sm:$0xff]
    %v848 = vld [vmem:[#allocation5 + $0x16c8] sm:$0xff]
    %v849 = vld [vmem:[#allocation5 + $0x16d0] sm:$0xff]
    %v850 = vld [vmem:[#allocation5 + $0x16d8] sm:$0xff]
    %v851 = vld [vmem:[#allocation5 + $0x16e0] sm:$0xff]
    %v852 = vld [vmem:[#allocation5 + $0x16e8] sm:$0xff]
    %v853 = vld [vmem:[#allocation5 + $0x16f0] sm:$0xff]
    %v854 = vld [vmem:[#allocation5 + $0x16f8] sm:$0xff]
    %v855 = vld [vmem:[#allocation5 + $0x1700] sm:$0xff]
    %v856 = vld [vmem:[#allocation5 + $0x1708] sm:$0xff]
    %v857 = vld [vmem:[#allocation5 + $0x1710] sm:$0xff]
    %v858 = vld [vmem:[#allocation5 + $0x1718] sm:$0xff]
    %v859 = vld [vmem:[#allocation5 + $0x1720] sm:$0xff]
    %v860 = vld [vmem:[#allocation5 + $0x1728] sm:$0xff]
    %v861 = vld [vmem:[#allocation5 + $0x1730] sm:$0xff]
    %v862 = vld [vmem:[#allocation5 + $0x1738] sm:$0xff]
    %v863 = vld [vmem:[#allocation5 + $0x1740] sm:$0xff]
    %v864 = vld [vmem:[#allocation5 + $0x1748] sm:$0xff]
    %v865 = vld [vmem:[#allocation5 + $0x1750] sm:$0xff]
    %v866 = vld [vmem:[#allocation5 + $0x1758] sm:$0xff]
    %v867 = vld [vmem:[#allocation5 + $0x1760] sm:$0xff]
    %v868 = vld [vmem:[#allocation5 + $0x1768] sm:$0xff]
    %v869 = vld [vmem:[#allocation5 + $0x1770] sm:$0xff]
    %v870 = vld [vmem:[#allocation5 + $0x1778] sm:$0xff]
    %v871 = vld [vmem:[#allocation5 + $0x1780] sm:$0xff]
    %v872 = vld [vmem:[#allocation5 + $0x1788] sm:$0xff]
    %v873 = vld [vmem:[#allocation5 + $0x1790] sm:$0xff]
    %v874 = vld [vmem:[#allocation5 + $0x1798] sm:$0xff]
    %v875 = vld [vmem:[#allocation5 + $0x17a0] sm:$0xff]
    %v876 = vld [vmem:[#allocation5 + $0x17a8] sm:$0xff]
    %v877 = vld [vmem:[#allocation5 + $0x17b0] sm:$0xff]
    %v878 = vld [vmem:[#allocation5 + $0x17b8] sm:$0xff]
    %v879 = vld [vmem:[#allocation5 + $0x17c0] sm:$0xff]
    %v880 = vld [vmem:[#allocation5 + $0x17c8] sm:$0xff]
    %v881 = vld [vmem:[#allocation5 + $0x17d0] sm:$0xff]
    %v882 = vld [vmem:[#allocation5 + $0x17d8] sm:$0xff]
    %v883 = vld [vmem:[#allocation5 + $0x17e0] sm:$0xff]
    %v884 = vld [vmem:[#allocation5 + $0x17e8] sm:$0xff]
    %v885 = vld [vmem:[#allocation5 + $0x17f0] sm:$0xff]
    %v886 = vld [vmem:[#allocation5 + $0x17f8] sm:$0xff]
    %v887 = vld [vmem:[#allocation7] sm:$0xf]
    %v889 = vperm.slane %v887, 0
    %v890 = vperm.slane %v887, 1
    %v891 = vperm.slane %v887, 2
    %v892 = vperm.slane %v887, 3
    %v921 = vunpack.c.l.b16 %v95
    %v922 = vunpack.c.h.b16 %v95
    %v923 = vunpack.c.l.b16 %v96
    %v924 = vunpack.c.h.b16 %v96
    %v925 = vunpack.c.l.b16 %v97
    %v926 = vunpack.c.h.b16 %v97
    %v927 = vunpack.c.l.b16 %v98
    %v928 = vunpack.c.h.b16 %v98
    %v929 = vunpack.c.l.b16 %v99
    %v930 = vunpack.c.h.b16 %v99
    %v931 = vunpack.c.l.b16 %v100
    %v932 = vunpack.c.h.b16 %v100
    %v933 = vunpack.c.l.b16 %v101
    %v934 = vunpack.c.h.b16 %v101
    %v935 = vunpack.c.l.b16 %v102
    %v936 = vunpack.c.h.b16 %v102
    %v937 = vunpack.c.l.b16 %v103
    %v938 = vunpack.c.h.b16 %v103
    %v939 = vunpack.c.l.b16 %v104
    %v940 = vunpack.c.h.b16 %v104
    %v941 = vunpack.c.l.b16 %v105
    %v942 = vunpack.c.h.b16 %v105
    %v943 = vunpack.c.l.b16 %v106
    %v944 = vunpack.c.h.b16 %v106
    %v945 = vunpack.c.l.b16 %v107
    %v946 = vunpack.c.h.b16 %v107
    %v947 = vunpack.c.l.b16 %v108
    %v948 = vunpack.c.h.b16 %v108
    %v949 = vunpack.c.l.b16 %v109
    %v950 = vunpack.c.h.b16 %v109
    %v951 = vunpack.c.l.b16 %v110
    %v952 = vunpack.c.h.b16 %v110
    %v953 = vunpack.c.l.b16 %v111
    %v954 = vunpack.c.h.b16 %v111
    %v955 = vunpack.c.l.b16 %v112
    %v956 = vunpack.c.h.b16 %v112
    %v957 = vunpack.c.l.b16 %v113
    %v958 = vunpack.c.h.b16 %v113
    %v959 = vunpack.c.l.b16 %v114
    %v960 = vunpack.c.h.b16 %v114
    %v961 = vunpack.c.l.b16 %v115
    %v962 = vunpack.c.h.b16 %v115
    %v963 = vunpack.c.l.b16 %v116
    %v964 = vunpack.c.h.b16 %v116
    %v965 = vunpack.c.l.b16 %v117
    %v966 = vunpack.c.h.b16 %v117
    %v967 = vunpack.c.l.b16 %v118
    %v968 = vunpack.c.h.b16 %v118
    %v969 = vpack.c.b16 %v945, %v921
    %v970 = vpack.c.b16 %v946, %v922
    %v971 = vpack.c.b16 %v947, %v923
    %v972 = vpack.c.b16 %v948, %v924
    %v973 = vpack.c.b16 %v949, %v925
    %v974 = vpack.c.b16 %v950, %v926
    %v975 = vpack.c.b16 %v951, %v927
    %v976 = vpack.c.b16 %v952, %v928
    %v977 = vpack.c.b16 %v953, %v929
    %v978 = vpack.c.b16 %v954, %v930
    %v979 = vpack.c.b16 %v955, %v931
    %v980 = vpack.c.b16 %v956, %v932
    %v981 = vpack.c.b16 %v957, %v933
    %v982 = vpack.c.b16 %v958, %v934
    %v983 = vpack.c.b16 %v959, %v935
    %v984 = vpack.c.b16 %v960, %v936
    %v985 = vpack.c.b16 %v961, %v937
    %v986 = vpack.c.b16 %v962, %v938
    %v987 = vpack.c.b16 %v963, %v939
    %v988 = vpack.c.b16 %v964, %v940
    %v989 = vpack.c.b16 %v965, %v941
    %v990 = vpack.c.b16 %v966, %v942
    %v991 = vpack.c.b16 %v967, %v943
    %v992 = vpack.c.b16 %v968, %v944
    %v1785 = vunpack.c.l.b16 %v119
    %v1786 = vunpack.c.h.b16 %v119
    %v1787 = vunpack.c.l.b16 %v120
    %v1788 = vunpack.c.h.b16 %v120
    %v1789 = vunpack.c.l.b16 %v121
    %v1790 = vunpack.c.h.b16 %v121
    %v1791 = vunpack.c.l.b16 %v122
    %v1792 = vunpack.c.h.b16 %v122
    %v1793 = vunpack.c.l.b16 %v123
    %v1794 = vunpack.c.h.b16 %v123
    %v1795 = vunpack.c.l.b16 %v124
    %v1796 = vunpack.c.h.b16 %v124
    %v1797 = vunpack.c.l.b16 %v125
    %v1798 = vunpack.c.h.b16 %v125
    %v1799 = vunpack.c.l.b16 %v126
    %v1800 = vunpack.c.h.b16 %v126
    %v1801 = vunpack.c.l.b16 %v127
    %v1802 = vunpack.c.h.b16 %v127
    %v1803 = vunpack.c.l.b16 %v128
    %v1804 = vunpack.c.h.b16 %v128
    %v1805 = vunpack.c.l.b16 %v129
    %v1806 = vunpack.c.h.b16 %v129
    %v1807 = vunpack.c.l.b16 %v130
    %v1808 = vunpack.c.h.b16 %v130
    %v1809 = vunpack.c.l.b16 %v131
    %v1810 = vunpack.c.h.b16 %v131
    %v1811 = vunpack.c.l.b16 %v132
    %v1812 = vunpack.c.h.b16 %v132
    %v1813 = vunpack.c.l.b16 %v133
    %v1814 = vunpack.c.h.b16 %v133
    %v1815 = vunpack.c.l.b16 %v134
    %v1816 = vunpack.c.h.b16 %v134
    %v1817 = vunpack.c.l.b16 %v135
    %v1818 = vunpack.c.h.b16 %v135
    %v1819 = vunpack.c.l.b16 %v136
    %v1820 = vunpack.c.h.b16 %v136
    %v1821 = vunpack.c.l.b16 %v137
    %v1822 = vunpack.c.h.b16 %v137
    %v1823 = vunpack.c.l.b16 %v138
    %v1824 = vunpack.c.h.b16 %v138
    %v1825 = vunpack.c.l.b16 %v139
    %v1826 = vunpack.c.h.b16 %v139
    %v1827 = vunpack.c.l.b16 %v140
    %v1828 = vunpack.c.h.b16 %v140
    %v1829 = vunpack.c.l.b16 %v141
    %v1830 = vunpack.c.h.b16 %v141
    %v1831 = vunpack.c.l.b16 %v142
    %v1832 = vunpack.c.h.b16 %v142
    %v1833 = vunpack.c.l.b16 %v143
    %v1834 = vunpack.c.h.b16 %v143
    %v1835 = vunpack.c.l.b16 %v144
    %v1836 = vunpack.c.h.b16 %v144
    %v1837 = vunpack.c.l.b16 %v145
    %v1838 = vunpack.c.h.b16 %v145
    %v1839 = vunpack.c.l.b16 %v146
    %v1840 = vunpack.c.h.b16 %v146
    %v1841 = vunpack.c.l.b16 %v147
    %v1842 = vunpack.c.h.b16 %v147
    %v1843 = vunpack.c.l.b16 %v148
    %v1844 = vunpack.c.h.b16 %v148
    %v1845 = vunpack.c.l.b16 %v149
    %v1846 = vunpack.c.h.b16 %v149
    %v1847 = vunpack.c.l.b16 %v150
    %v1848 = vunpack.c.h.b16 %v150
    %v1849 = vunpack.c.l.b16 %v151
    %v1850 = vunpack.c.h.b16 %v151
    %v1851 = vunpack.c.l.b16 %v152
    %v1852 = vunpack.c.h.b16 %v152
    %v1853 = vunpack.c.l.b16 %v153
    %v1854 = vunpack.c.h.b16 %v153
    %v1855 = vunpack.c.l.b16 %v154
    %v1856 = vunpack.c.h.b16 %v154
    %v1857 = vunpack.c.l.b16 %v155
    %v1858 = vunpack.c.h.b16 %v155
    %v1859 = vunpack.c.l.b16 %v156
    %v1860 = vunpack.c.h.b16 %v156
    %v1861 = vunpack.c.l.b16 %v157
    %v1862 = vunpack.c.h.b16 %v157
    %v1863 = vunpack.c.l.b16 %v158
    %v1864 = vunpack.c.h.b16 %v158
    %v1865 = vunpack.c.l.b16 %v159
    %v1866 = vunpack.c.h.b16 %v159
    %v1867 = vunpack.c.l.b16 %v160
    %v1868 = vunpack.c.h.b16 %v160
    %v1869 = vunpack.c.l.b16 %v161
    %v1870 = vunpack.c.h.b16 %v161
    %v1871 = vunpack.c.l.b16 %v162
    %v1872 = vunpack.c.h.b16 %v162
    %v1873 = vunpack.c.l.b16 %v163
    %v1874 = vunpack.c.h.b16 %v163
    %v1875 = vunpack.c.l.b16 %v164
    %v1876 = vunpack.c.h.b16 %v164
    %v1877 = vunpack.c.l.b16 %v165
    %v1878 = vunpack.c.h.b16 %v165
    %v1879 = vunpack.c.l.b16 %v166
    %v1880 = vunpack.c.h.b16 %v166
    %v1881 = vunpack.c.l.b16 %v167
    %v1882 = vunpack.c.h.b16 %v167
    %v1883 = vunpack.c.l.b16 %v168
    %v1884 = vunpack.c.h.b16 %v168
    %v1885 = vunpack.c.l.b16 %v169
    %v1886 = vunpack.c.h.b16 %v169
    %v1887 = vunpack.c.l.b16 %v170
    %v1888 = vunpack.c.h.b16 %v170
    %v1889 = vunpack.c.l.b16 %v171
    %v1890 = vunpack.c.h.b16 %v171
    %v1891 = vunpack.c.l.b16 %v172
    %v1892 = vunpack.c.h.b16 %v172
    %v1893 = vunpack.c.l.b16 %v173
    %v1894 = vunpack.c.h.b16 %v173
    %v1895 = vunpack.c.l.b16 %v174
    %v1896 = vunpack.c.h.b16 %v174
    %v1897 = vunpack.c.l.b16 %v175
    %v1898 = vunpack.c.h.b16 %v175
    %v1899 = vunpack.c.l.b16 %v176
    %v1900 = vunpack.c.h.b16 %v176
    %v1901 = vunpack.c.l.b16 %v177
    %v1902 = vunpack.c.h.b16 %v177
    %v1903 = vunpack.c.l.b16 %v178
    %v1904 = vunpack.c.h.b16 %v178
    %v1905 = vunpack.c.l.b16 %v179
    %v1906 = vunpack.c.h.b16 %v179
    %v1907 = vunpack.c.l.b16 %v180
    %v1908 = vunpack.c.h.b16 %v180
    %v1909 = vunpack.c.l.b16 %v181
    %v1910 = vunpack.c.h.b16 %v181
    %v1911 = vunpack.c.l.b16 %v182
    %v1912 = vunpack.c.h.b16 %v182
    %v1913 = vunpack.c.l.b16 %v183
    %v1914 = vunpack.c.h.b16 %v183
    %v1915 = vunpack.c.l.b16 %v184
    %v1916 = vunpack.c.h.b16 %v184
    %v1917 = vunpack.c.l.b16 %v185
    %v1918 = vunpack.c.h.b16 %v185
    %v1919 = vunpack.c.l.b16 %v186
    %v1920 = vunpack.c.h.b16 %v186
    %v1921 = vunpack.c.l.b16 %v187
    %v1922 = vunpack.c.h.b16 %v187
    %v1923 = vunpack.c.l.b16 %v188
    %v1924 = vunpack.c.h.b16 %v188
    %v1925 = vunpack.c.l.b16 %v189
    %v1926 = vunpack.c.h.b16 %v189
    %v1927 = vunpack.c.l.b16 %v190
    %v1928 = vunpack.c.h.b16 %v190
    %v1929 = vunpack.c.l.b16 %v191
    %v1930 = vunpack.c.h.b16 %v191
    %v1931 = vunpack.c.l.b16 %v192
    %v1932 = vunpack.c.h.b16 %v192
    %v1933 = vunpack.c.l.b16 %v193
    %v1934 = vunpack.c.h.b16 %v193
    %v1935 = vunpack.c.l.b16 %v194
    %v1936 = vunpack.c.h.b16 %v194
    %v1937 = vunpack.c.l.b16 %v195
    %v1938 = vunpack.c.h.b16 %v195
    %v1939 = vunpack.c.l.b16 %v196
    %v1940 = vunpack.c.h.b16 %v196
    %v1941 = vunpack.c.l.b16 %v197
    %v1942 = vunpack.c.h.b16 %v197
    %v1943 = vunpack.c.l.b16 %v198
    %v1944 = vunpack.c.h.b16 %v198
    %v1945 = vunpack.c.l.b16 %v199
    %v1946 = vunpack.c.h.b16 %v199
    %v1947 = vunpack.c.l.b16 %v200
    %v1948 = vunpack.c.h.b16 %v200
    %v1949 = vunpack.c.l.b16 %v201
    %v1950 = vunpack.c.h.b16 %v201
    %v1951 = vunpack.c.l.b16 %v202
    %v1952 = vunpack.c.h.b16 %v202
    %v1953 = vunpack.c.l.b16 %v203
    %v1954 = vunpack.c.h.b16 %v203
    %v1955 = vunpack.c.l.b16 %v204
    %v1956 = vunpack.c.h.b16 %v204
    %v1957 = vunpack.c.l.b16 %v205
    %v1958 = vunpack.c.h.b16 %v205
    %v1959 = vunpack.c.l.b16 %v206
    %v1960 = vunpack.c.h.b16 %v206
    %v1961 = vunpack.c.l.b16 %v207
    %v1962 = vunpack.c.h.b16 %v207
    %v1963 = vunpack.c.l.b16 %v208
    %v1964 = vunpack.c.h.b16 %v208
    %v1965 = vunpack.c.l.b16 %v209
    %v1966 = vunpack.c.h.b16 %v209
    %v1967 = vunpack.c.l.b16 %v210
    %v1968 = vunpack.c.h.b16 %v210
    %v1969 = vunpack.c.l.b16 %v211
    %v1970 = vunpack.c.h.b16 %v211
    %v1971 = vunpack.c.l.b16 %v212
    %v1972 = vunpack.c.h.b16 %v212
    %v1973 = vunpack.c.l.b16 %v213
    %v1974 = vunpack.c.h.b16 %v213
    %v1975 = vunpack.c.l.b16 %v214
    %v1976 = vunpack.c.h.b16 %v214
    %v1977 = vunpack.c.l.b16 %v215
    %v1978 = vunpack.c.h.b16 %v215
    %v1979 = vunpack.c.l.b16 %v216
    %v1980 = vunpack.c.h.b16 %v216
    %v1981 = vunpack.c.l.b16 %v217
    %v1982 = vunpack.c.h.b16 %v217
    %v1983 = vunpack.c.l.b16 %v218
    %v1984 = vunpack.c.h.b16 %v218
    %v1985 = vunpack.c.l.b16 %v219
    %v1986 = vunpack.c.h.b16 %v219
    %v1987 = vunpack.c.l.b16 %v220
    %v1988 = vunpack.c.h.b16 %v220
    %v1989 = vunpack.c.l.b16 %v221
    %v1990 = vunpack.c.h.b16 %v221
    %v1991 = vunpack.c.l.b16 %v222
    %v1992 = vunpack.c.h.b16 %v222
    %v1993 = vunpack.c.l.b16 %v223
    %v1994 = vunpack.c.h.b16 %v223
    %v1995 = vunpack.c.l.b16 %v224
    %v1996 = vunpack.c.h.b16 %v224
    %v1997 = vunpack.c.l.b16 %v225
    %v1998 = vunpack.c.h.b16 %v225
    %v1999 = vunpack.c.l.b16 %v226
    %v2000 = vunpack.c.h.b16 %v226
    %v2001 = vunpack.c.l.b16 %v227
    %v2002 = vunpack.c.h.b16 %v227
    %v2003 = vunpack.c.l.b16 %v228
    %v2004 = vunpack.c.h.b16 %v228
    %v2005 = vunpack.c.l.b16 %v229
    %v2006 = vunpack.c.h.b16 %v229
    %v2007 = vunpack.c.l.b16 %v230
    %v2008 = vunpack.c.h.b16 %v230
    %v2009 = vunpack.c.l.b16 %v231
    %v2010 = vunpack.c.h.b16 %v231
    %v2011 = vunpack.c.l.b16 %v232
    %v2012 = vunpack.c.h.b16 %v232
    %v2013 = vunpack.c.l.b16 %v233
    %v2014 = vunpack.c.h.b16 %v233
    %v2015 = vunpack.c.l.b16 %v234
    %v2016 = vunpack.c.h.b16 %v234
    %v2017 = vunpack.c.l.b16 %v235
    %v2018 = vunpack.c.h.b16 %v235
    %v2019 = vunpack.c.l.b16 %v236
    %v2020 = vunpack.c.h.b16 %v236
    %v2021 = vunpack.c.l.b16 %v237
    %v2022 = vunpack.c.h.b16 %v237
    %v2023 = vunpack.c.l.b16 %v238
    %v2024 = vunpack.c.h.b16 %v238
    %v2025 = vunpack.c.l.b16 %v239
    %v2026 = vunpack.c.h.b16 %v239
    %v2027 = vunpack.c.l.b16 %v240
    %v2028 = vunpack.c.h.b16 %v240
    %v2029 = vunpack.c.l.b16 %v241
    %v2030 = vunpack.c.h.b16 %v241
    %v2031 = vunpack.c.l.b16 %v242
    %v2032 = vunpack.c.h.b16 %v242
    %v2033 = vunpack.c.l.b16 %v243
    %v2034 = vunpack.c.h.b16 %v243
    %v2035 = vunpack.c.l.b16 %v244
    %v2036 = vunpack.c.h.b16 %v244
    %v2037 = vunpack.c.l.b16 %v245
    %v2038 = vunpack.c.h.b16 %v245
    %v2039 = vunpack.c.l.b16 %v246
    %v2040 = vunpack.c.h.b16 %v246
    %v2041 = vunpack.c.l.b16 %v247
    %v2042 = vunpack.c.h.b16 %v247
    %v2043 = vunpack.c.l.b16 %v248
    %v2044 = vunpack.c.h.b16 %v248
    %v2045 = vunpack.c.l.b16 %v249
    %v2046 = vunpack.c.h.b16 %v249
    %v2047 = vunpack.c.l.b16 %v250
    %v2048 = vunpack.c.h.b16 %v250
    %v2049 = vunpack.c.l.b16 %v251
    %v2050 = vunpack.c.h.b16 %v251
    %v2051 = vunpack.c.l.b16 %v252
    %v2052 = vunpack.c.h.b16 %v252
    %v2053 = vunpack.c.l.b16 %v253
    %v2054 = vunpack.c.h.b16 %v253
    %v2055 = vunpack.c.l.b16 %v254
    %v2056 = vunpack.c.h.b16 %v254
    %v2057 = vunpack.c.l.b16 %v255
    %v2058 = vunpack.c.h.b16 %v255
    %v2059 = vunpack.c.l.b16 %v256
    %v2060 = vunpack.c.h.b16 %v256
    %v2061 = vunpack.c.l.b16 %v257
    %v2062 = vunpack.c.h.b16 %v257
    %v2063 = vunpack.c.l.b16 %v258
    %v2064 = vunpack.c.h.b16 %v258
    %v2065 = vunpack.c.l.b16 %v259
    %v2066 = vunpack.c.h.b16 %v259
    %v2067 = vunpack.c.l.b16 %v260
    %v2068 = vunpack.c.h.b16 %v260
    %v2069 = vunpack.c.l.b16 %v261
    %v2070 = vunpack.c.h.b16 %v261
    %v2071 = vunpack.c.l.b16 %v262
    %v2072 = vunpack.c.h.b16 %v262
    %v2073 = vunpack.c.l.b16 %v263
    %v2074 = vunpack.c.h.b16 %v263
    %v2075 = vunpack.c.l.b16 %v264
    %v2076 = vunpack.c.h.b16 %v264
    %v2077 = vunpack.c.l.b16 %v265
    %v2078 = vunpack.c.h.b16 %v265
    %v2079 = vunpack.c.l.b16 %v266
    %v2080 = vunpack.c.h.b16 %v266
    %v2081 = vunpack.c.l.b16 %v267
    %v2082 = vunpack.c.h.b16 %v267
    %v2083 = vunpack.c.l.b16 %v268
    %v2084 = vunpack.c.h.b16 %v268
    %v2085 = vunpack.c.l.b16 %v269
    %v2086 = vunpack.c.h.b16 %v269
    %v2087 = vunpack.c.l.b16 %v270
    %v2088 = vunpack.c.h.b16 %v270
    %v2089 = vunpack.c.l.b16 %v271
    %v2090 = vunpack.c.h.b16 %v271
    %v2091 = vunpack.c.l.b16 %v272
    %v2092 = vunpack.c.h.b16 %v272
    %v2093 = vunpack.c.l.b16 %v273
    %v2094 = vunpack.c.h.b16 %v273
    %v2095 = vunpack.c.l.b16 %v274
    %v2096 = vunpack.c.h.b16 %v274
    %v2097 = vunpack.c.l.b16 %v275
    %v2098 = vunpack.c.h.b16 %v275
    %v2099 = vunpack.c.l.b16 %v276
    %v2100 = vunpack.c.h.b16 %v276
    %v2101 = vunpack.c.l.b16 %v277
    %v2102 = vunpack.c.h.b16 %v277
    %v2103 = vunpack.c.l.b16 %v278
    %v2104 = vunpack.c.h.b16 %v278
    %v2105 = vunpack.c.l.b16 %v279
    %v2106 = vunpack.c.h.b16 %v279
    %v2107 = vunpack.c.l.b16 %v280
    %v2108 = vunpack.c.h.b16 %v280
    %v2109 = vunpack.c.l.b16 %v281
    %v2110 = vunpack.c.h.b16 %v281
    %v2111 = vunpack.c.l.b16 %v282
    %v2112 = vunpack.c.h.b16 %v282
    %v2113 = vunpack.c.l.b16 %v283
    %v2114 = vunpack.c.h.b16 %v283
    %v2115 = vunpack.c.l.b16 %v284
    %v2116 = vunpack.c.h.b16 %v284
    %v2117 = vunpack.c.l.b16 %v285
    %v2118 = vunpack.c.h.b16 %v285
    %v2119 = vunpack.c.l.b16 %v286
    %v2120 = vunpack.c.h.b16 %v286
    %v2121 = vunpack.c.l.b16 %v287
    %v2122 = vunpack.c.h.b16 %v287
    %v2123 = vunpack.c.l.b16 %v288
    %v2124 = vunpack.c.h.b16 %v288
    %v2125 = vunpack.c.l.b16 %v289
    %v2126 = vunpack.c.h.b16 %v289
    %v2127 = vunpack.c.l.b16 %v290
    %v2128 = vunpack.c.h.b16 %v290
    %v2129 = vunpack.c.l.b16 %v291
    %v2130 = vunpack.c.h.b16 %v291
    %v2131 = vunpack.c.l.b16 %v292
    %v2132 = vunpack.c.h.b16 %v292
    %v2133 = vunpack.c.l.b16 %v293
    %v2134 = vunpack.c.h.b16 %v293
    %v2135 = vunpack.c.l.b16 %v294
    %v2136 = vunpack.c.h.b16 %v294
    %v2137 = vunpack.c.l.b16 %v295
    %v2138 = vunpack.c.h.b16 %v295
    %v2139 = vunpack.c.l.b16 %v296
    %v2140 = vunpack.c.h.b16 %v296
    %v2141 = vunpack.c.l.b16 %v297
    %v2142 = vunpack.c.h.b16 %v297
    %v2143 = vunpack.c.l.b16 %v298
    %v2144 = vunpack.c.h.b16 %v298
    %v2145 = vunpack.c.l.b16 %v299
    %v2146 = vunpack.c.h.b16 %v299
    %v2147 = vunpack.c.l.b16 %v300
    %v2148 = vunpack.c.h.b16 %v300
    %v2149 = vunpack.c.l.b16 %v301
    %v2150 = vunpack.c.h.b16 %v301
    %v2151 = vunpack.c.l.b16 %v302
    %v2152 = vunpack.c.h.b16 %v302
    %v2153 = vunpack.c.l.b16 %v303
    %v2154 = vunpack.c.h.b16 %v303
    %v2155 = vunpack.c.l.b16 %v304
    %v2156 = vunpack.c.h.b16 %v304
    %v2157 = vunpack.c.l.b16 %v305
    %v2158 = vunpack.c.h.b16 %v305
    %v2159 = vunpack.c.l.b16 %v306
    %v2160 = vunpack.c.h.b16 %v306
    %v2161 = vunpack.c.l.b16 %v307
    %v2162 = vunpack.c.h.b16 %v307
    %v2163 = vunpack.c.l.b16 %v308
    %v2164 = vunpack.c.h.b16 %v308
    %v2165 = vunpack.c.l.b16 %v309
    %v2166 = vunpack.c.h.b16 %v309
    %v2167 = vunpack.c.l.b16 %v310
    %v2168 = vunpack.c.h.b16 %v310
    %v2169 = vunpack.c.l.b16 %v311
    %v2170 = vunpack.c.h.b16 %v311
    %v2171 = vunpack.c.l.b16 %v312
    %v2172 = vunpack.c.h.b16 %v312
    %v2173 = vunpack.c.l.b16 %v313
    %v2174 = vunpack.c.h.b16 %v313
    %v2175 = vunpack.c.l.b16 %v314
    %v2176 = vunpack.c.h.b16 %v314
    %v2177 = vunpack.c.l.b16 %v315
    %v2178 = vunpack.c.h.b16 %v315
    %v2179 = vunpack.c.l.b16 %v316
    %v2180 = vunpack.c.h.b16 %v316
    %v2181 = vunpack.c.l.b16 %v317
    %v2182 = vunpack.c.h.b16 %v317
    %v2183 = vunpack.c.l.b16 %v318
    %v2184 = vunpack.c.h.b16 %v318
    %v2185 = vunpack.c.l.b16 %v319
    %v2186 = vunpack.c.h.b16 %v319
    %v2187 = vunpack.c.l.b16 %v320
    %v2188 = vunpack.c.h.b16 %v320
    %v2189 = vunpack.c.l.b16 %v321
    %v2190 = vunpack.c.h.b16 %v321
    %v2191 = vunpack.c.l.b16 %v322
    %v2192 = vunpack.c.h.b16 %v322
    %v2193 = vunpack.c.l.b16 %v323
    %v2194 = vunpack.c.h.b16 %v323
    %v2195 = vunpack.c.l.b16 %v324
    %v2196 = vunpack.c.h.b16 %v324
    %v2197 = vunpack.c.l.b16 %v325
    %v2198 = vunpack.c.h.b16 %v325
    %v2199 = vunpack.c.l.b16 %v326
    %v2200 = vunpack.c.h.b16 %v326
    %v2201 = vunpack.c.l.b16 %v327
    %v2202 = vunpack.c.h.b16 %v327
    %v2203 = vunpack.c.l.b16 %v328
    %v2204 = vunpack.c.h.b16 %v328
    %v2205 = vunpack.c.l.b16 %v329
    %v2206 = vunpack.c.h.b16 %v329
    %v2207 = vunpack.c.l.b16 %v330
    %v2208 = vunpack.c.h.b16 %v330
    %v2209 = vunpack.c.l.b16 %v331
    %v2210 = vunpack.c.h.b16 %v331
    %v2211 = vunpack.c.l.b16 %v332
    %v2212 = vunpack.c.h.b16 %v332
    %v2213 = vunpack.c.l.b16 %v333
    %v2214 = vunpack.c.h.b16 %v333
    %v2215 = vunpack.c.l.b16 %v334
    %v2216 = vunpack.c.h.b16 %v334
    %v2217 = vunpack.c.l.b16 %v335
    %v2218 = vunpack.c.h.b16 %v335
    %v2219 = vunpack.c.l.b16 %v336
    %v2220 = vunpack.c.h.b16 %v336
    %v2221 = vunpack.c.l.b16 %v337
    %v2222 = vunpack.c.h.b16 %v337
    %v2223 = vunpack.c.l.b16 %v338
    %v2224 = vunpack.c.h.b16 %v338
    %v2225 = vunpack.c.l.b16 %v339
    %v2226 = vunpack.c.h.b16 %v339
    %v2227 = vunpack.c.l.b16 %v340
    %v2228 = vunpack.c.h.b16 %v340
    %v2229 = vunpack.c.l.b16 %v341
    %v2230 = vunpack.c.h.b16 %v341
    %v2231 = vunpack.c.l.b16 %v342
    %v2232 = vunpack.c.h.b16 %v342
    %v2233 = vunpack.c.l.b16 %v343
    %v2234 = vunpack.c.h.b16 %v343
    %v2235 = vunpack.c.l.b16 %v344
    %v2236 = vunpack.c.h.b16 %v344
    %v2237 = vunpack.c.l.b16 %v345
    %v2238 = vunpack.c.h.b16 %v345
    %v2239 = vunpack.c.l.b16 %v346
    %v2240 = vunpack.c.h.b16 %v346
    %v2241 = vunpack.c.l.b16 %v347
    %v2242 = vunpack.c.h.b16 %v347
    %v2243 = vunpack.c.l.b16 %v348
    %v2244 = vunpack.c.h.b16 %v348
    %v2245 = vunpack.c.l.b16 %v349
    %v2246 = vunpack.c.h.b16 %v349
    %v2247 = vunpack.c.l.b16 %v350
    %v2248 = vunpack.c.h.b16 %v350
    %v2249 = vunpack.c.l.b16 %v351
    %v2250 = vunpack.c.h.b16 %v351
    %v2251 = vunpack.c.l.b16 %v352
    %v2252 = vunpack.c.h.b16 %v352
    %v2253 = vunpack.c.l.b16 %v353
    %v2254 = vunpack.c.h.b16 %v353
    %v2255 = vunpack.c.l.b16 %v354
    %v2256 = vunpack.c.h.b16 %v354
    %v2257 = vunpack.c.l.b16 %v355
    %v2258 = vunpack.c.h.b16 %v355
    %v2259 = vunpack.c.l.b16 %v356
    %v2260 = vunpack.c.h.b16 %v356
    %v2261 = vunpack.c.l.b16 %v357
    %v2262 = vunpack.c.h.b16 %v357
    %v2263 = vunpack.c.l.b16 %v358
    %v2264 = vunpack.c.h.b16 %v358
    %v2265 = vunpack.c.l.b16 %v359
    %v2266 = vunpack.c.h.b16 %v359
    %v2267 = vunpack.c.l.b16 %v360
    %v2268 = vunpack.c.h.b16 %v360
    %v2269 = vunpack.c.l.b16 %v361
    %v2270 = vunpack.c.h.b16 %v361
    %v2271 = vunpack.c.l.b16 %v362
    %v2272 = vunpack.c.h.b16 %v362
    %v2273 = vunpack.c.l.b16 %v363
    %v2274 = vunpack.c.h.b16 %v363
    %v2275 = vunpack.c.l.b16 %v364
    %v2276 = vunpack.c.h.b16 %v364
    %v2277 = vunpack.c.l.b16 %v365
    %v2278 = vunpack.c.h.b16 %v365
    %v2279 = vunpack.c.l.b16 %v366
    %v2280 = vunpack.c.h.b16 %v366
    %v2281 = vunpack.c.l.b16 %v367
    %v2282 = vunpack.c.h.b16 %v367
    %v2283 = vunpack.c.l.b16 %v368
    %v2284 = vunpack.c.h.b16 %v368
    %v2285 = vunpack.c.l.b16 %v369
    %v2286 = vunpack.c.h.b16 %v369
    %v2287 = vunpack.c.l.b16 %v370
    %v2288 = vunpack.c.h.b16 %v370
    %v2289 = vunpack.c.l.b16 %v371
    %v2290 = vunpack.c.h.b16 %v371
    %v2291 = vunpack.c.l.b16 %v372
    %v2292 = vunpack.c.h.b16 %v372
    %v2293 = vunpack.c.l.b16 %v373
    %v2294 = vunpack.c.h.b16 %v373
    %v2295 = vunpack.c.l.b16 %v374
    %v2296 = vunpack.c.h.b16 %v374
    %v2297 = vunpack.c.l.b16 %v375
    %v2298 = vunpack.c.h.b16 %v375
    %v2299 = vunpack.c.l.b16 %v376
    %v2300 = vunpack.c.h.b16 %v376
    %v2301 = vunpack.c.l.b16 %v377
    %v2302 = vunpack.c.h.b16 %v377
    %v2303 = vunpack.c.l.b16 %v378
    %v2304 = vunpack.c.h.b16 %v378
    %v2305 = vunpack.c.l.b16 %v379
    %v2306 = vunpack.c.h.b16 %v379
    %v2307 = vunpack.c.l.b16 %v380
    %v2308 = vunpack.c.h.b16 %v380
    %v2309 = vunpack.c.l.b16 %v381
    %v2310 = vunpack.c.h.b16 %v381
    %v2311 = vunpack.c.l.b16 %v382
    %v2312 = vunpack.c.h.b16 %v382
    %v2313 = vunpack.c.l.b16 %v383
    %v2314 = vunpack.c.h.b16 %v383
    %v2315 = vunpack.c.l.b16 %v384
    %v2316 = vunpack.c.h.b16 %v384
    %v2317 = vunpack.c.l.b16 %v385
    %v2318 = vunpack.c.h.b16 %v385
    %v2319 = vunpack.c.l.b16 %v386
    %v2320 = vunpack.c.h.b16 %v386
    %v2321 = vunpack.c.l.b16 %v387
    %v2322 = vunpack.c.h.b16 %v387
    %v2323 = vunpack.c.l.b16 %v388
    %v2324 = vunpack.c.h.b16 %v388
    %v2325 = vunpack.c.l.b16 %v389
    %v2326 = vunpack.c.h.b16 %v389
    %v2327 = vunpack.c.l.b16 %v390
    %v2328 = vunpack.c.h.b16 %v390
    %v2329 = vunpack.c.l.b16 %v391
    %v2330 = vunpack.c.h.b16 %v391
    %v2331 = vunpack.c.l.b16 %v392
    %v2332 = vunpack.c.h.b16 %v392
    %v2333 = vunpack.c.l.b16 %v393
    %v2334 = vunpack.c.h.b16 %v393
    %v2335 = vunpack.c.l.b16 %v394
    %v2336 = vunpack.c.h.b16 %v394
    %v2337 = vunpack.c.l.b16 %v395
    %v2338 = vunpack.c.h.b16 %v395
    %v2339 = vunpack.c.l.b16 %v396
    %v2340 = vunpack.c.h.b16 %v396
    %v2341 = vunpack.c.l.b16 %v397
    %v2342 = vunpack.c.h.b16 %v397
    %v2343 = vunpack.c.l.b16 %v398
    %v2344 = vunpack.c.h.b16 %v398
    %v2345 = vunpack.c.l.b16 %v399
    %v2346 = vunpack.c.h.b16 %v399
    %v2347 = vunpack.c.l.b16 %v400
    %v2348 = vunpack.c.h.b16 %v400
    %v2349 = vunpack.c.l.b16 %v401
    %v2350 = vunpack.c.h.b16 %v401
    %v2351 = vunpack.c.l.b16 %v402
    %v2352 = vunpack.c.h.b16 %v402
    %v2353 = vunpack.c.l.b16 %v403
    %v2354 = vunpack.c.h.b16 %v403
    %v2355 = vunpack.c.l.b16 %v404
    %v2356 = vunpack.c.h.b16 %v404
    %v2357 = vunpack.c.l.b16 %v405
    %v2358 = vunpack.c.h.b16 %v405
    %v2359 = vunpack.c.l.b16 %v406
    %v2360 = vunpack.c.h.b16 %v406
    %v2361 = vunpack.c.l.b16 %v407
    %v2362 = vunpack.c.h.b16 %v407
    %v2363 = vunpack.c.l.b16 %v408
    %v2364 = vunpack.c.h.b16 %v408
    %v2365 = vunpack.c.l.b16 %v409
    %v2366 = vunpack.c.h.b16 %v409
    %v2367 = vunpack.c.l.b16 %v410
    %v2368 = vunpack.c.h.b16 %v410
    %v2369 = vunpack.c.l.b16 %v411
    %v2370 = vunpack.c.h.b16 %v411
    %v2371 = vunpack.c.l.b16 %v412
    %v2372 = vunpack.c.h.b16 %v412
    %v2373 = vunpack.c.l.b16 %v413
    %v2374 = vunpack.c.h.b16 %v413
    %v2375 = vunpack.c.l.b16 %v414
    %v2376 = vunpack.c.h.b16 %v414
    %v2377 = vunpack.c.l.b16 %v415
    %v2378 = vunpack.c.h.b16 %v415
    %v2379 = vunpack.c.l.b16 %v416
    %v2380 = vunpack.c.h.b16 %v416
    %v2381 = vunpack.c.l.b16 %v417
    %v2382 = vunpack.c.h.b16 %v417
    %v2383 = vunpack.c.l.b16 %v418
    %v2384 = vunpack.c.h.b16 %v418
    %v2385 = vunpack.c.l.b16 %v419
    %v2386 = vunpack.c.h.b16 %v419
    %v2387 = vunpack.c.l.b16 %v420
    %v2388 = vunpack.c.h.b16 %v420
    %v2389 = vunpack.c.l.b16 %v421
    %v2390 = vunpack.c.h.b16 %v421
    %v2391 = vunpack.c.l.b16 %v422
    %v2392 = vunpack.c.h.b16 %v422
    %v2393 = vunpack.c.l.b16 %v423
    %v2394 = vunpack.c.h.b16 %v423
    %v2395 = vunpack.c.l.b16 %v424
    %v2396 = vunpack.c.h.b16 %v424
    %v2397 = vunpack.c.l.b16 %v425
    %v2398 = vunpack.c.h.b16 %v425
    %v2399 = vunpack.c.l.b16 %v426
    %v2400 = vunpack.c.h.b16 %v426
    %v2401 = vunpack.c.l.b16 %v427
    %v2402 = vunpack.c.h.b16 %v427
    %v2403 = vunpack.c.l.b16 %v428
    %v2404 = vunpack.c.h.b16 %v428
    %v2405 = vunpack.c.l.b16 %v429
    %v2406 = vunpack.c.h.b16 %v429
    %v2407 = vunpack.c.l.b16 %v430
    %v2408 = vunpack.c.h.b16 %v430
    %v2409 = vunpack.c.l.b16 %v431
    %v2410 = vunpack.c.h.b16 %v431
    %v2411 = vunpack.c.l.b16 %v432
    %v2412 = vunpack.c.h.b16 %v432
    %v2413 = vunpack.c.l.b16 %v433
    %v2414 = vunpack.c.h.b16 %v433
    %v2415 = vunpack.c.l.b16 %v434
    %v2416 = vunpack.c.h.b16 %v434
    %v2417 = vunpack.c.l.b16 %v435
    %v2418 = vunpack.c.h.b16 %v435
    %v2419 = vunpack.c.l.b16 %v436
    %v2420 = vunpack.c.h.b16 %v436
    %v2421 = vunpack.c.l.b16 %v437
    %v2422 = vunpack.c.h.b16 %v437
    %v2423 = vunpack.c.l.b16 %v438
    %v2424 = vunpack.c.h.b16 %v438
    %v2425 = vunpack.c.l.b16 %v439
    %v2426 = vunpack.c.h.b16 %v439
    %v2427 = vunpack.c.l.b16 %v440
    %v2428 = vunpack.c.h.b16 %v440
    %v2429 = vunpack.c.l.b16 %v441
    %v2430 = vunpack.c.h.b16 %v441
    %v2431 = vunpack.c.l.b16 %v442
    %v2432 = vunpack.c.h.b16 %v442
    %v2433 = vunpack.c.l.b16 %v443
    %v2434 = vunpack.c.h.b16 %v443
    %v2435 = vunpack.c.l.b16 %v444
    %v2436 = vunpack.c.h.b16 %v444
    %v2437 = vunpack.c.l.b16 %v445
    %v2438 = vunpack.c.h.b16 %v445
    %v2439 = vunpack.c.l.b16 %v446
    %v2440 = vunpack.c.h.b16 %v446
    %v2441 = vunpack.c.l.b16 %v447
    %v2442 = vunpack.c.h.b16 %v447
    %v2443 = vunpack.c.l.b16 %v448
    %v2444 = vunpack.c.h.b16 %v448
    %v2445 = vunpack.c.l.b16 %v449
    %v2446 = vunpack.c.h.b16 %v449
    %v2447 = vunpack.c.l.b16 %v450
    %v2448 = vunpack.c.h.b16 %v450
    %v2449 = vunpack.c.l.b16 %v451
    %v2450 = vunpack.c.h.b16 %v451
    %v2451 = vunpack.c.l.b16 %v452
    %v2452 = vunpack.c.h.b16 %v452
    %v2453 = vunpack.c.l.b16 %v453
    %v2454 = vunpack.c.h.b16 %v453
    %v2455 = vunpack.c.l.b16 %v454
    %v2456 = vunpack.c.h.b16 %v454
    %v2457 = vunpack.c.l.b16 %v455
    %v2458 = vunpack.c.h.b16 %v455
    %v2459 = vunpack.c.l.b16 %v456
    %v2460 = vunpack.c.h.b16 %v456
    %v2461 = vunpack.c.l.b16 %v457
    %v2462 = vunpack.c.h.b16 %v457
    %v2463 = vunpack.c.l.b16 %v458
    %v2464 = vunpack.c.h.b16 %v458
    %v2465 = vunpack.c.l.b16 %v459
    %v2466 = vunpack.c.h.b16 %v459
    %v2467 = vunpack.c.l.b16 %v460
    %v2468 = vunpack.c.h.b16 %v460
    %v2469 = vunpack.c.l.b16 %v461
    %v2470 = vunpack.c.h.b16 %v461
    %v2471 = vunpack.c.l.b16 %v462
    %v2472 = vunpack.c.h.b16 %v462
    %v2473 = vunpack.c.l.b16 %v463
    %v2474 = vunpack.c.h.b16 %v463
    %v2475 = vunpack.c.l.b16 %v464
    %v2476 = vunpack.c.h.b16 %v464
    %v2477 = vunpack.c.l.b16 %v465
    %v2478 = vunpack.c.h.b16 %v465
    %v2479 = vunpack.c.l.b16 %v466
    %v2480 = vunpack.c.h.b16 %v466
    %v2481 = vunpack.c.l.b16 %v467
    %v2482 = vunpack.c.h.b16 %v467
    %v2483 = vunpack.c.l.b16 %v468
    %v2484 = vunpack.c.h.b16 %v468
    %v2485 = vunpack.c.l.b16 %v469
    %v2486 = vunpack.c.h.b16 %v469
    %v2487 = vunpack.c.l.b16 %v470
    %v2488 = vunpack.c.h.b16 %v470
    %v2489 = vunpack.c.l.b16 %v471
    %v2490 = vunpack.c.h.b16 %v471
    %v2491 = vunpack.c.l.b16 %v472
    %v2492 = vunpack.c.h.b16 %v472
    %v2493 = vunpack.c.l.b16 %v473
    %v2494 = vunpack.c.h.b16 %v473
    %v2495 = vunpack.c.l.b16 %v474
    %v2496 = vunpack.c.h.b16 %v474
    %v2497 = vunpack.c.l.b16 %v475
    %v2498 = vunpack.c.h.b16 %v475
    %v2499 = vunpack.c.l.b16 %v476
    %v2500 = vunpack.c.h.b16 %v476
    %v2501 = vunpack.c.l.b16 %v477
    %v2502 = vunpack.c.h.b16 %v477
    %v2503 = vunpack.c.l.b16 %v478
    %v2504 = vunpack.c.h.b16 %v478
    %v2505 = vunpack.c.l.b16 %v479
    %v2506 = vunpack.c.h.b16 %v479
    %v2507 = vunpack.c.l.b16 %v480
    %v2508 = vunpack.c.h.b16 %v480
    %v2509 = vunpack.c.l.b16 %v481
    %v2510 = vunpack.c.h.b16 %v481
    %v2511 = vunpack.c.l.b16 %v482
    %v2512 = vunpack.c.h.b16 %v482
    %v2513 = vunpack.c.l.b16 %v483
    %v2514 = vunpack.c.h.b16 %v483
    %v2515 = vunpack.c.l.b16 %v484
    %v2516 = vunpack.c.h.b16 %v484
    %v2517 = vunpack.c.l.b16 %v485
    %v2518 = vunpack.c.h.b16 %v485
    %v2519 = vunpack.c.l.b16 %v486
    %v2520 = vunpack.c.h.b16 %v486
    %v2521 = vunpack.c.l.b16 %v487
    %v2522 = vunpack.c.h.b16 %v487
    %v2523 = vunpack.c.l.b16 %v488
    %v2524 = vunpack.c.h.b16 %v488
    %v2525 = vunpack.c.l.b16 %v489
    %v2526 = vunpack.c.h.b16 %v489
    %v2527 = vunpack.c.l.b16 %v490
    %v2528 = vunpack.c.h.b16 %v490
    %v2529 = vunpack.c.l.b16 %v491
    %v2530 = vunpack.c.h.b16 %v491
    %v2531 = vunpack.c.l.b16 %v492
    %v2532 = vunpack.c.h.b16 %v492
    %v2533 = vunpack.c.l.b16 %v493
    %v2534 = vunpack.c.h.b16 %v493
    %v2535 = vunpack.c.l.b16 %v494
    %v2536 = vunpack.c.h.b16 %v494
    %v2537 = vunpack.c.l.b16 %v495
    %v2538 = vunpack.c.h.b16 %v495
    %v2539 = vunpack.c.l.b16 %v496
    %v2540 = vunpack.c.h.b16 %v496
    %v2541 = vunpack.c.l.b16 %v497
    %v2542 = vunpack.c.h.b16 %v497
    %v2543 = vunpack.c.l.b16 %v498
    %v2544 = vunpack.c.h.b16 %v498
    %v2545 = vunpack.c.l.b16 %v499
    %v2546 = vunpack.c.h.b16 %v499
    %v2547 = vunpack.c.l.b16 %v500
    %v2548 = vunpack.c.h.b16 %v500
    %v2549 = vunpack.c.l.b16 %v501
    %v2550 = vunpack.c.h.b16 %v501
    %v2551 = vunpack.c.l.b16 %v502
    %v2552 = vunpack.c.h.b16 %v502
    %v2553 = vunpack.c.l.b16 %v503
    %v2554 = vunpack.c.h.b16 %v503
    %v2555 = vunpack.c.l.b16 %v504
    %v2556 = vunpack.c.h.b16 %v504
    %v2557 = vunpack.c.l.b16 %v505
    %v2558 = vunpack.c.h.b16 %v505
    %v2559 = vunpack.c.l.b16 %v506
    %v2560 = vunpack.c.h.b16 %v506
    %v2561 = vunpack.c.l.b16 %v507
    %v2562 = vunpack.c.h.b16 %v507
    %v2563 = vunpack.c.l.b16 %v508
    %v2564 = vunpack.c.h.b16 %v508
    %v2565 = vunpack.c.l.b16 %v509
    %v2566 = vunpack.c.h.b16 %v509
    %v2567 = vunpack.c.l.b16 %v510
    %v2568 = vunpack.c.h.b16 %v510
    %v2569 = vunpack.c.l.b16 %v511
    %v2570 = vunpack.c.h.b16 %v511
    %v2571 = vunpack.c.l.b16 %v512
    %v2572 = vunpack.c.h.b16 %v512
    %v2573 = vunpack.c.l.b16 %v513
    %v2574 = vunpack.c.h.b16 %v513
    %v2575 = vunpack.c.l.b16 %v514
    %v2576 = vunpack.c.h.b16 %v514
    %v2577 = vunpack.c.l.b16 %v515
    %v2578 = vunpack.c.h.b16 %v515
    %v2579 = vunpack.c.l.b16 %v516
    %v2580 = vunpack.c.h.b16 %v516
    %v2581 = vunpack.c.l.b16 %v517
    %v2582 = vunpack.c.h.b16 %v517
    %v2583 = vunpack.c.l.b16 %v518
    %v2584 = vunpack.c.h.b16 %v518
    %v2585 = vunpack.c.l.b16 %v519
    %v2586 = vunpack.c.h.b16 %v519
    %v2587 = vunpack.c.l.b16 %v520
    %v2588 = vunpack.c.h.b16 %v520
    %v2589 = vunpack.c.l.b16 %v521
    %v2590 = vunpack.c.h.b16 %v521
    %v2591 = vunpack.c.l.b16 %v522
    %v2592 = vunpack.c.h.b16 %v522
    %v2593 = vunpack.c.l.b16 %v523
    %v2594 = vunpack.c.h.b16 %v523
    %v2595 = vunpack.c.l.b16 %v524
    %v2596 = vunpack.c.h.b16 %v524
    %v2597 = vunpack.c.l.b16 %v525
    %v2598 = vunpack.c.h.b16 %v525
    %v2599 = vunpack.c.l.b16 %v526
    %v2600 = vunpack.c.h.b16 %v526
    %v2601 = vunpack.c.l.b16 %v527
    %v2602 = vunpack.c.h.b16 %v527
    %v2603 = vunpack.c.l.b16 %v528
    %v2604 = vunpack.c.h.b16 %v528
    %v2605 = vunpack.c.l.b16 %v529
    %v2606 = vunpack.c.h.b16 %v529
    %v2607 = vunpack.c.l.b16 %v530
    %v2608 = vunpack.c.h.b16 %v530
    %v2609 = vunpack.c.l.b16 %v531
    %v2610 = vunpack.c.h.b16 %v531
    %v2611 = vunpack.c.l.b16 %v532
    %v2612 = vunpack.c.h.b16 %v532
    %v2613 = vunpack.c.l.b16 %v533
    %v2614 = vunpack.c.h.b16 %v533
    %v2615 = vunpack.c.l.b16 %v534
    %v2616 = vunpack.c.h.b16 %v534
    %v2617 = vunpack.c.l.b16 %v535
    %v2618 = vunpack.c.h.b16 %v535
    %v2619 = vunpack.c.l.b16 %v536
    %v2620 = vunpack.c.h.b16 %v536
    %v2621 = vunpack.c.l.b16 %v537
    %v2622 = vunpack.c.h.b16 %v537
    %v2623 = vunpack.c.l.b16 %v538
    %v2624 = vunpack.c.h.b16 %v538
    %v2625 = vunpack.c.l.b16 %v539
    %v2626 = vunpack.c.h.b16 %v539
    %v2627 = vunpack.c.l.b16 %v540
    %v2628 = vunpack.c.h.b16 %v540
    %v2629 = vunpack.c.l.b16 %v541
    %v2630 = vunpack.c.h.b16 %v541
    %v2631 = vunpack.c.l.b16 %v542
    %v2632 = vunpack.c.h.b16 %v542
    %v2633 = vunpack.c.l.b16 %v543
    %v2634 = vunpack.c.h.b16 %v543
    %v2635 = vunpack.c.l.b16 %v544
    %v2636 = vunpack.c.h.b16 %v544
    %v2637 = vunpack.c.l.b16 %v545
    %v2638 = vunpack.c.h.b16 %v545
    %v2639 = vunpack.c.l.b16 %v546
    %v2640 = vunpack.c.h.b16 %v546
    %v2641 = vunpack.c.l.b16 %v547
    %v2642 = vunpack.c.h.b16 %v547
    %v2643 = vunpack.c.l.b16 %v548
    %v2644 = vunpack.c.h.b16 %v548
    %v2645 = vunpack.c.l.b16 %v549
    %v2646 = vunpack.c.h.b16 %v549
    %v2647 = vunpack.c.l.b16 %v550
    %v2648 = vunpack.c.h.b16 %v550
    %v2649 = vunpack.c.l.b16 %v551
    %v2650 = vunpack.c.h.b16 %v551
    %v2651 = vunpack.c.l.b16 %v552
    %v2652 = vunpack.c.h.b16 %v552
    %v2653 = vunpack.c.l.b16 %v553
    %v2654 = vunpack.c.h.b16 %v553
    %v2655 = vunpack.c.l.b16 %v554
    %v2656 = vunpack.c.h.b16 %v554
    %v2657 = vunpack.c.l.b16 %v555
    %v2658 = vunpack.c.h.b16 %v555
    %v2659 = vunpack.c.l.b16 %v556
    %v2660 = vunpack.c.h.b16 %v556
    %v2661 = vunpack.c.l.b16 %v557
    %v2662 = vunpack.c.h.b16 %v557
    %v2663 = vunpack.c.l.b16 %v558
    %v2664 = vunpack.c.h.b16 %v558
    %v2665 = vunpack.c.l.b16 %v559
    %v2666 = vunpack.c.h.b16 %v559
    %v2667 = vunpack.c.l.b16 %v560
    %v2668 = vunpack.c.h.b16 %v560
    %v2669 = vunpack.c.l.b16 %v561
    %v2670 = vunpack.c.h.b16 %v561
    %v2671 = vunpack.c.l.b16 %v562
    %v2672 = vunpack.c.h.b16 %v562
    %v2673 = vunpack.c.l.b16 %v563
    %v2674 = vunpack.c.h.b16 %v563
    %v2675 = vunpack.c.l.b16 %v564
    %v2676 = vunpack.c.h.b16 %v564
    %v2677 = vunpack.c.l.b16 %v565
    %v2678 = vunpack.c.h.b16 %v565
    %v2679 = vunpack.c.l.b16 %v566
    %v2680 = vunpack.c.h.b16 %v566
    %v2681 = vunpack.c.l.b16 %v567
    %v2682 = vunpack.c.h.b16 %v567
    %v2683 = vunpack.c.l.b16 %v568
    %v2684 = vunpack.c.h.b16 %v568
    %v2685 = vunpack.c.l.b16 %v569
    %v2686 = vunpack.c.h.b16 %v569
    %v2687 = vunpack.c.l.b16 %v570
    %v2688 = vunpack.c.h.b16 %v570
    %v2689 = vunpack.c.l.b16 %v571
    %v2690 = vunpack.c.h.b16 %v571
    %v2691 = vunpack.c.l.b16 %v572
    %v2692 = vunpack.c.h.b16 %v572
    %v2693 = vunpack.c.l.b16 %v573
    %v2694 = vunpack.c.h.b16 %v573
    %v2695 = vunpack.c.l.b16 %v574
    %v2696 = vunpack.c.h.b16 %v574
    %v2697 = vunpack.c.l.b16 %v575
    %v2698 = vunpack.c.h.b16 %v575
    %v2699 = vunpack.c.l.b16 %v576
    %v2700 = vunpack.c.h.b16 %v576
    %v2701 = vunpack.c.l.b16 %v577
    %v2702 = vunpack.c.h.b16 %v577
    %v2703 = vunpack.c.l.b16 %v578
    %v2704 = vunpack.c.h.b16 %v578
    %v2705 = vunpack.c.l.b16 %v579
    %v2706 = vunpack.c.h.b16 %v579
    %v2707 = vunpack.c.l.b16 %v580
    %v2708 = vunpack.c.h.b16 %v580
    %v2709 = vunpack.c.l.b16 %v581
    %v2710 = vunpack.c.h.b16 %v581
    %v2711 = vunpack.c.l.b16 %v582
    %v2712 = vunpack.c.h.b16 %v582
    %v2713 = vunpack.c.l.b16 %v583
    %v2714 = vunpack.c.h.b16 %v583
    %v2715 = vunpack.c.l.b16 %v584
    %v2716 = vunpack.c.h.b16 %v584
    %v2717 = vunpack.c.l.b16 %v585
    %v2718 = vunpack.c.h.b16 %v585
    %v2719 = vunpack.c.l.b16 %v586
    %v2720 = vunpack.c.h.b16 %v586
    %v2721 = vunpack.c.l.b16 %v587
    %v2722 = vunpack.c.h.b16 %v587
    %v2723 = vunpack.c.l.b16 %v588
    %v2724 = vunpack.c.h.b16 %v588
    %v2725 = vunpack.c.l.b16 %v589
    %v2726 = vunpack.c.h.b16 %v589
    %v2727 = vunpack.c.l.b16 %v590
    %v2728 = vunpack.c.h.b16 %v590
    %v2729 = vunpack.c.l.b16 %v591
    %v2730 = vunpack.c.h.b16 %v591
    %v2731 = vunpack.c.l.b16 %v592
    %v2732 = vunpack.c.h.b16 %v592
    %v2733 = vunpack.c.l.b16 %v593
    %v2734 = vunpack.c.h.b16 %v593
    %v2735 = vunpack.c.l.b16 %v594
    %v2736 = vunpack.c.h.b16 %v594
    %v2737 = vunpack.c.l.b16 %v595
    %v2738 = vunpack.c.h.b16 %v595
    %v2739 = vunpack.c.l.b16 %v596
    %v2740 = vunpack.c.h.b16 %v596
    %v2741 = vunpack.c.l.b16 %v597
    %v2742 = vunpack.c.h.b16 %v597
    %v2743 = vunpack.c.l.b16 %v598
    %v2744 = vunpack.c.h.b16 %v598
    %v2745 = vunpack.c.l.b16 %v599
    %v2746 = vunpack.c.h.b16 %v599
    %v2747 = vunpack.c.l.b16 %v600
    %v2748 = vunpack.c.h.b16 %v600
    %v2749 = vunpack.c.l.b16 %v601
    %v2750 = vunpack.c.h.b16 %v601
    %v2751 = vunpack.c.l.b16 %v602
    %v2752 = vunpack.c.h.b16 %v602
    %v2753 = vunpack.c.l.b16 %v603
    %v2754 = vunpack.c.h.b16 %v603
    %v2755 = vunpack.c.l.b16 %v604
    %v2756 = vunpack.c.h.b16 %v604
    %v2757 = vunpack.c.l.b16 %v605
    %v2758 = vunpack.c.h.b16 %v605
    %v2759 = vunpack.c.l.b16 %v606
    %v2760 = vunpack.c.h.b16 %v606
    %v2761 = vunpack.c.l.b16 %v607
    %v2762 = vunpack.c.h.b16 %v607
    %v2763 = vunpack.c.l.b16 %v608
    %v2764 = vunpack.c.h.b16 %v608
    %v2765 = vunpack.c.l.b16 %v609
    %v2766 = vunpack.c.h.b16 %v609
    %v2767 = vunpack.c.l.b16 %v610
    %v2768 = vunpack.c.h.b16 %v610
    %v2769 = vunpack.c.l.b16 %v611
    %v2770 = vunpack.c.h.b16 %v611
    %v2771 = vunpack.c.l.b16 %v612
    %v2772 = vunpack.c.h.b16 %v612
    %v2773 = vunpack.c.l.b16 %v613
    %v2774 = vunpack.c.h.b16 %v613
    %v2775 = vunpack.c.l.b16 %v614
    %v2776 = vunpack.c.h.b16 %v614
    %v2777 = vunpack.c.l.b16 %v615
    %v2778 = vunpack.c.h.b16 %v615
    %v2779 = vunpack.c.l.b16 %v616
    %v2780 = vunpack.c.h.b16 %v616
    %v2781 = vunpack.c.l.b16 %v617
    %v2782 = vunpack.c.h.b16 %v617
    %v2783 = vunpack.c.l.b16 %v618
    %v2784 = vunpack.c.h.b16 %v618
    %v2785 = vunpack.c.l.b16 %v619
    %v2786 = vunpack.c.h.b16 %v619
    %v2787 = vunpack.c.l.b16 %v620
    %v2788 = vunpack.c.h.b16 %v620
    %v2789 = vunpack.c.l.b16 %v621
    %v2790 = vunpack.c.h.b16 %v621
    %v2791 = vunpack.c.l.b16 %v622
    %v2792 = vunpack.c.h.b16 %v622
    %v2793 = vunpack.c.l.b16 %v623
    %v2794 = vunpack.c.h.b16 %v623
    %v2795 = vunpack.c.l.b16 %v624
    %v2796 = vunpack.c.h.b16 %v624
    %v2797 = vunpack.c.l.b16 %v625
    %v2798 = vunpack.c.h.b16 %v625
    %v2799 = vunpack.c.l.b16 %v626
    %v2800 = vunpack.c.h.b16 %v626
    %v2801 = vunpack.c.l.b16 %v627
    %v2802 = vunpack.c.h.b16 %v627
    %v2803 = vunpack.c.l.b16 %v628
    %v2804 = vunpack.c.h.b16 %v628
    %v2805 = vunpack.c.l.b16 %v629
    %v2806 = vunpack.c.h.b16 %v629
    %v2807 = vunpack.c.l.b16 %v630
    %v2808 = vunpack.c.h.b16 %v630
    %v2809 = vunpack.c.l.b16 %v631
    %v2810 = vunpack.c.h.b16 %v631
    %v2811 = vunpack.c.l.b16 %v632
    %v2812 = vunpack.c.h.b16 %v632
    %v2813 = vunpack.c.l.b16 %v633
    %v2814 = vunpack.c.h.b16 %v633
    %v2815 = vunpack.c.l.b16 %v634
    %v2816 = vunpack.c.h.b16 %v634
    %v2817 = vunpack.c.l.b16 %v635
    %v2818 = vunpack.c.h.b16 %v635
    %v2819 = vunpack.c.l.b16 %v636
    %v2820 = vunpack.c.h.b16 %v636
    %v2821 = vunpack.c.l.b16 %v637
    %v2822 = vunpack.c.h.b16 %v637
    %v2823 = vunpack.c.l.b16 %v638
    %v2824 = vunpack.c.h.b16 %v638
    %v2825 = vunpack.c.l.b16 %v639
    %v2826 = vunpack.c.h.b16 %v639
    %v2827 = vunpack.c.l.b16 %v640
    %v2828 = vunpack.c.h.b16 %v640
    %v2829 = vunpack.c.l.b16 %v641
    %v2830 = vunpack.c.h.b16 %v641
    %v2831 = vunpack.c.l.b16 %v642
    %v2832 = vunpack.c.h.b16 %v642
    %v2833 = vunpack.c.l.b16 %v643
    %v2834 = vunpack.c.h.b16 %v643
    %v2835 = vunpack.c.l.b16 %v644
    %v2836 = vunpack.c.h.b16 %v644
    %v2837 = vunpack.c.l.b16 %v645
    %v2838 = vunpack.c.h.b16 %v645
    %v2839 = vunpack.c.l.b16 %v646
    %v2840 = vunpack.c.h.b16 %v646
    %v2841 = vunpack.c.l.b16 %v647
    %v2842 = vunpack.c.h.b16 %v647
    %v2843 = vunpack.c.l.b16 %v648
    %v2844 = vunpack.c.h.b16 %v648
    %v2845 = vunpack.c.l.b16 %v649
    %v2846 = vunpack.c.h.b16 %v649
    %v2847 = vunpack.c.l.b16 %v650
    %v2848 = vunpack.c.h.b16 %v650
    %v2849 = vunpack.c.l.b16 %v651
    %v2850 = vunpack.c.h.b16 %v651
    %v2851 = vunpack.c.l.b16 %v652
    %v2852 = vunpack.c.h.b16 %v652
    %v2853 = vunpack.c.l.b16 %v653
    %v2854 = vunpack.c.h.b16 %v653
    %v2855 = vunpack.c.l.b16 %v654
    %v2856 = vunpack.c.h.b16 %v654
    %v2857 = vunpack.c.l.b16 %v655
    %v2858 = vunpack.c.h.b16 %v655
    %v2859 = vunpack.c.l.b16 %v656
    %v2860 = vunpack.c.h.b16 %v656
    %v2861 = vunpack.c.l.b16 %v657
    %v2862 = vunpack.c.h.b16 %v657
    %v2863 = vunpack.c.l.b16 %v658
    %v2864 = vunpack.c.h.b16 %v658
    %v2865 = vunpack.c.l.b16 %v659
    %v2866 = vunpack.c.h.b16 %v659
    %v2867 = vunpack.c.l.b16 %v660
    %v2868 = vunpack.c.h.b16 %v660
    %v2869 = vunpack.c.l.b16 %v661
    %v2870 = vunpack.c.h.b16 %v661
    %v2871 = vunpack.c.l.b16 %v662
    %v2872 = vunpack.c.h.b16 %v662
    %v2873 = vunpack.c.l.b16 %v663
    %v2874 = vunpack.c.h.b16 %v663
    %v2875 = vunpack.c.l.b16 %v664
    %v2876 = vunpack.c.h.b16 %v664
    %v2877 = vunpack.c.l.b16 %v665
    %v2878 = vunpack.c.h.b16 %v665
    %v2879 = vunpack.c.l.b16 %v666
    %v2880 = vunpack.c.h.b16 %v666
    %v2881 = vunpack.c.l.b16 %v667
    %v2882 = vunpack.c.h.b16 %v667
    %v2883 = vunpack.c.l.b16 %v668
    %v2884 = vunpack.c.h.b16 %v668
    %v2885 = vunpack.c.l.b16 %v669
    %v2886 = vunpack.c.h.b16 %v669
    %v2887 = vunpack.c.l.b16 %v670
    %v2888 = vunpack.c.h.b16 %v670
    %v2889 = vunpack.c.l.b16 %v671
    %v2890 = vunpack.c.h.b16 %v671
    %v2891 = vunpack.c.l.b16 %v672
    %v2892 = vunpack.c.h.b16 %v672
    %v2893 = vunpack.c.l.b16 %v673
    %v2894 = vunpack.c.h.b16 %v673
    %v2895 = vunpack.c.l.b16 %v674
    %v2896 = vunpack.c.h.b16 %v674
    %v2897 = vunpack.c.l.b16 %v675
    %v2898 = vunpack.c.h.b16 %v675
    %v2899 = vunpack.c.l.b16 %v676
    %v2900 = vunpack.c.h.b16 %v676
    %v2901 = vunpack.c.l.b16 %v677
    %v2902 = vunpack.c.h.b16 %v677
    %v2903 = vunpack.c.l.b16 %v678
    %v2904 = vunpack.c.h.b16 %v678
    %v2905 = vunpack.c.l.b16 %v679
    %v2906 = vunpack.c.h.b16 %v679
    %v2907 = vunpack.c.l.b16 %v680
    %v2908 = vunpack.c.h.b16 %v680
    %v2909 = vunpack.c.l.b16 %v681
    %v2910 = vunpack.c.h.b16 %v681
    %v2911 = vunpack.c.l.b16 %v682
    %v2912 = vunpack.c.h.b16 %v682
    %v2913 = vunpack.c.l.b16 %v683
    %v2914 = vunpack.c.h.b16 %v683
    %v2915 = vunpack.c.l.b16 %v684
    %v2916 = vunpack.c.h.b16 %v684
    %v2917 = vunpack.c.l.b16 %v685
    %v2918 = vunpack.c.h.b16 %v685
    %v2919 = vunpack.c.l.b16 %v686
    %v2920 = vunpack.c.h.b16 %v686
    %v2921 = vunpack.c.l.b16 %v687
    %v2922 = vunpack.c.h.b16 %v687
    %v2923 = vunpack.c.l.b16 %v688
    %v2924 = vunpack.c.h.b16 %v688
    %v2925 = vunpack.c.l.b16 %v689
    %v2926 = vunpack.c.h.b16 %v689
    %v2927 = vunpack.c.l.b16 %v690
    %v2928 = vunpack.c.h.b16 %v690
    %v2929 = vunpack.c.l.b16 %v691
    %v2930 = vunpack.c.h.b16 %v691
    %v2931 = vunpack.c.l.b16 %v692
    %v2932 = vunpack.c.h.b16 %v692
    %v2933 = vunpack.c.l.b16 %v693
    %v2934 = vunpack.c.h.b16 %v693
    %v2935 = vunpack.c.l.b16 %v694
    %v2936 = vunpack.c.h.b16 %v694
    %v2937 = vunpack.c.l.b16 %v695
    %v2938 = vunpack.c.h.b16 %v695
    %v2939 = vunpack.c.l.b16 %v696
    %v2940 = vunpack.c.h.b16 %v696
    %v2941 = vunpack.c.l.b16 %v697
    %v2942 = vunpack.c.h.b16 %v697
    %v2943 = vunpack.c.l.b16 %v698
    %v2944 = vunpack.c.h.b16 %v698
    %v2945 = vunpack.c.l.b16 %v699
    %v2946 = vunpack.c.h.b16 %v699
    %v2947 = vunpack.c.l.b16 %v700
    %v2948 = vunpack.c.h.b16 %v700
    %v2949 = vunpack.c.l.b16 %v701
    %v2950 = vunpack.c.h.b16 %v701
    %v2951 = vunpack.c.l.b16 %v702
    %v2952 = vunpack.c.h.b16 %v702
    %v2953 = vunpack.c.l.b16 %v703
    %v2954 = vunpack.c.h.b16 %v703
    %v2955 = vunpack.c.l.b16 %v704
    %v2956 = vunpack.c.h.b16 %v704
    %v2957 = vunpack.c.l.b16 %v705
    %v2958 = vunpack.c.h.b16 %v705
    %v2959 = vunpack.c.l.b16 %v706
    %v2960 = vunpack.c.h.b16 %v706
    %v2961 = vunpack.c.l.b16 %v707
    %v2962 = vunpack.c.h.b16 %v707
    %v2963 = vunpack.c.l.b16 %v708
    %v2964 = vunpack.c.h.b16 %v708
    %v2965 = vunpack.c.l.b16 %v709
    %v2966 = vunpack.c.h.b16 %v709
    %v2967 = vunpack.c.l.b16 %v710
    %v2968 = vunpack.c.h.b16 %v710
    %v2969 = vunpack.c.l.b16 %v711
    %v2970 = vunpack.c.h.b16 %v711
    %v2971 = vunpack.c.l.b16 %v712
    %v2972 = vunpack.c.h.b16 %v712
    %v2973 = vunpack.c.l.b16 %v713
    %v2974 = vunpack.c.h.b16 %v713
    %v2975 = vunpack.c.l.b16 %v714
    %v2976 = vunpack.c.h.b16 %v714
    %v2977 = vunpack.c.l.b16 %v715
    %v2978 = vunpack.c.h.b16 %v715
    %v2979 = vunpack.c.l.b16 %v716
    %v2980 = vunpack.c.h.b16 %v716
    %v2981 = vunpack.c.l.b16 %v717
    %v2982 = vunpack.c.h.b16 %v717
    %v2983 = vunpack.c.l.b16 %v718
    %v2984 = vunpack.c.h.b16 %v718
    %v2985 = vunpack.c.l.b16 %v719
    %v2986 = vunpack.c.h.b16 %v719
    %v2987 = vunpack.c.l.b16 %v720
    %v2988 = vunpack.c.h.b16 %v720
    %v2989 = vunpack.c.l.b16 %v721
    %v2990 = vunpack.c.h.b16 %v721
    %v2991 = vunpack.c.l.b16 %v722
    %v2992 = vunpack.c.h.b16 %v722
    %v2993 = vunpack.c.l.b16 %v723
    %v2994 = vunpack.c.h.b16 %v723
    %v2995 = vunpack.c.l.b16 %v724
    %v2996 = vunpack.c.h.b16 %v724
    %v2997 = vunpack.c.l.b16 %v725
    %v2998 = vunpack.c.h.b16 %v725
    %v2999 = vunpack.c.l.b16 %v726
    %v3000 = vunpack.c.h.b16 %v726
    %v3001 = vunpack.c.l.b16 %v727
    %v3002 = vunpack.c.h.b16 %v727
    %v3003 = vunpack.c.l.b16 %v728
    %v3004 = vunpack.c.h.b16 %v728
    %v3005 = vunpack.c.l.b16 %v729
    %v3006 = vunpack.c.h.b16 %v729
    %v3007 = vunpack.c.l.b16 %v730
    %v3008 = vunpack.c.h.b16 %v730
    %v3009 = vunpack.c.l.b16 %v731
    %v3010 = vunpack.c.h.b16 %v731
    %v3011 = vunpack.c.l.b16 %v732
    %v3012 = vunpack.c.h.b16 %v732
    %v3013 = vunpack.c.l.b16 %v733
    %v3014 = vunpack.c.h.b16 %v733
    %v3015 = vunpack.c.l.b16 %v734
    %v3016 = vunpack.c.h.b16 %v734
    %v3017 = vunpack.c.l.b16 %v735
    %v3018 = vunpack.c.h.b16 %v735
    %v3019 = vunpack.c.l.b16 %v736
    %v3020 = vunpack.c.h.b16 %v736
    %v3021 = vunpack.c.l.b16 %v737
    %v3022 = vunpack.c.h.b16 %v737
    %v3023 = vunpack.c.l.b16 %v738
    %v3024 = vunpack.c.h.b16 %v738
    %v3025 = vunpack.c.l.b16 %v739
    %v3026 = vunpack.c.h.b16 %v739
    %v3027 = vunpack.c.l.b16 %v740
    %v3028 = vunpack.c.h.b16 %v740
    %v3029 = vunpack.c.l.b16 %v741
    %v3030 = vunpack.c.h.b16 %v741
    %v3031 = vunpack.c.l.b16 %v742
    %v3032 = vunpack.c.h.b16 %v742
    %v3033 = vunpack.c.l.b16 %v743
    %v3034 = vunpack.c.h.b16 %v743
    %v3035 = vunpack.c.l.b16 %v744
    %v3036 = vunpack.c.h.b16 %v744
    %v3037 = vunpack.c.l.b16 %v745
    %v3038 = vunpack.c.h.b16 %v745
    %v3039 = vunpack.c.l.b16 %v746
    %v3040 = vunpack.c.h.b16 %v746
    %v3041 = vunpack.c.l.b16 %v747
    %v3042 = vunpack.c.h.b16 %v747
    %v3043 = vunpack.c.l.b16 %v748
    %v3044 = vunpack.c.h.b16 %v748
    %v3045 = vunpack.c.l.b16 %v749
    %v3046 = vunpack.c.h.b16 %v749
    %v3047 = vunpack.c.l.b16 %v750
    %v3048 = vunpack.c.h.b16 %v750
    %v3049 = vunpack.c.l.b16 %v751
    %v3050 = vunpack.c.h.b16 %v751
    %v3051 = vunpack.c.l.b16 %v752
    %v3052 = vunpack.c.h.b16 %v752
    %v3053 = vunpack.c.l.b16 %v753
    %v3054 = vunpack.c.h.b16 %v753
    %v3055 = vunpack.c.l.b16 %v754
    %v3056 = vunpack.c.h.b16 %v754
    %v3057 = vunpack.c.l.b16 %v755
    %v3058 = vunpack.c.h.b16 %v755
    %v3059 = vunpack.c.l.b16 %v756
    %v3060 = vunpack.c.h.b16 %v756
    %v3061 = vunpack.c.l.b16 %v757
    %v3062 = vunpack.c.h.b16 %v757
    %v3063 = vunpack.c.l.b16 %v758
    %v3064 = vunpack.c.h.b16 %v758
    %v3065 = vunpack.c.l.b16 %v759
    %v3066 = vunpack.c.h.b16 %v759
    %v3067 = vunpack.c.l.b16 %v760
    %v3068 = vunpack.c.h.b16 %v760
    %v3069 = vunpack.c.l.b16 %v761
    %v3070 = vunpack.c.h.b16 %v761
    %v3071 = vunpack.c.l.b16 %v762
    %v3072 = vunpack.c.h.b16 %v762
    %v3073 = vunpack.c.l.b16 %v763
    %v3074 = vunpack.c.h.b16 %v763
    %v3075 = vunpack.c.l.b16 %v764
    %v3076 = vunpack.c.h.b16 %v764
    %v3077 = vunpack.c.l.b16 %v765
    %v3078 = vunpack.c.h.b16 %v765
    %v3079 = vunpack.c.l.b16 %v766
    %v3080 = vunpack.c.h.b16 %v766
    %v3081 = vunpack.c.l.b16 %v767
    %v3082 = vunpack.c.h.b16 %v767
    %v3083 = vunpack.c.l.b16 %v768
    %v3084 = vunpack.c.h.b16 %v768
    %v3085 = vunpack.c.l.b16 %v769
    %v3086 = vunpack.c.h.b16 %v769
    %v3087 = vunpack.c.l.b16 %v770
    %v3088 = vunpack.c.h.b16 %v770
    %v3089 = vunpack.c.l.b16 %v771
    %v3090 = vunpack.c.h.b16 %v771
    %v3091 = vunpack.c.l.b16 %v772
    %v3092 = vunpack.c.h.b16 %v772
    %v3093 = vunpack.c.l.b16 %v773
    %v3094 = vunpack.c.h.b16 %v773
    %v3095 = vunpack.c.l.b16 %v774
    %v3096 = vunpack.c.h.b16 %v774
    %v3097 = vunpack.c.l.b16 %v775
    %v3098 = vunpack.c.h.b16 %v775
    %v3099 = vunpack.c.l.b16 %v776
    %v3100 = vunpack.c.h.b16 %v776
    %v3101 = vunpack.c.l.b16 %v777
    %v3102 = vunpack.c.h.b16 %v777
    %v3103 = vunpack.c.l.b16 %v778
    %v3104 = vunpack.c.h.b16 %v778
    %v3105 = vunpack.c.l.b16 %v779
    %v3106 = vunpack.c.h.b16 %v779
    %v3107 = vunpack.c.l.b16 %v780
    %v3108 = vunpack.c.h.b16 %v780
    %v3109 = vunpack.c.l.b16 %v781
    %v3110 = vunpack.c.h.b16 %v781
    %v3111 = vunpack.c.l.b16 %v782
    %v3112 = vunpack.c.h.b16 %v782
    %v3113 = vunpack.c.l.b16 %v783
    %v3114 = vunpack.c.h.b16 %v783
    %v3115 = vunpack.c.l.b16 %v784
    %v3116 = vunpack.c.h.b16 %v784
    %v3117 = vunpack.c.l.b16 %v785
    %v3118 = vunpack.c.h.b16 %v785
    %v3119 = vunpack.c.l.b16 %v786
    %v3120 = vunpack.c.h.b16 %v786
    %v3121 = vunpack.c.l.b16 %v787
    %v3122 = vunpack.c.h.b16 %v787
    %v3123 = vunpack.c.l.b16 %v788
    %v3124 = vunpack.c.h.b16 %v788
    %v3125 = vunpack.c.l.b16 %v789
    %v3126 = vunpack.c.h.b16 %v789
    %v3127 = vunpack.c.l.b16 %v790
    %v3128 = vunpack.c.h.b16 %v790
    %v3129 = vunpack.c.l.b16 %v791
    %v3130 = vunpack.c.h.b16 %v791
    %v3131 = vunpack.c.l.b16 %v792
    %v3132 = vunpack.c.h.b16 %v792
    %v3133 = vunpack.c.l.b16 %v793
    %v3134 = vunpack.c.h.b16 %v793
    %v3135 = vunpack.c.l.b16 %v794
    %v3136 = vunpack.c.h.b16 %v794
    %v3137 = vunpack.c.l.b16 %v795
    %v3138 = vunpack.c.h.b16 %v795
    %v3139 = vunpack.c.l.b16 %v796
    %v3140 = vunpack.c.h.b16 %v796
    %v3141 = vunpack.c.l.b16 %v797
    %v3142 = vunpack.c.h.b16 %v797
    %v3143 = vunpack.c.l.b16 %v798
    %v3144 = vunpack.c.h.b16 %v798
    %v3145 = vunpack.c.l.b16 %v799
    %v3146 = vunpack.c.h.b16 %v799
    %v3147 = vunpack.c.l.b16 %v800
    %v3148 = vunpack.c.h.b16 %v800
    %v3149 = vunpack.c.l.b16 %v801
    %v3150 = vunpack.c.h.b16 %v801
    %v3151 = vunpack.c.l.b16 %v802
    %v3152 = vunpack.c.h.b16 %v802
    %v3153 = vunpack.c.l.b16 %v803
    %v3154 = vunpack.c.h.b16 %v803
    %v3155 = vunpack.c.l.b16 %v804
    %v3156 = vunpack.c.h.b16 %v804
    %v3157 = vunpack.c.l.b16 %v805
    %v3158 = vunpack.c.h.b16 %v805
    %v3159 = vunpack.c.l.b16 %v806
    %v3160 = vunpack.c.h.b16 %v806
    %v3161 = vunpack.c.l.b16 %v807
    %v3162 = vunpack.c.h.b16 %v807
    %v3163 = vunpack.c.l.b16 %v808
    %v3164 = vunpack.c.h.b16 %v808
    %v3165 = vunpack.c.l.b16 %v809
    %v3166 = vunpack.c.h.b16 %v809
    %v3167 = vunpack.c.l.b16 %v810
    %v3168 = vunpack.c.h.b16 %v810
    %v3169 = vunpack.c.l.b16 %v811
    %v3170 = vunpack.c.h.b16 %v811
    %v3171 = vunpack.c.l.b16 %v812
    %v3172 = vunpack.c.h.b16 %v812
    %v3173 = vunpack.c.l.b16 %v813
    %v3174 = vunpack.c.h.b16 %v813
    %v3175 = vunpack.c.l.b16 %v814
    %v3176 = vunpack.c.h.b16 %v814
    %v3177 = vunpack.c.l.b16 %v815
    %v3178 = vunpack.c.h.b16 %v815
    %v3179 = vunpack.c.l.b16 %v816
    %v3180 = vunpack.c.h.b16 %v816
    %v3181 = vunpack.c.l.b16 %v817
    %v3182 = vunpack.c.h.b16 %v817
    %v3183 = vunpack.c.l.b16 %v818
    %v3184 = vunpack.c.h.b16 %v818
    %v3185 = vunpack.c.l.b16 %v819
    %v3186 = vunpack.c.h.b16 %v819
    %v3187 = vunpack.c.l.b16 %v820
    %v3188 = vunpack.c.h.b16 %v820
    %v3189 = vunpack.c.l.b16 %v821
    %v3190 = vunpack.c.h.b16 %v821
    %v3191 = vunpack.c.l.b16 %v822
    %v3192 = vunpack.c.h.b16 %v822
    %v3193 = vunpack.c.l.b16 %v823
    %v3194 = vunpack.c.h.b16 %v823
    %v3195 = vunpack.c.l.b16 %v824
    %v3196 = vunpack.c.h.b16 %v824
    %v3197 = vunpack.c.l.b16 %v825
    %v3198 = vunpack.c.h.b16 %v825
    %v3199 = vunpack.c.l.b16 %v826
    %v3200 = vunpack.c.h.b16 %v826
    %v3201 = vunpack.c.l.b16 %v827
    %v3202 = vunpack.c.h.b16 %v827
    %v3203 = vunpack.c.l.b16 %v828
    %v3204 = vunpack.c.h.b16 %v828
    %v3205 = vunpack.c.l.b16 %v829
    %v3206 = vunpack.c.h.b16 %v829
    %v3207 = vunpack.c.l.b16 %v830
    %v3208 = vunpack.c.h.b16 %v830
    %v3209 = vunpack.c.l.b16 %v831
    %v3210 = vunpack.c.h.b16 %v831
    %v3211 = vunpack.c.l.b16 %v832
    %v3212 = vunpack.c.h.b16 %v832
    %v3213 = vunpack.c.l.b16 %v833
    %v3214 = vunpack.c.h.b16 %v833
    %v3215 = vunpack.c.l.b16 %v834
    %v3216 = vunpack.c.h.b16 %v834
    %v3217 = vunpack.c.l.b16 %v835
    %v3218 = vunpack.c.h.b16 %v835
    %v3219 = vunpack.c.l.b16 %v836
    %v3220 = vunpack.c.h.b16 %v836
    %v3221 = vunpack.c.l.b16 %v837
    %v3222 = vunpack.c.h.b16 %v837
    %v3223 = vunpack.c.l.b16 %v838
    %v3224 = vunpack.c.h.b16 %v838
    %v3225 = vunpack.c.l.b16 %v839
    %v3226 = vunpack.c.h.b16 %v839
    %v3227 = vunpack.c.l.b16 %v840
    %v3228 = vunpack.c.h.b16 %v840
    %v3229 = vunpack.c.l.b16 %v841
    %v3230 = vunpack.c.h.b16 %v841
    %v3231 = vunpack.c.l.b16 %v842
    %v3232 = vunpack.c.h.b16 %v842
    %v3233 = vunpack.c.l.b16 %v843
    %v3234 = vunpack.c.h.b16 %v843
    %v3235 = vunpack.c.l.b16 %v844
    %v3236 = vunpack.c.h.b16 %v844
    %v3237 = vunpack.c.l.b16 %v845
    %v3238 = vunpack.c.h.b16 %v845
    %v3239 = vunpack.c.l.b16 %v846
    %v3240 = vunpack.c.h.b16 %v846
    %v3241 = vunpack.c.l.b16 %v847
    %v3242 = vunpack.c.h.b16 %v847
    %v3243 = vunpack.c.l.b16 %v848
    %v3244 = vunpack.c.h.b16 %v848
    %v3245 = vunpack.c.l.b16 %v849
    %v3246 = vunpack.c.h.b16 %v849
    %v3247 = vunpack.c.l.b16 %v850
    %v3248 = vunpack.c.h.b16 %v850
    %v3249 = vunpack.c.l.b16 %v851
    %v3250 = vunpack.c.h.b16 %v851
    %v3251 = vunpack.c.l.b16 %v852
    %v3252 = vunpack.c.h.b16 %v852
    %v3253 = vunpack.c.l.b16 %v853
    %v3254 = vunpack.c.h.b16 %v853
    %v3255 = vunpack.c.l.b16 %v854
    %v3256 = vunpack.c.h.b16 %v854
    %v3257 = vunpack.c.l.b16 %v855
    %v3258 = vunpack.c.h.b16 %v855
    %v3259 = vunpack.c.l.b16 %v856
    %v3260 = vunpack.c.h.b16 %v856
    %v3261 = vunpack.c.l.b16 %v857
    %v3262 = vunpack.c.h.b16 %v857
    %v3263 = vunpack.c.l.b16 %v858
    %v3264 = vunpack.c.h.b16 %v858
    %v3265 = vunpack.c.l.b16 %v859
    %v3266 = vunpack.c.h.b16 %v859
    %v3267 = vunpack.c.l.b16 %v860
    %v3268 = vunpack.c.h.b16 %v860
    %v3269 = vunpack.c.l.b16 %v861
    %v3270 = vunpack.c.h.b16 %v861
    %v3271 = vunpack.c.l.b16 %v862
    %v3272 = vunpack.c.h.b16 %v862
    %v3273 = vunpack.c.l.b16 %v863
    %v3274 = vunpack.c.h.b16 %v863
    %v3275 = vunpack.c.l.b16 %v864
    %v3276 = vunpack.c.h.b16 %v864
    %v3277 = vunpack.c.l.b16 %v865
    %v3278 = vunpack.c.h.b16 %v865
    %v3279 = vunpack.c.l.b16 %v866
    %v3280 = vunpack.c.h.b16 %v866
    %v3281 = vunpack.c.l.b16 %v867
    %v3282 = vunpack.c.h.b16 %v867
    %v3283 = vunpack.c.l.b16 %v868
    %v3284 = vunpack.c.h.b16 %v868
    %v3285 = vunpack.c.l.b16 %v869
    %v3286 = vunpack.c.h.b16 %v869
    %v3287 = vunpack.c.l.b16 %v870
    %v3288 = vunpack.c.h.b16 %v870
    %v3289 = vunpack.c.l.b16 %v871
    %v3290 = vunpack.c.h.b16 %v871
    %v3291 = vunpack.c.l.b16 %v872
    %v3292 = vunpack.c.h.b16 %v872
    %v3293 = vunpack.c.l.b16 %v873
    %v3294 = vunpack.c.h.b16 %v873
    %v3295 = vunpack.c.l.b16 %v874
    %v3296 = vunpack.c.h.b16 %v874
    %v3297 = vunpack.c.l.b16 %v875
    %v3298 = vunpack.c.h.b16 %v875
    %v3299 = vunpack.c.l.b16 %v876
    %v3300 = vunpack.c.h.b16 %v876
    %v3301 = vunpack.c.l.b16 %v877
    %v3302 = vunpack.c.h.b16 %v877
    %v3303 = vunpack.c.l.b16 %v878
    %v3304 = vunpack.c.h.b16 %v878
    %v3305 = vunpack.c.l.b16 %v879
    %v3306 = vunpack.c.h.b16 %v879
    %v3307 = vunpack.c.l.b16 %v880
    %v3308 = vunpack.c.h.b16 %v880
    %v3309 = vunpack.c.l.b16 %v881
    %v3310 = vunpack.c.h.b16 %v881
    %v3311 = vunpack.c.l.b16 %v882
    %v3312 = vunpack.c.h.b16 %v882
    %v3313 = vunpack.c.l.b16 %v883
    %v3314 = vunpack.c.h.b16 %v883
    %v3315 = vunpack.c.l.b16 %v884
    %v3316 = vunpack.c.h.b16 %v884
    %v3317 = vunpack.c.l.b16 %v885
    %v3318 = vunpack.c.h.b16 %v885
    %v3319 = vunpack.c.l.b16 %v886
    %v3320 = vunpack.c.h.b16 %v886
    %v3321 = vpack.c.b16 %v1789, %v1785
    %v3322 = vpack.c.b16 %v1790, %v1786
    %v3323 = vpack.c.b16 %v1791, %v1787
    %v3324 = vpack.c.b16 %v1792, %v1788
    %v3325 = vpack.c.b16 %v1797, %v1793
    %v3326 = vpack.c.b16 %v1798, %v1794
    %v3327 = vpack.c.b16 %v1799, %v1795
    %v3328 = vpack.c.b16 %v1800, %v1796
    %v3329 = vpack.c.b16 %v1805, %v1801
    %v3330 = vpack.c.b16 %v1806, %v1802
    %v3331 = vpack.c.b16 %v1807, %v1803
    %v3332 = vpack.c.b16 %v1808, %v1804
    %v3333 = vpack.c.b16 %v1813, %v1809
    %v3334 = vpack.c.b16 %v1814, %v1810
    %v3335 = vpack.c.b16 %v1815, %v1811
    %v3336 = vpack.c.b16 %v1816, %v1812
    %v3337 = vpack.c.b16 %v1821, %v1817
    %v3338 = vpack.c.b16 %v1822, %v1818
    %v3339 = vpack.c.b16 %v1823, %v1819
    %v3340 = vpack.c.b16 %v1824, %v1820
    %v3341 = vpack.c.b16 %v1829, %v1825
    %v3342 = vpack.c.b16 %v1830, %v1826
    %v3343 = vpack.c.b16 %v1831, %v1827
    %v3344 = vpack.c.b16 %v1832, %v1828
    %v3345 = vpack.c.b16 %v1837, %v1833
    %v3346 = vpack.c.b16 %v1838, %v1834
    %v3347 = vpack.c.b16 %v1839, %v1835
    %v3348 = vpack.c.b16 %v1840, %v1836
    %v3349 = vpack.c.b16 %v1845, %v1841
    %v3350 = vpack.c.b16 %v1846, %v1842
    %v3351 = vpack.c.b16 %v1847, %v1843
    %v3352 = vpack.c.b16 %v1848, %v1844
    %v3353 = vpack.c.b16 %v1853, %v1849
    %v3354 = vpack.c.b16 %v1854, %v1850
    %v3355 = vpack.c.b16 %v1855, %v1851
    %v3356 = vpack.c.b16 %v1856, %v1852
    %v3357 = vpack.c.b16 %v1861, %v1857
    %v3358 = vpack.c.b16 %v1862, %v1858
    %v3359 = vpack.c.b16 %v1863, %v1859
    %v3360 = vpack.c.b16 %v1864, %v1860
    %v3361 = vpack.c.b16 %v1869, %v1865
    %v3362 = vpack.c.b16 %v1870, %v1866
    %v3363 = vpack.c.b16 %v1871, %v1867
    %v3364 = vpack.c.b16 %v1872, %v1868
    %v3365 = vpack.c.b16 %v1877, %v1873
    %v3366 = vpack.c.b16 %v1878, %v1874
    %v3367 = vpack.c.b16 %v1879, %v1875
    %v3368 = vpack.c.b16 %v1880, %v1876
    %v3369 = vpack.c.b16 %v1885, %v1881
    %v3370 = vpack.c.b16 %v1886, %v1882
    %v3371 = vpack.c.b16 %v1887, %v1883
    %v3372 = vpack.c.b16 %v1888, %v1884
    %v3373 = vpack.c.b16 %v1893, %v1889
    %v3374 = vpack.c.b16 %v1894, %v1890
    %v3375 = vpack.c.b16 %v1895, %v1891
    %v3376 = vpack.c.b16 %v1896, %v1892
    %v3377 = vpack.c.b16 %v1901, %v1897
    %v3378 = vpack.c.b16 %v1902, %v1898
    %v3379 = vpack.c.b16 %v1903, %v1899
    %v3380 = vpack.c.b16 %v1904, %v1900
    %v3381 = vpack.c.b16 %v1909, %v1905
    %v3382 = vpack.c.b16 %v1910, %v1906
    %v3383 = vpack.c.b16 %v1911, %v1907
    %v3384 = vpack.c.b16 %v1912, %v1908
    %v3385 = vpack.c.b16 %v1917, %v1913
    %v3386 = vpack.c.b16 %v1918, %v1914
    %v3387 = vpack.c.b16 %v1919, %v1915
    %v3388 = vpack.c.b16 %v1920, %v1916
    %v3389 = vpack.c.b16 %v1925, %v1921
    %v3390 = vpack.c.b16 %v1926, %v1922
    %v3391 = vpack.c.b16 %v1927, %v1923
    %v3392 = vpack.c.b16 %v1928, %v1924
    %v3393 = vpack.c.b16 %v1933, %v1929
    %v3394 = vpack.c.b16 %v1934, %v1930
    %v3395 = vpack.c.b16 %v1935, %v1931
    %v3396 = vpack.c.b16 %v1936, %v1932
    %v3397 = vpack.c.b16 %v1941, %v1937
    %v3398 = vpack.c.b16 %v1942, %v1938
    %v3399 = vpack.c.b16 %v1943, %v1939
    %v3400 = vpack.c.b16 %v1944, %v1940
    %v3401 = vpack.c.b16 %v1949, %v1945
    %v3402 = vpack.c.b16 %v1950, %v1946
    %v3403 = vpack.c.b16 %v1951, %v1947
    %v3404 = vpack.c.b16 %v1952, %v1948
    %v3405 = vpack.c.b16 %v1957, %v1953
    %v3406 = vpack.c.b16 %v1958, %v1954
    %v3407 = vpack.c.b16 %v1959, %v1955
    %v3408 = vpack.c.b16 %v1960, %v1956
    %v3409 = vpack.c.b16 %v1965, %v1961
    %v3410 = vpack.c.b16 %v1966, %v1962
    %v3411 = vpack.c.b16 %v1967, %v1963
    %v3412 = vpack.c.b16 %v1968, %v1964
    %v3413 = vpack.c.b16 %v1973, %v1969
    %v3414 = vpack.c.b16 %v1974, %v1970
    %v3415 = vpack.c.b16 %v1975, %v1971
    %v3416 = vpack.c.b16 %v1976, %v1972
    %v3417 = vpack.c.b16 %v1981, %v1977
    %v3418 = vpack.c.b16 %v1982, %v1978
    %v3419 = vpack.c.b16 %v1983, %v1979
    %v3420 = vpack.c.b16 %v1984, %v1980
    %v3421 = vpack.c.b16 %v1989, %v1985
    %v3422 = vpack.c.b16 %v1990, %v1986
    %v3423 = vpack.c.b16 %v1991, %v1987
    %v3424 = vpack.c.b16 %v1992, %v1988
    %v3425 = vpack.c.b16 %v1997, %v1993
    %v3426 = vpack.c.b16 %v1998, %v1994
    %v3427 = vpack.c.b16 %v1999, %v1995
    %v3428 = vpack.c.b16 %v2000, %v1996
    %v3429 = vpack.c.b16 %v2005, %v2001
    %v3430 = vpack.c.b16 %v2006, %v2002
    %v3431 = vpack.c.b16 %v2007, %v2003
    %v3432 = vpack.c.b16 %v2008, %v2004
    %v3433 = vpack.c.b16 %v2013, %v2009
    %v3434 = vpack.c.b16 %v2014, %v2010
    %v3435 = vpack.c.b16 %v2015, %v2011
    %v3436 = vpack.c.b16 %v2016, %v2012
    %v3437 = vpack.c.b16 %v2021, %v2017
    %v3438 = vpack.c.b16 %v2022, %v2018
    %v3439 = vpack.c.b16 %v2023, %v2019
    %v3440 = vpack.c.b16 %v2024, %v2020
    %v3441 = vpack.c.b16 %v2029, %v2025
    %v3442 = vpack.c.b16 %v2030, %v2026
    %v3443 = vpack.c.b16 %v2031, %v2027
    %v3444 = vpack.c.b16 %v2032, %v2028
    %v3445 = vpack.c.b16 %v2037, %v2033
    %v3446 = vpack.c.b16 %v2038, %v2034
    %v3447 = vpack.c.b16 %v2039, %v2035
    %v3448 = vpack.c.b16 %v2040, %v2036
    %v3449 = vpack.c.b16 %v2045, %v2041
    %v3450 = vpack.c.b16 %v2046, %v2042
    %v3451 = vpack.c.b16 %v2047, %v2043
    %v3452 = vpack.c.b16 %v2048, %v2044
    %v3453 = vpack.c.b16 %v2053, %v2049
    %v3454 = vpack.c.b16 %v2054, %v2050
    %v3455 = vpack.c.b16 %v2055, %v2051
    %v3456 = vpack.c.b16 %v2056, %v2052
    %v3457 = vpack.c.b16 %v2061, %v2057
    %v3458 = vpack.c.b16 %v2062, %v2058
    %v3459 = vpack.c.b16 %v2063, %v2059
    %v3460 = vpack.c.b16 %v2064, %v2060
    %v3461 = vpack.c.b16 %v2069, %v2065
    %v3462 = vpack.c.b16 %v2070, %v2066
    %v3463 = vpack.c.b16 %v2071, %v2067
    %v3464 = vpack.c.b16 %v2072, %v2068
    %v3465 = vpack.c.b16 %v2077, %v2073
    %v3466 = vpack.c.b16 %v2078, %v2074
    %v3467 = vpack.c.b16 %v2079, %v2075
    %v3468 = vpack.c.b16 %v2080, %v2076
    %v3469 = vpack.c.b16 %v2085, %v2081
    %v3470 = vpack.c.b16 %v2086, %v2082
    %v3471 = vpack.c.b16 %v2087, %v2083
    %v3472 = vpack.c.b16 %v2088, %v2084
    %v3473 = vpack.c.b16 %v2093, %v2089
    %v3474 = vpack.c.b16 %v2094, %v2090
    %v3475 = vpack.c.b16 %v2095, %v2091
    %v3476 = vpack.c.b16 %v2096, %v2092
    %v3477 = vpack.c.b16 %v2101, %v2097
    %v3478 = vpack.c.b16 %v2102, %v2098
    %v3479 = vpack.c.b16 %v2103, %v2099
    %v3480 = vpack.c.b16 %v2104, %v2100
    %v3481 = vpack.c.b16 %v2109, %v2105
    %v3482 = vpack.c.b16 %v2110, %v2106
    %v3483 = vpack.c.b16 %v2111, %v2107
    %v3484 = vpack.c.b16 %v2112, %v2108
    %v3485 = vpack.c.b16 %v2117, %v2113
    %v3486 = vpack.c.b16 %v2118, %v2114
    %v3487 = vpack.c.b16 %v2119, %v2115
    %v3488 = vpack.c.b16 %v2120, %v2116
    %v3489 = vpack.c.b16 %v2125, %v2121
    %v3490 = vpack.c.b16 %v2126, %v2122
    %v3491 = vpack.c.b16 %v2127, %v2123
    %v3492 = vpack.c.b16 %v2128, %v2124
    %v3493 = vpack.c.b16 %v2133, %v2129
    %v3494 = vpack.c.b16 %v2134, %v2130
    %v3495 = vpack.c.b16 %v2135, %v2131
    %v3496 = vpack.c.b16 %v2136, %v2132
    %v3497 = vpack.c.b16 %v2141, %v2137
    %v3498 = vpack.c.b16 %v2142, %v2138
    %v3499 = vpack.c.b16 %v2143, %v2139
    %v3500 = vpack.c.b16 %v2144, %v2140
    %v3501 = vpack.c.b16 %v2149, %v2145
    %v3502 = vpack.c.b16 %v2150, %v2146
    %v3503 = vpack.c.b16 %v2151, %v2147
    %v3504 = vpack.c.b16 %v2152, %v2148
    %v3505 = vpack.c.b16 %v2157, %v2153
    %v3506 = vpack.c.b16 %v2158, %v2154
    %v3507 = vpack.c.b16 %v2159, %v2155
    %v3508 = vpack.c.b16 %v2160, %v2156
    %v3509 = vpack.c.b16 %v2165, %v2161
    %v3510 = vpack.c.b16 %v2166, %v2162
    %v3511 = vpack.c.b16 %v2167, %v2163
    %v3512 = vpack.c.b16 %v2168, %v2164
    %v3513 = vpack.c.b16 %v2173, %v2169
    %v3514 = vpack.c.b16 %v2174, %v2170
    %v3515 = vpack.c.b16 %v2175, %v2171
    %v3516 = vpack.c.b16 %v2176, %v2172
    %v3517 = vpack.c.b16 %v2181, %v2177
    %v3518 = vpack.c.b16 %v2182, %v2178
    %v3519 = vpack.c.b16 %v2183, %v2179
    %v3520 = vpack.c.b16 %v2184, %v2180
    %v3521 = vpack.c.b16 %v2189, %v2185
    %v3522 = vpack.c.b16 %v2190, %v2186
    %v3523 = vpack.c.b16 %v2191, %v2187
    %v3524 = vpack.c.b16 %v2192, %v2188
    %v3525 = vpack.c.b16 %v2197, %v2193
    %v3526 = vpack.c.b16 %v2198, %v2194
    %v3527 = vpack.c.b16 %v2199, %v2195
    %v3528 = vpack.c.b16 %v2200, %v2196
    %v3529 = vpack.c.b16 %v2205, %v2201
    %v3530 = vpack.c.b16 %v2206, %v2202
    %v3531 = vpack.c.b16 %v2207, %v2203
    %v3532 = vpack.c.b16 %v2208, %v2204
    %v3533 = vpack.c.b16 %v2213, %v2209
    %v3534 = vpack.c.b16 %v2214, %v2210
    %v3535 = vpack.c.b16 %v2215, %v2211
    %v3536 = vpack.c.b16 %v2216, %v2212
    %v3537 = vpack.c.b16 %v2221, %v2217
    %v3538 = vpack.c.b16 %v2222, %v2218
    %v3539 = vpack.c.b16 %v2223, %v2219
    %v3540 = vpack.c.b16 %v2224, %v2220
    %v3541 = vpack.c.b16 %v2229, %v2225
    %v3542 = vpack.c.b16 %v2230, %v2226
    %v3543 = vpack.c.b16 %v2231, %v2227
    %v3544 = vpack.c.b16 %v2232, %v2228
    %v3545 = vpack.c.b16 %v2237, %v2233
    %v3546 = vpack.c.b16 %v2238, %v2234
    %v3547 = vpack.c.b16 %v2239, %v2235
    %v3548 = vpack.c.b16 %v2240, %v2236
    %v3549 = vpack.c.b16 %v2245, %v2241
    %v3550 = vpack.c.b16 %v2246, %v2242
    %v3551 = vpack.c.b16 %v2247, %v2243
    %v3552 = vpack.c.b16 %v2248, %v2244
    %v3553 = vpack.c.b16 %v2253, %v2249
    %v3554 = vpack.c.b16 %v2254, %v2250
    %v3555 = vpack.c.b16 %v2255, %v2251
    %v3556 = vpack.c.b16 %v2256, %v2252
    %v3557 = vpack.c.b16 %v2261, %v2257
    %v3558 = vpack.c.b16 %v2262, %v2258
    %v3559 = vpack.c.b16 %v2263, %v2259
    %v3560 = vpack.c.b16 %v2264, %v2260
    %v3561 = vpack.c.b16 %v2269, %v2265
    %v3562 = vpack.c.b16 %v2270, %v2266
    %v3563 = vpack.c.b16 %v2271, %v2267
    %v3564 = vpack.c.b16 %v2272, %v2268
    %v3565 = vpack.c.b16 %v2277, %v2273
    %v3566 = vpack.c.b16 %v2278, %v2274
    %v3567 = vpack.c.b16 %v2279, %v2275
    %v3568 = vpack.c.b16 %v2280, %v2276
    %v3569 = vpack.c.b16 %v2285, %v2281
    %v3570 = vpack.c.b16 %v2286, %v2282
    %v3571 = vpack.c.b16 %v2287, %v2283
    %v3572 = vpack.c.b16 %v2288, %v2284
    %v3573 = vpack.c.b16 %v2293, %v2289
    %v3574 = vpack.c.b16 %v2294, %v2290
    %v3575 = vpack.c.b16 %v2295, %v2291
    %v3576 = vpack.c.b16 %v2296, %v2292
    %v3577 = vpack.c.b16 %v2301, %v2297
    %v3578 = vpack.c.b16 %v2302, %v2298
    %v3579 = vpack.c.b16 %v2303, %v2299
    %v3580 = vpack.c.b16 %v2304, %v2300
    %v3581 = vpack.c.b16 %v2309, %v2305
    %v3582 = vpack.c.b16 %v2310, %v2306
    %v3583 = vpack.c.b16 %v2311, %v2307
    %v3584 = vpack.c.b16 %v2312, %v2308
    %v3585 = vpack.c.b16 %v2317, %v2313
    %v3586 = vpack.c.b16 %v2318, %v2314
    %v3587 = vpack.c.b16 %v2319, %v2315
    %v3588 = vpack.c.b16 %v2320, %v2316
    %v3589 = vpack.c.b16 %v2325, %v2321
    %v3590 = vpack.c.b16 %v2326, %v2322
    %v3591 = vpack.c.b16 %v2327, %v2323
    %v3592 = vpack.c.b16 %v2328, %v2324
    %v3593 = vpack.c.b16 %v2333, %v2329
    %v3594 = vpack.c.b16 %v2334, %v2330
    %v3595 = vpack.c.b16 %v2335, %v2331
    %v3596 = vpack.c.b16 %v2336, %v2332
    %v3597 = vpack.c.b16 %v2341, %v2337
    %v3598 = vpack.c.b16 %v2342, %v2338
    %v3599 = vpack.c.b16 %v2343, %v2339
    %v3600 = vpack.c.b16 %v2344, %v2340
    %v3601 = vpack.c.b16 %v2349, %v2345
    %v3602 = vpack.c.b16 %v2350, %v2346
    %v3603 = vpack.c.b16 %v2351, %v2347
    %v3604 = vpack.c.b16 %v2352, %v2348
    %v3605 = vpack.c.b16 %v2357, %v2353
    %v3606 = vpack.c.b16 %v2358, %v2354
    %v3607 = vpack.c.b16 %v2359, %v2355
    %v3608 = vpack.c.b16 %v2360, %v2356
    %v3609 = vpack.c.b16 %v2365, %v2361
    %v3610 = vpack.c.b16 %v2366, %v2362
    %v3611 = vpack.c.b16 %v2367, %v2363
    %v3612 = vpack.c.b16 %v2368, %v2364
    %v3613 = vpack.c.b16 %v2373, %v2369
    %v3614 = vpack.c.b16 %v2374, %v2370
    %v3615 = vpack.c.b16 %v2375, %v2371
    %v3616 = vpack.c.b16 %v2376, %v2372
    %v3617 = vpack.c.b16 %v2381, %v2377
    %v3618 = vpack.c.b16 %v2382, %v2378
    %v3619 = vpack.c.b16 %v2383, %v2379
    %v3620 = vpack.c.b16 %v2384, %v2380
    %v3621 = vpack.c.b16 %v2389, %v2385
    %v3622 = vpack.c.b16 %v2390, %v2386
    %v3623 = vpack.c.b16 %v2391, %v2387
    %v3624 = vpack.c.b16 %v2392, %v2388
    %v3625 = vpack.c.b16 %v2397, %v2393
    %v3626 = vpack.c.b16 %v2398, %v2394
    %v3627 = vpack.c.b16 %v2399, %v2395
    %v3628 = vpack.c.b16 %v2400, %v2396
    %v3629 = vpack.c.b16 %v2405, %v2401
    %v3630 = vpack.c.b16 %v2406, %v2402
    %v3631 = vpack.c.b16 %v2407, %v2403
    %v3632 = vpack.c.b16 %v2408, %v2404
    %v3633 = vpack.c.b16 %v2413, %v2409
    %v3634 = vpack.c.b16 %v2414, %v2410
    %v3635 = vpack.c.b16 %v2415, %v2411
    %v3636 = vpack.c.b16 %v2416, %v2412
    %v3637 = vpack.c.b16 %v2421, %v2417
    %v3638 = vpack.c.b16 %v2422, %v2418
    %v3639 = vpack.c.b16 %v2423, %v2419
    %v3640 = vpack.c.b16 %v2424, %v2420
    %v3641 = vpack.c.b16 %v2429, %v2425
    %v3642 = vpack.c.b16 %v2430, %v2426
    %v3643 = vpack.c.b16 %v2431, %v2427
    %v3644 = vpack.c.b16 %v2432, %v2428
    %v3645 = vpack.c.b16 %v2437, %v2433
    %v3646 = vpack.c.b16 %v2438, %v2434
    %v3647 = vpack.c.b16 %v2439, %v2435
    %v3648 = vpack.c.b16 %v2440, %v2436
    %v3649 = vpack.c.b16 %v2445, %v2441
    %v3650 = vpack.c.b16 %v2446, %v2442
    %v3651 = vpack.c.b16 %v2447, %v2443
    %v3652 = vpack.c.b16 %v2448, %v2444
    %v3653 = vpack.c.b16 %v2453, %v2449
    %v3654 = vpack.c.b16 %v2454, %v2450
    %v3655 = vpack.c.b16 %v2455, %v2451
    %v3656 = vpack.c.b16 %v2456, %v2452
    %v3657 = vpack.c.b16 %v2461, %v2457
    %v3658 = vpack.c.b16 %v2462, %v2458
    %v3659 = vpack.c.b16 %v2463, %v2459
    %v3660 = vpack.c.b16 %v2464, %v2460
    %v3661 = vpack.c.b16 %v2469, %v2465
    %v3662 = vpack.c.b16 %v2470, %v2466
    %v3663 = vpack.c.b16 %v2471, %v2467
    %v3664 = vpack.c.b16 %v2472, %v2468
    %v3665 = vpack.c.b16 %v2477, %v2473
    %v3666 = vpack.c.b16 %v2478, %v2474
    %v3667 = vpack.c.b16 %v2479, %v2475
    %v3668 = vpack.c.b16 %v2480, %v2476
    %v3669 = vpack.c.b16 %v2485, %v2481
    %v3670 = vpack.c.b16 %v2486, %v2482
    %v3671 = vpack.c.b16 %v2487, %v2483
    %v3672 = vpack.c.b16 %v2488, %v2484
    %v3673 = vpack.c.b16 %v2493, %v2489
    %v3674 = vpack.c.b16 %v2494, %v2490
    %v3675 = vpack.c.b16 %v2495, %v2491
    %v3676 = vpack.c.b16 %v2496, %v2492
    %v3677 = vpack.c.b16 %v2501, %v2497
    %v3678 = vpack.c.b16 %v2502, %v2498
    %v3679 = vpack.c.b16 %v2503, %v2499
    %v3680 = vpack.c.b16 %v2504, %v2500
    %v3681 = vpack.c.b16 %v2509, %v2505
    %v3682 = vpack.c.b16 %v2510, %v2506
    %v3683 = vpack.c.b16 %v2511, %v2507
    %v3684 = vpack.c.b16 %v2512, %v2508
    %v3685 = vpack.c.b16 %v2517, %v2513
    %v3686 = vpack.c.b16 %v2518, %v2514
    %v3687 = vpack.c.b16 %v2519, %v2515
    %v3688 = vpack.c.b16 %v2520, %v2516
    %v3689 = vpack.c.b16 %v2525, %v2521
    %v3690 = vpack.c.b16 %v2526, %v2522
    %v3691 = vpack.c.b16 %v2527, %v2523
    %v3692 = vpack.c.b16 %v2528, %v2524
    %v3693 = vpack.c.b16 %v2533, %v2529
    %v3694 = vpack.c.b16 %v2534, %v2530
    %v3695 = vpack.c.b16 %v2535, %v2531
    %v3696 = vpack.c.b16 %v2536, %v2532
    %v3697 = vpack.c.b16 %v2541, %v2537
    %v3698 = vpack.c.b16 %v2542, %v2538
    %v3699 = vpack.c.b16 %v2543, %v2539
    %v3700 = vpack.c.b16 %v2544, %v2540
    %v3701 = vpack.c.b16 %v2549, %v2545
    %v3702 = vpack.c.b16 %v2550, %v2546
    %v3703 = vpack.c.b16 %v2551, %v2547
    %v3704 = vpack.c.b16 %v2552, %v2548
    %v3705 = vpack.c.b16 %v2557, %v2553
    %v3706 = vpack.c.b16 %v2558, %v2554
    %v3707 = vpack.c.b16 %v2559, %v2555
    %v3708 = vpack.c.b16 %v2560, %v2556
    %v3709 = vpack.c.b16 %v2565, %v2561
    %v3710 = vpack.c.b16 %v2566, %v2562
    %v3711 = vpack.c.b16 %v2567, %v2563
    %v3712 = vpack.c.b16 %v2568, %v2564
    %v3713 = vpack.c.b16 %v2573, %v2569
    %v3714 = vpack.c.b16 %v2574, %v2570
    %v3715 = vpack.c.b16 %v2575, %v2571
    %v3716 = vpack.c.b16 %v2576, %v2572
    %v3717 = vpack.c.b16 %v2581, %v2577
    %v3718 = vpack.c.b16 %v2582, %v2578
    %v3719 = vpack.c.b16 %v2583, %v2579
    %v3720 = vpack.c.b16 %v2584, %v2580
    %v3721 = vpack.c.b16 %v2589, %v2585
    %v3722 = vpack.c.b16 %v2590, %v2586
    %v3723 = vpack.c.b16 %v2591, %v2587
    %v3724 = vpack.c.b16 %v2592, %v2588
    %v3725 = vpack.c.b16 %v2597, %v2593
    %v3726 = vpack.c.b16 %v2598, %v2594
    %v3727 = vpack.c.b16 %v2599, %v2595
    %v3728 = vpack.c.b16 %v2600, %v2596
    %v3729 = vpack.c.b16 %v2605, %v2601
    %v3730 = vpack.c.b16 %v2606, %v2602
    %v3731 = vpack.c.b16 %v2607, %v2603
    %v3732 = vpack.c.b16 %v2608, %v2604
    %v3733 = vpack.c.b16 %v2613, %v2609
    %v3734 = vpack.c.b16 %v2614, %v2610
    %v3735 = vpack.c.b16 %v2615, %v2611
    %v3736 = vpack.c.b16 %v2616, %v2612
    %v3737 = vpack.c.b16 %v2621, %v2617
    %v3738 = vpack.c.b16 %v2622, %v2618
    %v3739 = vpack.c.b16 %v2623, %v2619
    %v3740 = vpack.c.b16 %v2624, %v2620
    %v3741 = vpack.c.b16 %v2629, %v2625
    %v3742 = vpack.c.b16 %v2630, %v2626
    %v3743 = vpack.c.b16 %v2631, %v2627
    %v3744 = vpack.c.b16 %v2632, %v2628
    %v3745 = vpack.c.b16 %v2637, %v2633
    %v3746 = vpack.c.b16 %v2638, %v2634
    %v3747 = vpack.c.b16 %v2639, %v2635
    %v3748 = vpack.c.b16 %v2640, %v2636
    %v3749 = vpack.c.b16 %v2645, %v2641
    %v3750 = vpack.c.b16 %v2646, %v2642
    %v3751 = vpack.c.b16 %v2647, %v2643
    %v3752 = vpack.c.b16 %v2648, %v2644
    %v3753 = vpack.c.b16 %v2653, %v2649
    %v3754 = vpack.c.b16 %v2654, %v2650
    %v3755 = vpack.c.b16 %v2655, %v2651
    %v3756 = vpack.c.b16 %v2656, %v2652
    %v3757 = vpack.c.b16 %v2661, %v2657
    %v3758 = vpack.c.b16 %v2662, %v2658
    %v3759 = vpack.c.b16 %v2663, %v2659
    %v3760 = vpack.c.b16 %v2664, %v2660
    %v3761 = vpack.c.b16 %v2669, %v2665
    %v3762 = vpack.c.b16 %v2670, %v2666
    %v3763 = vpack.c.b16 %v2671, %v2667
    %v3764 = vpack.c.b16 %v2672, %v2668
    %v3765 = vpack.c.b16 %v2677, %v2673
    %v3766 = vpack.c.b16 %v2678, %v2674
    %v3767 = vpack.c.b16 %v2679, %v2675
    %v3768 = vpack.c.b16 %v2680, %v2676
    %v3769 = vpack.c.b16 %v2685, %v2681
    %v3770 = vpack.c.b16 %v2686, %v2682
    %v3771 = vpack.c.b16 %v2687, %v2683
    %v3772 = vpack.c.b16 %v2688, %v2684
    %v3773 = vpack.c.b16 %v2693, %v2689
    %v3774 = vpack.c.b16 %v2694, %v2690
    %v3775 = vpack.c.b16 %v2695, %v2691
    %v3776 = vpack.c.b16 %v2696, %v2692
    %v3777 = vpack.c.b16 %v2701, %v2697
    %v3778 = vpack.c.b16 %v2702, %v2698
    %v3779 = vpack.c.b16 %v2703, %v2699
    %v3780 = vpack.c.b16 %v2704, %v2700
    %v3781 = vpack.c.b16 %v2709, %v2705
    %v3782 = vpack.c.b16 %v2710, %v2706
    %v3783 = vpack.c.b16 %v2711, %v2707
    %v3784 = vpack.c.b16 %v2712, %v2708
    %v3785 = vpack.c.b16 %v2717, %v2713
    %v3786 = vpack.c.b16 %v2718, %v2714
    %v3787 = vpack.c.b16 %v2719, %v2715
    %v3788 = vpack.c.b16 %v2720, %v2716
    %v3789 = vpack.c.b16 %v2725, %v2721
    %v3790 = vpack.c.b16 %v2726, %v2722
    %v3791 = vpack.c.b16 %v2727, %v2723
    %v3792 = vpack.c.b16 %v2728, %v2724
    %v3793 = vpack.c.b16 %v2733, %v2729
    %v3794 = vpack.c.b16 %v2734, %v2730
    %v3795 = vpack.c.b16 %v2735, %v2731
    %v3796 = vpack.c.b16 %v2736, %v2732
    %v3797 = vpack.c.b16 %v2741, %v2737
    %v3798 = vpack.c.b16 %v2742, %v2738
    %v3799 = vpack.c.b16 %v2743, %v2739
    %v3800 = vpack.c.b16 %v2744, %v2740
    %v3801 = vpack.c.b16 %v2749, %v2745
    %v3802 = vpack.c.b16 %v2750, %v2746
    %v3803 = vpack.c.b16 %v2751, %v2747
    %v3804 = vpack.c.b16 %v2752, %v2748
    %v3805 = vpack.c.b16 %v2757, %v2753
    %v3806 = vpack.c.b16 %v2758, %v2754
    %v3807 = vpack.c.b16 %v2759, %v2755
    %v3808 = vpack.c.b16 %v2760, %v2756
    %v3809 = vpack.c.b16 %v2765, %v2761
    %v3810 = vpack.c.b16 %v2766, %v2762
    %v3811 = vpack.c.b16 %v2767, %v2763
    %v3812 = vpack.c.b16 %v2768, %v2764
    %v3813 = vpack.c.b16 %v2773, %v2769
    %v3814 = vpack.c.b16 %v2774, %v2770
    %v3815 = vpack.c.b16 %v2775, %v2771
    %v3816 = vpack.c.b16 %v2776, %v2772
    %v3817 = vpack.c.b16 %v2781, %v2777
    %v3818 = vpack.c.b16 %v2782, %v2778
    %v3819 = vpack.c.b16 %v2783, %v2779
    %v3820 = vpack.c.b16 %v2784, %v2780
    %v3821 = vpack.c.b16 %v2789, %v2785
    %v3822 = vpack.c.b16 %v2790, %v2786
    %v3823 = vpack.c.b16 %v2791, %v2787
    %v3824 = vpack.c.b16 %v2792, %v2788
    %v3825 = vpack.c.b16 %v2797, %v2793
    %v3826 = vpack.c.b16 %v2798, %v2794
    %v3827 = vpack.c.b16 %v2799, %v2795
    %v3828 = vpack.c.b16 %v2800, %v2796
    %v3829 = vpack.c.b16 %v2805, %v2801
    %v3830 = vpack.c.b16 %v2806, %v2802
    %v3831 = vpack.c.b16 %v2807, %v2803
    %v3832 = vpack.c.b16 %v2808, %v2804
    %v3833 = vpack.c.b16 %v2813, %v2809
    %v3834 = vpack.c.b16 %v2814, %v2810
    %v3835 = vpack.c.b16 %v2815, %v2811
    %v3836 = vpack.c.b16 %v2816, %v2812
    %v3837 = vpack.c.b16 %v2821, %v2817
    %v3838 = vpack.c.b16 %v2822, %v2818
    %v3839 = vpack.c.b16 %v2823, %v2819
    %v3840 = vpack.c.b16 %v2824, %v2820
    %v3841 = vpack.c.b16 %v2829, %v2825
    %v3842 = vpack.c.b16 %v2830, %v2826
    %v3843 = vpack.c.b16 %v2831, %v2827
    %v3844 = vpack.c.b16 %v2832, %v2828
    %v3845 = vpack.c.b16 %v2837, %v2833
    %v3846 = vpack.c.b16 %v2838, %v2834
    %v3847 = vpack.c.b16 %v2839, %v2835
    %v3848 = vpack.c.b16 %v2840, %v2836
    %v3849 = vpack.c.b16 %v2845, %v2841
    %v3850 = vpack.c.b16 %v2846, %v2842
    %v3851 = vpack.c.b16 %v2847, %v2843
    %v3852 = vpack.c.b16 %v2848, %v2844
    %v3853 = vpack.c.b16 %v2853, %v2849
    %v3854 = vpack.c.b16 %v2854, %v2850
    %v3855 = vpack.c.b16 %v2855, %v2851
    %v3856 = vpack.c.b16 %v2856, %v2852
    %v3857 = vpack.c.b16 %v2861, %v2857
    %v3858 = vpack.c.b16 %v2862, %v2858
    %v3859 = vpack.c.b16 %v2863, %v2859
    %v3860 = vpack.c.b16 %v2864, %v2860
    %v3861 = vpack.c.b16 %v2869, %v2865
    %v3862 = vpack.c.b16 %v2870, %v2866
    %v3863 = vpack.c.b16 %v2871, %v2867
    %v3864 = vpack.c.b16 %v2872, %v2868
    %v3865 = vpack.c.b16 %v2877, %v2873
    %v3866 = vpack.c.b16 %v2878, %v2874
    %v3867 = vpack.c.b16 %v2879, %v2875
    %v3868 = vpack.c.b16 %v2880, %v2876
    %v3869 = vpack.c.b16 %v2885, %v2881
    %v3870 = vpack.c.b16 %v2886, %v2882
    %v3871 = vpack.c.b16 %v2887, %v2883
    %v3872 = vpack.c.b16 %v2888, %v2884
    %v3873 = vpack.c.b16 %v2893, %v2889
    %v3874 = vpack.c.b16 %v2894, %v2890
    %v3875 = vpack.c.b16 %v2895, %v2891
    %v3876 = vpack.c.b16 %v2896, %v2892
    %v3877 = vpack.c.b16 %v2901, %v2897
    %v3878 = vpack.c.b16 %v2902, %v2898
    %v3879 = vpack.c.b16 %v2903, %v2899
    %v3880 = vpack.c.b16 %v2904, %v2900
    %v3881 = vpack.c.b16 %v2909, %v2905
    %v3882 = vpack.c.b16 %v2910, %v2906
    %v3883 = vpack.c.b16 %v2911, %v2907
    %v3884 = vpack.c.b16 %v2912, %v2908
    %v3885 = vpack.c.b16 %v2917, %v2913
    %v3886 = vpack.c.b16 %v2918, %v2914
    %v3887 = vpack.c.b16 %v2919, %v2915
    %v3888 = vpack.c.b16 %v2920, %v2916
    %v3889 = vpack.c.b16 %v2925, %v2921
    %v3890 = vpack.c.b16 %v2926, %v2922
    %v3891 = vpack.c.b16 %v2927, %v2923
    %v3892 = vpack.c.b16 %v2928, %v2924
    %v3893 = vpack.c.b16 %v2933, %v2929
    %v3894 = vpack.c.b16 %v2934, %v2930
    %v3895 = vpack.c.b16 %v2935, %v2931
    %v3896 = vpack.c.b16 %v2936, %v2932
    %v3897 = vpack.c.b16 %v2941, %v2937
    %v3898 = vpack.c.b16 %v2942, %v2938
    %v3899 = vpack.c.b16 %v2943, %v2939
    %v3900 = vpack.c.b16 %v2944, %v2940
    %v3901 = vpack.c.b16 %v2949, %v2945
    %v3902 = vpack.c.b16 %v2950, %v2946
    %v3903 = vpack.c.b16 %v2951, %v2947
    %v3904 = vpack.c.b16 %v2952, %v2948
    %v3905 = vpack.c.b16 %v2957, %v2953
    %v3906 = vpack.c.b16 %v2958, %v2954
    %v3907 = vpack.c.b16 %v2959, %v2955
    %v3908 = vpack.c.b16 %v2960, %v2956
    %v3909 = vpack.c.b16 %v2965, %v2961
    %v3910 = vpack.c.b16 %v2966, %v2962
    %v3911 = vpack.c.b16 %v2967, %v2963
    %v3912 = vpack.c.b16 %v2968, %v2964
    %v3913 = vpack.c.b16 %v2973, %v2969
    %v3914 = vpack.c.b16 %v2974, %v2970
    %v3915 = vpack.c.b16 %v2975, %v2971
    %v3916 = vpack.c.b16 %v2976, %v2972
    %v3917 = vpack.c.b16 %v2981, %v2977
    %v3918 = vpack.c.b16 %v2982, %v2978
    %v3919 = vpack.c.b16 %v2983, %v2979
    %v3920 = vpack.c.b16 %v2984, %v2980
    %v3921 = vpack.c.b16 %v2989, %v2985
    %v3922 = vpack.c.b16 %v2990, %v2986
    %v3923 = vpack.c.b16 %v2991, %v2987
    %v3924 = vpack.c.b16 %v2992, %v2988
    %v3925 = vpack.c.b16 %v2997, %v2993
    %v3926 = vpack.c.b16 %v2998, %v2994
    %v3927 = vpack.c.b16 %v2999, %v2995
    %v3928 = vpack.c.b16 %v3000, %v2996
    %v3929 = vpack.c.b16 %v3005, %v3001
    %v3930 = vpack.c.b16 %v3006, %v3002
    %v3931 = vpack.c.b16 %v3007, %v3003
    %v3932 = vpack.c.b16 %v3008, %v3004
    %v3933 = vpack.c.b16 %v3013, %v3009
    %v3934 = vpack.c.b16 %v3014, %v3010
    %v3935 = vpack.c.b16 %v3015, %v3011
    %v3936 = vpack.c.b16 %v3016, %v3012
    %v3937 = vpack.c.b16 %v3021, %v3017
    %v3938 = vpack.c.b16 %v3022, %v3018
    %v3939 = vpack.c.b16 %v3023, %v3019
    %v3940 = vpack.c.b16 %v3024, %v3020
    %v3941 = vpack.c.b16 %v3029, %v3025
    %v3942 = vpack.c.b16 %v3030, %v3026
    %v3943 = vpack.c.b16 %v3031, %v3027
    %v3944 = vpack.c.b16 %v3032, %v3028
    %v3945 = vpack.c.b16 %v3037, %v3033
    %v3946 = vpack.c.b16 %v3038, %v3034
    %v3947 = vpack.c.b16 %v3039, %v3035
    %v3948 = vpack.c.b16 %v3040, %v3036
    %v3949 = vpack.c.b16 %v3045, %v3041
    %v3950 = vpack.c.b16 %v3046, %v3042
    %v3951 = vpack.c.b16 %v3047, %v3043
    %v3952 = vpack.c.b16 %v3048, %v3044
    %v3953 = vpack.c.b16 %v3053, %v3049
    %v3954 = vpack.c.b16 %v3054, %v3050
    %v3955 = vpack.c.b16 %v3055, %v3051
    %v3956 = vpack.c.b16 %v3056, %v3052
    %v3957 = vpack.c.b16 %v3061, %v3057
    %v3958 = vpack.c.b16 %v3062, %v3058
    %v3959 = vpack.c.b16 %v3063, %v3059
    %v3960 = vpack.c.b16 %v3064, %v3060
    %v3961 = vpack.c.b16 %v3069, %v3065
    %v3962 = vpack.c.b16 %v3070, %v3066
    %v3963 = vpack.c.b16 %v3071, %v3067
    %v3964 = vpack.c.b16 %v3072, %v3068
    %v3965 = vpack.c.b16 %v3077, %v3073
    %v3966 = vpack.c.b16 %v3078, %v3074
    %v3967 = vpack.c.b16 %v3079, %v3075
    %v3968 = vpack.c.b16 %v3080, %v3076
    %v3969 = vpack.c.b16 %v3085, %v3081
    %v3970 = vpack.c.b16 %v3086, %v3082
    %v3971 = vpack.c.b16 %v3087, %v3083
    %v3972 = vpack.c.b16 %v3088, %v3084
    %v3973 = vpack.c.b16 %v3093, %v3089
    %v3974 = vpack.c.b16 %v3094, %v3090
    %v3975 = vpack.c.b16 %v3095, %v3091
    %v3976 = vpack.c.b16 %v3096, %v3092
    %v3977 = vpack.c.b16 %v3101, %v3097
    %v3978 = vpack.c.b16 %v3102, %v3098
    %v3979 = vpack.c.b16 %v3103, %v3099
    %v3980 = vpack.c.b16 %v3104, %v3100
    %v3981 = vpack.c.b16 %v3109, %v3105
    %v3982 = vpack.c.b16 %v3110, %v3106
    %v3983 = vpack.c.b16 %v3111, %v3107
    %v3984 = vpack.c.b16 %v3112, %v3108
    %v3985 = vpack.c.b16 %v3117, %v3113
    %v3986 = vpack.c.b16 %v3118, %v3114
    %v3987 = vpack.c.b16 %v3119, %v3115
    %v3988 = vpack.c.b16 %v3120, %v3116
    %v3989 = vpack.c.b16 %v3125, %v3121
    %v3990 = vpack.c.b16 %v3126, %v3122
    %v3991 = vpack.c.b16 %v3127, %v3123
    %v3992 = vpack.c.b16 %v3128, %v3124
    %v3993 = vpack.c.b16 %v3133, %v3129
    %v3994 = vpack.c.b16 %v3134, %v3130
    %v3995 = vpack.c.b16 %v3135, %v3131
    %v3996 = vpack.c.b16 %v3136, %v3132
    %v3997 = vpack.c.b16 %v3141, %v3137
    %v3998 = vpack.c.b16 %v3142, %v3138
    %v3999 = vpack.c.b16 %v3143, %v3139
    %v4000 = vpack.c.b16 %v3144, %v3140
    %v4001 = vpack.c.b16 %v3149, %v3145
    %v4002 = vpack.c.b16 %v3150, %v3146
    %v4003 = vpack.c.b16 %v3151, %v3147
    %v4004 = vpack.c.b16 %v3152, %v3148
    %v4005 = vpack.c.b16 %v3157, %v3153
    %v4006 = vpack.c.b16 %v3158, %v3154
    %v4007 = vpack.c.b16 %v3159, %v3155
    %v4008 = vpack.c.b16 %v3160, %v3156
    %v4009 = vpack.c.b16 %v3165, %v3161
    %v4010 = vpack.c.b16 %v3166, %v3162
    %v4011 = vpack.c.b16 %v3167, %v3163
    %v4012 = vpack.c.b16 %v3168, %v3164
    %v4013 = vpack.c.b16 %v3173, %v3169
    %v4014 = vpack.c.b16 %v3174, %v3170
    %v4015 = vpack.c.b16 %v3175, %v3171
    %v4016 = vpack.c.b16 %v3176, %v3172
    %v4017 = vpack.c.b16 %v3181, %v3177
    %v4018 = vpack.c.b16 %v3182, %v3178
    %v4019 = vpack.c.b16 %v3183, %v3179
    %v4020 = vpack.c.b16 %v3184, %v3180
    %v4021 = vpack.c.b16 %v3189, %v3185
    %v4022 = vpack.c.b16 %v3190, %v3186
    %v4023 = vpack.c.b16 %v3191, %v3187
    %v4024 = vpack.c.b16 %v3192, %v3188
    %v4025 = vpack.c.b16 %v3197, %v3193
    %v4026 = vpack.c.b16 %v3198, %v3194
    %v4027 = vpack.c.b16 %v3199, %v3195
    %v4028 = vpack.c.b16 %v3200, %v3196
    %v4029 = vpack.c.b16 %v3205, %v3201
    %v4030 = vpack.c.b16 %v3206, %v3202
    %v4031 = vpack.c.b16 %v3207, %v3203
    %v4032 = vpack.c.b16 %v3208, %v3204
    %v4033 = vpack.c.b16 %v3213, %v3209
    %v4034 = vpack.c.b16 %v3214, %v3210
    %v4035 = vpack.c.b16 %v3215, %v3211
    %v4036 = vpack.c.b16 %v3216, %v3212
    %v4037 = vpack.c.b16 %v3221, %v3217
    %v4038 = vpack.c.b16 %v3222, %v3218
    %v4039 = vpack.c.b16 %v3223, %v3219
    %v4040 = vpack.c.b16 %v3224, %v3220
    %v4041 = vpack.c.b16 %v3229, %v3225
    %v4042 = vpack.c.b16 %v3230, %v3226
    %v4043 = vpack.c.b16 %v3231, %v3227
    %v4044 = vpack.c.b16 %v3232, %v3228
    %v4045 = vpack.c.b16 %v3237, %v3233
    %v4046 = vpack.c.b16 %v3238, %v3234
    %v4047 = vpack.c.b16 %v3239, %v3235
    %v4048 = vpack.c.b16 %v3240, %v3236
    %v4049 = vpack.c.b16 %v3245, %v3241
    %v4050 = vpack.c.b16 %v3246, %v3242
    %v4051 = vpack.c.b16 %v3247, %v3243
    %v4052 = vpack.c.b16 %v3248, %v3244
    %v4053 = vpack.c.b16 %v3253, %v3249
    %v4054 = vpack.c.b16 %v3254, %v3250
    %v4055 = vpack.c.b16 %v3255, %v3251
    %v4056 = vpack.c.b16 %v3256, %v3252
    %v4057 = vpack.c.b16 %v3261, %v3257
    %v4058 = vpack.c.b16 %v3262, %v3258
    %v4059 = vpack.c.b16 %v3263, %v3259
    %v4060 = vpack.c.b16 %v3264, %v3260
    %v4061 = vpack.c.b16 %v3269, %v3265
    %v4062 = vpack.c.b16 %v3270, %v3266
    %v4063 = vpack.c.b16 %v3271, %v3267
    %v4064 = vpack.c.b16 %v3272, %v3268
    %v4065 = vpack.c.b16 %v3277, %v3273
    %v4066 = vpack.c.b16 %v3278, %v3274
    %v4067 = vpack.c.b16 %v3279, %v3275
    %v4068 = vpack.c.b16 %v3280, %v3276
    %v4069 = vpack.c.b16 %v3285, %v3281
    %v4070 = vpack.c.b16 %v3286, %v3282
    %v4071 = vpack.c.b16 %v3287, %v3283
    %v4072 = vpack.c.b16 %v3288, %v3284
    %v4073 = vpack.c.b16 %v3293, %v3289
    %v4074 = vpack.c.b16 %v3294, %v3290
    %v4075 = vpack.c.b16 %v3295, %v3291
    %v4076 = vpack.c.b16 %v3296, %v3292
    %v4077 = vpack.c.b16 %v3301, %v3297
    %v4078 = vpack.c.b16 %v3302, %v3298
    %v4079 = vpack.c.b16 %v3303, %v3299
    %v4080 = vpack.c.b16 %v3304, %v3300
    %v4081 = vpack.c.b16 %v3309, %v3305
    %v4082 = vpack.c.b16 %v3310, %v3306
    %v4083 = vpack.c.b16 %v3311, %v3307
    %v4084 = vpack.c.b16 %v3312, %v3308
    %v4085 = vpack.c.b16 %v3317, %v3313
    %v4086 = vpack.c.b16 %v3318, %v3314
    %v4087 = vpack.c.b16 %v3319, %v3315
    %v4088 = vpack.c.b16 %v3320, %v3316
    %4857 = vmatpush.bf16.msra.mxu0 %v3349
    %4858 = vmatpush.bf16.msra.mxu0 %v3345
    %4859 = vmatpush.bf16.msra.mxu0 %v3341
    %4860 = vmatpush.bf16.msra.mxu0 %v3337
    %4861 = vmatpush.bf16.msra.mxu0 %v3333
    %4862 = vmatpush.bf16.msra.mxu0 %v3329
    %4863 = vmatpush.bf16.msra.mxu0 %v3325
    %4864 = vmatpush.bf16.msra.mxu0 %v3321
    %4865 = vmatmul.bf16.gmra.mxu0 %v969
    %v4866 = vpop.f32.mrf.mxu0
    %v4867 = vadd.f32 %v889, %v4866
    %v4868 = vpop.f32.mrf.mxu0
    %v4869 = vadd.f32 %v889, %v4868
    %4870 = vdwg.mxu0
    %4871 = vmatpush.bf16.msra.mxu0 %v3381
    %4872 = vmatpush.bf16.msra.mxu0 %v3377
    %4873 = vmatpush.bf16.msra.mxu0 %v3373
    %4874 = vmatpush.bf16.msra.mxu0 %v3369
    %4875 = vmatpush.bf16.msra.mxu0 %v3365
    %4876 = vmatpush.bf16.msra.mxu0 %v3361
    %4877 = vmatpush.bf16.msra.mxu0 %v3357
    %4878 = vmatpush.bf16.msra.mxu0 %v3353
    %4879 = vmatmul.bf16.gmra.mxu0 %v970
    %v4880 = vpop.f32.mrf.mxu0
    %v4881 = vadd.f32 %v4867, %v4880
    %v4882 = vpop.f32.mrf.mxu0
    %v4883 = vadd.f32 %v4869, %v4882
    %4884 = vdwg.mxu0
    %4885 = vmatpush.bf16.msra.mxu0 %v3413
    %4886 = vmatpush.bf16.msra.mxu0 %v3409
    %4887 = vmatpush.bf16.msra.mxu0 %v3405
    %4888 = vmatpush.bf16.msra.mxu0 %v3401
    %4889 = vmatpush.bf16.msra.mxu0 %v3397
    %4890 = vmatpush.bf16.msra.mxu0 %v3393
    %4891 = vmatpush.bf16.msra.mxu0 %v3389
    %4892 = vmatpush.bf16.msra.mxu0 %v3385
    %4893 = vmatmul.bf16.gmra.mxu0 %v971
    %v4894 = vpop.f32.mrf.mxu0
    %v4895 = vadd.f32 %v4881, %v4894
    %v4896 = vpop.f32.mrf.mxu0
    %v4897 = vadd.f32 %v4883, %v4896
    %4898 = vdwg.mxu0
    %4899 = vmatpush.bf16.msra.mxu0 %v3445
    %4900 = vmatpush.bf16.msra.mxu0 %v3441
    %4901 = vmatpush.bf16.msra.mxu0 %v3437
    %4902 = vmatpush.bf16.msra.mxu0 %v3433
    %4903 = vmatpush.bf16.msra.mxu0 %v3429
    %4904 = vmatpush.bf16.msra.mxu0 %v3425
    %4905 = vmatpush.bf16.msra.mxu0 %v3421
    %4906 = vmatpush.bf16.msra.mxu0 %v3417
    %4907 = vmatmul.bf16.gmra.mxu0 %v972
    %v4908 = vpop.f32.mrf.mxu0
    %v4909 = vadd.f32 %v4895, %v4908
    %v4910 = vpop.f32.mrf.mxu0
    %v4911 = vadd.f32 %v4897, %v4910
    %4912 = vdwg.mxu0
    %4913 = vmatpush.bf16.msra.mxu0 %v3477
    %4914 = vmatpush.bf16.msra.mxu0 %v3473
    %4915 = vmatpush.bf16.msra.mxu0 %v3469
    %4916 = vmatpush.bf16.msra.mxu0 %v3465
    %4917 = vmatpush.bf16.msra.mxu0 %v3461
    %4918 = vmatpush.bf16.msra.mxu0 %v3457
    %4919 = vmatpush.bf16.msra.mxu0 %v3453
    %4920 = vmatpush.bf16.msra.mxu0 %v3449
    %4921 = vmatmul.bf16.gmra.mxu0 %v973
    %v4922 = vpop.f32.mrf.mxu0
    %v4923 = vadd.f32 %v4909, %v4922
    %v4924 = vpop.f32.mrf.mxu0
    %v4925 = vadd.f32 %v4911, %v4924
    %4926 = vdwg.mxu0
    %4927 = vmatpush.bf16.msra.mxu0 %v3509
    %4928 = vmatpush.bf16.msra.mxu0 %v3505
    %4929 = vmatpush.bf16.msra.mxu0 %v3501
    %4930 = vmatpush.bf16.msra.mxu0 %v3497
    %4931 = vmatpush.bf16.msra.mxu0 %v3493
    %4932 = vmatpush.bf16.msra.mxu0 %v3489
    %4933 = vmatpush.bf16.msra.mxu0 %v3485
    %4934 = vmatpush.bf16.msra.mxu0 %v3481
    %4935 = vmatmul.bf16.gmra.mxu0 %v974
    %v4936 = vpop.f32.mrf.mxu0
    %v4937 = vadd.f32 %v4923, %v4936
    %v4938 = vpop.f32.mrf.mxu0
    %v4939 = vadd.f32 %v4925, %v4938
    %4940 = vdwg.mxu0
    %4941 = vmatpush.bf16.msra.mxu0 %v3541
    %4942 = vmatpush.bf16.msra.mxu0 %v3537
    %4943 = vmatpush.bf16.msra.mxu0 %v3533
    %4944 = vmatpush.bf16.msra.mxu0 %v3529
    %4945 = vmatpush.bf16.msra.mxu0 %v3525
    %4946 = vmatpush.bf16.msra.mxu0 %v3521
    %4947 = vmatpush.bf16.msra.mxu0 %v3517
    %4948 = vmatpush.bf16.msra.mxu0 %v3513
    %4949 = vmatmul.bf16.gmra.mxu0 %v975
    %v4950 = vpop.f32.mrf.mxu0
    %v4951 = vadd.f32 %v4937, %v4950
    %v4952 = vpop.f32.mrf.mxu0
    %v4953 = vadd.f32 %v4939, %v4952
    %4954 = vdwg.mxu0
    %4955 = vmatpush.bf16.msra.mxu0 %v3573
    %4956 = vmatpush.bf16.msra.mxu0 %v3569
    %4957 = vmatpush.bf16.msra.mxu0 %v3565
    %4958 = vmatpush.bf16.msra.mxu0 %v3561
    %4959 = vmatpush.bf16.msra.mxu0 %v3557
    %4960 = vmatpush.bf16.msra.mxu0 %v3553
    %4961 = vmatpush.bf16.msra.mxu0 %v3549
    %4962 = vmatpush.bf16.msra.mxu0 %v3545
    %4963 = vmatmul.bf16.gmra.mxu0 %v976
    %v4964 = vpop.f32.mrf.mxu0
    %v4965 = vadd.f32 %v4951, %v4964
    %v4966 = vpop.f32.mrf.mxu0
    %v4967 = vadd.f32 %v4953, %v4966
    %4968 = vdwg.mxu0
    %4969 = vmatpush.bf16.msra.mxu0 %v3605
    %4970 = vmatpush.bf16.msra.mxu0 %v3601
    %4971 = vmatpush.bf16.msra.mxu0 %v3597
    %4972 = vmatpush.bf16.msra.mxu0 %v3593
    %4973 = vmatpush.bf16.msra.mxu0 %v3589
    %4974 = vmatpush.bf16.msra.mxu0 %v3585
    %4975 = vmatpush.bf16.msra.mxu0 %v3581
    %4976 = vmatpush.bf16.msra.mxu0 %v3577
    %4977 = vmatmul.bf16.gmra.mxu0 %v977
    %v4978 = vpop.f32.mrf.mxu0
    %v4979 = vadd.f32 %v4965, %v4978
    %v4980 = vpop.f32.mrf.mxu0
    %v4981 = vadd.f32 %v4967, %v4980
    %4982 = vdwg.mxu0
    %4983 = vmatpush.bf16.msra.mxu0 %v3637
    %4984 = vmatpush.bf16.msra.mxu0 %v3633
    %4985 = vmatpush.bf16.msra.mxu0 %v3629
    %4986 = vmatpush.bf16.msra.mxu0 %v3625
    %4987 = vmatpush.bf16.msra.mxu0 %v3621
    %4988 = vmatpush.bf16.msra.mxu0 %v3617
    %4989 = vmatpush.bf16.msra.mxu0 %v3613
    %4990 = vmatpush.bf16.msra.mxu0 %v3609
    %4991 = vmatmul.bf16.gmra.mxu0 %v978
    %v4992 = vpop.f32.mrf.mxu0
    %v4993 = vadd.f32 %v4979, %v4992
    %v4994 = vpop.f32.mrf.mxu0
    %v4995 = vadd.f32 %v4981, %v4994
    %4996 = vdwg.mxu0
    %4997 = vmatpush.bf16.msra.mxu0 %v3669
    %4998 = vmatpush.bf16.msra.mxu0 %v3665
    %4999 = vmatpush.bf16.msra.mxu0 %v3661
    %5000 = vmatpush.bf16.msra.mxu0 %v3657
    %5001 = vmatpush.bf16.msra.mxu0 %v3653
    %5002 = vmatpush.bf16.msra.mxu0 %v3649
    %5003 = vmatpush.bf16.msra.mxu0 %v3645
    %5004 = vmatpush.bf16.msra.mxu0 %v3641
    %5005 = vmatmul.bf16.gmra.mxu0 %v979
    %v5006 = vpop.f32.mrf.mxu0
    %v5007 = vadd.f32 %v4993, %v5006
    %v5008 = vpop.f32.mrf.mxu0
    %v5009 = vadd.f32 %v4995, %v5008
    %5010 = vdwg.mxu0
    %5011 = vmatpush.bf16.msra.mxu0 %v3701
    %5012 = vmatpush.bf16.msra.mxu0 %v3697
    %5013 = vmatpush.bf16.msra.mxu0 %v3693
    %5014 = vmatpush.bf16.msra.mxu0 %v3689
    %5015 = vmatpush.bf16.msra.mxu0 %v3685
    %5016 = vmatpush.bf16.msra.mxu0 %v3681
    %5017 = vmatpush.bf16.msra.mxu0 %v3677
    %5018 = vmatpush.bf16.msra.mxu0 %v3673
    %5019 = vmatmul.bf16.gmra.mxu0 %v980
    %v5020 = vpop.f32.mrf.mxu0
    %v5021 = vadd.f32 %v5007, %v5020
    %v5022 = vpop.f32.mrf.mxu0
    %v5023 = vadd.f32 %v5009, %v5022
    %5024 = vdwg.mxu0
    %5025 = vmatpush.bf16.msra.mxu0 %v3733
    %5026 = vmatpush.bf16.msra.mxu0 %v3729
    %5027 = vmatpush.bf16.msra.mxu0 %v3725
    %5028 = vmatpush.bf16.msra.mxu0 %v3721
    %5029 = vmatpush.bf16.msra.mxu0 %v3717
    %5030 = vmatpush.bf16.msra.mxu0 %v3713
    %5031 = vmatpush.bf16.msra.mxu0 %v3709
    %5032 = vmatpush.bf16.msra.mxu0 %v3705
    %5033 = vmatmul.bf16.gmra.mxu0 %v981
    %v5034 = vpop.f32.mrf.mxu0
    %v5035 = vadd.f32 %v5021, %v5034
    %v5036 = vpop.f32.mrf.mxu0
    %v5037 = vadd.f32 %v5023, %v5036
    %5038 = vdwg.mxu0
    %5039 = vmatpush.bf16.msra.mxu0 %v3765
    %5040 = vmatpush.bf16.msra.mxu0 %v3761
    %5041 = vmatpush.bf16.msra.mxu0 %v3757
    %5042 = vmatpush.bf16.msra.mxu0 %v3753
    %5043 = vmatpush.bf16.msra.mxu0 %v3749
    %5044 = vmatpush.bf16.msra.mxu0 %v3745
    %5045 = vmatpush.bf16.msra.mxu0 %v3741
    %5046 = vmatpush.bf16.msra.mxu0 %v3737
    %5047 = vmatmul.bf16.gmra.mxu0 %v982
    %v5048 = vpop.f32.mrf.mxu0
    %v5049 = vadd.f32 %v5035, %v5048
    %v5050 = vpop.f32.mrf.mxu0
    %v5051 = vadd.f32 %v5037, %v5050
    %5052 = vdwg.mxu0
    %5053 = vmatpush.bf16.msra.mxu0 %v3797
    %5054 = vmatpush.bf16.msra.mxu0 %v3793
    %5055 = vmatpush.bf16.msra.mxu0 %v3789
    %5056 = vmatpush.bf16.msra.mxu0 %v3785
    %5057 = vmatpush.bf16.msra.mxu0 %v3781
    %5058 = vmatpush.bf16.msra.mxu0 %v3777
    %5059 = vmatpush.bf16.msra.mxu0 %v3773
    %5060 = vmatpush.bf16.msra.mxu0 %v3769
    %5061 = vmatmul.bf16.gmra.mxu0 %v983
    %v5062 = vpop.f32.mrf.mxu0
    %v5063 = vadd.f32 %v5049, %v5062
    %v5064 = vpop.f32.mrf.mxu0
    %v5065 = vadd.f32 %v5051, %v5064
    %5066 = vdwg.mxu0
    %5067 = vmatpush.bf16.msra.mxu0 %v3829
    %5068 = vmatpush.bf16.msra.mxu0 %v3825
    %5069 = vmatpush.bf16.msra.mxu0 %v3821
    %5070 = vmatpush.bf16.msra.mxu0 %v3817
    %5071 = vmatpush.bf16.msra.mxu0 %v3813
    %5072 = vmatpush.bf16.msra.mxu0 %v3809
    %5073 = vmatpush.bf16.msra.mxu0 %v3805
    %5074 = vmatpush.bf16.msra.mxu0 %v3801
    %5075 = vmatmul.bf16.gmra.mxu0 %v984
    %v5076 = vpop.f32.mrf.mxu0
    %v5077 = vadd.f32 %v5063, %v5076
    %v5078 = vpop.f32.mrf.mxu0
    %v5079 = vadd.f32 %v5065, %v5078
    %5080 = vdwg.mxu0
    %5081 = vmatpush.bf16.msra.mxu0 %v3861
    %5082 = vmatpush.bf16.msra.mxu0 %v3857
    %5083 = vmatpush.bf16.msra.mxu0 %v3853
    %5084 = vmatpush.bf16.msra.mxu0 %v3849
    %5085 = vmatpush.bf16.msra.mxu0 %v3845
    %5086 = vmatpush.bf16.msra.mxu0 %v3841
    %5087 = vmatpush.bf16.msra.mxu0 %v3837
    %5088 = vmatpush.bf16.msra.mxu0 %v3833
    %5089 = vmatmul.bf16.gmra.mxu0 %v985
    %v5090 = vpop.f32.mrf.mxu0
    %v5091 = vadd.f32 %v5077, %v5090
    %v5092 = vpop.f32.mrf.mxu0
    %v5093 = vadd.f32 %v5079, %v5092
    %5094 = vdwg.mxu0
    %5095 = vmatpush.bf16.msra.mxu0 %v3893
    %5096 = vmatpush.bf16.msra.mxu0 %v3889
    %5097 = vmatpush.bf16.msra.mxu0 %v3885
    %5098 = vmatpush.bf16.msra.mxu0 %v3881
    %5099 = vmatpush.bf16.msra.mxu0 %v3877
    %5100 = vmatpush.bf16.msra.mxu0 %v3873
    %5101 = vmatpush.bf16.msra.mxu0 %v3869
    %5102 = vmatpush.bf16.msra.mxu0 %v3865
    %5103 = vmatmul.bf16.gmra.mxu0 %v986
    %v5104 = vpop.f32.mrf.mxu0
    %v5105 = vadd.f32 %v5091, %v5104
    %v5106 = vpop.f32.mrf.mxu0
    %v5107 = vadd.f32 %v5093, %v5106
    %5108 = vdwg.mxu0
    %5109 = vmatpush.bf16.msra.mxu0 %v3925
    %5110 = vmatpush.bf16.msra.mxu0 %v3921
    %5111 = vmatpush.bf16.msra.mxu0 %v3917
    %5112 = vmatpush.bf16.msra.mxu0 %v3913
    %5113 = vmatpush.bf16.msra.mxu0 %v3909
    %5114 = vmatpush.bf16.msra.mxu0 %v3905
    %5115 = vmatpush.bf16.msra.mxu0 %v3901
    %5116 = vmatpush.bf16.msra.mxu0 %v3897
    %5117 = vmatmul.bf16.gmra.mxu0 %v987
    %v5118 = vpop.f32.mrf.mxu0
    %v5119 = vadd.f32 %v5105, %v5118
    %v5120 = vpop.f32.mrf.mxu0
    %v5121 = vadd.f32 %v5107, %v5120
    %5122 = vdwg.mxu0
    %5123 = vmatpush.bf16.msra.mxu0 %v3957
    %5124 = vmatpush.bf16.msra.mxu0 %v3953
    %5125 = vmatpush.bf16.msra.mxu0 %v3949
    %5126 = vmatpush.bf16.msra.mxu0 %v3945
    %5127 = vmatpush.bf16.msra.mxu0 %v3941
    %5128 = vmatpush.bf16.msra.mxu0 %v3937
    %5129 = vmatpush.bf16.msra.mxu0 %v3933
    %5130 = vmatpush.bf16.msra.mxu0 %v3929
    %5131 = vmatmul.bf16.gmra.mxu0 %v988
    %v5132 = vpop.f32.mrf.mxu0
    %v5133 = vadd.f32 %v5119, %v5132
    %v5134 = vpop.f32.mrf.mxu0
    %v5135 = vadd.f32 %v5121, %v5134
    %5136 = vdwg.mxu0
    %5137 = vmatpush.bf16.msra.mxu0 %v3989
    %5138 = vmatpush.bf16.msra.mxu0 %v3985
    %5139 = vmatpush.bf16.msra.mxu0 %v3981
    %5140 = vmatpush.bf16.msra.mxu0 %v3977
    %5141 = vmatpush.bf16.msra.mxu0 %v3973
    %5142 = vmatpush.bf16.msra.mxu0 %v3969
    %5143 = vmatpush.bf16.msra.mxu0 %v3965
    %5144 = vmatpush.bf16.msra.mxu0 %v3961
    %5145 = vmatmul.bf16.gmra.mxu0 %v989
    %v5146 = vpop.f32.mrf.mxu0
    %v5147 = vadd.f32 %v5133, %v5146
    %v5148 = vpop.f32.mrf.mxu0
    %v5149 = vadd.f32 %v5135, %v5148
    %5150 = vdwg.mxu0
    %5151 = vmatpush.bf16.msra.mxu0 %v4021
    %5152 = vmatpush.bf16.msra.mxu0 %v4017
    %5153 = vmatpush.bf16.msra.mxu0 %v4013
    %5154 = vmatpush.bf16.msra.mxu0 %v4009
    %5155 = vmatpush.bf16.msra.mxu0 %v4005
    %5156 = vmatpush.bf16.msra.mxu0 %v4001
    %5157 = vmatpush.bf16.msra.mxu0 %v3997
    %5158 = vmatpush.bf16.msra.mxu0 %v3993
    %5159 = vmatmul.bf16.gmra.mxu0 %v990
    %v5160 = vpop.f32.mrf.mxu0
    %v5161 = vadd.f32 %v5147, %v5160
    %v5162 = vpop.f32.mrf.mxu0
    %v5163 = vadd.f32 %v5149, %v5162
    %5164 = vdwg.mxu0
    %5165 = vmatpush.bf16.msra.mxu0 %v4053
    %5166 = vmatpush.bf16.msra.mxu0 %v4049
    %5167 = vmatpush.bf16.msra.mxu0 %v4045
    %5168 = vmatpush.bf16.msra.mxu0 %v4041
    %5169 = vmatpush.bf16.msra.mxu0 %v4037
    %5170 = vmatpush.bf16.msra.mxu0 %v4033
    %5171 = vmatpush.bf16.msra.mxu0 %v4029
    %5172 = vmatpush.bf16.msra.mxu0 %v4025
    %5173 = vmatmul.bf16.gmra.mxu0 %v991
    %v5174 = vpop.f32.mrf.mxu0
    %v5175 = vadd.f32 %v5161, %v5174
    %v5176 = vpop.f32.mrf.mxu0
    %v5177 = vadd.f32 %v5163, %v5176
    %5178 = vdwg.mxu0
    %5179 = vmatpush.bf16.msra.mxu0 %v4085
    %5180 = vmatpush.bf16.msra.mxu0 %v4081
    %5181 = vmatpush.bf16.msra.mxu0 %v4077
    %5182 = vmatpush.bf16.msra.mxu0 %v4073
    %5183 = vmatpush.bf16.msra.mxu0 %v4069
    %5184 = vmatpush.bf16.msra.mxu0 %v4065
    %5185 = vmatpush.bf16.msra.mxu0 %v4061
    %5186 = vmatpush.bf16.msra.mxu0 %v4057
    %5187 = vmatmul.bf16.gmra.mxu0 %v992
    %v5188 = vpop.f32.mrf.mxu0
    %v5189 = vadd.f32 %v5175, %v5188
    %v5190 = vpop.f32.mrf.mxu0
    %v5191 = vadd.f32 %v5177, %v5190
    %5192 = vdwg.mxu0
    %5193 = vmatpush.bf16.msra.mxu0 %v3350
    %5194 = vmatpush.bf16.msra.mxu0 %v3346
    %5195 = vmatpush.bf16.msra.mxu0 %v3342
    %5196 = vmatpush.bf16.msra.mxu0 %v3338
    %5197 = vmatpush.bf16.msra.mxu0 %v3334
    %5198 = vmatpush.bf16.msra.mxu0 %v3330
    %5199 = vmatpush.bf16.msra.mxu0 %v3326
    %5200 = vmatpush.bf16.msra.mxu0 %v3322
    %5201 = vmatmul.bf16.gmra.mxu0 %v969
    %v5202 = vpop.f32.mrf.mxu0
    %v5203 = vadd.f32 %v890, %v5202
    %v5204 = vpop.f32.mrf.mxu0
    %v5205 = vadd.f32 %v890, %v5204
    %5206 = vdwg.mxu0
    %5207 = vmatpush.bf16.msra.mxu0 %v3382
    %5208 = vmatpush.bf16.msra.mxu0 %v3378
    %5209 = vmatpush.bf16.msra.mxu0 %v3374
    %5210 = vmatpush.bf16.msra.mxu0 %v3370
    %5211 = vmatpush.bf16.msra.mxu0 %v3366
    %5212 = vmatpush.bf16.msra.mxu0 %v3362
    %5213 = vmatpush.bf16.msra.mxu0 %v3358
    %5214 = vmatpush.bf16.msra.mxu0 %v3354
    %5215 = vmatmul.bf16.gmra.mxu0 %v970
    %v5216 = vpop.f32.mrf.mxu0
    %v5217 = vadd.f32 %v5203, %v5216
    %v5218 = vpop.f32.mrf.mxu0
    %v5219 = vadd.f32 %v5205, %v5218
    %5220 = vdwg.mxu0
    %5221 = vmatpush.bf16.msra.mxu0 %v3414
    %5222 = vmatpush.bf16.msra.mxu0 %v3410
    %5223 = vmatpush.bf16.msra.mxu0 %v3406
    %5224 = vmatpush.bf16.msra.mxu0 %v3402
    %5225 = vmatpush.bf16.msra.mxu0 %v3398
    %5226 = vmatpush.bf16.msra.mxu0 %v3394
    %5227 = vmatpush.bf16.msra.mxu0 %v3390
    %5228 = vmatpush.bf16.msra.mxu0 %v3386
    %5229 = vmatmul.bf16.gmra.mxu0 %v971
    %v5230 = vpop.f32.mrf.mxu0
    %v5231 = vadd.f32 %v5217, %v5230
    %v5232 = vpop.f32.mrf.mxu0
    %v5233 = vadd.f32 %v5219, %v5232
    %5234 = vdwg.mxu0
    %5235 = vmatpush.bf16.msra.mxu0 %v3446
    %5236 = vmatpush.bf16.msra.mxu0 %v3442
    %5237 = vmatpush.bf16.msra.mxu0 %v3438
    %5238 = vmatpush.bf16.msra.mxu0 %v3434
    %5239 = vmatpush.bf16.msra.mxu0 %v3430
    %5240 = vmatpush.bf16.msra.mxu0 %v3426
    %5241 = vmatpush.bf16.msra.mxu0 %v3422
    %5242 = vmatpush.bf16.msra.mxu0 %v3418
    %5243 = vmatmul.bf16.gmra.mxu0 %v972
    %v5244 = vpop.f32.mrf.mxu0
    %v5245 = vadd.f32 %v5231, %v5244
    %v5246 = vpop.f32.mrf.mxu0
    %v5247 = vadd.f32 %v5233, %v5246
    %5248 = vdwg.mxu0
    %5249 = vmatpush.bf16.msra.mxu0 %v3478
    %5250 = vmatpush.bf16.msra.mxu0 %v3474
    %5251 = vmatpush.bf16.msra.mxu0 %v3470
    %5252 = vmatpush.bf16.msra.mxu0 %v3466
    %5253 = vmatpush.bf16.msra.mxu0 %v3462
    %5254 = vmatpush.bf16.msra.mxu0 %v3458
    %5255 = vmatpush.bf16.msra.mxu0 %v3454
    %5256 = vmatpush.bf16.msra.mxu0 %v3450
    %5257 = vmatmul.bf16.gmra.mxu0 %v973
    %v5258 = vpop.f32.mrf.mxu0
    %v5259 = vadd.f32 %v5245, %v5258
    %v5260 = vpop.f32.mrf.mxu0
    %v5261 = vadd.f32 %v5247, %v5260
    %5262 = vdwg.mxu0
    %5263 = vmatpush.bf16.msra.mxu0 %v3510
    %5264 = vmatpush.bf16.msra.mxu0 %v3506
    %5265 = vmatpush.bf16.msra.mxu0 %v3502
    %5266 = vmatpush.bf16.msra.mxu0 %v3498
    %5267 = vmatpush.bf16.msra.mxu0 %v3494
    %5268 = vmatpush.bf16.msra.mxu0 %v3490
    %5269 = vmatpush.bf16.msra.mxu0 %v3486
    %5270 = vmatpush.bf16.msra.mxu0 %v3482
    %5271 = vmatmul.bf16.gmra.mxu0 %v974
    %v5272 = vpop.f32.mrf.mxu0
    %v5273 = vadd.f32 %v5259, %v5272
    %v5274 = vpop.f32.mrf.mxu0
    %v5275 = vadd.f32 %v5261, %v5274
    %5276 = vdwg.mxu0
    %5277 = vmatpush.bf16.msra.mxu0 %v3542
    %5278 = vmatpush.bf16.msra.mxu0 %v3538
    %5279 = vmatpush.bf16.msra.mxu0 %v3534
    %5280 = vmatpush.bf16.msra.mxu0 %v3530
    %5281 = vmatpush.bf16.msra.mxu0 %v3526
    %5282 = vmatpush.bf16.msra.mxu0 %v3522
    %5283 = vmatpush.bf16.msra.mxu0 %v3518
    %5284 = vmatpush.bf16.msra.mxu0 %v3514
    %5285 = vmatmul.bf16.gmra.mxu0 %v975
    %v5286 = vpop.f32.mrf.mxu0
    %v5287 = vadd.f32 %v5273, %v5286
    %v5288 = vpop.f32.mrf.mxu0
    %v5289 = vadd.f32 %v5275, %v5288
    %5290 = vdwg.mxu0
    %5291 = vmatpush.bf16.msra.mxu0 %v3574
    %5292 = vmatpush.bf16.msra.mxu0 %v3570
    %5293 = vmatpush.bf16.msra.mxu0 %v3566
    %5294 = vmatpush.bf16.msra.mxu0 %v3562
    %5295 = vmatpush.bf16.msra.mxu0 %v3558
    %5296 = vmatpush.bf16.msra.mxu0 %v3554
    %5297 = vmatpush.bf16.msra.mxu0 %v3550
    %5298 = vmatpush.bf16.msra.mxu0 %v3546
    %5299 = vmatmul.bf16.gmra.mxu0 %v976
    %v5300 = vpop.f32.mrf.mxu0
    %v5301 = vadd.f32 %v5287, %v5300
    %v5302 = vpop.f32.mrf.mxu0
    %v5303 = vadd.f32 %v5289, %v5302
    %5304 = vdwg.mxu0
    %5305 = vmatpush.bf16.msra.mxu0 %v3606
    %5306 = vmatpush.bf16.msra.mxu0 %v3602
    %5307 = vmatpush.bf16.msra.mxu0 %v3598
    %5308 = vmatpush.bf16.msra.mxu0 %v3594
    %5309 = vmatpush.bf16.msra.mxu0 %v3590
    %5310 = vmatpush.bf16.msra.mxu0 %v3586
    %5311 = vmatpush.bf16.msra.mxu0 %v3582
    %5312 = vmatpush.bf16.msra.mxu0 %v3578
    %5313 = vmatmul.bf16.gmra.mxu0 %v977
    %v5314 = vpop.f32.mrf.mxu0
    %v5315 = vadd.f32 %v5301, %v5314
    %v5316 = vpop.f32.mrf.mxu0
    %v5317 = vadd.f32 %v5303, %v5316
    %5318 = vdwg.mxu0
    %5319 = vmatpush.bf16.msra.mxu0 %v3638
    %5320 = vmatpush.bf16.msra.mxu0 %v3634
    %5321 = vmatpush.bf16.msra.mxu0 %v3630
    %5322 = vmatpush.bf16.msra.mxu0 %v3626
    %5323 = vmatpush.bf16.msra.mxu0 %v3622
    %5324 = vmatpush.bf16.msra.mxu0 %v3618
    %5325 = vmatpush.bf16.msra.mxu0 %v3614
    %5326 = vmatpush.bf16.msra.mxu0 %v3610
    %5327 = vmatmul.bf16.gmra.mxu0 %v978
    %v5328 = vpop.f32.mrf.mxu0
    %v5329 = vadd.f32 %v5315, %v5328
    %v5330 = vpop.f32.mrf.mxu0
    %v5331 = vadd.f32 %v5317, %v5330
    %5332 = vdwg.mxu0
    %5333 = vmatpush.bf16.msra.mxu0 %v3670
    %5334 = vmatpush.bf16.msra.mxu0 %v3666
    %5335 = vmatpush.bf16.msra.mxu0 %v3662
    %5336 = vmatpush.bf16.msra.mxu0 %v3658
    %5337 = vmatpush.bf16.msra.mxu0 %v3654
    %5338 = vmatpush.bf16.msra.mxu0 %v3650
    %5339 = vmatpush.bf16.msra.mxu0 %v3646
    %5340 = vmatpush.bf16.msra.mxu0 %v3642
    %5341 = vmatmul.bf16.gmra.mxu0 %v979
    %v5342 = vpop.f32.mrf.mxu0
    %v5343 = vadd.f32 %v5329, %v5342
    %v5344 = vpop.f32.mrf.mxu0
    %v5345 = vadd.f32 %v5331, %v5344
    %5346 = vdwg.mxu0
    %5347 = vmatpush.bf16.msra.mxu0 %v3702
    %5348 = vmatpush.bf16.msra.mxu0 %v3698
    %5349 = vmatpush.bf16.msra.mxu0 %v3694
    %5350 = vmatpush.bf16.msra.mxu0 %v3690
    %5351 = vmatpush.bf16.msra.mxu0 %v3686
    %5352 = vmatpush.bf16.msra.mxu0 %v3682
    %5353 = vmatpush.bf16.msra.mxu0 %v3678
    %5354 = vmatpush.bf16.msra.mxu0 %v3674
    %5355 = vmatmul.bf16.gmra.mxu0 %v980
    %v5356 = vpop.f32.mrf.mxu0
    %v5357 = vadd.f32 %v5343, %v5356
    %v5358 = vpop.f32.mrf.mxu0
    %v5359 = vadd.f32 %v5345, %v5358
    %5360 = vdwg.mxu0
    %5361 = vmatpush.bf16.msra.mxu0 %v3734
    %5362 = vmatpush.bf16.msra.mxu0 %v3730
    %5363 = vmatpush.bf16.msra.mxu0 %v3726
    %5364 = vmatpush.bf16.msra.mxu0 %v3722
    %5365 = vmatpush.bf16.msra.mxu0 %v3718
    %5366 = vmatpush.bf16.msra.mxu0 %v3714
    %5367 = vmatpush.bf16.msra.mxu0 %v3710
    %5368 = vmatpush.bf16.msra.mxu0 %v3706
    %5369 = vmatmul.bf16.gmra.mxu0 %v981
    %v5370 = vpop.f32.mrf.mxu0
    %v5371 = vadd.f32 %v5357, %v5370
    %v5372 = vpop.f32.mrf.mxu0
    %v5373 = vadd.f32 %v5359, %v5372
    %5374 = vdwg.mxu0
    %5375 = vmatpush.bf16.msra.mxu0 %v3766
    %5376 = vmatpush.bf16.msra.mxu0 %v3762
    %5377 = vmatpush.bf16.msra.mxu0 %v3758
    %5378 = vmatpush.bf16.msra.mxu0 %v3754
    %5379 = vmatpush.bf16.msra.mxu0 %v3750
    %5380 = vmatpush.bf16.msra.mxu0 %v3746
    %5381 = vmatpush.bf16.msra.mxu0 %v3742
    %5382 = vmatpush.bf16.msra.mxu0 %v3738
    %5383 = vmatmul.bf16.gmra.mxu0 %v982
    %v5384 = vpop.f32.mrf.mxu0
    %v5385 = vadd.f32 %v5371, %v5384
    %v5386 = vpop.f32.mrf.mxu0
    %v5387 = vadd.f32 %v5373, %v5386
    %5388 = vdwg.mxu0
    %5389 = vmatpush.bf16.msra.mxu0 %v3798
    %5390 = vmatpush.bf16.msra.mxu0 %v3794
    %5391 = vmatpush.bf16.msra.mxu0 %v3790
    %5392 = vmatpush.bf16.msra.mxu0 %v3786
    %5393 = vmatpush.bf16.msra.mxu0 %v3782
    %5394 = vmatpush.bf16.msra.mxu0 %v3778
    %5395 = vmatpush.bf16.msra.mxu0 %v3774
    %5396 = vmatpush.bf16.msra.mxu0 %v3770
    %5397 = vmatmul.bf16.gmra.mxu0 %v983
    %v5398 = vpop.f32.mrf.mxu0
    %v5399 = vadd.f32 %v5385, %v5398
    %v5400 = vpop.f32.mrf.mxu0
    %v5401 = vadd.f32 %v5387, %v5400
    %5402 = vdwg.mxu0
    %5403 = vmatpush.bf16.msra.mxu0 %v3830
    %5404 = vmatpush.bf16.msra.mxu0 %v3826
    %5405 = vmatpush.bf16.msra.mxu0 %v3822
    %5406 = vmatpush.bf16.msra.mxu0 %v3818
    %5407 = vmatpush.bf16.msra.mxu0 %v3814
    %5408 = vmatpush.bf16.msra.mxu0 %v3810
    %5409 = vmatpush.bf16.msra.mxu0 %v3806
    %5410 = vmatpush.bf16.msra.mxu0 %v3802
    %5411 = vmatmul.bf16.gmra.mxu0 %v984
    %v5412 = vpop.f32.mrf.mxu0
    %v5413 = vadd.f32 %v5399, %v5412
    %v5414 = vpop.f32.mrf.mxu0
    %v5415 = vadd.f32 %v5401, %v5414
    %5416 = vdwg.mxu0
    %5417 = vmatpush.bf16.msra.mxu0 %v3862
    %5418 = vmatpush.bf16.msra.mxu0 %v3858
    %5419 = vmatpush.bf16.msra.mxu0 %v3854
    %5420 = vmatpush.bf16.msra.mxu0 %v3850
    %5421 = vmatpush.bf16.msra.mxu0 %v3846
    %5422 = vmatpush.bf16.msra.mxu0 %v3842
    %5423 = vmatpush.bf16.msra.mxu0 %v3838
    %5424 = vmatpush.bf16.msra.mxu0 %v3834
    %5425 = vmatmul.bf16.gmra.mxu0 %v985
    %v5426 = vpop.f32.mrf.mxu0
    %v5427 = vadd.f32 %v5413, %v5426
    %v5428 = vpop.f32.mrf.mxu0
    %v5429 = vadd.f32 %v5415, %v5428
    %5430 = vdwg.mxu0
    %5431 = vmatpush.bf16.msra.mxu0 %v3894
    %5432 = vmatpush.bf16.msra.mxu0 %v3890
    %5433 = vmatpush.bf16.msra.mxu0 %v3886
    %5434 = vmatpush.bf16.msra.mxu0 %v3882
    %5435 = vmatpush.bf16.msra.mxu0 %v3878
    %5436 = vmatpush.bf16.msra.mxu0 %v3874
    %5437 = vmatpush.bf16.msra.mxu0 %v3870
    %5438 = vmatpush.bf16.msra.mxu0 %v3866
    %5439 = vmatmul.bf16.gmra.mxu0 %v986
    %v5440 = vpop.f32.mrf.mxu0
    %v5441 = vadd.f32 %v5427, %v5440
    %v5442 = vpop.f32.mrf.mxu0
    %v5443 = vadd.f32 %v5429, %v5442
    %5444 = vdwg.mxu0
    %5445 = vmatpush.bf16.msra.mxu0 %v3926
    %5446 = vmatpush.bf16.msra.mxu0 %v3922
    %5447 = vmatpush.bf16.msra.mxu0 %v3918
    %5448 = vmatpush.bf16.msra.mxu0 %v3914
    %5449 = vmatpush.bf16.msra.mxu0 %v3910
    %5450 = vmatpush.bf16.msra.mxu0 %v3906
    %5451 = vmatpush.bf16.msra.mxu0 %v3902
    %5452 = vmatpush.bf16.msra.mxu0 %v3898
    %5453 = vmatmul.bf16.gmra.mxu0 %v987
    %v5454 = vpop.f32.mrf.mxu0
    %v5455 = vadd.f32 %v5441, %v5454
    %v5456 = vpop.f32.mrf.mxu0
    %v5457 = vadd.f32 %v5443, %v5456
    %5458 = vdwg.mxu0
    %5459 = vmatpush.bf16.msra.mxu0 %v3958
    %5460 = vmatpush.bf16.msra.mxu0 %v3954
    %5461 = vmatpush.bf16.msra.mxu0 %v3950
    %5462 = vmatpush.bf16.msra.mxu0 %v3946
    %5463 = vmatpush.bf16.msra.mxu0 %v3942
    %5464 = vmatpush.bf16.msra.mxu0 %v3938
    %5465 = vmatpush.bf16.msra.mxu0 %v3934
    %5466 = vmatpush.bf16.msra.mxu0 %v3930
    %5467 = vmatmul.bf16.gmra.mxu0 %v988
    %v5468 = vpop.f32.mrf.mxu0
    %v5469 = vadd.f32 %v5455, %v5468
    %v5470 = vpop.f32.mrf.mxu0
    %v5471 = vadd.f32 %v5457, %v5470
    %5472 = vdwg.mxu0
    %5473 = vmatpush.bf16.msra.mxu0 %v3990
    %5474 = vmatpush.bf16.msra.mxu0 %v3986
    %5475 = vmatpush.bf16.msra.mxu0 %v3982
    %5476 = vmatpush.bf16.msra.mxu0 %v3978
    %5477 = vmatpush.bf16.msra.mxu0 %v3974
    %5478 = vmatpush.bf16.msra.mxu0 %v3970
    %5479 = vmatpush.bf16.msra.mxu0 %v3966
    %5480 = vmatpush.bf16.msra.mxu0 %v3962
    %5481 = vmatmul.bf16.gmra.mxu0 %v989
    %v5482 = vpop.f32.mrf.mxu0
    %v5483 = vadd.f32 %v5469, %v5482
    %v5484 = vpop.f32.mrf.mxu0
    %v5485 = vadd.f32 %v5471, %v5484
    %5486 = vdwg.mxu0
    %5487 = vmatpush.bf16.msra.mxu0 %v4022
    %5488 = vmatpush.bf16.msra.mxu0 %v4018
    %5489 = vmatpush.bf16.msra.mxu0 %v4014
    %5490 = vmatpush.bf16.msra.mxu0 %v4010
    %5491 = vmatpush.bf16.msra.mxu0 %v4006
    %5492 = vmatpush.bf16.msra.mxu0 %v4002
    %5493 = vmatpush.bf16.msra.mxu0 %v3998
    %5494 = vmatpush.bf16.msra.mxu0 %v3994
    %5495 = vmatmul.bf16.gmra.mxu0 %v990
    %v5496 = vpop.f32.mrf.mxu0
    %v5497 = vadd.f32 %v5483, %v5496
    %v5498 = vpop.f32.mrf.mxu0
    %v5499 = vadd.f32 %v5485, %v5498
    %5500 = vdwg.mxu0
    %5501 = vmatpush.bf16.msra.mxu0 %v4054
    %5502 = vmatpush.bf16.msra.mxu0 %v4050
    %5503 = vmatpush.bf16.msra.mxu0 %v4046
    %5504 = vmatpush.bf16.msra.mxu0 %v4042
    %5505 = vmatpush.bf16.msra.mxu0 %v4038
    %5506 = vmatpush.bf16.msra.mxu0 %v4034
    %5507 = vmatpush.bf16.msra.mxu0 %v4030
    %5508 = vmatpush.bf16.msra.mxu0 %v4026
    %5509 = vmatmul.bf16.gmra.mxu0 %v991
    %v5510 = vpop.f32.mrf.mxu0
    %v5511 = vadd.f32 %v5497, %v5510
    %v5512 = vpop.f32.mrf.mxu0
    %v5513 = vadd.f32 %v5499, %v5512
    %5514 = vdwg.mxu0
    %5515 = vmatpush.bf16.msra.mxu0 %v4086
    %5516 = vmatpush.bf16.msra.mxu0 %v4082
    %5517 = vmatpush.bf16.msra.mxu0 %v4078
    %5518 = vmatpush.bf16.msra.mxu0 %v4074
    %5519 = vmatpush.bf16.msra.mxu0 %v4070
    %5520 = vmatpush.bf16.msra.mxu0 %v4066
    %5521 = vmatpush.bf16.msra.mxu0 %v4062
    %5522 = vmatpush.bf16.msra.mxu0 %v4058
    %5523 = vmatmul.bf16.gmra.mxu0 %v992
    %v5524 = vpop.f32.mrf.mxu0
    %v5525 = vadd.f32 %v5511, %v5524
    %v5526 = vpop.f32.mrf.mxu0
    %v5527 = vadd.f32 %v5513, %v5526
    %5528 = vdwg.mxu0
    %5529 = vmatpush.bf16.msra.mxu0 %v3351
    %5530 = vmatpush.bf16.msra.mxu0 %v3347
    %5531 = vmatpush.bf16.msra.mxu0 %v3343
    %5532 = vmatpush.bf16.msra.mxu0 %v3339
    %5533 = vmatpush.bf16.msra.mxu0 %v3335
    %5534 = vmatpush.bf16.msra.mxu0 %v3331
    %5535 = vmatpush.bf16.msra.mxu0 %v3327
    %5536 = vmatpush.bf16.msra.mxu0 %v3323
    %5537 = vmatmul.bf16.gmra.mxu0 %v969
    %v5538 = vpop.f32.mrf.mxu0
    %v5539 = vadd.f32 %v891, %v5538
    %v5540 = vpop.f32.mrf.mxu0
    %v5541 = vadd.f32 %v891, %v5540
    %5542 = vdwg.mxu0
    %5543 = vmatpush.bf16.msra.mxu0 %v3383
    %5544 = vmatpush.bf16.msra.mxu0 %v3379
    %5545 = vmatpush.bf16.msra.mxu0 %v3375
    %5546 = vmatpush.bf16.msra.mxu0 %v3371
    %5547 = vmatpush.bf16.msra.mxu0 %v3367
    %5548 = vmatpush.bf16.msra.mxu0 %v3363
    %5549 = vmatpush.bf16.msra.mxu0 %v3359
    %5550 = vmatpush.bf16.msra.mxu0 %v3355
    %5551 = vmatmul.bf16.gmra.mxu0 %v970
    %v5552 = vpop.f32.mrf.mxu0
    %v5553 = vadd.f32 %v5539, %v5552
    %v5554 = vpop.f32.mrf.mxu0
    %v5555 = vadd.f32 %v5541, %v5554
    %5556 = vdwg.mxu0
    %5557 = vmatpush.bf16.msra.mxu0 %v3415
    %5558 = vmatpush.bf16.msra.mxu0 %v3411
    %5559 = vmatpush.bf16.msra.mxu0 %v3407
    %5560 = vmatpush.bf16.msra.mxu0 %v3403
    %5561 = vmatpush.bf16.msra.mxu0 %v3399
    %5562 = vmatpush.bf16.msra.mxu0 %v3395
    %5563 = vmatpush.bf16.msra.mxu0 %v3391
    %5564 = vmatpush.bf16.msra.mxu0 %v3387
    %5565 = vmatmul.bf16.gmra.mxu0 %v971
    %v5566 = vpop.f32.mrf.mxu0
    %v5567 = vadd.f32 %v5553, %v5566
    %v5568 = vpop.f32.mrf.mxu0
    %v5569 = vadd.f32 %v5555, %v5568
    %5570 = vdwg.mxu0
    %5571 = vmatpush.bf16.msra.mxu0 %v3447
    %5572 = vmatpush.bf16.msra.mxu0 %v3443
    %5573 = vmatpush.bf16.msra.mxu0 %v3439
    %5574 = vmatpush.bf16.msra.mxu0 %v3435
    %5575 = vmatpush.bf16.msra.mxu0 %v3431
    %5576 = vmatpush.bf16.msra.mxu0 %v3427
    %5577 = vmatpush.bf16.msra.mxu0 %v3423
    %5578 = vmatpush.bf16.msra.mxu0 %v3419
    %5579 = vmatmul.bf16.gmra.mxu0 %v972
    %v5580 = vpop.f32.mrf.mxu0
    %v5581 = vadd.f32 %v5567, %v5580
    %v5582 = vpop.f32.mrf.mxu0
    %v5583 = vadd.f32 %v5569, %v5582
    %5584 = vdwg.mxu0
    %5585 = vmatpush.bf16.msra.mxu0 %v3479
    %5586 = vmatpush.bf16.msra.mxu0 %v3475
    %5587 = vmatpush.bf16.msra.mxu0 %v3471
    %5588 = vmatpush.bf16.msra.mxu0 %v3467
    %5589 = vmatpush.bf16.msra.mxu0 %v3463
    %5590 = vmatpush.bf16.msra.mxu0 %v3459
    %5591 = vmatpush.bf16.msra.mxu0 %v3455
    %5592 = vmatpush.bf16.msra.mxu0 %v3451
    %5593 = vmatmul.bf16.gmra.mxu0 %v973
    %v5594 = vpop.f32.mrf.mxu0
    %v5595 = vadd.f32 %v5581, %v5594
    %v5596 = vpop.f32.mrf.mxu0
    %v5597 = vadd.f32 %v5583, %v5596
    %5598 = vdwg.mxu0
    %5599 = vmatpush.bf16.msra.mxu0 %v3511
    %5600 = vmatpush.bf16.msra.mxu0 %v3507
    %5601 = vmatpush.bf16.msra.mxu0 %v3503
    %5602 = vmatpush.bf16.msra.mxu0 %v3499
    %5603 = vmatpush.bf16.msra.mxu0 %v3495
    %5604 = vmatpush.bf16.msra.mxu0 %v3491
    %5605 = vmatpush.bf16.msra.mxu0 %v3487
    %5606 = vmatpush.bf16.msra.mxu0 %v3483
    %5607 = vmatmul.bf16.gmra.mxu0 %v974
    %v5608 = vpop.f32.mrf.mxu0
    %v5609 = vadd.f32 %v5595, %v5608
    %v5610 = vpop.f32.mrf.mxu0
    %v5611 = vadd.f32 %v5597, %v5610
    %5612 = vdwg.mxu0
    %5613 = vmatpush.bf16.msra.mxu0 %v3543
    %5614 = vmatpush.bf16.msra.mxu0 %v3539
    %5615 = vmatpush.bf16.msra.mxu0 %v3535
    %5616 = vmatpush.bf16.msra.mxu0 %v3531
    %5617 = vmatpush.bf16.msra.mxu0 %v3527
    %5618 = vmatpush.bf16.msra.mxu0 %v3523
    %5619 = vmatpush.bf16.msra.mxu0 %v3519
    %5620 = vmatpush.bf16.msra.mxu0 %v3515
    %5621 = vmatmul.bf16.gmra.mxu0 %v975
    %v5622 = vpop.f32.mrf.mxu0
    %v5623 = vadd.f32 %v5609, %v5622
    %v5624 = vpop.f32.mrf.mxu0
    %v5625 = vadd.f32 %v5611, %v5624
    %5626 = vdwg.mxu0
    %5627 = vmatpush.bf16.msra.mxu0 %v3575
    %5628 = vmatpush.bf16.msra.mxu0 %v3571
    %5629 = vmatpush.bf16.msra.mxu0 %v3567
    %5630 = vmatpush.bf16.msra.mxu0 %v3563
    %5631 = vmatpush.bf16.msra.mxu0 %v3559
    %5632 = vmatpush.bf16.msra.mxu0 %v3555
    %5633 = vmatpush.bf16.msra.mxu0 %v3551
    %5634 = vmatpush.bf16.msra.mxu0 %v3547
    %5635 = vmatmul.bf16.gmra.mxu0 %v976
    %v5636 = vpop.f32.mrf.mxu0
    %v5637 = vadd.f32 %v5623, %v5636
    %v5638 = vpop.f32.mrf.mxu0
    %v5639 = vadd.f32 %v5625, %v5638
    %5640 = vdwg.mxu0
    %5641 = vmatpush.bf16.msra.mxu0 %v3607
    %5642 = vmatpush.bf16.msra.mxu0 %v3603
    %5643 = vmatpush.bf16.msra.mxu0 %v3599
    %5644 = vmatpush.bf16.msra.mxu0 %v3595
    %5645 = vmatpush.bf16.msra.mxu0 %v3591
    %5646 = vmatpush.bf16.msra.mxu0 %v3587
    %5647 = vmatpush.bf16.msra.mxu0 %v3583
    %5648 = vmatpush.bf16.msra.mxu0 %v3579
    %5649 = vmatmul.bf16.gmra.mxu0 %v977
    %v5650 = vpop.f32.mrf.mxu0
    %v5651 = vadd.f32 %v5637, %v5650
    %v5652 = vpop.f32.mrf.mxu0
    %v5653 = vadd.f32 %v5639, %v5652
    %5654 = vdwg.mxu0
    %5655 = vmatpush.bf16.msra.mxu0 %v3639
    %5656 = vmatpush.bf16.msra.mxu0 %v3635
    %5657 = vmatpush.bf16.msra.mxu0 %v3631
    %5658 = vmatpush.bf16.msra.mxu0 %v3627
    %5659 = vmatpush.bf16.msra.mxu0 %v3623
    %5660 = vmatpush.bf16.msra.mxu0 %v3619
    %5661 = vmatpush.bf16.msra.mxu0 %v3615
    %5662 = vmatpush.bf16.msra.mxu0 %v3611
    %5663 = vmatmul.bf16.gmra.mxu0 %v978
    %v5664 = vpop.f32.mrf.mxu0
    %v5665 = vadd.f32 %v5651, %v5664
    %v5666 = vpop.f32.mrf.mxu0
    %v5667 = vadd.f32 %v5653, %v5666
    %5668 = vdwg.mxu0
    %5669 = vmatpush.bf16.msra.mxu0 %v3671
    %5670 = vmatpush.bf16.msra.mxu0 %v3667
    %5671 = vmatpush.bf16.msra.mxu0 %v3663
    %5672 = vmatpush.bf16.msra.mxu0 %v3659
    %5673 = vmatpush.bf16.msra.mxu0 %v3655
    %5674 = vmatpush.bf16.msra.mxu0 %v3651
    %5675 = vmatpush.bf16.msra.mxu0 %v3647
    %5676 = vmatpush.bf16.msra.mxu0 %v3643
    %5677 = vmatmul.bf16.gmra.mxu0 %v979
    %v5678 = vpop.f32.mrf.mxu0
    %v5679 = vadd.f32 %v5665, %v5678
    %v5680 = vpop.f32.mrf.mxu0
    %v5681 = vadd.f32 %v5667, %v5680
    %5682 = vdwg.mxu0
    %5683 = vmatpush.bf16.msra.mxu0 %v3703
    %5684 = vmatpush.bf16.msra.mxu0 %v3699
    %5685 = vmatpush.bf16.msra.mxu0 %v3695
    %5686 = vmatpush.bf16.msra.mxu0 %v3691
    %5687 = vmatpush.bf16.msra.mxu0 %v3687
    %5688 = vmatpush.bf16.msra.mxu0 %v3683
    %5689 = vmatpush.bf16.msra.mxu0 %v3679
    %5690 = vmatpush.bf16.msra.mxu0 %v3675
    %5691 = vmatmul.bf16.gmra.mxu0 %v980
    %v5692 = vpop.f32.mrf.mxu0
    %v5693 = vadd.f32 %v5679, %v5692
    %v5694 = vpop.f32.mrf.mxu0
    %v5695 = vadd.f32 %v5681, %v5694
    %5696 = vdwg.mxu0
    %5697 = vmatpush.bf16.msra.mxu0 %v3735
    %5698 = vmatpush.bf16.msra.mxu0 %v3731
    %5699 = vmatpush.bf16.msra.mxu0 %v3727
    %5700 = vmatpush.bf16.msra.mxu0 %v3723
    %5701 = vmatpush.bf16.msra.mxu0 %v3719
    %5702 = vmatpush.bf16.msra.mxu0 %v3715
    %5703 = vmatpush.bf16.msra.mxu0 %v3711
    %5704 = vmatpush.bf16.msra.mxu0 %v3707
    %5705 = vmatmul.bf16.gmra.mxu0 %v981
    %v5706 = vpop.f32.mrf.mxu0
    %v5707 = vadd.f32 %v5693, %v5706
    %v5708 = vpop.f32.mrf.mxu0
    %v5709 = vadd.f32 %v5695, %v5708
    %5710 = vdwg.mxu0
    %5711 = vmatpush.bf16.msra.mxu0 %v3767
    %5712 = vmatpush.bf16.msra.mxu0 %v3763
    %5713 = vmatpush.bf16.msra.mxu0 %v3759
    %5714 = vmatpush.bf16.msra.mxu0 %v3755
    %5715 = vmatpush.bf16.msra.mxu0 %v3751
    %5716 = vmatpush.bf16.msra.mxu0 %v3747
    %5717 = vmatpush.bf16.msra.mxu0 %v3743
    %5718 = vmatpush.bf16.msra.mxu0 %v3739
    %5719 = vmatmul.bf16.gmra.mxu0 %v982
    %v5720 = vpop.f32.mrf.mxu0
    %v5721 = vadd.f32 %v5707, %v5720
    %v5722 = vpop.f32.mrf.mxu0
    %v5723 = vadd.f32 %v5709, %v5722
    %5724 = vdwg.mxu0
    %5725 = vmatpush.bf16.msra.mxu0 %v3799
    %5726 = vmatpush.bf16.msra.mxu0 %v3795
    %5727 = vmatpush.bf16.msra.mxu0 %v3791
    %5728 = vmatpush.bf16.msra.mxu0 %v3787
    %5729 = vmatpush.bf16.msra.mxu0 %v3783
    %5730 = vmatpush.bf16.msra.mxu0 %v3779
    %5731 = vmatpush.bf16.msra.mxu0 %v3775
    %5732 = vmatpush.bf16.msra.mxu0 %v3771
    %5733 = vmatmul.bf16.gmra.mxu0 %v983
    %v5734 = vpop.f32.mrf.mxu0
    %v5735 = vadd.f32 %v5721, %v5734
    %v5736 = vpop.f32.mrf.mxu0
    %v5737 = vadd.f32 %v5723, %v5736
    %5738 = vdwg.mxu0
    %5739 = vmatpush.bf16.msra.mxu0 %v3831
    %5740 = vmatpush.bf16.msra.mxu0 %v3827
    %5741 = vmatpush.bf16.msra.mxu0 %v3823
    %5742 = vmatpush.bf16.msra.mxu0 %v3819
    %5743 = vmatpush.bf16.msra.mxu0 %v3815
    %5744 = vmatpush.bf16.msra.mxu0 %v3811
    %5745 = vmatpush.bf16.msra.mxu0 %v3807
    %5746 = vmatpush.bf16.msra.mxu0 %v3803
    %5747 = vmatmul.bf16.gmra.mxu0 %v984
    %v5748 = vpop.f32.mrf.mxu0
    %v5749 = vadd.f32 %v5735, %v5748
    %v5750 = vpop.f32.mrf.mxu0
    %v5751 = vadd.f32 %v5737, %v5750
    %5752 = vdwg.mxu0
    %5753 = vmatpush.bf16.msra.mxu0 %v3863
    %5754 = vmatpush.bf16.msra.mxu0 %v3859
    %5755 = vmatpush.bf16.msra.mxu0 %v3855
    %5756 = vmatpush.bf16.msra.mxu0 %v3851
    %5757 = vmatpush.bf16.msra.mxu0 %v3847
    %5758 = vmatpush.bf16.msra.mxu0 %v3843
    %5759 = vmatpush.bf16.msra.mxu0 %v3839
    %5760 = vmatpush.bf16.msra.mxu0 %v3835
    %5761 = vmatmul.bf16.gmra.mxu0 %v985
    %v5762 = vpop.f32.mrf.mxu0
    %v5763 = vadd.f32 %v5749, %v5762
    %v5764 = vpop.f32.mrf.mxu0
    %v5765 = vadd.f32 %v5751, %v5764
    %5766 = vdwg.mxu0
    %5767 = vmatpush.bf16.msra.mxu0 %v3895
    %5768 = vmatpush.bf16.msra.mxu0 %v3891
    %5769 = vmatpush.bf16.msra.mxu0 %v3887
    %5770 = vmatpush.bf16.msra.mxu0 %v3883
    %5771 = vmatpush.bf16.msra.mxu0 %v3879
    %5772 = vmatpush.bf16.msra.mxu0 %v3875
    %5773 = vmatpush.bf16.msra.mxu0 %v3871
    %5774 = vmatpush.bf16.msra.mxu0 %v3867
    %5775 = vmatmul.bf16.gmra.mxu0 %v986
    %v5776 = vpop.f32.mrf.mxu0
    %v5777 = vadd.f32 %v5763, %v5776
    %v5778 = vpop.f32.mrf.mxu0
    %v5779 = vadd.f32 %v5765, %v5778
    %5780 = vdwg.mxu0
    %5781 = vmatpush.bf16.msra.mxu0 %v3927
    %5782 = vmatpush.bf16.msra.mxu0 %v3923
    %5783 = vmatpush.bf16.msra.mxu0 %v3919
    %5784 = vmatpush.bf16.msra.mxu0 %v3915
    %5785 = vmatpush.bf16.msra.mxu0 %v3911
    %5786 = vmatpush.bf16.msra.mxu0 %v3907
    %5787 = vmatpush.bf16.msra.mxu0 %v3903
    %5788 = vmatpush.bf16.msra.mxu0 %v3899
    %5789 = vmatmul.bf16.gmra.mxu0 %v987
    %v5790 = vpop.f32.mrf.mxu0
    %v5791 = vadd.f32 %v5777, %v5790
    %v5792 = vpop.f32.mrf.mxu0
    %v5793 = vadd.f32 %v5779, %v5792
    %5794 = vdwg.mxu0
    %5795 = vmatpush.bf16.msra.mxu0 %v3959
    %5796 = vmatpush.bf16.msra.mxu0 %v3955
    %5797 = vmatpush.bf16.msra.mxu0 %v3951
    %5798 = vmatpush.bf16.msra.mxu0 %v3947
    %5799 = vmatpush.bf16.msra.mxu0 %v3943
    %5800 = vmatpush.bf16.msra.mxu0 %v3939
    %5801 = vmatpush.bf16.msra.mxu0 %v3935
    %5802 = vmatpush.bf16.msra.mxu0 %v3931
    %5803 = vmatmul.bf16.gmra.mxu0 %v988
    %v5804 = vpop.f32.mrf.mxu0
    %v5805 = vadd.f32 %v5791, %v5804
    %v5806 = vpop.f32.mrf.mxu0
    %v5807 = vadd.f32 %v5793, %v5806
    %5808 = vdwg.mxu0
    %5809 = vmatpush.bf16.msra.mxu0 %v3991
    %5810 = vmatpush.bf16.msra.mxu0 %v3987
    %5811 = vmatpush.bf16.msra.mxu0 %v3983
    %5812 = vmatpush.bf16.msra.mxu0 %v3979
    %5813 = vmatpush.bf16.msra.mxu0 %v3975
    %5814 = vmatpush.bf16.msra.mxu0 %v3971
    %5815 = vmatpush.bf16.msra.mxu0 %v3967
    %5816 = vmatpush.bf16.msra.mxu0 %v3963
    %5817 = vmatmul.bf16.gmra.mxu0 %v989
    %v5818 = vpop.f32.mrf.mxu0
    %v5819 = vadd.f32 %v5805, %v5818
    %v5820 = vpop.f32.mrf.mxu0
    %v5821 = vadd.f32 %v5807, %v5820
    %5822 = vdwg.mxu0
    %5823 = vmatpush.bf16.msra.mxu0 %v4023
    %5824 = vmatpush.bf16.msra.mxu0 %v4019
    %5825 = vmatpush.bf16.msra.mxu0 %v4015
    %5826 = vmatpush.bf16.msra.mxu0 %v4011
    %5827 = vmatpush.bf16.msra.mxu0 %v4007
    %5828 = vmatpush.bf16.msra.mxu0 %v4003
    %5829 = vmatpush.bf16.msra.mxu0 %v3999
    %5830 = vmatpush.bf16.msra.mxu0 %v3995
    %5831 = vmatmul.bf16.gmra.mxu0 %v990
    %v5832 = vpop.f32.mrf.mxu0
    %v5833 = vadd.f32 %v5819, %v5832
    %v5834 = vpop.f32.mrf.mxu0
    %v5835 = vadd.f32 %v5821, %v5834
    %5836 = vdwg.mxu0
    %5837 = vmatpush.bf16.msra.mxu0 %v4055
    %5838 = vmatpush.bf16.msra.mxu0 %v4051
    %5839 = vmatpush.bf16.msra.mxu0 %v4047
    %5840 = vmatpush.bf16.msra.mxu0 %v4043
    %5841 = vmatpush.bf16.msra.mxu0 %v4039
    %5842 = vmatpush.bf16.msra.mxu0 %v4035
    %5843 = vmatpush.bf16.msra.mxu0 %v4031
    %5844 = vmatpush.bf16.msra.mxu0 %v4027
    %5845 = vmatmul.bf16.gmra.mxu0 %v991
    %v5846 = vpop.f32.mrf.mxu0
    %v5847 = vadd.f32 %v5833, %v5846
    %v5848 = vpop.f32.mrf.mxu0
    %v5849 = vadd.f32 %v5835, %v5848
    %5850 = vdwg.mxu0
    %5851 = vmatpush.bf16.msra.mxu0 %v4087
    %5852 = vmatpush.bf16.msra.mxu0 %v4083
    %5853 = vmatpush.bf16.msra.mxu0 %v4079
    %5854 = vmatpush.bf16.msra.mxu0 %v4075
    %5855 = vmatpush.bf16.msra.mxu0 %v4071
    %5856 = vmatpush.bf16.msra.mxu0 %v4067
    %5857 = vmatpush.bf16.msra.mxu0 %v4063
    %5858 = vmatpush.bf16.msra.mxu0 %v4059
    %5859 = vmatmul.bf16.gmra.mxu0 %v992
    %v5860 = vpop.f32.mrf.mxu0
    %v5861 = vadd.f32 %v5847, %v5860
    %v5862 = vpop.f32.mrf.mxu0
    %v5863 = vadd.f32 %v5849, %v5862
    %5864 = vdwg.mxu0
    %5865 = vmatpush.bf16.msra.mxu0 %v3352
    %5866 = vmatpush.bf16.msra.mxu0 %v3348
    %5867 = vmatpush.bf16.msra.mxu0 %v3344
    %5868 = vmatpush.bf16.msra.mxu0 %v3340
    %5869 = vmatpush.bf16.msra.mxu0 %v3336
    %5870 = vmatpush.bf16.msra.mxu0 %v3332
    %5871 = vmatpush.bf16.msra.mxu0 %v3328
    %5872 = vmatpush.bf16.msra.mxu0 %v3324
    %5873 = vmatmul.bf16.gmra.mxu0 %v969
    %v5874 = vpop.f32.mrf.mxu0
    %v5875 = vadd.f32 %v892, %v5874
    %v5876 = vpop.f32.mrf.mxu0
    %v5877 = vadd.f32 %v892, %v5876
    %5878 = vdwg.mxu0
    %5879 = vmatpush.bf16.msra.mxu0 %v3384
    %5880 = vmatpush.bf16.msra.mxu0 %v3380
    %5881 = vmatpush.bf16.msra.mxu0 %v3376
    %5882 = vmatpush.bf16.msra.mxu0 %v3372
    %5883 = vmatpush.bf16.msra.mxu0 %v3368
    %5884 = vmatpush.bf16.msra.mxu0 %v3364
    %5885 = vmatpush.bf16.msra.mxu0 %v3360
    %5886 = vmatpush.bf16.msra.mxu0 %v3356
    %5887 = vmatmul.bf16.gmra.mxu0 %v970
    %v5888 = vpop.f32.mrf.mxu0
    %v5889 = vadd.f32 %v5875, %v5888
    %v5890 = vpop.f32.mrf.mxu0
    %v5891 = vadd.f32 %v5877, %v5890
    %5892 = vdwg.mxu0
    %5893 = vmatpush.bf16.msra.mxu0 %v3416
    %5894 = vmatpush.bf16.msra.mxu0 %v3412
    %5895 = vmatpush.bf16.msra.mxu0 %v3408
    %5896 = vmatpush.bf16.msra.mxu0 %v3404
    %5897 = vmatpush.bf16.msra.mxu0 %v3400
    %5898 = vmatpush.bf16.msra.mxu0 %v3396
    %5899 = vmatpush.bf16.msra.mxu0 %v3392
    %5900 = vmatpush.bf16.msra.mxu0 %v3388
    %5901 = vmatmul.bf16.gmra.mxu0 %v971
    %v5902 = vpop.f32.mrf.mxu0
    %v5903 = vadd.f32 %v5889, %v5902
    %v5904 = vpop.f32.mrf.mxu0
    %v5905 = vadd.f32 %v5891, %v5904
    %5906 = vdwg.mxu0
    %5907 = vmatpush.bf16.msra.mxu0 %v3448
    %5908 = vmatpush.bf16.msra.mxu0 %v3444
    %5909 = vmatpush.bf16.msra.mxu0 %v3440
    %5910 = vmatpush.bf16.msra.mxu0 %v3436
    %5911 = vmatpush.bf16.msra.mxu0 %v3432
    %5912 = vmatpush.bf16.msra.mxu0 %v3428
    %5913 = vmatpush.bf16.msra.mxu0 %v3424
    %5914 = vmatpush.bf16.msra.mxu0 %v3420
    %5915 = vmatmul.bf16.gmra.mxu0 %v972
    %v5916 = vpop.f32.mrf.mxu0
    %v5917 = vadd.f32 %v5903, %v5916
    %v5918 = vpop.f32.mrf.mxu0
    %v5919 = vadd.f32 %v5905, %v5918
    %5920 = vdwg.mxu0
    %5921 = vmatpush.bf16.msra.mxu0 %v3480
    %5922 = vmatpush.bf16.msra.mxu0 %v3476
    %5923 = vmatpush.bf16.msra.mxu0 %v3472
    %5924 = vmatpush.bf16.msra.mxu0 %v3468
    %5925 = vmatpush.bf16.msra.mxu0 %v3464
    %5926 = vmatpush.bf16.msra.mxu0 %v3460
    %5927 = vmatpush.bf16.msra.mxu0 %v3456
    %5928 = vmatpush.bf16.msra.mxu0 %v3452
    %5929 = vmatmul.bf16.gmra.mxu0 %v973
    %v5930 = vpop.f32.mrf.mxu0
    %v5931 = vadd.f32 %v5917, %v5930
    %v5932 = vpop.f32.mrf.mxu0
    %v5933 = vadd.f32 %v5919, %v5932
    %5934 = vdwg.mxu0
    %5935 = vmatpush.bf16.msra.mxu0 %v3512
    %5936 = vmatpush.bf16.msra.mxu0 %v3508
    %5937 = vmatpush.bf16.msra.mxu0 %v3504
    %5938 = vmatpush.bf16.msra.mxu0 %v3500
    %5939 = vmatpush.bf16.msra.mxu0 %v3496
    %5940 = vmatpush.bf16.msra.mxu0 %v3492
    %5941 = vmatpush.bf16.msra.mxu0 %v3488
    %5942 = vmatpush.bf16.msra.mxu0 %v3484
    %5943 = vmatmul.bf16.gmra.mxu0 %v974
    %v5944 = vpop.f32.mrf.mxu0
    %v5945 = vadd.f32 %v5931, %v5944
    %v5946 = vpop.f32.mrf.mxu0
    %v5947 = vadd.f32 %v5933, %v5946
    %5948 = vdwg.mxu0
    %5949 = vmatpush.bf16.msra.mxu0 %v3544
    %5950 = vmatpush.bf16.msra.mxu0 %v3540
    %5951 = vmatpush.bf16.msra.mxu0 %v3536
    %5952 = vmatpush.bf16.msra.mxu0 %v3532
    %5953 = vmatpush.bf16.msra.mxu0 %v3528
    %5954 = vmatpush.bf16.msra.mxu0 %v3524
    %5955 = vmatpush.bf16.msra.mxu0 %v3520
    %5956 = vmatpush.bf16.msra.mxu0 %v3516
    %5957 = vmatmul.bf16.gmra.mxu0 %v975
    %v5958 = vpop.f32.mrf.mxu0
    %v5959 = vadd.f32 %v5945, %v5958
    %v5960 = vpop.f32.mrf.mxu0
    %v5961 = vadd.f32 %v5947, %v5960
    %5962 = vdwg.mxu0
    %5963 = vmatpush.bf16.msra.mxu0 %v3576
    %5964 = vmatpush.bf16.msra.mxu0 %v3572
    %5965 = vmatpush.bf16.msra.mxu0 %v3568
    %5966 = vmatpush.bf16.msra.mxu0 %v3564
    %5967 = vmatpush.bf16.msra.mxu0 %v3560
    %5968 = vmatpush.bf16.msra.mxu0 %v3556
    %5969 = vmatpush.bf16.msra.mxu0 %v3552
    %5970 = vmatpush.bf16.msra.mxu0 %v3548
    %5971 = vmatmul.bf16.gmra.mxu0 %v976
    %v5972 = vpop.f32.mrf.mxu0
    %v5973 = vadd.f32 %v5959, %v5972
    %v5974 = vpop.f32.mrf.mxu0
    %v5975 = vadd.f32 %v5961, %v5974
    %5976 = vdwg.mxu0
    %5977 = vmatpush.bf16.msra.mxu0 %v3608
    %5978 = vmatpush.bf16.msra.mxu0 %v3604
    %5979 = vmatpush.bf16.msra.mxu0 %v3600
    %5980 = vmatpush.bf16.msra.mxu0 %v3596
    %5981 = vmatpush.bf16.msra.mxu0 %v3592
    %5982 = vmatpush.bf16.msra.mxu0 %v3588
    %5983 = vmatpush.bf16.msra.mxu0 %v3584
    %5984 = vmatpush.bf16.msra.mxu0 %v3580
    %5985 = vmatmul.bf16.gmra.mxu0 %v977
    %v5986 = vpop.f32.mrf.mxu0
    %v5987 = vadd.f32 %v5973, %v5986
    %v5988 = vpop.f32.mrf.mxu0
    %v5989 = vadd.f32 %v5975, %v5988
    %5990 = vdwg.mxu0
    %5991 = vmatpush.bf16.msra.mxu0 %v3640
    %5992 = vmatpush.bf16.msra.mxu0 %v3636
    %5993 = vmatpush.bf16.msra.mxu0 %v3632
    %5994 = vmatpush.bf16.msra.mxu0 %v3628
    %5995 = vmatpush.bf16.msra.mxu0 %v3624
    %5996 = vmatpush.bf16.msra.mxu0 %v3620
    %5997 = vmatpush.bf16.msra.mxu0 %v3616
    %5998 = vmatpush.bf16.msra.mxu0 %v3612
    %5999 = vmatmul.bf16.gmra.mxu0 %v978
    %v6000 = vpop.f32.mrf.mxu0
    %v6001 = vadd.f32 %v5987, %v6000
    %v6002 = vpop.f32.mrf.mxu0
    %v6003 = vadd.f32 %v5989, %v6002
    %6004 = vdwg.mxu0
    %6005 = vmatpush.bf16.msra.mxu0 %v3672
    %6006 = vmatpush.bf16.msra.mxu0 %v3668
    %6007 = vmatpush.bf16.msra.mxu0 %v3664
    %6008 = vmatpush.bf16.msra.mxu0 %v3660
    %6009 = vmatpush.bf16.msra.mxu0 %v3656
    %6010 = vmatpush.bf16.msra.mxu0 %v3652
    %6011 = vmatpush.bf16.msra.mxu0 %v3648
    %6012 = vmatpush.bf16.msra.mxu0 %v3644
    %6013 = vmatmul.bf16.gmra.mxu0 %v979
    %v6014 = vpop.f32.mrf.mxu0
    %v6015 = vadd.f32 %v6001, %v6014
    %v6016 = vpop.f32.mrf.mxu0
    %v6017 = vadd.f32 %v6003, %v6016
    %6018 = vdwg.mxu0
    %6019 = vmatpush.bf16.msra.mxu0 %v3704
    %6020 = vmatpush.bf16.msra.mxu0 %v3700
    %6021 = vmatpush.bf16.msra.mxu0 %v3696
    %6022 = vmatpush.bf16.msra.mxu0 %v3692
    %6023 = vmatpush.bf16.msra.mxu0 %v3688
    %6024 = vmatpush.bf16.msra.mxu0 %v3684
    %6025 = vmatpush.bf16.msra.mxu0 %v3680
    %6026 = vmatpush.bf16.msra.mxu0 %v3676
    %6027 = vmatmul.bf16.gmra.mxu0 %v980
    %v6028 = vpop.f32.mrf.mxu0
    %v6029 = vadd.f32 %v6015, %v6028
    %v6030 = vpop.f32.mrf.mxu0
    %v6031 = vadd.f32 %v6017, %v6030
    %6032 = vdwg.mxu0
    %6033 = vmatpush.bf16.msra.mxu0 %v3736
    %6034 = vmatpush.bf16.msra.mxu0 %v3732
    %6035 = vmatpush.bf16.msra.mxu0 %v3728
    %6036 = vmatpush.bf16.msra.mxu0 %v3724
    %6037 = vmatpush.bf16.msra.mxu0 %v3720
    %6038 = vmatpush.bf16.msra.mxu0 %v3716
    %6039 = vmatpush.bf16.msra.mxu0 %v3712
    %6040 = vmatpush.bf16.msra.mxu0 %v3708
    %6041 = vmatmul.bf16.gmra.mxu0 %v981
    %v6042 = vpop.f32.mrf.mxu0
    %v6043 = vadd.f32 %v6029, %v6042
    %v6044 = vpop.f32.mrf.mxu0
    %v6045 = vadd.f32 %v6031, %v6044
    %6046 = vdwg.mxu0
    %6047 = vmatpush.bf16.msra.mxu0 %v3768
    %6048 = vmatpush.bf16.msra.mxu0 %v3764
    %6049 = vmatpush.bf16.msra.mxu0 %v3760
    %6050 = vmatpush.bf16.msra.mxu0 %v3756
    %6051 = vmatpush.bf16.msra.mxu0 %v3752
    %6052 = vmatpush.bf16.msra.mxu0 %v3748
    %6053 = vmatpush.bf16.msra.mxu0 %v3744
    %6054 = vmatpush.bf16.msra.mxu0 %v3740
    %6055 = vmatmul.bf16.gmra.mxu0 %v982
    %v6056 = vpop.f32.mrf.mxu0
    %v6057 = vadd.f32 %v6043, %v6056
    %v6058 = vpop.f32.mrf.mxu0
    %v6059 = vadd.f32 %v6045, %v6058
    %6060 = vdwg.mxu0
    %6061 = vmatpush.bf16.msra.mxu0 %v3800
    %6062 = vmatpush.bf16.msra.mxu0 %v3796
    %6063 = vmatpush.bf16.msra.mxu0 %v3792
    %6064 = vmatpush.bf16.msra.mxu0 %v3788
    %6065 = vmatpush.bf16.msra.mxu0 %v3784
    %6066 = vmatpush.bf16.msra.mxu0 %v3780
    %6067 = vmatpush.bf16.msra.mxu0 %v3776
    %6068 = vmatpush.bf16.msra.mxu0 %v3772
    %6069 = vmatmul.bf16.gmra.mxu0 %v983
    %v6070 = vpop.f32.mrf.mxu0
    %v6071 = vadd.f32 %v6057, %v6070
    %v6072 = vpop.f32.mrf.mxu0
    %v6073 = vadd.f32 %v6059, %v6072
    %6074 = vdwg.mxu0
    %6075 = vmatpush.bf16.msra.mxu0 %v3832
    %6076 = vmatpush.bf16.msra.mxu0 %v3828
    %6077 = vmatpush.bf16.msra.mxu0 %v3824
    %6078 = vmatpush.bf16.msra.mxu0 %v3820
    %6079 = vmatpush.bf16.msra.mxu0 %v3816
    %6080 = vmatpush.bf16.msra.mxu0 %v3812
    %6081 = vmatpush.bf16.msra.mxu0 %v3808
    %6082 = vmatpush.bf16.msra.mxu0 %v3804
    %6083 = vmatmul.bf16.gmra.mxu0 %v984
    %v6084 = vpop.f32.mrf.mxu0
    %v6085 = vadd.f32 %v6071, %v6084
    %v6086 = vpop.f32.mrf.mxu0
    %v6087 = vadd.f32 %v6073, %v6086
    %6088 = vdwg.mxu0
    %6089 = vmatpush.bf16.msra.mxu0 %v3864
    %6090 = vmatpush.bf16.msra.mxu0 %v3860
    %6091 = vmatpush.bf16.msra.mxu0 %v3856
    %6092 = vmatpush.bf16.msra.mxu0 %v3852
    %6093 = vmatpush.bf16.msra.mxu0 %v3848
    %6094 = vmatpush.bf16.msra.mxu0 %v3844
    %6095 = vmatpush.bf16.msra.mxu0 %v3840
    %6096 = vmatpush.bf16.msra.mxu0 %v3836
    %6097 = vmatmul.bf16.gmra.mxu0 %v985
    %v6098 = vpop.f32.mrf.mxu0
    %v6099 = vadd.f32 %v6085, %v6098
    %v6100 = vpop.f32.mrf.mxu0
    %v6101 = vadd.f32 %v6087, %v6100
    %6102 = vdwg.mxu0
    %6103 = vmatpush.bf16.msra.mxu0 %v3896
    %6104 = vmatpush.bf16.msra.mxu0 %v3892
    %6105 = vmatpush.bf16.msra.mxu0 %v3888
    %6106 = vmatpush.bf16.msra.mxu0 %v3884
    %6107 = vmatpush.bf16.msra.mxu0 %v3880
    %6108 = vmatpush.bf16.msra.mxu0 %v3876
    %6109 = vmatpush.bf16.msra.mxu0 %v3872
    %6110 = vmatpush.bf16.msra.mxu0 %v3868
    %6111 = vmatmul.bf16.gmra.mxu0 %v986
    %v6112 = vpop.f32.mrf.mxu0
    %v6113 = vadd.f32 %v6099, %v6112
    %v6114 = vpop.f32.mrf.mxu0
    %v6115 = vadd.f32 %v6101, %v6114
    %6116 = vdwg.mxu0
    %6117 = vmatpush.bf16.msra.mxu0 %v3928
    %6118 = vmatpush.bf16.msra.mxu0 %v3924
    %6119 = vmatpush.bf16.msra.mxu0 %v3920
    %6120 = vmatpush.bf16.msra.mxu0 %v3916
    %6121 = vmatpush.bf16.msra.mxu0 %v3912
    %6122 = vmatpush.bf16.msra.mxu0 %v3908
    %6123 = vmatpush.bf16.msra.mxu0 %v3904
    %6124 = vmatpush.bf16.msra.mxu0 %v3900
    %6125 = vmatmul.bf16.gmra.mxu0 %v987
    %v6126 = vpop.f32.mrf.mxu0
    %v6127 = vadd.f32 %v6113, %v6126
    %v6128 = vpop.f32.mrf.mxu0
    %v6129 = vadd.f32 %v6115, %v6128
    %6130 = vdwg.mxu0
    %6131 = vmatpush.bf16.msra.mxu0 %v3960
    %6132 = vmatpush.bf16.msra.mxu0 %v3956
    %6133 = vmatpush.bf16.msra.mxu0 %v3952
    %6134 = vmatpush.bf16.msra.mxu0 %v3948
    %6135 = vmatpush.bf16.msra.mxu0 %v3944
    %6136 = vmatpush.bf16.msra.mxu0 %v3940
    %6137 = vmatpush.bf16.msra.mxu0 %v3936
    %6138 = vmatpush.bf16.msra.mxu0 %v3932
    %6139 = vmatmul.bf16.gmra.mxu0 %v988
    %v6140 = vpop.f32.mrf.mxu0
    %v6141 = vadd.f32 %v6127, %v6140
    %v6142 = vpop.f32.mrf.mxu0
    %v6143 = vadd.f32 %v6129, %v6142
    %6144 = vdwg.mxu0
    %6145 = vmatpush.bf16.msra.mxu0 %v3992
    %6146 = vmatpush.bf16.msra.mxu0 %v3988
    %6147 = vmatpush.bf16.msra.mxu0 %v3984
    %6148 = vmatpush.bf16.msra.mxu0 %v3980
    %6149 = vmatpush.bf16.msra.mxu0 %v3976
    %6150 = vmatpush.bf16.msra.mxu0 %v3972
    %6151 = vmatpush.bf16.msra.mxu0 %v3968
    %6152 = vmatpush.bf16.msra.mxu0 %v3964
    %6153 = vmatmul.bf16.gmra.mxu0 %v989
    %v6154 = vpop.f32.mrf.mxu0
    %v6155 = vadd.f32 %v6141, %v6154
    %v6156 = vpop.f32.mrf.mxu0
    %v6157 = vadd.f32 %v6143, %v6156
    %6158 = vdwg.mxu0
    %6159 = vmatpush.bf16.msra.mxu0 %v4024
    %6160 = vmatpush.bf16.msra.mxu0 %v4020
    %6161 = vmatpush.bf16.msra.mxu0 %v4016
    %6162 = vmatpush.bf16.msra.mxu0 %v4012
    %6163 = vmatpush.bf16.msra.mxu0 %v4008
    %6164 = vmatpush.bf16.msra.mxu0 %v4004
    %6165 = vmatpush.bf16.msra.mxu0 %v4000
    %6166 = vmatpush.bf16.msra.mxu0 %v3996
    %6167 = vmatmul.bf16.gmra.mxu0 %v990
    %v6168 = vpop.f32.mrf.mxu0
    %v6169 = vadd.f32 %v6155, %v6168
    %v6170 = vpop.f32.mrf.mxu0
    %v6171 = vadd.f32 %v6157, %v6170
    %6172 = vdwg.mxu0
    %6173 = vmatpush.bf16.msra.mxu0 %v4056
    %6174 = vmatpush.bf16.msra.mxu0 %v4052
    %6175 = vmatpush.bf16.msra.mxu0 %v4048
    %6176 = vmatpush.bf16.msra.mxu0 %v4044
    %6177 = vmatpush.bf16.msra.mxu0 %v4040
    %6178 = vmatpush.bf16.msra.mxu0 %v4036
    %6179 = vmatpush.bf16.msra.mxu0 %v4032
    %6180 = vmatpush.bf16.msra.mxu0 %v4028
    %6181 = vmatmul.bf16.gmra.mxu0 %v991
    %v6182 = vpop.f32.mrf.mxu0
    %v6183 = vadd.f32 %v6169, %v6182
    %v6184 = vpop.f32.mrf.mxu0
    %v6185 = vadd.f32 %v6171, %v6184
    %6186 = vdwg.mxu0
    %6187 = vmatpush.bf16.msra.mxu0 %v4088
    %6188 = vmatpush.bf16.msra.mxu0 %v4084
    %6189 = vmatpush.bf16.msra.mxu0 %v4080
    %6190 = vmatpush.bf16.msra.mxu0 %v4076
    %6191 = vmatpush.bf16.msra.mxu0 %v4072
    %6192 = vmatpush.bf16.msra.mxu0 %v4068
    %6193 = vmatpush.bf16.msra.mxu0 %v4064
    %6194 = vmatpush.bf16.msra.mxu0 %v4060
    %6195 = vmatmul.bf16.gmra.mxu0 %v992
    %v6196 = vpop.f32.mrf.mxu0
    %v6197 = vadd.f32 %v6183, %v6196
    %v6198 = vpop.f32.mrf.mxu0
    %v6199 = vadd.f32 %v6185, %v6198
    %6200 = vdwg.mxu0
    %v6201 = vmax.f32 %v5189, 0.0
    %v6202 = vmax.f32 %v5525, 0.0
    %v6203 = vmax.f32 %v5861, 0.0
    %v6204 = vmax.f32 %v6197, 0.0
    %v6205 = vmax.f32 %v5191, 0.0
    %v6206 = vmax.f32 %v5527, 0.0
    %v6207 = vmax.f32 %v5863, 0.0
    %v6208 = vmax.f32 %v6199, 0.0
    %v6209 = vpack.c.bf16 %v6205, %v6201
    %v6210 = vpack.c.bf16 %v6206, %v6202
    %v6211 = vpack.c.bf16 %v6207, %v6203
    %v6212 = vpack.c.bf16 %v6208, %v6204
    %v6213 = vld [vmem:[#allocation8] sm:$0xf]
    %v6214 = vld [vmem:[#allocation8 + $0x4] sm:$0xf]
    %v6215 = vld [vmem:[#allocation8 + $0x8] sm:$0xf]
    %v6216 = vld [vmem:[#allocation8 + $0xc] sm:$0xf]
    %v6217 = vld [vmem:[#allocation8 + $0x10] sm:$0xf]
    %v6218 = vld [vmem:[#allocation8 + $0x14] sm:$0xf]
    %v6219 = vld [vmem:[#allocation8 + $0x18] sm:$0xf]
    %v6220 = vld [vmem:[#allocation8 + $0x1c] sm:$0xf]
    %v6221 = vld [vmem:[#allocation8 + $0x20] sm:$0xf]
    %v6222 = vld [vmem:[#allocation8 + $0x24] sm:$0xf]
    %v6223 = vld [vmem:[#allocation8 + $0x28] sm:$0xf]
    %v6224 = vld [vmem:[#allocation8 + $0x2c] sm:$0xf]
    %v6225 = vld [vmem:[#allocation8 + $0x30] sm:$0xf]
    %v6226 = vld [vmem:[#allocation8 + $0x34] sm:$0xf]
    %v6227 = vld [vmem:[#allocation8 + $0x38] sm:$0xf]
    %v6228 = vld [vmem:[#allocation8 + $0x3c] sm:$0xf]
    %v6229 = vld [vmem:[#allocation8 + $0x40] sm:$0xf]
    %v6230 = vld [vmem:[#allocation8 + $0x44] sm:$0xf]
    %v6231 = vld [vmem:[#allocation8 + $0x48] sm:$0xf]
    %v6232 = vld [vmem:[#allocation8 + $0x4c] sm:$0xf]
    %v6233 = vld [vmem:[#allocation8 + $0x50] sm:$0xf]
    %v6234 = vld [vmem:[#allocation8 + $0x54] sm:$0xf]
    %v6235 = vld [vmem:[#allocation8 + $0x58] sm:$0xf]
    %v6236 = vld [vmem:[#allocation8 + $0x5c] sm:$0xf]
    %v6237 = vld [vmem:[#allocation8 + $0x60] sm:$0xf]
    %v6238 = vld [vmem:[#allocation8 + $0x64] sm:$0xf]
    %v6239 = vld [vmem:[#allocation8 + $0x68] sm:$0xf]
    %v6240 = vld [vmem:[#allocation8 + $0x6c] sm:$0xf]
    %v6241 = vld [vmem:[#allocation8 + $0x70] sm:$0xf]
    %v6242 = vld [vmem:[#allocation8 + $0x74] sm:$0xf]
    %v6243 = vld [vmem:[#allocation8 + $0x78] sm:$0xf]
    %v6244 = vld [vmem:[#allocation8 + $0x7c] sm:$0xf]
    %v6245 = vld [vmem:[#allocation8 + $0x80] sm:$0xf]
    %v6246 = vld [vmem:[#allocation8 + $0x84] sm:$0xf]
    %v6247 = vld [vmem:[#allocation8 + $0x88] sm:$0xf]
    %v6248 = vld [vmem:[#allocation8 + $0x8c] sm:$0xf]
    %v6249 = vld [vmem:[#allocation8 + $0x90] sm:$0xf]
    %v6250 = vld [vmem:[#allocation8 + $0x94] sm:$0xf]
    %v6251 = vld [vmem:[#allocation8 + $0x98] sm:$0xf]
    %v6252 = vld [vmem:[#allocation8 + $0x9c] sm:$0xf]
    %v6253 = vld [vmem:[#allocation8 + $0xa0] sm:$0xf]
    %v6254 = vld [vmem:[#allocation8 + $0xa4] sm:$0xf]
    %v6255 = vld [vmem:[#allocation8 + $0xa8] sm:$0xf]
    %v6256 = vld [vmem:[#allocation8 + $0xac] sm:$0xf]
    %v6257 = vld [vmem:[#allocation8 + $0xb0] sm:$0xf]
    %v6258 = vld [vmem:[#allocation8 + $0xb4] sm:$0xf]
    %v6259 = vld [vmem:[#allocation8 + $0xb8] sm:$0xf]
    %v6260 = vld [vmem:[#allocation8 + $0xbc] sm:$0xf]
    %v6261 = vld [vmem:[#allocation8 + $0xc0] sm:$0xf]
    %v6262 = vld [vmem:[#allocation8 + $0xc4] sm:$0xf]
    %v6263 = vld [vmem:[#allocation8 + $0xc8] sm:$0xf]
    %v6264 = vld [vmem:[#allocation8 + $0xcc] sm:$0xf]
    %v6265 = vld [vmem:[#allocation8 + $0xd0] sm:$0xf]
    %v6266 = vld [vmem:[#allocation8 + $0xd4] sm:$0xf]
    %v6267 = vld [vmem:[#allocation8 + $0xd8] sm:$0xf]
    %v6268 = vld [vmem:[#allocation8 + $0xdc] sm:$0xf]
    %v6269 = vld [vmem:[#allocation8 + $0xe0] sm:$0xf]
    %v6270 = vld [vmem:[#allocation8 + $0xe4] sm:$0xf]
    %v6271 = vld [vmem:[#allocation8 + $0xe8] sm:$0xf]
    %v6272 = vld [vmem:[#allocation8 + $0xec] sm:$0xf]
    %v6273 = vld [vmem:[#allocation8 + $0xf0] sm:$0xf]
    %v6274 = vld [vmem:[#allocation8 + $0xf4] sm:$0xf]
    %v6275 = vld [vmem:[#allocation8 + $0xf8] sm:$0xf]
    %v6276 = vld [vmem:[#allocation8 + $0xfc] sm:$0xf]
    %v6277 = vld [vmem:[#allocation10] sm:$0x1]
    %v6279 = vperm.slane %v6277, 0
    %v6345 = vunpack.c.l.b16 %v6213
    %v6346 = vunpack.c.l.b16 %v6214
    %v6347 = vunpack.c.l.b16 %v6215
    %v6348 = vunpack.c.l.b16 %v6216
    %v6349 = vunpack.c.l.b16 %v6217
    %v6350 = vunpack.c.l.b16 %v6218
    %v6351 = vunpack.c.l.b16 %v6219
    %v6352 = vunpack.c.l.b16 %v6220
    %v6353 = vunpack.c.l.b16 %v6221
    %v6354 = vunpack.c.l.b16 %v6222
    %v6355 = vunpack.c.l.b16 %v6223
    %v6356 = vunpack.c.l.b16 %v6224
    %v6357 = vunpack.c.l.b16 %v6225
    %v6358 = vunpack.c.l.b16 %v6226
    %v6359 = vunpack.c.l.b16 %v6227
    %v6360 = vunpack.c.l.b16 %v6228
    %v6361 = vunpack.c.l.b16 %v6229
    %v6362 = vunpack.c.l.b16 %v6230
    %v6363 = vunpack.c.l.b16 %v6231
    %v6364 = vunpack.c.l.b16 %v6232
    %v6365 = vunpack.c.l.b16 %v6233
    %v6366 = vunpack.c.l.b16 %v6234
    %v6367 = vunpack.c.l.b16 %v6235
    %v6368 = vunpack.c.l.b16 %v6236
    %v6369 = vunpack.c.l.b16 %v6237
    %v6370 = vunpack.c.l.b16 %v6238
    %v6371 = vunpack.c.l.b16 %v6239
    %v6372 = vunpack.c.l.b16 %v6240
    %v6373 = vunpack.c.l.b16 %v6241
    %v6374 = vunpack.c.l.b16 %v6242
    %v6375 = vunpack.c.l.b16 %v6243
    %v6376 = vunpack.c.l.b16 %v6244
    %v6377 = vunpack.c.l.b16 %v6245
    %v6378 = vunpack.c.l.b16 %v6246
    %v6379 = vunpack.c.l.b16 %v6247
    %v6380 = vunpack.c.l.b16 %v6248
    %v6381 = vunpack.c.l.b16 %v6249
    %v6382 = vunpack.c.l.b16 %v6250
    %v6383 = vunpack.c.l.b16 %v6251
    %v6384 = vunpack.c.l.b16 %v6252
    %v6385 = vunpack.c.l.b16 %v6253
    %v6386 = vunpack.c.l.b16 %v6254
    %v6387 = vunpack.c.l.b16 %v6255
    %v6388 = vunpack.c.l.b16 %v6256
    %v6389 = vunpack.c.l.b16 %v6257
    %v6390 = vunpack.c.l.b16 %v6258
    %v6391 = vunpack.c.l.b16 %v6259
    %v6392 = vunpack.c.l.b16 %v6260
    %v6393 = vunpack.c.l.b16 %v6261
    %v6394 = vunpack.c.l.b16 %v6262
    %v6395 = vunpack.c.l.b16 %v6263
    %v6396 = vunpack.c.l.b16 %v6264
    %v6397 = vunpack.c.l.b16 %v6265
    %v6398 = vunpack.c.l.b16 %v6266
    %v6399 = vunpack.c.l.b16 %v6267
    %v6400 = vunpack.c.l.b16 %v6268
    %v6401 = vunpack.c.l.b16 %v6269
    %v6402 = vunpack.c.l.b16 %v6270
    %v6403 = vunpack.c.l.b16 %v6271
    %v6404 = vunpack.c.l.b16 %v6272
    %v6405 = vunpack.c.l.b16 %v6273
    %v6406 = vunpack.c.l.b16 %v6274
    %v6407 = vunpack.c.l.b16 %v6275
    %v6408 = vunpack.c.l.b16 %v6276
    %v6409 = vpack.c.b16 %v6346, %v6345
    %v6410 = vpack.c.b16 %v6348, %v6347
    %v6411 = vpack.c.b16 %v6350, %v6349
    %v6412 = vpack.c.b16 %v6352, %v6351
    %v6413 = vpack.c.b16 %v6354, %v6353
    %v6414 = vpack.c.b16 %v6356, %v6355
    %v6415 = vpack.c.b16 %v6358, %v6357
    %v6416 = vpack.c.b16 %v6360, %v6359
    %v6417 = vpack.c.b16 %v6362, %v6361
    %v6418 = vpack.c.b16 %v6364, %v6363
    %v6419 = vpack.c.b16 %v6366, %v6365
    %v6420 = vpack.c.b16 %v6368, %v6367
    %v6421 = vpack.c.b16 %v6370, %v6369
    %v6422 = vpack.c.b16 %v6372, %v6371
    %v6423 = vpack.c.b16 %v6374, %v6373
    %v6424 = vpack.c.b16 %v6376, %v6375
    %v6425 = vpack.c.b16 %v6378, %v6377
    %v6426 = vpack.c.b16 %v6380, %v6379
    %v6427 = vpack.c.b16 %v6382, %v6381
    %v6428 = vpack.c.b16 %v6384, %v6383
    %v6429 = vpack.c.b16 %v6386, %v6385
    %v6430 = vpack.c.b16 %v6388, %v6387
    %v6431 = vpack.c.b16 %v6390, %v6389
    %v6432 = vpack.c.b16 %v6392, %v6391
    %v6433 = vpack.c.b16 %v6394, %v6393
    %v6434 = vpack.c.b16 %v6396, %v6395
    %v6435 = vpack.c.b16 %v6398, %v6397
    %v6436 = vpack.c.b16 %v6400, %v6399
    %v6437 = vpack.c.b16 %v6402, %v6401
    %v6438 = vpack.c.b16 %v6404, %v6403
    %v6439 = vpack.c.b16 %v6406, %v6405
    %v6440 = vpack.c.b16 %v6408, %v6407
    %6473 = vmatpush.bf16.msra.mxu0 %v6416
    %6474 = vmatpush.bf16.msra.mxu0 %v6415
    %6475 = vmatpush.bf16.msra.mxu0 %v6414
    %6476 = vmatpush.bf16.msra.mxu0 %v6413
    %6477 = vmatpush.bf16.msra.mxu0 %v6412
    %6478 = vmatpush.bf16.msra.mxu0 %v6411
    %6479 = vmatpush.bf16.msra.mxu0 %v6410
    %6480 = vmatpush.bf16.msra.mxu0 %v6409
    %6481 = vmatmul.bf16.gmra.mxu0 %v6209
    %v6482 = vpop.f32.mrf.mxu0
    %v6483 = vadd.f32 %v6279, %v6482
    %v6484 = vpop.f32.mrf.mxu0
    %v6485 = vadd.f32 %v6279, %v6484
    %6486 = vdwg.mxu0
    %6487 = vmatpush.bf16.msra.mxu0 %v6424
    %6488 = vmatpush.bf16.msra.mxu0 %v6423
    %6489 = vmatpush.bf16.msra.mxu0 %v6422
    %6490 = vmatpush.bf16.msra.mxu0 %v6421
    %6491 = vmatpush.bf16.msra.mxu0 %v6420
    %6492 = vmatpush.bf16.msra.mxu0 %v6419
    %6493 = vmatpush.bf16.msra.mxu0 %v6418
    %6494 = vmatpush.bf16.msra.mxu0 %v6417
    %6495 = vmatmul.bf16.gmra.mxu0 %v6210
    %v6496 = vpop.f32.mrf.mxu0
    %v6497 = vadd.f32 %v6483, %v6496
    %v6498 = vpop.f32.mrf.mxu0
    %v6499 = vadd.f32 %v6485, %v6498
    %6500 = vdwg.mxu0
    %6501 = vmatpush.bf16.msra.mxu0 %v6432
    %6502 = vmatpush.bf16.msra.mxu0 %v6431
    %6503 = vmatpush.bf16.msra.mxu0 %v6430
    %6504 = vmatpush.bf16.msra.mxu0 %v6429
    %6505 = vmatpush.bf16.msra.mxu0 %v6428
    %6506 = vmatpush.bf16.msra.mxu0 %v6427
    %6507 = vmatpush.bf16.msra.mxu0 %v6426
    %6508 = vmatpush.bf16.msra.mxu0 %v6425
    %6509 = vmatmul.bf16.gmra.mxu0 %v6211
    %v6510 = vpop.f32.mrf.mxu0
    %v6511 = vadd.f32 %v6497, %v6510
    %v6512 = vpop.f32.mrf.mxu0
    %v6513 = vadd.f32 %v6499, %v6512
    %6514 = vdwg.mxu0
    %6515 = vmatpush.bf16.msra.mxu0 %v6440
    %6516 = vmatpush.bf16.msra.mxu0 %v6439
    %6517 = vmatpush.bf16.msra.mxu0 %v6438
    %6518 = vmatpush.bf16.msra.mxu0 %v6437
    %6519 = vmatpush.bf16.msra.mxu0 %v6436
    %6520 = vmatpush.bf16.msra.mxu0 %v6435
    %6521 = vmatpush.bf16.msra.mxu0 %v6434
    %6522 = vmatpush.bf16.msra.mxu0 %v6433
    %6523 = vmatmul.bf16.gmra.mxu0 %v6212
    %v6524 = vpop.f32.mrf.mxu0
    %v6525 = vadd.f32 %v6511, %v6524
    %v6526 = vpop.f32.mrf.mxu0
    %v6527 = vadd.f32 %v6513, %v6526
    %6528 = vdwg.mxu0
    %6529 = vst [vmem:[#allocation11] sm:$0xff] %v6525
    %6530 = vst [vmem:[#allocation11 + $0x8] sm:$0xff] %v6527
    // Predicated region
    $region42: #{tpu_custom_call.1} parent=1 // pred_check
      _
    $region43: #{tpu_custom_call.1} parent=1 // pred_check_branch
      %6532 = sbr.rel (0) target = $region45
    $region44: #{tpu_custom_call.1} parent=1 // pred_region
      %6534 = vsyncadd [#allocation4], 0
      %s6535 = sshll.u32 [#allocation11], 4
      %s6536 = int_to_ptr.vmem [resolvable:$true] %s6535
      %s6537 = sshll.u32 %s5, 4
      %s6538 = int_to_ptr.hbm [resolvable:$true] %s6537
      %6543 = dma.vmem_to_hbm [thread:$0]  %s6536, 256, %s6538, [#allocation4], 128, 128, 8
    $region45: #{tpu_custom_call.1} parent=1 // pred_fallthru
      _
    // Predicated region
    $region46: #{tpu_custom_call.1} parent=1 // pred_check
      _
    $region47: #{tpu_custom_call.1} parent=1 // pred_check_branch
      %6545 = sbr.rel (0) target = $region49
    $region48: #{tpu_custom_call.1} parent=1 // pred_region
      %6547 = dma.done [#allocation4], 256
    $region49: #{tpu_custom_call.1} parent=1 // pred_fallthru
      _
    %6548 = vsyncpa [#allocation3], 1
    %6549 = vsyncpa [#allocation6], 1
    %6550 = vsyncpa [#allocation9], 1
    %6551 = vsyncpa [#allocation4], 1

</llo_original>
